<compile_context>
chip_gen: v5e
topology: v5e:2x2
jax: 0.10.0
libtpu: 0.0.40
codegen_flags: <defaults>
</compile_context>

<pallas_src>
import functools

import jax
import jax.numpy as jnp
from jax import lax
from jax.experimental import pallas as pl
from jax.experimental.pallas import tpu as pltpu


# ----------------------------------------------------------------------------
# VGG19 truncation logic (mirrors the PyTorch __init__ exactly).
# ----------------------------------------------------------------------------
def vgg19_truncated_layers(i, j):
    cfg = [64, 64, 'M', 128, 128, 'M', 256, 256, 256, 256, 'M',
           512, 512, 512, 512, 'M', 512, 512, 512, 512, 'M']
    layers = []
    in_ch = 3
    for v in cfg:
        if v == 'M':
            layers.append(('maxpool',))
        else:
            layers.append(('conv', in_ch, v))
            layers.append(('relu',))
            in_ch = v

    maxpool_counter = 0
    conv_counter = 0
    truncate_at = 0
    found = False
    for layer in layers:
        truncate_at += 1
        if layer[0] == 'conv':
            conv_counter += 1
        if layer[0] == 'maxpool':
            maxpool_counter += 1
            conv_counter = 0
        if maxpool_counter == i - 1 and conv_counter == j:
            found = True
            break
    assert found, 'i=%d, j=%d does not match the VGG19 structure' % (i, j)
    return layers[:truncate_at + 1]


# Structure implemented by the fused kernels below (i=2, j=2).
_EXPECTED_LAYERS = (
    ('conv', 3, 64), ('relu',), ('conv', 64, 64), ('relu',), ('maxpool',),
    ('conv', 64, 128), ('relu',), ('conv', 128, 128), ('relu',),
)


# ----------------------------------------------------------------------------
# Pallas kernels
# ----------------------------------------------------------------------------
def _block1_kernel(p27_ref, w1_ref, b1_ref, w2_ref, b2_ref, out_ref,
                   a1s_ref, pat_e_ref, pat_o_ref):
    """conv1(3->64)+ReLU -> conv2(64->64)+ReLU -> 2x2 maxpool for one row tile.

    p27_ref : (1, H+2, W, 27) bf16  conv1 3x3 patches; W axis ordered
              [even spatial cols | odd spatial cols].
    out_ref : (1, TP, W//2, 64) bf16  pooled rows [t*TP, (t+1)*TP).
    """
    t = pl.program_id(1)
    n_t = pl.num_programs(1)
    TP, W2 = out_ref.shape[1], out_ref.shape[2]
    W = p27_ref.shape[2]
    r1 = 2 * TP + 2                       # conv1 rows produced (incl. +-1 halo)
    r2 = 2 * TP                           # conv2 / pre-pool rows

    # ---- conv1: one K=27 MXU matmul over prebuilt patches ------------------
    row0 = pl.multiple_of(t * r2, r2)
    p = p27_ref[0, pl.ds(row0, r1), :, :]                    # (r1, W, 27) bf16
    a1 = jnp.dot(p.reshape(r1 * W, 27), w1_ref[...],
                 preferred_element_type=jnp.float32)
    a1 = jnp.maximum(a1 + b1_ref[...], 0.0).reshape(r1, W, 64)

    # ---- stage conv1 output in VMEM: [even cols | 2 zero cols | odd cols] --
    a1s_ref[:, 0:W2, :] = a1[:, :W2, :]
    a1s_ref[:, W2:W2 + 2, :] = jnp.zeros((r1, 2, 64), jnp.float32)
    a1s_ref[:, W2 + 2:2 * W2 + 2, :] = a1[:, W2:, :]

    # Halo rows that fall outside the image are conv2's zero padding.
    @pl.when(t == 0)
    def _():
        a1s_ref[0:1, :, :] = jnp.zeros((1, 2 * W2 + 2, 64), jnp.float32)

    @pl.when(t == n_t - 1)
    def _():
        a1s_ref[r1 - 1:r1, :, :] = jnp.zeros((1, 2 * W2 + 2, 64), jnp.float32)

    # ---- conv2: K=576 im2col per output-column parity, built in VMEM -------
    # even output col 2c needs input cols (2c-1, 2c, 2c+1) = (odd[c-1], even[c], odd[c])
    # odd  output col 2c+1 needs cols (2c, 2c+1, 2c+2)     = (even[c], odd[c], even[c+1])
    off_e = (W2 + 1, 0, W2 + 2)   # odd shifted right (zero col), even, odd
    off_o = (0, W2 + 2, 1)        # even, odd, even shifted left (zero col)
    for dy in range(3):
        for dx in range(3):
            k = dy * 3 + dx
            te = a1s_ref[dy:dy + r2, off_e[dx]:off_e[dx] + W2, :]
            to = a1s_ref[dy:dy + r2, off_o[dx]:off_o[dx] + W2, :]
            pat_e_ref[:, k * 64:(k + 1) * 64] = (
                te.reshape(r2 * W2, 64).astype(jnp.bfloat16))
            pat_o_ref[:, k * 64:(k + 1) * 64] = (
                to.reshape(r2 * W2, 64).astype(jnp.bfloat16))

    w2m = w2_ref[...]
    c2e = jnp.maximum(
        jnp.dot(pat_e_ref[...], w2m, preferred_element_type=jnp.float32)
        + b2_ref[...], 0.0)
    c2o = jnp.maximum(
        jnp.dot(pat_o_ref[...], w2m, preferred_element_type=jnp.float32)
        + b2_ref[...], 0.0)

    # ---- fused 2x2 maxpool: columns pool across the two parities, rows pool
    # across adjacent conv2 rows (cheap leading-dim reshape only). ------------
    pooled = jnp.max(jnp.maximum(c2e, c2o).reshape(TP, 2, W2, 64), axis=1)
    out_ref[0] = pooled.astype(out_ref.dtype)


def _block2_kernel(xq_ref, w3_ref, b3_ref, w4_ref, b4_ref, out_ref,
                   pat3_ref, a3s_ref, pat4_ref):
    """conv3(64->128)+ReLU -> conv4(128->128)+ReLU for one row tile.

    xq_ref : (1, H2+4, W2+2, 64) bf16  pooled map, zero-padded rows+-2 / cols+-1.
    out_ref: (1, TR, W2, 128) f32      output rows [t*TR, (t+1)*TR).
    """
    t = pl.program_id(1)
    n_t = pl.num_programs(1)
    TR, W2 = out_ref.shape[1], out_ref.shape[2]
    r3 = TR + 2                           # conv3 rows produced (incl. +-1 halo)

    row0 = pl.multiple_of(t * TR, TR)

    # ---- conv3: K=576 im2col gathered straight from the padded input block --
    for dy in range(3):
        for dx in range(3):
            k = dy * 3 + dx
            tap = xq_ref[0, pl.ds(row0 + dy, r3), dx:dx + W2, :]  # (r3, W2, 64)
            pat3_ref[:, k * 64:(k + 1) * 64] = tap.reshape(r3 * W2, 64)
    a3 = jnp.dot(pat3_ref[...], w3_ref[...], preferred_element_type=jnp.float32)
    a3 = jnp.maximum(a3 + b3_ref[...], 0.0).reshape(r3, W2, 128)

    # stage conv3 output with one zero column of padding on each side
    a3s_ref[:, 0:1, :] = jnp.zeros((r3, 1, 128), jnp.float32)
    a3s_ref[:, 1:W2 + 1, :] = a3
    a3s_ref[:, W2 + 1:W2 + 2, :] = jnp.zeros((r3, 1, 128), jnp.float32)

    # Halo rows outside the pooled map are conv4's zero padding.
    @pl.when(t == 0)
    def _():
        a3s_ref[0:1, :, :] = jnp.zeros((1, W2 + 2, 128), jnp.float32)

    @pl.when(t == n_t - 1)
    def _():
        a3s_ref[r3 - 1:r3, :, :] = jnp.zeros((1, W2 + 2, 128), jnp.float32)

    # ---- conv4: K=1152 im2col from the staged conv3 tile --------------------
    for dy in range(3):
        for dx in range(3):
            k = dy * 3 + dx
            tap = a3s_ref[dy:dy + TR, dx:dx + W2, :]              # (TR, W2, 128)
            pat4_ref[:, k * 128:(k + 1) * 128] = (
                tap.reshape(TR * W2, 128).astype(jnp.bfloat16))
    a4 = jnp.dot(pat4_ref[...], w4_ref[...], preferred_element_type=jnp.float32)
    a4 = jnp.maximum(a4 + b4_ref[...], 0.0)
    out_ref[0] = a4.reshape(TR, W2, 128).astype(out_ref.dtype)


# ----------------------------------------------------------------------------
# Wrapper
# ----------------------------------------------------------------------------
def _row_tile(h2, cap=8):
    for d in range(min(h2, cap), 0, -1):
        if h2 % d == 0:
            return d
    return 1


def truncated_vgg19_forward(x_nchw, params, *, pool_tile_rows=None,
                            out_tile_rows=None):
    """Forward pass of TruncatedVGG19(i=2, j=2). Input/Output are NCHW."""
    x = jnp.transpose(x_nchw, (0, 2, 3, 1)).astype(jnp.bfloat16)  # NCHW -> NHWC
    N, H, W, Cin = x.shape
    assert Cin == 3 and H % 2 == 0 and W % 2 == 0
    H2, W2 = H // 2, W // 2
    TP = pool_tile_rows or _row_tile(H2)
    TR = out_tile_rows or _row_tile(H2)
    assert H2 % TP == 0 and H2 % TR == 0

    w1, b1 = params['conv1']
    w2, b2 = params['conv2']
    w3, b3 = params['conv3']
    w4, b4 = params['conv4']
    w1m = w1.reshape(27, 64).astype(jnp.bfloat16)
    w2m = w2.reshape(576, 64).astype(jnp.bfloat16)
    w3m = w3.reshape(576, 128).astype(jnp.bfloat16)
    w4m = w4.reshape(1152, 128).astype(jnp.bfloat16)
    b1m = b1.reshape(1, 64).astype(jnp.float32)
    b2m = b2.reshape(1, 64).astype(jnp.float32)
    b3m = b3.reshape(1, 128).astype(jnp.float32)
    b4m = b4.reshape(1, 128).astype(jnp.float32)

    # conv1 im2col (K=27) built once in HBM: the network input has only 3
    # channels, so this keeps the first contraction dense on the lane axis.
    # The big 64/128-channel im2col matrices are only ever built per-tile in
    # VMEM inside the kernels.  Columns are reordered [even | odd] so the
    # fused conv2 + maxpool needs only unit-stride windows.
    xp = jnp.pad(x, ((0, 0), (2, 2), (1, 1), (0, 0)))
    pats = jnp.concatenate(
        [xp[:, dy:dy + H + 2, dx:dx + W, :] for dy in range(3) for dx in range(3)],
        axis=-1)                                                  # (N, H+2, W, 27)
    col_order = jnp.concatenate([jnp.arange(0, W, 2), jnp.arange(1, W, 2)])
    p27 = jnp.take(pats, col_order, axis=2)

    cparams = pltpu.CompilerParams(
        dimension_semantics=("parallel", "parallel"),
        vmem_limit_bytes=32 * 1024 * 1024)

    r1, r2 = 2 * TP + 2, 2 * TP
    pooled = pl.pallas_call(
        _block1_kernel,
        out_shape=jax.ShapeDtypeStruct((N, H2, W2, 64), jnp.bfloat16),
        grid=(N, H2 // TP),
        in_specs=[
            pl.BlockSpec((1, H + 2, W, 27), lambda n, t: (n, 0, 0, 0)),
            pl.BlockSpec((27, 64), lambda n, t: (0, 0)),
            pl.BlockSpec((1, 64), lambda n, t: (0, 0)),
            pl.BlockSpec((576, 64), lambda n, t: (0, 0)),
            pl.BlockSpec((1, 64), lambda n, t: (0, 0)),
        ],
        out_specs=pl.BlockSpec((1, TP, W2, 64), lambda n, t: (n, t, 0, 0)),
        scratch_shapes=[
            pltpu.VMEM((r1, 2 * W2 + 2, 64), jnp.float32),   # staged conv1 tile
            pltpu.VMEM((r2 * W2, 576), jnp.bfloat16),        # im2col, even cols
            pltpu.VMEM((r2 * W2, 576), jnp.bfloat16),        # im2col, odd cols
        ],
        compiler_params=cparams,
    )(p27, w1m, b1m, w2m, b2m)

    # Second fused block operates on the quarter-area pooled map.
    xq = jnp.pad(pooled, ((0, 0), (2, 2), (1, 1), (0, 0)))
    r3 = TR + 2
    out = pl.pallas_call(
        _block2_kernel,
        out_shape=jax.ShapeDtypeStruct((N, H2, W2, 128), jnp.float32),
        grid=(N, H2 // TR),
        in_specs=[
            pl.BlockSpec((1, H2 + 4, W2 + 2, 64), lambda n, t: (n, 0, 0, 0)),
            pl.BlockSpec((576, 128), lambda n, t: (0, 0)),
            pl.BlockSpec((1, 128), lambda n, t: (0, 0)),
            pl.BlockSpec((1152, 128), lambda n, t: (0, 0)),
            pl.BlockSpec((1, 128), lambda n, t: (0, 0)),
        ],
        out_specs=pl.BlockSpec((1, TR, W2, 128), lambda n, t: (n, t, 0, 0)),
        scratch_shapes=[
            pltpu.VMEM((r3 * W2, 576), jnp.bfloat16),        # conv3 im2col
            pltpu.VMEM((r3, W2 + 2, 128), jnp.float32),      # staged conv3 tile
            pltpu.VMEM((TR * W2, 1152), jnp.bfloat16),       # conv4 im2col
        ],
        compiler_params=cparams,
    )(xq, w3m, b3m, w4m, b4m)

    return jnp.transpose(out, (0, 3, 1, 2))                  # NHWC -> NCHW


# ----------------------------------------------------------------------------
# Parameters and pure-JAX reference (same bf16 rounding points as the kernels)
# ----------------------------------------------------------------------------
def init_params(layers, key):
    params = {}
    n = 0
    for layer in layers:
        if layer[0] == 'conv':
            n += 1
            _, cin, cout = layer
            key, kw = jax.random.split(key)
            w = 0.05 * jax.random.normal(kw, (3, 3, cin, cout), jnp.float32)
            b = 0.01 * jnp.ones((cout,), jnp.float32)
            params['conv%d' % n] = (w, b)
    assert n == 4
    return params


def reference_forward(x_nchw, params):
    def conv_relu(x, w, b):
        y = lax.conv_general_dilated(
            x.astype(jnp.bfloat16), w.astype(jnp.bfloat16),
            window_strides=(1, 1), padding=((1, 1), (1, 1)),
            dimension_numbers=('NHWC', 'HWIO', 'NHWC'),
            preferred_element_type=jnp.float32)
        return jnp.maximum(y + b[None, None, None, :], 0.0)

    x = jnp.transpose(x_nchw, (0, 2, 3, 1))
    a1 = conv_relu(x, *params['conv1'])
    a2 = conv_relu(a1, *params['conv2'])
    p = lax.reduce_window(a2, -jnp.inf, lax.max,
                          (1, 2, 2, 1), (1, 2, 2, 1), 'VALID')
    a3 = conv_relu(p, *params['conv3'])
    a4 = conv_relu(a3, *params['conv4'])
    return jnp.transpose(a4, (0, 3, 1, 2))


if __name__ == "__main__":
    i, j = 2, 2
    layers = vgg19_truncated_layers(i, j)
    assert tuple(layers) == _EXPECTED_LAYERS, layers

    key = jax.random.PRNGKey(0)
    key, kx = jax.random.split(key)
    x = jax.random.normal(kx, (2, 3, 32, 32), jnp.float32)    # NCHW input
    params = init_params(layers, key)

    fwd = jax.jit(truncated_vgg19_forward)
    out = jax.block_until_ready(fwd(x, params))

    ref = jax.block_until_ready(reference_forward(x, params))
    assert out.shape == ref.shape == (2, 128, 16, 16), out.shape
    max_err = float(jnp.max(jnp.abs(out - ref)))
    assert jnp.allclose(out, ref, rtol=1e-2, atol=1e-2), (
        "mismatch vs reference, max abs err %g" % max_err)

    print("KERNEL_OK")
</pallas_src>

<mosaic_0001>
module attributes {stable_mosaic.version = 11 : i64} {
  func.func @_block1_kernel(%arg0: i32, %arg1: i32, %arg2: memref<1x34x32x27xbf16, #tpu.memory_space<vmem>>, %arg3: memref<27x64xbf16, #tpu.memory_space<vmem>>, %arg4: memref<1x64xf32, #tpu.memory_space<vmem>>, %arg5: memref<576x64xbf16, #tpu.memory_space<vmem>>, %arg6: memref<1x64xf32, #tpu.memory_space<vmem>>, %arg7: memref<1x8x16x64xbf16, #tpu.memory_space<vmem>>, %arg8: memref<18x34x64xf32, #tpu.memory_space<vmem>>, %arg9: memref<256x576xbf16, #tpu.memory_space<vmem>>, %arg10: memref<256x576xbf16, #tpu.memory_space<vmem>>) attributes {dimension_semantics = [#tpu.dimension_semantics<parallel>, #tpu.dimension_semantics<parallel>], iteration_bounds = array<i64: 2, 2>, scalar_prefetch = 0 : i64, scratch_operands = 3 : i64, tpu.core_type = #tpu.core_type<tc>, window_params = [{transform_indices = @transform_0, window_bounds = array<i64: 1, 34, 32, 27>}, {pipeline_mode = #tpu.pipeline_mode<synchronous>, transform_indices = @transform_1, window_bounds = array<i64: 27, 64>}, {pipeline_mode = #tpu.pipeline_mode<synchronous>, transform_indices = @transform_2, window_bounds = array<i64: 1, 64>}, {pipeline_mode = #tpu.pipeline_mode<synchronous>, transform_indices = @transform_3, window_bounds = array<i64: 576, 64>}, {pipeline_mode = #tpu.pipeline_mode<synchronous>, transform_indices = @transform_4, window_bounds = array<i64: 1, 64>}, {transform_indices = @transform_5, window_bounds = array<i64: 1, 8, 16, 64>}]} {
    %c16_i32 = arith.constant 16 : i32
    %0 = arith.muli %arg1, %c16_i32 : i32
    %1 = tpu.assume_multiple %0, 16 : i32
    %c0 = arith.constant 0 : index
    %2 = arith.index_cast %1 : i32 to index
    %c0_0 = arith.constant 0 : index
    %c0_1 = arith.constant 0 : index
    %3 = vector.load %arg2[%c0, %2, %c0_0, %c0_1] : memref<1x34x32x27xbf16, #tpu.memory_space<vmem>>, vector<1x18x32x27xbf16>
    %4 = vector.shape_cast %3 : vector<1x18x32x27xbf16> to vector<18x32x27xbf16>
    %5 = vector.shape_cast %4 : vector<18x32x27xbf16> to vector<576x27xbf16>
    %c0_2 = arith.constant 0 : index
    %c0_3 = arith.constant 0 : index
    %6 = vector.load %arg3[%c0_2, %c0_3] : memref<27x64xbf16, #tpu.memory_space<vmem>>, vector<27x64xbf16>
    %cst = arith.constant dense<0.000000e+00> : vector<576x64xf32>
    %7 = tpu.matmul %5, %6, %cst {dimension_numbers = #tpu.dot_dimension_numbers<[1], [0], [0], [1], [0, 0, 1, 1], [], []>} : vector<576x27xbf16>, vector<27x64xbf16>, vector<576x64xf32> -> vector<576x64xf32>
    %c0_4 = arith.constant 0 : index
    %c0_5 = arith.constant 0 : index
    %8 = vector.load %arg4[%c0_4, %c0_5] : memref<1x64xf32, #tpu.memory_space<vmem>>, vector<1x64xf32>
    %9 = vector.broadcast %8 : vector<1x64xf32> to vector<576x64xf32>
    %10 = arith.addf %7, %9 : vector<576x64xf32>
    %cst_6 = arith.constant 0.000000e+00 : f32
    %11 = vector.broadcast %cst_6 : f32 to vector<576x64xf32>
    %12 = arith.maximumf %10, %11 : vector<576x64xf32>
    %13 = vector.shape_cast %12 : vector<576x64xf32> to vector<18x32x64xf32>
    %14 = vector.extract_strided_slice %13 {offsets = [0, 0, 0], sizes = [18, 16, 64], strides = [1, 1, 1]} : vector<18x32x64xf32> to vector<18x16x64xf32>
    %c0_7 = arith.constant 0 : index
    %c0_8 = arith.constant 0 : index
    %c0_9 = arith.constant 0 : index
    %15 = vector.load %arg8[%c0_7, %c0_8, %c0_9] : memref<18x34x64xf32, #tpu.memory_space<vmem>>, vector<18x16x64xf32>
    tpu.vector_store %arg8[%c0_7, %c0_8, %c0_9], %14 {strides = array<i32>} : memref<18x34x64xf32, #tpu.memory_space<vmem>>, vector<18x16x64xf32>,
    %cst_10 = arith.constant 0.000000e+00 : f32
    %16 = vector.broadcast %cst_10 : f32 to vector<18x2x64xf32>
    %c0_11 = arith.constant 0 : index
    %c16 = arith.constant 16 : index
    %c0_12 = arith.constant 0 : index
    %17 = vector.load %arg8[%c0_11, %c16, %c0_12] : memref<18x34x64xf32, #tpu.memory_space<vmem>>, vector<18x2x64xf32>
    tpu.vector_store %arg8[%c0_11, %c16, %c0_12], %16 {strides = array<i32>} : memref<18x34x64xf32, #tpu.memory_space<vmem>>, vector<18x2x64xf32>,
    %18 = vector.extract_strided_slice %13 {offsets = [0, 16, 0], sizes = [18, 16, 64], strides = [1, 1, 1]} : vector<18x32x64xf32> to vector<18x16x64xf32>
    %c0_13 = arith.constant 0 : index
    %c18 = arith.constant 18 : index
    %c0_14 = arith.constant 0 : index
    %19 = vector.load %arg8[%c0_13, %c18, %c0_14] : memref<18x34x64xf32, #tpu.memory_space<vmem>>, vector<18x16x64xf32>
    tpu.vector_store %arg8[%c0_13, %c18, %c0_14], %18 {strides = array<i32>} : memref<18x34x64xf32, #tpu.memory_space<vmem>>, vector<18x16x64xf32>,
    %c0_i32 = arith.constant 0 : i32
    %20 = arith.cmpi eq, %arg1, %c0_i32 : i32
    %21 = arith.extui %20 : i1 to i32
    %c0_i32_15 = arith.constant 0 : i32
    %22 = arith.cmpi ne, %21, %c0_i32_15 : i32
    scf.if %22 {
      %cst_115 = arith.constant 0.000000e+00 : f32
      %120 = vector.broadcast %cst_115 : f32 to vector<1x34x64xf32>
      %c0_116 = arith.constant 0 : index
      %c0_117 = arith.constant 0 : index
      %c0_118 = arith.constant 0 : index
      %121 = vector.load %arg8[%c0_116, %c0_117, %c0_118] : memref<18x34x64xf32, #tpu.memory_space<vmem>>, vector<1x34x64xf32>
      tpu.vector_store %arg8[%c0_116, %c0_117, %c0_118], %120 {strides = array<i32>} : memref<18x34x64xf32, #tpu.memory_space<vmem>>, vector<1x34x64xf32>,
    } else {
    }
    %c1_i32 = arith.constant 1 : i32
    %23 = arith.cmpi eq, %arg1, %c1_i32 : i32
    %24 = arith.extui %23 : i1 to i32
    %c0_i32_16 = arith.constant 0 : i32
    %25 = arith.cmpi ne, %24, %c0_i32_16 : i32
    scf.if %25 {
      %cst_115 = arith.constant 0.000000e+00 : f32
      %120 = vector.broadcast %cst_115 : f32 to vector<1x34x64xf32>
      %c17_116 = arith.constant 17 : index
      %c0_117 = arith.constant 0 : index
      %c0_118 = arith.constant 0 : index
      %121 = vector.load %arg8[%c17_116, %c0_117, %c0_118] : memref<18x34x64xf32, #tpu.memory_space<vmem>>, vector<1x34x64xf32>
      tpu.vector_store %arg8[%c17_116, %c0_117, %c0_118], %120 {strides = array<i32>} : memref<18x34x64xf32, #tpu.memory_space<vmem>>, vector<1x34x64xf32>,
    } else {
    }
    %c0_17 = arith.constant 0 : index
    %c17 = arith.constant 17 : index
    %c0_18 = arith.constant 0 : index
    %26 = vector.load %arg8[%c0_17, %c17, %c0_18] : memref<18x34x64xf32, #tpu.memory_space<vmem>>, vector<16x16x64xf32>
    %c0_19 = arith.constant 0 : index
    %c0_20 = arith.constant 0 : index
    %c0_21 = arith.constant 0 : index
    %27 = vector.load %arg8[%c0_19, %c0_20, %c0_21] : memref<18x34x64xf32, #tpu.memory_space<vmem>>, vector<16x16x64xf32>
    %28 = vector.shape_cast %26 : vector<16x16x64xf32> to vector<256x64xf32>
    %29 = arith.truncf %28 : vector<256x64xf32> to vector<256x64xbf16>
    %c0_22 = arith.constant 0 : index
    %c0_23 = arith.constant 0 : index
    %30 = vector.load %arg9[%c0_22, %c0_23] : memref<256x576xbf16, #tpu.memory_space<vmem>>, vector<256x64xbf16>
    tpu.vector_store %arg9[%c0_22, %c0_23], %29 {strides = array<i32>} : memref<256x576xbf16, #tpu.memory_space<vmem>>, vector<256x64xbf16>,
    %31 = vector.shape_cast %27 : vector<16x16x64xf32> to vector<256x64xf32>
    %32 = arith.truncf %31 : vector<256x64xf32> to vector<256x64xbf16>
    %c0_24 = arith.constant 0 : index
    %c0_25 = arith.constant 0 : index
    %33 = vector.load %arg10[%c0_24, %c0_25] : memref<256x576xbf16, #tpu.memory_space<vmem>>, vector<256x64xbf16>
    tpu.vector_store %arg10[%c0_24, %c0_25], %32 {strides = array<i32>} : memref<256x576xbf16, #tpu.memory_space<vmem>>, vector<256x64xbf16>,
    %c0_26 = arith.constant 0 : index
    %c0_27 = arith.constant 0 : index
    %c0_28 = arith.constant 0 : index
    %34 = vector.load %arg8[%c0_26, %c0_27, %c0_28] : memref<18x34x64xf32, #tpu.memory_space<vmem>>, vector<16x16x64xf32>
    %c0_29 = arith.constant 0 : index
    %c18_30 = arith.constant 18 : index
    %c0_31 = arith.constant 0 : index
    %35 = vector.load %arg8[%c0_29, %c18_30, %c0_31] : memref<18x34x64xf32, #tpu.memory_space<vmem>>, vector<16x16x64xf32>
    %36 = vector.shape_cast %34 : vector<16x16x64xf32> to vector<256x64xf32>
    %37 = arith.truncf %36 : vector<256x64xf32> to vector<256x64xbf16>
    %c0_32 = arith.constant 0 : index
    %c64 = arith.constant 64 : index
    %38 = vector.load %arg9[%c0_32, %c64] : memref<256x576xbf16, #tpu.memory_space<vmem>>, vector<256x64xbf16>
    tpu.vector_store %arg9[%c0_32, %c64], %37 {strides = array<i32>} : memref<256x576xbf16, #tpu.memory_space<vmem>>, vector<256x64xbf16>,
    %39 = vector.shape_cast %35 : vector<16x16x64xf32> to vector<256x64xf32>
    %40 = arith.truncf %39 : vector<256x64xf32> to vector<256x64xbf16>
    %c0_33 = arith.constant 0 : index
    %c64_34 = arith.constant 64 : index
    %41 = vector.load %arg10[%c0_33, %c64_34] : memref<256x576xbf16, #tpu.memory_space<vmem>>, vector<256x64xbf16>
    tpu.vector_store %arg10[%c0_33, %c64_34], %40 {strides = array<i32>} : memref<256x576xbf16, #tpu.memory_space<vmem>>, vector<256x64xbf16>,
    %c0_35 = arith.constant 0 : index
    %c18_36 = arith.constant 18 : index
    %c0_37 = arith.constant 0 : index
    %42 = vector.load %arg8[%c0_35, %c18_36, %c0_37] : memref<18x34x64xf32, #tpu.memory_space<vmem>>, vector<16x16x64xf32>
    %c0_38 = arith.constant 0 : index
    %c1 = arith.constant 1 : index
    %c0_39 = arith.constant 0 : index
    %43 = vector.load %arg8[%c0_38, %c1, %c0_39] : memref<18x34x64xf32, #tpu.memory_space<vmem>>, vector<16x16x64xf32>
    %44 = vector.shape_cast %42 : vector<16x16x64xf32> to vector<256x64xf32>
    %45 = arith.truncf %44 : vector<256x64xf32> to vector<256x64xbf16>
    %c0_40 = arith.constant 0 : index
    %c128 = arith.constant 128 : index
    %46 = vector.load %arg9[%c0_40, %c128] : memref<256x576xbf16, #tpu.memory_space<vmem>>, vector<256x64xbf16>
    tpu.vector_store %arg9[%c0_40, %c128], %45 {strides = array<i32>} : memref<256x576xbf16, #tpu.memory_space<vmem>>, vector<256x64xbf16>,
    %47 = vector.shape_cast %43 : vector<16x16x64xf32> to vector<256x64xf32>
    %48 = arith.truncf %47 : vector<256x64xf32> to vector<256x64xbf16>
    %c0_41 = arith.constant 0 : index
    %c128_42 = arith.constant 128 : index
    %49 = vector.load %arg10[%c0_41, %c128_42] : memref<256x576xbf16, #tpu.memory_space<vmem>>, vector<256x64xbf16>
    tpu.vector_store %arg10[%c0_41, %c128_42], %48 {strides = array<i32>} : memref<256x576xbf16, #tpu.memory_space<vmem>>, vector<256x64xbf16>,
    %c1_43 = arith.constant 1 : index
    %c17_44 = arith.constant 17 : index
    %c0_45 = arith.constant 0 : index
    %50 = vector.load %arg8[%c1_43, %c17_44, %c0_45] : memref<18x34x64xf32, #tpu.memory_space<vmem>>, vector<16x16x64xf32>
    %c1_46 = arith.constant 1 : index
    %c0_47 = arith.constant 0 : index
    %c0_48 = arith.constant 0 : index
    %51 = vector.load %arg8[%c1_46, %c0_47, %c0_48] : memref<18x34x64xf32, #tpu.memory_space<vmem>>, vector<16x16x64xf32>
    %52 = vector.shape_cast %50 : vector<16x16x64xf32> to vector<256x64xf32>
    %53 = arith.truncf %52 : vector<256x64xf32> to vector<256x64xbf16>
    %c0_49 = arith.constant 0 : index
    %c192 = arith.constant 192 : index
    %54 = vector.load %arg9[%c0_49, %c192] : memref<256x576xbf16, #tpu.memory_space<vmem>>, vector<256x64xbf16>
    tpu.vector_store %arg9[%c0_49, %c192], %53 {strides = array<i32>} : memref<256x576xbf16, #tpu.memory_space<vmem>>, vector<256x64xbf16>,
    %55 = vector.shape_cast %51 : vector<16x16x64xf32> to vector<256x64xf32>
    %56 = arith.truncf %55 : vector<256x64xf32> to vector<256x64xbf16>
    %c0_50 = arith.constant 0 : index
    %c192_51 = arith.constant 192 : index
    %57 = vector.load %arg10[%c0_50, %c192_51] : memref<256x576xbf16, #tpu.memory_space<vmem>>, vector<256x64xbf16>
    tpu.vector_store %arg10[%c0_50, %c192_51], %56 {strides = array<i32>} : memref<256x576xbf16, #tpu.memory_space<vmem>>, vector<256x64xbf16>,
    %c1_52 = arith.constant 1 : index
    %c0_53 = arith.constant 0 : index
    %c0_54 = arith.constant 0 : index
    %58 = vector.load %arg8[%c1_52, %c0_53, %c0_54] : memref<18x34x64xf32, #tpu.memory_space<vmem>>, vector<16x16x64xf32>
    %c1_55 = arith.constant 1 : index
    %c18_56 = arith.constant 18 : index
    %c0_57 = arith.constant 0 : index
    %59 = vector.load %arg8[%c1_55, %c18_56, %c0_57] : memref<18x34x64xf32, #tpu.memory_space<vmem>>, vector<16x16x64xf32>
    %60 = vector.shape_cast %58 : vector<16x16x64xf32> to vector<256x64xf32>
    %61 = arith.truncf %60 : vector<256x64xf32> to vector<256x64xbf16>
    %c0_58 = arith.constant 0 : index
    %c256 = arith.constant 256 : index
    %62 = vector.load %arg9[%c0_58, %c256] : memref<256x576xbf16, #tpu.memory_space<vmem>>, vector<256x64xbf16>
    tpu.vector_store %arg9[%c0_58, %c256], %61 {strides = array<i32>} : memref<256x576xbf16, #tpu.memory_space<vmem>>, vector<256x64xbf16>,
    %63 = vector.shape_cast %59 : vector<16x16x64xf32> to vector<256x64xf32>
    %64 = arith.truncf %63 : vector<256x64xf32> to vector<256x64xbf16>
    %c0_59 = arith.constant 0 : index
    %c256_60 = arith.constant 256 : index
    %65 = vector.load %arg10[%c0_59, %c256_60] : memref<256x576xbf16, #tpu.memory_space<vmem>>, vector<256x64xbf16>
    tpu.vector_store %arg10[%c0_59, %c256_60], %64 {strides = array<i32>} : memref<256x576xbf16, #tpu.memory_space<vmem>>, vector<256x64xbf16>,
    %c1_61 = arith.constant 1 : index
    %c18_62 = arith.constant 18 : index
    %c0_63 = arith.constant 0 : index
    %66 = vector.load %arg8[%c1_61, %c18_62, %c0_63] : memref<18x34x64xf32, #tpu.memory_space<vmem>>, vector<16x16x64xf32>
    %c1_64 = arith.constant 1 : index
    %c1_65 = arith.constant 1 : index
    %c0_66 = arith.constant 0 : index
    %67 = vector.load %arg8[%c1_64, %c1_65, %c0_66] : memref<18x34x64xf32, #tpu.memory_space<vmem>>, vector<16x16x64xf32>
    %68 = vector.shape_cast %66 : vector<16x16x64xf32> to vector<256x64xf32>
    %69 = arith.truncf %68 : vector<256x64xf32> to vector<256x64xbf16>
    %c0_67 = arith.constant 0 : index
    %c320 = arith.constant 320 : index
    %70 = vector.load %arg9[%c0_67, %c320] : memref<256x576xbf16, #tpu.memory_space<vmem>>, vector<256x64xbf16>
    tpu.vector_store %arg9[%c0_67, %c320], %69 {strides = array<i32>} : memref<256x576xbf16, #tpu.memory_space<vmem>>, vector<256x64xbf16>,
    %71 = vector.shape_cast %67 : vector<16x16x64xf32> to vector<256x64xf32>
    %72 = arith.truncf %71 : vector<256x64xf32> to vector<256x64xbf16>
    %c0_68 = arith.constant 0 : index
    %c320_69 = arith.constant 320 : index
    %73 = vector.load %arg10[%c0_68, %c320_69] : memref<256x576xbf16, #tpu.memory_space<vmem>>, vector<256x64xbf16>
    tpu.vector_store %arg10[%c0_68, %c320_69], %72 {strides = array<i32>} : memref<256x576xbf16, #tpu.memory_space<vmem>>, vector<256x64xbf16>,
    %c2 = arith.constant 2 : index
    %c17_70 = arith.constant 17 : index
    %c0_71 = arith.constant 0 : index
    %74 = vector.load %arg8[%c2, %c17_70, %c0_71] : memref<18x34x64xf32, #tpu.memory_space<vmem>>, vector<16x16x64xf32>
    %c2_72 = arith.constant 2 : index
    %c0_73 = arith.constant 0 : index
    %c0_74 = arith.constant 0 : index
    %75 = vector.load %arg8[%c2_72, %c0_73, %c0_74] : memref<18x34x64xf32, #tpu.memory_space<vmem>>, vector<16x16x64xf32>
    %76 = vector.shape_cast %74 : vector<16x16x64xf32> to vector<256x64xf32>
    %77 = arith.truncf %76 : vector<256x64xf32> to vector<256x64xbf16>
    %c0_75 = arith.constant 0 : index
    %c384 = arith.constant 384 : index
    %78 = vector.load %arg9[%c0_75, %c384] : memref<256x576xbf16, #tpu.memory_space<vmem>>, vector<256x64xbf16>
    tpu.vector_store %arg9[%c0_75, %c384], %77 {strides = array<i32>} : memref<256x576xbf16, #tpu.memory_space<vmem>>, vector<256x64xbf16>,
    %79 = vector.shape_cast %75 : vector<16x16x64xf32> to vector<256x64xf32>
    %80 = arith.truncf %79 : vector<256x64xf32> to vector<256x64xbf16>
    %c0_76 = arith.constant 0 : index
    %c384_77 = arith.constant 384 : index
    %81 = vector.load %arg10[%c0_76, %c384_77] : memref<256x576xbf16, #tpu.memory_space<vmem>>, vector<256x64xbf16>
    tpu.vector_store %arg10[%c0_76, %c384_77], %80 {strides = array<i32>} : memref<256x576xbf16, #tpu.memory_space<vmem>>, vector<256x64xbf16>,
    %c2_78 = arith.constant 2 : index
    %c0_79 = arith.constant 0 : index
    %c0_80 = arith.constant 0 : index
    %82 = vector.load %arg8[%c2_78, %c0_79, %c0_80] : memref<18x34x64xf32, #tpu.memory_space<vmem>>, vector<16x16x64xf32>
    %c2_81 = arith.constant 2 : index
    %c18_82 = arith.constant 18 : index
    %c0_83 = arith.constant 0 : index
    %83 = vector.load %arg8[%c2_81, %c18_82, %c0_83] : memref<18x34x64xf32, #tpu.memory_space<vmem>>, vector<16x16x64xf32>
    %84 = vector.shape_cast %82 : vector<16x16x64xf32> to vector<256x64xf32>
    %85 = arith.truncf %84 : vector<256x64xf32> to vector<256x64xbf16>
    %c0_84 = arith.constant 0 : index
    %c448 = arith.constant 448 : index
    %86 = vector.load %arg9[%c0_84, %c448] : memref<256x576xbf16, #tpu.memory_space<vmem>>, vector<256x64xbf16>
    tpu.vector_store %arg9[%c0_84, %c448], %85 {strides = array<i32>} : memref<256x576xbf16, #tpu.memory_space<vmem>>, vector<256x64xbf16>,
    %87 = vector.shape_cast %83 : vector<16x16x64xf32> to vector<256x64xf32>
    %88 = arith.truncf %87 : vector<256x64xf32> to vector<256x64xbf16>
    %c0_85 = arith.constant 0 : index
    %c448_86 = arith.constant 448 : index
    %89 = vector.load %arg10[%c0_85, %c448_86] : memref<256x576xbf16, #tpu.memory_space<vmem>>, vector<256x64xbf16>
    tpu.vector_store %arg10[%c0_85, %c448_86], %88 {strides = array<i32>} : memref<256x576xbf16, #tpu.memory_space<vmem>>, vector<256x64xbf16>,
    %c2_87 = arith.constant 2 : index
    %c18_88 = arith.constant 18 : index
    %c0_89 = arith.constant 0 : index
    %90 = vector.load %arg8[%c2_87, %c18_88, %c0_89] : memref<18x34x64xf32, #tpu.memory_space<vmem>>, vector<16x16x64xf32>
    %c2_90 = arith.constant 2 : index
    %c1_91 = arith.constant 1 : index
    %c0_92 = arith.constant 0 : index
    %91 = vector.load %arg8[%c2_90, %c1_91, %c0_92] : memref<18x34x64xf32, #tpu.memory_space<vmem>>, vector<16x16x64xf32>
    %92 = vector.shape_cast %90 : vector<16x16x64xf32> to vector<256x64xf32>
    %93 = arith.truncf %92 : vector<256x64xf32> to vector<256x64xbf16>
    %c0_93 = arith.constant 0 : index
    %c512 = arith.constant 512 : index
    %94 = vector.load %arg9[%c0_93, %c512] : memref<256x576xbf16, #tpu.memory_space<vmem>>, vector<256x64xbf16>
    tpu.vector_store %arg9[%c0_93, %c512], %93 {strides = array<i32>} : memref<256x576xbf16, #tpu.memory_space<vmem>>, vector<256x64xbf16>,
    %95 = vector.shape_cast %91 : vector<16x16x64xf32> to vector<256x64xf32>
    %96 = arith.truncf %95 : vector<256x64xf32> to vector<256x64xbf16>
    %c0_94 = arith.constant 0 : index
    %c512_95 = arith.constant 512 : index
    %97 = vector.load %arg10[%c0_94, %c512_95] : memref<256x576xbf16, #tpu.memory_space<vmem>>, vector<256x64xbf16>
    tpu.vector_store %arg10[%c0_94, %c512_95], %96 {strides = array<i32>} : memref<256x576xbf16, #tpu.memory_space<vmem>>, vector<256x64xbf16>,
    %c0_96 = arith.constant 0 : index
    %c0_97 = arith.constant 0 : index
    %98 = vector.load %arg5[%c0_96, %c0_97] : memref<576x64xbf16, #tpu.memory_space<vmem>>, vector<576x64xbf16>
    %c0_98 = arith.constant 0 : index
    %c0_99 = arith.constant 0 : index
    %99 = vector.load %arg9[%c0_98, %c0_99] : memref<256x576xbf16, #tpu.memory_space<vmem>>, vector<256x576xbf16>
    %cst_100 = arith.constant dense<0.000000e+00> : vector<256x64xf32>
    %100 = tpu.matmul %99, %98, %cst_100 {dimension_numbers = #tpu.dot_dimension_numbers<[1], [0], [0], [1], [0, 0, 1, 1], [], []>} : vector<256x576xbf16>, vector<576x64xbf16>, vector<256x64xf32> -> vector<256x64xf32>
    %c0_101 = arith.constant 0 : index
    %c0_102 = arith.constant 0 : index
    %101 = vector.load %arg6[%c0_101, %c0_102] : memref<1x64xf32, #tpu.memory_space<vmem>>, vector<1x64xf32>
    %102 = vector.broadcast %101 : vector<1x64xf32> to vector<256x64xf32>
    %103 = arith.addf %100, %102 : vector<256x64xf32>
    %cst_103 = arith.constant 0.000000e+00 : f32
    %104 = vector.broadcast %cst_103 : f32 to vector<256x64xf32>
    %105 = arith.maximumf %103, %104 : vector<256x64xf32>
    %c0_104 = arith.constant 0 : index
    %c0_105 = arith.constant 0 : index
    %106 = vector.load %arg10[%c0_104, %c0_105] : memref<256x576xbf16, #tpu.memory_space<vmem>>, vector<256x576xbf16>
    %cst_106 = arith.constant dense<0.000000e+00> : vector<256x64xf32>
    %107 = tpu.matmul %106, %98, %cst_106 {dimension_numbers = #tpu.dot_dimension_numbers<[1], [0], [0], [1], [0, 0, 1, 1], [], []>} : vector<256x576xbf16>, vector<576x64xbf16>, vector<256x64xf32> -> vector<256x64xf32>
    %c0_107 = arith.constant 0 : index
    %c0_108 = arith.constant 0 : index
    %108 = vector.load %arg6[%c0_107, %c0_108] : memref<1x64xf32, #tpu.memory_space<vmem>>, vector<1x64xf32>
    %109 = vector.broadcast %108 : vector<1x64xf32> to vector<256x64xf32>
    %110 = arith.addf %107, %109 : vector<256x64xf32>
    %cst_109 = arith.constant 0.000000e+00 : f32
    %111 = vector.broadcast %cst_109 : f32 to vector<256x64xf32>
    %112 = arith.maximumf %110, %111 : vector<256x64xf32>
    %113 = arith.maximumf %105, %112 : vector<256x64xf32>
    %114 = vector.shape_cast %113 : vector<256x64xf32> to vector<8x2x16x64xf32>
    %cst_110 = arith.constant dense<0xFF800000> : vector<8x16x64xf32>
    %115 = vector.multi_reduction <maximumf>, %114, %cst_110 [1] : vector<8x2x16x64xf32> to vector<8x16x64xf32>
    %116 = arith.truncf %115 : vector<8x16x64xf32> to vector<8x16x64xbf16>
    %c0_111 = arith.constant 0 : index
    %c0_112 = arith.constant 0 : index
    %c0_113 = arith.constant 0 : index
    %c0_114 = arith.constant 0 : index
    %117 = vector.load %arg7[%c0_111, %c0_112, %c0_113, %c0_114] : memref<1x8x16x64xbf16, #tpu.memory_space<vmem>>, vector<1x8x16x64xbf16>
    %118 = vector.shape_cast %117 : vector<1x8x16x64xbf16> to vector<8x16x64xbf16>
    %119 = vector.shape_cast %116 : vector<8x16x64xbf16> to vector<1x8x16x64xbf16>
    tpu.vector_store %arg7[%c0_111, %c0_112, %c0_113, %c0_114], %119 {strides = array<i32>} : memref<1x8x16x64xbf16, #tpu.memory_space<vmem>>, vector<1x8x16x64xbf16>,
    return
  }
  func.func @transform_0(%arg0: i32, %arg1: i32) -> (i32, i32, i32, i32) {
    %c0_i32 = arith.constant 0 : i32
    %c0_i32_0 = arith.constant 0 : i32
    %c0_i32_1 = arith.constant 0 : i32
    %c0_i32_2 = arith.constant 0 : i32
    return %arg0, %c0_i32, %c0_i32_0, %c0_i32_1 : i32, i32, i32, i32
  }
  func.func @transform_1(%arg0: i32, %arg1: i32) -> (i32, i32) {
    %c0_i32 = arith.constant 0 : i32
    %c0_i32_0 = arith.constant 0 : i32
    %c0_i32_1 = arith.constant 0 : i32
    return %c0_i32, %c0_i32_0 : i32, i32
  }
  func.func @transform_2(%arg0: i32, %arg1: i32) -> (i32, i32) {
    %c0_i32 = arith.constant 0 : i32
    %c0_i32_0 = arith.constant 0 : i32
    %c0_i32_1 = arith.constant 0 : i32
    return %c0_i32, %c0_i32_0 : i32, i32
  }
  func.func @transform_3(%arg0: i32, %arg1: i32) -> (i32, i32) {
    %c0_i32 = arith.constant 0 : i32
    %c0_i32_0 = arith.constant 0 : i32
    %c0_i32_1 = arith.constant 0 : i32
    return %c0_i32, %c0_i32_0 : i32, i32
  }
  func.func @transform_4(%arg0: i32, %arg1: i32) -> (i32, i32) {
    %c0_i32 = arith.constant 0 : i32
    %c0_i32_0 = arith.constant 0 : i32
    %c0_i32_1 = arith.constant 0 : i32
    return %c0_i32, %c0_i32_0 : i32, i32
  }
  func.func @transform_5(%arg0: i32, %arg1: i32) -> (i32, i32, i32, i32) {
    %c0_i32 = arith.constant 0 : i32
    %c0_i32_0 = arith.constant 0 : i32
    %c0_i32_1 = arith.constant 0 : i32
    return %arg0, %arg1, %c0_i32, %c0_i32_0 : i32, i32, i32, i32
  }
}

module attributes {stable_mosaic.version = 11 : i64} {
  func.func @_block2_kernel(%arg0: i32, %arg1: i32, %arg2: memref<1x20x18x64xbf16, #tpu.memory_space<vmem>>, %arg3: memref<576x128xbf16, #tpu.memory_space<vmem>>, %arg4: memref<1x128xf32, #tpu.memory_space<vmem>>, %arg5: memref<1152x128xbf16, #tpu.memory_space<vmem>>, %arg6: memref<1x128xf32, #tpu.memory_space<vmem>>, %arg7: memref<1x8x16x128xf32, #tpu.memory_space<vmem>>, %arg8: memref<160x576xbf16, #tpu.memory_space<vmem>>, %arg9: memref<10x18x128xf32, #tpu.memory_space<vmem>>, %arg10: memref<128x1152xbf16, #tpu.memory_space<vmem>>) attributes {dimension_semantics = [#tpu.dimension_semantics<parallel>, #tpu.dimension_semantics<parallel>], iteration_bounds = array<i64: 2, 2>, scalar_prefetch = 0 : i64, scratch_operands = 3 : i64, tpu.core_type = #tpu.core_type<tc>, window_params = [{transform_indices = @transform_0, window_bounds = array<i64: 1, 20, 18, 64>}, {pipeline_mode = #tpu.pipeline_mode<synchronous>, transform_indices = @transform_1, window_bounds = array<i64: 576, 128>}, {pipeline_mode = #tpu.pipeline_mode<synchronous>, transform_indices = @transform_2, window_bounds = array<i64: 1, 128>}, {pipeline_mode = #tpu.pipeline_mode<synchronous>, transform_indices = @transform_3, window_bounds = array<i64: 1152, 128>}, {pipeline_mode = #tpu.pipeline_mode<synchronous>, transform_indices = @transform_4, window_bounds = array<i64: 1, 128>}, {transform_indices = @transform_5, window_bounds = array<i64: 1, 8, 16, 128>}]} {
    %c8_i32 = arith.constant 8 : i32
    %0 = arith.muli %arg1, %c8_i32 : i32
    %1 = tpu.assume_multiple %0, 8 : i32
    %c0_i32 = arith.constant 0 : i32
    %2 = arith.addi %1, %c0_i32 : i32
    %c0 = arith.constant 0 : index
    %3 = arith.index_cast %2 : i32 to index
    %c0_0 = arith.constant 0 : index
    %c0_1 = arith.constant 0 : index
    %4 = vector.load %arg2[%c0, %3, %c0_0, %c0_1] : memref<1x20x18x64xbf16, #tpu.memory_space<vmem>>, vector<1x10x16x64xbf16>
    %5 = vector.shape_cast %4 : vector<1x10x16x64xbf16> to vector<10x16x64xbf16>
    %6 = vector.shape_cast %5 : vector<10x16x64xbf16> to vector<160x64xbf16>
    %c0_2 = arith.constant 0 : index
    %c0_3 = arith.constant 0 : index
    %7 = vector.load %arg8[%c0_2, %c0_3] : memref<160x576xbf16, #tpu.memory_space<vmem>>, vector<160x64xbf16>
    tpu.vector_store %arg8[%c0_2, %c0_3], %6 {strides = array<i32>} : memref<160x576xbf16, #tpu.memory_space<vmem>>, vector<160x64xbf16>,
    %c0_i32_4 = arith.constant 0 : i32
    %8 = arith.addi %1, %c0_i32_4 : i32
    %c0_5 = arith.constant 0 : index
    %9 = arith.index_cast %8 : i32 to index
    %c1 = arith.constant 1 : index
    %c0_6 = arith.constant 0 : index
    %10 = vector.load %arg2[%c0_5, %9, %c1, %c0_6] : memref<1x20x18x64xbf16, #tpu.memory_space<vmem>>, vector<1x10x16x64xbf16>
    %11 = vector.shape_cast %10 : vector<1x10x16x64xbf16> to vector<10x16x64xbf16>
    %12 = vector.shape_cast %11 : vector<10x16x64xbf16> to vector<160x64xbf16>
    %c0_7 = arith.constant 0 : index
    %c64 = arith.constant 64 : index
    %13 = vector.load %arg8[%c0_7, %c64] : memref<160x576xbf16, #tpu.memory_space<vmem>>, vector<160x64xbf16>
    tpu.vector_store %arg8[%c0_7, %c64], %12 {strides = array<i32>} : memref<160x576xbf16, #tpu.memory_space<vmem>>, vector<160x64xbf16>,
    %c0_i32_8 = arith.constant 0 : i32
    %14 = arith.addi %1, %c0_i32_8 : i32
    %c0_9 = arith.constant 0 : index
    %15 = arith.index_cast %14 : i32 to index
    %c2 = arith.constant 2 : index
    %c0_10 = arith.constant 0 : index
    %16 = vector.load %arg2[%c0_9, %15, %c2, %c0_10] : memref<1x20x18x64xbf16, #tpu.memory_space<vmem>>, vector<1x10x16x64xbf16>
    %17 = vector.shape_cast %16 : vector<1x10x16x64xbf16> to vector<10x16x64xbf16>
    %18 = vector.shape_cast %17 : vector<10x16x64xbf16> to vector<160x64xbf16>
    %c0_11 = arith.constant 0 : index
    %c128 = arith.constant 128 : index
    %19 = vector.load %arg8[%c0_11, %c128] : memref<160x576xbf16, #tpu.memory_space<vmem>>, vector<160x64xbf16>
    tpu.vector_store %arg8[%c0_11, %c128], %18 {strides = array<i32>} : memref<160x576xbf16, #tpu.memory_space<vmem>>, vector<160x64xbf16>,
    %c1_i32 = arith.constant 1 : i32
    %20 = arith.addi %1, %c1_i32 : i32
    %c0_12 = arith.constant 0 : index
    %21 = arith.index_cast %20 : i32 to index
    %c0_13 = arith.constant 0 : index
    %c0_14 = arith.constant 0 : index
    %22 = vector.load %arg2[%c0_12, %21, %c0_13, %c0_14] : memref<1x20x18x64xbf16, #tpu.memory_space<vmem>>, vector<1x10x16x64xbf16>
    %23 = vector.shape_cast %22 : vector<1x10x16x64xbf16> to vector<10x16x64xbf16>
    %24 = vector.shape_cast %23 : vector<10x16x64xbf16> to vector<160x64xbf16>
    %c0_15 = arith.constant 0 : index
    %c192 = arith.constant 192 : index
    %25 = vector.load %arg8[%c0_15, %c192] : memref<160x576xbf16, #tpu.memory_space<vmem>>, vector<160x64xbf16>
    tpu.vector_store %arg8[%c0_15, %c192], %24 {strides = array<i32>} : memref<160x576xbf16, #tpu.memory_space<vmem>>, vector<160x64xbf16>,
    %c1_i32_16 = arith.constant 1 : i32
    %26 = arith.addi %1, %c1_i32_16 : i32
    %c0_17 = arith.constant 0 : index
    %27 = arith.index_cast %26 : i32 to index
    %c1_18 = arith.constant 1 : index
    %c0_19 = arith.constant 0 : index
    %28 = vector.load %arg2[%c0_17, %27, %c1_18, %c0_19] : memref<1x20x18x64xbf16, #tpu.memory_space<vmem>>, vector<1x10x16x64xbf16>
    %29 = vector.shape_cast %28 : vector<1x10x16x64xbf16> to vector<10x16x64xbf16>
    %30 = vector.shape_cast %29 : vector<10x16x64xbf16> to vector<160x64xbf16>
    %c0_20 = arith.constant 0 : index
    %c256 = arith.constant 256 : index
    %31 = vector.load %arg8[%c0_20, %c256] : memref<160x576xbf16, #tpu.memory_space<vmem>>, vector<160x64xbf16>
    tpu.vector_store %arg8[%c0_20, %c256], %30 {strides = array<i32>} : memref<160x576xbf16, #tpu.memory_space<vmem>>, vector<160x64xbf16>,
    %c1_i32_21 = arith.constant 1 : i32
    %32 = arith.addi %1, %c1_i32_21 : i32
    %c0_22 = arith.constant 0 : index
    %33 = arith.index_cast %32 : i32 to index
    %c2_23 = arith.constant 2 : index
    %c0_24 = arith.constant 0 : index
    %34 = vector.load %arg2[%c0_22, %33, %c2_23, %c0_24] : memref<1x20x18x64xbf16, #tpu.memory_space<vmem>>, vector<1x10x16x64xbf16>
    %35 = vector.shape_cast %34 : vector<1x10x16x64xbf16> to vector<10x16x64xbf16>
    %36 = vector.shape_cast %35 : vector<10x16x64xbf16> to vector<160x64xbf16>
    %c0_25 = arith.constant 0 : index
    %c320 = arith.constant 320 : index
    %37 = vector.load %arg8[%c0_25, %c320] : memref<160x576xbf16, #tpu.memory_space<vmem>>, vector<160x64xbf16>
    tpu.vector_store %arg8[%c0_25, %c320], %36 {strides = array<i32>} : memref<160x576xbf16, #tpu.memory_space<vmem>>, vector<160x64xbf16>,
    %c2_i32 = arith.constant 2 : i32
    %38 = arith.addi %1, %c2_i32 : i32
    %c0_26 = arith.constant 0 : index
    %39 = arith.index_cast %38 : i32 to index
    %c0_27 = arith.constant 0 : index
    %c0_28 = arith.constant 0 : index
    %40 = vector.load %arg2[%c0_26, %39, %c0_27, %c0_28] : memref<1x20x18x64xbf16, #tpu.memory_space<vmem>>, vector<1x10x16x64xbf16>
    %41 = vector.shape_cast %40 : vector<1x10x16x64xbf16> to vector<10x16x64xbf16>
    %42 = vector.shape_cast %41 : vector<10x16x64xbf16> to vector<160x64xbf16>
    %c0_29 = arith.constant 0 : index
    %c384 = arith.constant 384 : index
    %43 = vector.load %arg8[%c0_29, %c384] : memref<160x576xbf16, #tpu.memory_space<vmem>>, vector<160x64xbf16>
    tpu.vector_store %arg8[%c0_29, %c384], %42 {strides = array<i32>} : memref<160x576xbf16, #tpu.memory_space<vmem>>, vector<160x64xbf16>,
    %c2_i32_30 = arith.constant 2 : i32
    %44 = arith.addi %1, %c2_i32_30 : i32
    %c0_31 = arith.constant 0 : index
    %45 = arith.index_cast %44 : i32 to index
    %c1_32 = arith.constant 1 : index
    %c0_33 = arith.constant 0 : index
    %46 = vector.load %arg2[%c0_31, %45, %c1_32, %c0_33] : memref<1x20x18x64xbf16, #tpu.memory_space<vmem>>, vector<1x10x16x64xbf16>
    %47 = vector.shape_cast %46 : vector<1x10x16x64xbf16> to vector<10x16x64xbf16>
    %48 = vector.shape_cast %47 : vector<10x16x64xbf16> to vector<160x64xbf16>
    %c0_34 = arith.constant 0 : index
    %c448 = arith.constant 448 : index
    %49 = vector.load %arg8[%c0_34, %c448] : memref<160x576xbf16, #tpu.memory_space<vmem>>, vector<160x64xbf16>
    tpu.vector_store %arg8[%c0_34, %c448], %48 {strides = array<i32>} : memref<160x576xbf16, #tpu.memory_space<vmem>>, vector<160x64xbf16>,
    %c2_i32_35 = arith.constant 2 : i32
    %50 = arith.addi %1, %c2_i32_35 : i32
    %c0_36 = arith.constant 0 : index
    %51 = arith.index_cast %50 : i32 to index
    %c2_37 = arith.constant 2 : index
    %c0_38 = arith.constant 0 : index
    %52 = vector.load %arg2[%c0_36, %51, %c2_37, %c0_38] : memref<1x20x18x64xbf16, #tpu.memory_space<vmem>>, vector<1x10x16x64xbf16>
    %53 = vector.shape_cast %52 : vector<1x10x16x64xbf16> to vector<10x16x64xbf16>
    %54 = vector.shape_cast %53 : vector<10x16x64xbf16> to vector<160x64xbf16>
    %c0_39 = arith.constant 0 : index
    %c512 = arith.constant 512 : index
    %55 = vector.load %arg8[%c0_39, %c512] : memref<160x576xbf16, #tpu.memory_space<vmem>>, vector<160x64xbf16>
    tpu.vector_store %arg8[%c0_39, %c512], %54 {strides = array<i32>} : memref<160x576xbf16, #tpu.memory_space<vmem>>, vector<160x64xbf16>,
    %c0_40 = arith.constant 0 : index
    %c0_41 = arith.constant 0 : index
    %56 = vector.load %arg8[%c0_40, %c0_41] : memref<160x576xbf16, #tpu.memory_space<vmem>>, vector<160x576xbf16>
    %c0_42 = arith.constant 0 : index
    %c0_43 = arith.constant 0 : index
    %57 = vector.load %arg3[%c0_42, %c0_43] : memref<576x128xbf16, #tpu.memory_space<vmem>>, vector<576x128xbf16>
    %cst = arith.constant dense<0.000000e+00> : vector<160x128xf32>
    %58 = tpu.matmul %56, %57, %cst {dimension_numbers = #tpu.dot_dimension_numbers<[1], [0], [0], [1], [0, 0, 1, 1], [], []>} : vector<160x576xbf16>, vector<576x128xbf16>, vector<160x128xf32> -> vector<160x128xf32>
    %c0_44 = arith.constant 0 : index
    %c0_45 = arith.constant 0 : index
    %59 = vector.load %arg4[%c0_44, %c0_45] : memref<1x128xf32, #tpu.memory_space<vmem>>, vector<1x128xf32>
    %60 = vector.broadcast %59 : vector<1x128xf32> to vector<160x128xf32>
    %61 = arith.addf %58, %60 : vector<160x128xf32>
    %cst_46 = arith.constant 0.000000e+00 : f32
    %62 = vector.broadcast %cst_46 : f32 to vector<160x128xf32>
    %63 = arith.maximumf %61, %62 : vector<160x128xf32>
    %64 = vector.shape_cast %63 : vector<160x128xf32> to vector<10x16x128xf32>
    %cst_47 = arith.constant 0.000000e+00 : f32
    %65 = vector.broadcast %cst_47 : f32 to vector<10x1x128xf32>
    %c0_48 = arith.constant 0 : index
    %c0_49 = arith.constant 0 : index
    %c0_50 = arith.constant 0 : index
    %66 = vector.load %arg9[%c0_48, %c0_49, %c0_50] : memref<10x18x128xf32, #tpu.memory_space<vmem>>, vector<10x1x128xf32>
    tpu.vector_store %arg9[%c0_48, %c0_49, %c0_50], %65 {strides = array<i32>} : memref<10x18x128xf32, #tpu.memory_space<vmem>>, vector<10x1x128xf32>,
    %c0_51 = arith.constant 0 : index
    %c1_52 = arith.constant 1 : index
    %c0_53 = arith.constant 0 : index
    %67 = vector.load %arg9[%c0_51, %c1_52, %c0_53] : memref<10x18x128xf32, #tpu.memory_space<vmem>>, vector<10x16x128xf32>
    tpu.vector_store %arg9[%c0_51, %c1_52, %c0_53], %64 {strides = array<i32>} : memref<10x18x128xf32, #tpu.memory_space<vmem>>, vector<10x16x128xf32>,
    %cst_54 = arith.constant 0.000000e+00 : f32
    %68 = vector.broadcast %cst_54 : f32 to vector<10x1x128xf32>
    %c0_55 = arith.constant 0 : index
    %c17 = arith.constant 17 : index
    %c0_56 = arith.constant 0 : index
    %69 = vector.load %arg9[%c0_55, %c17, %c0_56] : memref<10x18x128xf32, #tpu.memory_space<vmem>>, vector<10x1x128xf32>
    tpu.vector_store %arg9[%c0_55, %c17, %c0_56], %68 {strides = array<i32>} : memref<10x18x128xf32, #tpu.memory_space<vmem>>, vector<10x1x128xf32>,
    %c0_i32_57 = arith.constant 0 : i32
    %70 = arith.cmpi eq, %arg1, %c0_i32_57 : i32
    %71 = arith.extui %70 : i1 to i32
    %c0_i32_58 = arith.constant 0 : i32
    %72 = arith.cmpi ne, %71, %c0_i32_58 : i32
    scf.if %72 {
      %cst_114 = arith.constant 0.000000e+00 : f32
      %124 = vector.broadcast %cst_114 : f32 to vector<1x18x128xf32>
      %c0_115 = arith.constant 0 : index
      %c0_116 = arith.constant 0 : index
      %c0_117 = arith.constant 0 : index
      %125 = vector.load %arg9[%c0_115, %c0_116, %c0_117] : memref<10x18x128xf32, #tpu.memory_space<vmem>>, vector<1x18x128xf32>
      tpu.vector_store %arg9[%c0_115, %c0_116, %c0_117], %124 {strides = array<i32>} : memref<10x18x128xf32, #tpu.memory_space<vmem>>, vector<1x18x128xf32>,
    } else {
    }
    %c1_i32_59 = arith.constant 1 : i32
    %73 = arith.cmpi eq, %arg1, %c1_i32_59 : i32
    %74 = arith.extui %73 : i1 to i32
    %c0_i32_60 = arith.constant 0 : i32
    %75 = arith.cmpi ne, %74, %c0_i32_60 : i32
    scf.if %75 {
      %cst_114 = arith.constant 0.000000e+00 : f32
      %124 = vector.broadcast %cst_114 : f32 to vector<1x18x128xf32>
      %c9 = arith.constant 9 : index
      %c0_115 = arith.constant 0 : index
      %c0_116 = arith.constant 0 : index
      %125 = vector.load %arg9[%c9, %c0_115, %c0_116] : memref<10x18x128xf32, #tpu.memory_space<vmem>>, vector<1x18x128xf32>
      tpu.vector_store %arg9[%c9, %c0_115, %c0_116], %124 {strides = array<i32>} : memref<10x18x128xf32, #tpu.memory_space<vmem>>, vector<1x18x128xf32>,
    } else {
    }
    %c0_61 = arith.constant 0 : index
    %c0_62 = arith.constant 0 : index
    %c0_63 = arith.constant 0 : index
    %76 = vector.load %arg9[%c0_61, %c0_62, %c0_63] : memref<10x18x128xf32, #tpu.memory_space<vmem>>, vector<8x16x128xf32>
    %77 = vector.shape_cast %76 : vector<8x16x128xf32> to vector<128x128xf32>
    %78 = arith.truncf %77 : vector<128x128xf32> to vector<128x128xbf16>
    %c0_64 = arith.constant 0 : index
    %c0_65 = arith.constant 0 : index
    %79 = vector.load %arg10[%c0_64, %c0_65] : memref<128x1152xbf16, #tpu.memory_space<vmem>>, vector<128x128xbf16>
    tpu.vector_store %arg10[%c0_64, %c0_65], %78 {strides = array<i32>} : memref<128x1152xbf16, #tpu.memory_space<vmem>>, vector<128x128xbf16>,
    %c0_66 = arith.constant 0 : index
    %c1_67 = arith.constant 1 : index
    %c0_68 = arith.constant 0 : index
    %80 = vector.load %arg9[%c0_66, %c1_67, %c0_68] : memref<10x18x128xf32, #tpu.memory_space<vmem>>, vector<8x16x128xf32>
    %81 = vector.shape_cast %80 : vector<8x16x128xf32> to vector<128x128xf32>
    %82 = arith.truncf %81 : vector<128x128xf32> to vector<128x128xbf16>
    %c0_69 = arith.constant 0 : index
    %c128_70 = arith.constant 128 : index
    %83 = vector.load %arg10[%c0_69, %c128_70] : memref<128x1152xbf16, #tpu.memory_space<vmem>>, vector<128x128xbf16>
    tpu.vector_store %arg10[%c0_69, %c128_70], %82 {strides = array<i32>} : memref<128x1152xbf16, #tpu.memory_space<vmem>>, vector<128x128xbf16>,
    %c0_71 = arith.constant 0 : index
    %c2_72 = arith.constant 2 : index
    %c0_73 = arith.constant 0 : index
    %84 = vector.load %arg9[%c0_71, %c2_72, %c0_73] : memref<10x18x128xf32, #tpu.memory_space<vmem>>, vector<8x16x128xf32>
    %85 = vector.shape_cast %84 : vector<8x16x128xf32> to vector<128x128xf32>
    %86 = arith.truncf %85 : vector<128x128xf32> to vector<128x128xbf16>
    %c0_74 = arith.constant 0 : index
    %c256_75 = arith.constant 256 : index
    %87 = vector.load %arg10[%c0_74, %c256_75] : memref<128x1152xbf16, #tpu.memory_space<vmem>>, vector<128x128xbf16>
    tpu.vector_store %arg10[%c0_74, %c256_75], %86 {strides = array<i32>} : memref<128x1152xbf16, #tpu.memory_space<vmem>>, vector<128x128xbf16>,
    %c1_76 = arith.constant 1 : index
    %c0_77 = arith.constant 0 : index
    %c0_78 = arith.constant 0 : index
    %88 = vector.load %arg9[%c1_76, %c0_77, %c0_78] : memref<10x18x128xf32, #tpu.memory_space<vmem>>, vector<8x16x128xf32>
    %89 = vector.shape_cast %88 : vector<8x16x128xf32> to vector<128x128xf32>
    %90 = arith.truncf %89 : vector<128x128xf32> to vector<128x128xbf16>
    %c0_79 = arith.constant 0 : index
    %c384_80 = arith.constant 384 : index
    %91 = vector.load %arg10[%c0_79, %c384_80] : memref<128x1152xbf16, #tpu.memory_space<vmem>>, vector<128x128xbf16>
    tpu.vector_store %arg10[%c0_79, %c384_80], %90 {strides = array<i32>} : memref<128x1152xbf16, #tpu.memory_space<vmem>>, vector<128x128xbf16>,
    %c1_81 = arith.constant 1 : index
    %c1_82 = arith.constant 1 : index
    %c0_83 = arith.constant 0 : index
    %92 = vector.load %arg9[%c1_81, %c1_82, %c0_83] : memref<10x18x128xf32, #tpu.memory_space<vmem>>, vector<8x16x128xf32>
    %93 = vector.shape_cast %92 : vector<8x16x128xf32> to vector<128x128xf32>
    %94 = arith.truncf %93 : vector<128x128xf32> to vector<128x128xbf16>
    %c0_84 = arith.constant 0 : index
    %c512_85 = arith.constant 512 : index
    %95 = vector.load %arg10[%c0_84, %c512_85] : memref<128x1152xbf16, #tpu.memory_space<vmem>>, vector<128x128xbf16>
    tpu.vector_store %arg10[%c0_84, %c512_85], %94 {strides = array<i32>} : memref<128x1152xbf16, #tpu.memory_space<vmem>>, vector<128x128xbf16>,
    %c1_86 = arith.constant 1 : index
    %c2_87 = arith.constant 2 : index
    %c0_88 = arith.constant 0 : index
    %96 = vector.load %arg9[%c1_86, %c2_87, %c0_88] : memref<10x18x128xf32, #tpu.memory_space<vmem>>, vector<8x16x128xf32>
    %97 = vector.shape_cast %96 : vector<8x16x128xf32> to vector<128x128xf32>
    %98 = arith.truncf %97 : vector<128x128xf32> to vector<128x128xbf16>
    %c0_89 = arith.constant 0 : index
    %c640 = arith.constant 640 : index
    %99 = vector.load %arg10[%c0_89, %c640] : memref<128x1152xbf16, #tpu.memory_space<vmem>>, vector<128x128xbf16>
    tpu.vector_store %arg10[%c0_89, %c640], %98 {strides = array<i32>} : memref<128x1152xbf16, #tpu.memory_space<vmem>>, vector<128x128xbf16>,
    %c2_90 = arith.constant 2 : index
    %c0_91 = arith.constant 0 : index
    %c0_92 = arith.constant 0 : index
    %100 = vector.load %arg9[%c2_90, %c0_91, %c0_92] : memref<10x18x128xf32, #tpu.memory_space<vmem>>, vector<8x16x128xf32>
    %101 = vector.shape_cast %100 : vector<8x16x128xf32> to vector<128x128xf32>
    %102 = arith.truncf %101 : vector<128x128xf32> to vector<128x128xbf16>
    %c0_93 = arith.constant 0 : index
    %c768 = arith.constant 768 : index
    %103 = vector.load %arg10[%c0_93, %c768] : memref<128x1152xbf16, #tpu.memory_space<vmem>>, vector<128x128xbf16>
    tpu.vector_store %arg10[%c0_93, %c768], %102 {strides = array<i32>} : memref<128x1152xbf16, #tpu.memory_space<vmem>>, vector<128x128xbf16>,
    %c2_94 = arith.constant 2 : index
    %c1_95 = arith.constant 1 : index
    %c0_96 = arith.constant 0 : index
    %104 = vector.load %arg9[%c2_94, %c1_95, %c0_96] : memref<10x18x128xf32, #tpu.memory_space<vmem>>, vector<8x16x128xf32>
    %105 = vector.shape_cast %104 : vector<8x16x128xf32> to vector<128x128xf32>
    %106 = arith.truncf %105 : vector<128x128xf32> to vector<128x128xbf16>
    %c0_97 = arith.constant 0 : index
    %c896 = arith.constant 896 : index
    %107 = vector.load %arg10[%c0_97, %c896] : memref<128x1152xbf16, #tpu.memory_space<vmem>>, vector<128x128xbf16>
    tpu.vector_store %arg10[%c0_97, %c896], %106 {strides = array<i32>} : memref<128x1152xbf16, #tpu.memory_space<vmem>>, vector<128x128xbf16>,
    %c2_98 = arith.constant 2 : index
    %c2_99 = arith.constant 2 : index
    %c0_100 = arith.constant 0 : index
    %108 = vector.load %arg9[%c2_98, %c2_99, %c0_100] : memref<10x18x128xf32, #tpu.memory_space<vmem>>, vector<8x16x128xf32>
    %109 = vector.shape_cast %108 : vector<8x16x128xf32> to vector<128x128xf32>
    %110 = arith.truncf %109 : vector<128x128xf32> to vector<128x128xbf16>
    %c0_101 = arith.constant 0 : index
    %c1024 = arith.constant 1024 : index
    %111 = vector.load %arg10[%c0_101, %c1024] : memref<128x1152xbf16, #tpu.memory_space<vmem>>, vector<128x128xbf16>
    tpu.vector_store %arg10[%c0_101, %c1024], %110 {strides = array<i32>} : memref<128x1152xbf16, #tpu.memory_space<vmem>>, vector<128x128xbf16>,
    %c0_102 = arith.constant 0 : index
    %c0_103 = arith.constant 0 : index
    %112 = vector.load %arg10[%c0_102, %c0_103] : memref<128x1152xbf16, #tpu.memory_space<vmem>>, vector<128x1152xbf16>
    %c0_104 = arith.constant 0 : index
    %c0_105 = arith.constant 0 : index
    %113 = vector.load %arg5[%c0_104, %c0_105] : memref<1152x128xbf16, #tpu.memory_space<vmem>>, vector<1152x128xbf16>
    %cst_106 = arith.constant dense<0.000000e+00> : vector<128x128xf32>
    %114 = tpu.matmul %112, %113, %cst_106 {dimension_numbers = #tpu.dot_dimension_numbers<[1], [0], [0], [1], [0, 0, 1, 1], [], []>} : vector<128x1152xbf16>, vector<1152x128xbf16>, vector<128x128xf32> -> vector<128x128xf32>
    %c0_107 = arith.constant 0 : index
    %c0_108 = arith.constant 0 : index
    %115 = vector.load %arg6[%c0_107, %c0_108] : memref<1x128xf32, #tpu.memory_space<vmem>>, vector<1x128xf32>
    %116 = vector.broadcast %115 : vector<1x128xf32> to vector<128x128xf32>
    %117 = arith.addf %114, %116 : vector<128x128xf32>
    %cst_109 = arith.constant 0.000000e+00 : f32
    %118 = vector.broadcast %cst_109 : f32 to vector<128x128xf32>
    %119 = arith.maximumf %117, %118 : vector<128x128xf32>
    %120 = vector.shape_cast %119 : vector<128x128xf32> to vector<8x16x128xf32>
    %c0_110 = arith.constant 0 : index
    %c0_111 = arith.constant 0 : index
    %c0_112 = arith.constant 0 : index
    %c0_113 = arith.constant 0 : index
    %121 = vector.load %arg7[%c0_110, %c0_111, %c0_112, %c0_113] : memref<1x8x16x128xf32, #tpu.memory_space<vmem>>, vector<1x8x16x128xf32>
    %122 = vector.shape_cast %121 : vector<1x8x16x128xf32> to vector<8x16x128xf32>
    %123 = vector.shape_cast %120 : vector<8x16x128xf32> to vector<1x8x16x128xf32>
    tpu.vector_store %arg7[%c0_110, %c0_111, %c0_112, %c0_113], %123 {strides = array<i32>} : memref<1x8x16x128xf32, #tpu.memory_space<vmem>>, vector<1x8x16x128xf32>,
    return
  }
  func.func @transform_0(%arg0: i32, %arg1: i32) -> (i32, i32, i32, i32) {
    %c0_i32 = arith.constant 0 : i32
    %c0_i32_0 = arith.constant 0 : i32
    %c0_i32_1 = arith.constant 0 : i32
    %c0_i32_2 = arith.constant 0 : i32
    return %arg0, %c0_i32, %c0_i32_0, %c0_i32_1 : i32, i32, i32, i32
  }
  func.func @transform_1(%arg0: i32, %arg1: i32) -> (i32, i32) {
    %c0_i32 = arith.constant 0 : i32
    %c0_i32_0 = arith.constant 0 : i32
    %c0_i32_1 = arith.constant 0 : i32
    return %c0_i32, %c0_i32_0 : i32, i32
  }
  func.func @transform_2(%arg0: i32, %arg1: i32) -> (i32, i32) {
    %c0_i32 = arith.constant 0 : i32
    %c0_i32_0 = arith.constant 0 : i32
    %c0_i32_1 = arith.constant 0 : i32
    return %c0_i32, %c0_i32_0 : i32, i32
  }
  func.func @transform_3(%arg0: i32, %arg1: i32) -> (i32, i32) {
    %c0_i32 = arith.constant 0 : i32
    %c0_i32_0 = arith.constant 0 : i32
    %c0_i32_1 = arith.constant 0 : i32
    return %c0_i32, %c0_i32_0 : i32, i32
  }
  func.func @transform_4(%arg0: i32, %arg1: i32) -> (i32, i32) {
    %c0_i32 = arith.constant 0 : i32
    %c0_i32_0 = arith.constant 0 : i32
    %c0_i32_1 = arith.constant 0 : i32
    return %c0_i32, %c0_i32_0 : i32, i32
  }
  func.func @transform_5(%arg0: i32, %arg1: i32) -> (i32, i32, i32, i32) {
    %c0_i32 = arith.constant 0 : i32
    %c0_i32_0 = arith.constant 0 : i32
    %c0_i32_1 = arith.constant 0 : i32
    return %arg0, %arg1, %c0_i32, %c0_i32_0 : i32, i32, i32, i32
  }
}

</mosaic_0001>

<llo_original>
// kernel: truncated_vgg19_forward.3
$region0: #{truncated_vgg19_forward.3}
  #allocation0 [shape = 'u32[]', space=smem, size = 0x4, offset = 0x4, fixed_abs, tag = 'smem constant byte address 0x4 - core index']
  #allocation1 [shape = 'u32[72,128]{1,0:T(1,128)}', space=vmem, size = 0x9000, scoped, tag = 'internal scratch']
  #allocation2 [shape = 'bf16[160,576]{1,0:T(8,128)(2,1)}', space=vmem, size = 0x32000, scoped, tag = 'scratch operand']
  #allocation3 [shape = 'f32[10,18,128]{2,1,0:T(8,128)}', space=vmem, size = 0x1e000, scoped, tag = 'scratch operand']
  #allocation4 [shape = 'bf16[128,1152]{1,0:T(8,128)(2,1)}', space=vmem, size = 0x48000, scoped, tag = 'scratch operand']
  %s0 = inlined_call_operand.vmem [shape: bf16[2,20,18,64], index: 0, kind: input, shape index: {}]
  %s1 = inlined_call_operand.vmem [shape: bf16[576,128], index: 1, kind: input, shape index: {}]
  %s2 = inlined_call_operand.vmem [shape: f32[1,128], index: 2, kind: input, shape index: {}]
  %s3 = inlined_call_operand.vmem [shape: bf16[1152,128], index: 3, kind: input, shape index: {}]
  %s4 = inlined_call_operand.vmem [shape: f32[1,128], index: 4, kind: input, shape index: {}]
  %s5 = inlined_call_operand.hbm [shape: f32[2,16,16,128], index: 5, kind: output, shape index: {}]
  %s6 = sld [smem:[#allocation0]]
  $region61: #{truncated_vgg19_forward.3} parent=0
    _
  %s8 = ssub.s32 1, %s6
  %s9 = scalar_select 0, %s8, %s6
  $region1: #{truncated_vgg19_forward.3} parent=0
    #allocation5 [shape = 'u8[131072]{0}', space=vmem, size = 0x20000, scoped, tag = 'output window, operand 0']
    #allocation6 [shape = 's32[2]{0}', space=sflag, size = 0x8, scoped, tag = 'scoped memory for truncated_vgg19_forward.3']
    %10 = vsyncpa [#allocation6], 0
    %s11 = scalar_lea.sflag [#allocation6], 1
    %12 = vsyncpa %s11, 0
    loop: start=0, step=1, limit=6
    $region2: #{truncated_vgg19_forward.3} parent=1 // loop_pre_header
      _
    $region3: #{truncated_vgg19_forward.3} parent=1 // loop_header
      %s14 = sphi 0, %s18
      %p15 = scmp.ge.s32.totalorder %s14, 6
      %s21 = sphi 0, %s33
      %s22 = sphi 0, %s29
      %s23 = sphi 0, %s21
      %s24 = sphi 0, %s22
      %s25 = sphi 0, %s23
      %s26 = sphi 0, %s24
      %s36 = sphi 0, %s38
      %s39 = sphi 0, %s36
      %s40 = sphi 0, %s39
      %s56 = sphi 0, %s40
      %s60 = sphi 0, %s60
      %s62 = sphi 0, %s60
      %s63 = sphi 0, %s62
      %s77 = sphi 0, %s63
      %s81 = sphi 0, %s81
      %s83 = sphi 0, %s81
      %s84 = sphi 0, %s83
      %s98 = sphi 0, %s84
      %s102 = sphi 0, %s102
      %s104 = sphi 0, %s102
      %s105 = sphi 0, %s104
      %s119 = sphi 0, %s105
      %s123 = sphi 0, %s123
      %s125 = sphi 0, %s123
      %s126 = sphi 0, %s125
      %s140 = sphi 0, %s126
      %s148 = sphi 0, %s150
      %s151 = sphi 0, %s148
      %s152 = sphi 0, %s151
      %s168 = sphi 0, %s152
    $region4: #{truncated_vgg19_forward.3} parent=1 // loop_header_branch
      %17 = sbr.rel (%p15) target = $region8
    $region5: #{truncated_vgg19_forward.3} parent=1 // loop_body
      %s19 = ssub.s32 %s14, 1
      %s20 = ssub.s32 %s14, 2
      %s27 = sadd.s32 1, %s22
      %p28 = scmp.ge.s32.totalorder %s27, 2
      %s29 = scalar_select %p28, 0, %s27
      %s30 = sadd.s32 1, %s21
      %s31 = scalar_select %p28, %s30, %s21
      %p32 = scmp.ge.s32.totalorder %s31, 2
      %s33 = scalar_select %p32, 0, %s31
      %s34 = ssub.s32 %s21, %s33
      %p35 = scmp.eq.s32.totalorder %s34, 0
      %s37 = sadd.s32 %s36, 1
      %s38 = scalar_select %p35, %s36, %s37
      %p41 = pneg %p35
      %p42 = scmp.eq.s32.totalorder %s14, 3
      %p43 = por %p41, %p42
      %p44 = scmp.ne.s32.totalorder %s36, %s39
      %p45 = scmp.eq.s32.totalorder %s14, 0
      %p46 = por %p44, %p45
      %p47 = scmp.ne.s32.totalorder %s36, %s39
      %p48 = scmp.eq.s32.totalorder %s19, 3
      %p49 = por %p47, %p48
      %p50 = scmp.ne.s32.totalorder %s39, %s40
      %p51 = scmp.eq.s32.totalorder %s19, 0
      %p52 = por %p50, %p51
      %p53 = scmp.ne.s32.totalorder %s39, %s40
      %p54 = scmp.eq.s32.totalorder %s20, 3
      %p55 = por %p53, %p54
      %p57 = scmp.ne.s32.totalorder %s40, %s56
      %p58 = scmp.eq.s32.totalorder %s20, 0
      %p59 = por %p57, %p58
      %s61 = sadd.s32 %s60, 1
      %p64 = scmp.eq.s32.totalorder %s14, 3
      %p65 = scmp.ne.s32.totalorder %s60, %s62
      %p66 = scmp.eq.s32.totalorder %s14, 0
      %p67 = por %p65, %p66
      %p68 = scmp.ne.s32.totalorder %s60, %s62
      %p69 = scmp.eq.s32.totalorder %s19, 3
      %p70 = por %p68, %p69
      %p71 = scmp.ne.s32.totalorder %s62, %s63
      %p72 = scmp.eq.s32.totalorder %s19, 0
      %p73 = por %p71, %p72
      %p74 = scmp.ne.s32.totalorder %s62, %s63
      %p75 = scmp.eq.s32.totalorder %s20, 3
      %p76 = por %p74, %p75
      %p78 = scmp.ne.s32.totalorder %s63, %s77
      %p79 = scmp.eq.s32.totalorder %s20, 0
      %p80 = por %p78, %p79
      %s82 = sadd.s32 %s81, 1
      %p85 = scmp.eq.s32.totalorder %s14, 3
      %p86 = scmp.ne.s32.totalorder %s81, %s83
      %p87 = scmp.eq.s32.totalorder %s14, 0
      %p88 = por %p86, %p87
      %p89 = scmp.ne.s32.totalorder %s81, %s83
      %p90 = scmp.eq.s32.totalorder %s19, 3
      %p91 = por %p89, %p90
      %p92 = scmp.ne.s32.totalorder %s83, %s84
      %p93 = scmp.eq.s32.totalorder %s19, 0
      %p94 = por %p92, %p93
      %p95 = scmp.ne.s32.totalorder %s83, %s84
      %p96 = scmp.eq.s32.totalorder %s20, 3
      %p97 = por %p95, %p96
      %p99 = scmp.ne.s32.totalorder %s84, %s98
      %p100 = scmp.eq.s32.totalorder %s20, 0
      %p101 = por %p99, %p100
      %s103 = sadd.s32 %s102, 1
      %p106 = scmp.eq.s32.totalorder %s14, 3
      %p107 = scmp.ne.s32.totalorder %s102, %s104
      %p108 = scmp.eq.s32.totalorder %s14, 0
      %p109 = por %p107, %p108
      %p110 = scmp.ne.s32.totalorder %s102, %s104
      %p111 = scmp.eq.s32.totalorder %s19, 3
      %p112 = por %p110, %p111
      %p113 = scmp.ne.s32.totalorder %s104, %s105
      %p114 = scmp.eq.s32.totalorder %s19, 0
      %p115 = por %p113, %p114
      %p116 = scmp.ne.s32.totalorder %s104, %s105
      %p117 = scmp.eq.s32.totalorder %s20, 3
      %p118 = por %p116, %p117
      %p120 = scmp.ne.s32.totalorder %s105, %s119
      %p121 = scmp.eq.s32.totalorder %s20, 0
      %p122 = por %p120, %p121
      %s124 = sadd.s32 %s123, 1
      %p127 = scmp.eq.s32.totalorder %s14, 3
      %p128 = scmp.ne.s32.totalorder %s123, %s125
      %p129 = scmp.eq.s32.totalorder %s14, 0
      %p130 = por %p128, %p129
      %p131 = scmp.ne.s32.totalorder %s123, %s125
      %p132 = scmp.eq.s32.totalorder %s19, 3
      %p133 = por %p131, %p132
      %p134 = scmp.ne.s32.totalorder %s125, %s126
      %p135 = scmp.eq.s32.totalorder %s19, 0
      %p136 = por %p134, %p135
      %p137 = scmp.ne.s32.totalorder %s125, %s126
      %p138 = scmp.eq.s32.totalorder %s20, 3
      %p139 = por %p137, %p138
      %p141 = scmp.ne.s32.totalorder %s126, %s140
      %p142 = scmp.eq.s32.totalorder %s20, 0
      %p143 = por %p141, %p142
      %s144 = ssub.s32 %s21, %s33
      %s145 = ssub.s32 %s22, %s29
      %s146 = sor.u32 %s144, %s145
      %p147 = scmp.eq.s32.totalorder %s146, 0
      %s149 = sadd.s32 %s148, 1
      %s150 = scalar_select %p147, %s148, %s149
      %p153 = pneg %p147
      %p154 = scmp.eq.s32.totalorder %s14, 3
      %p155 = por %p153, %p154
      %p156 = scmp.ne.s32.totalorder %s148, %s151
      %p157 = scmp.eq.s32.totalorder %s14, 0
      %p158 = por %p156, %p157
      %p159 = scmp.ne.s32.totalorder %s148, %s151
      %p160 = scmp.eq.s32.totalorder %s19, 3
      %p161 = por %p159, %p160
      %p162 = scmp.ne.s32.totalorder %s151, %s152
      %p163 = scmp.eq.s32.totalorder %s19, 0
      %p164 = por %p162, %p163
      %p165 = scmp.ne.s32.totalorder %s151, %s152
      %p166 = scmp.eq.s32.totalorder %s20, 3
      %p167 = por %p165, %p166
      %p169 = scmp.ne.s32.totalorder %s152, %s168
      %p170 = scmp.eq.s32.totalorder %s20, 0
      %p171 = por %p169, %p170
      %p172 = scmp.le.s32.totalorder 1, %s14
      %p173 = scmp.lt.s32.totalorder %s14, 5
      %p174 = pnand %p172, %p173
      %p175 = pneg %p174
      // Predicated region
      $region9: #{truncated_vgg19_forward.3} parent=5 // pred_check
        _
      $region10: #{truncated_vgg19_forward.3} parent=5 // pred_check_branch
        %177 = sbr.rel (%p174) target = $region12
      $region11: #{truncated_vgg19_forward.3} parent=5 // pred_region
        %s178 = ssub.s32 %s14, 1
        // Predicated region
        $region13: #{truncated_vgg19_forward.3} parent=11 // pred_check
          %p179 = pneg %p73
        $region14: #{truncated_vgg19_forward.3} parent=11 // pred_check_branch
          %181 = sbr.rel (%p179) target = $region16
        $region15: #{truncated_vgg19_forward.3} parent=11 // pred_region
          _
        $region16: #{truncated_vgg19_forward.3} parent=11 // pred_fallthru
          _
        // Predicated region
        $region17: #{truncated_vgg19_forward.3} parent=11 // pred_check
          %p182 = pneg %p94
        $region18: #{truncated_vgg19_forward.3} parent=11 // pred_check_branch
          %184 = sbr.rel (%p182) target = $region20
        $region19: #{truncated_vgg19_forward.3} parent=11 // pred_region
          _
        $region20: #{truncated_vgg19_forward.3} parent=11 // pred_fallthru
          _
        // Predicated region
        $region21: #{truncated_vgg19_forward.3} parent=11 // pred_check
          %p185 = pneg %p115
        $region22: #{truncated_vgg19_forward.3} parent=11 // pred_check_branch
          %187 = sbr.rel (%p185) target = $region24
        $region23: #{truncated_vgg19_forward.3} parent=11 // pred_region
          _
        $region24: #{truncated_vgg19_forward.3} parent=11 // pred_fallthru
          _
        // Predicated region
        $region25: #{truncated_vgg19_forward.3} parent=11 // pred_check
          %p188 = pneg %p136
        $region26: #{truncated_vgg19_forward.3} parent=11 // pred_check_branch
          %190 = sbr.rel (%p188) target = $region28
        $region27: #{truncated_vgg19_forward.3} parent=11 // pred_region
          _
        $region28: #{truncated_vgg19_forward.3} parent=11 // pred_fallthru
          _
      $region12: #{truncated_vgg19_forward.3} parent=5 // pred_fallthru
        _
      %p191 = scmp.lt.s32.totalorder %s14, 4
      // Predicated region
      $region29: #{truncated_vgg19_forward.3} parent=5 // pred_check
        %p192 = pneg %p191
      $region30: #{truncated_vgg19_forward.3} parent=5 // pred_check_branch
        %194 = sbr.rel (%p192) target = $region32
      $region31: #{truncated_vgg19_forward.3} parent=5 // pred_region
        // Predicated region
        $region33: #{truncated_vgg19_forward.3} parent=31 // pred_check
          %p195 = pneg %p46
        $region34: #{truncated_vgg19_forward.3} parent=31 // pred_check_branch
          %197 = sbr.rel (%p195) target = $region36
        $region35: #{truncated_vgg19_forward.3} parent=31 // pred_region
          %p198 = scmp.lt.s32.totalorder %s21, 1
          %s199 = scalar_select %p198, %s21, 1
          %s200 = smul.addr %s199, 60
          %s201 = smul.addr %s200, 4
          %s202 = scalar_lea.vmem %s0, %s201
        $region36: #{truncated_vgg19_forward.3} parent=31 // pred_fallthru
          _
      $region32: #{truncated_vgg19_forward.3} parent=5 // pred_fallthru
        _
      %p203 = scmp.le.s32.totalorder 1, %s14
      %p204 = scmp.lt.s32.totalorder %s14, 5
      %p205 = pnand %p203, %p204
      %p206 = pneg %p205
      // Predicated region
      $region37: #{truncated_vgg19_forward.3} parent=5 // pred_check
        _
      $region38: #{truncated_vgg19_forward.3} parent=5 // pred_check_branch
        %208 = sbr.rel (%p205) target = $region40
      $region39: #{truncated_vgg19_forward.3} parent=5 // pred_region
        %s209 = ssub.s32 %s14, 1
        %p210 = scmp.lt.s32.totalorder %s23, 1
        %s211 = scalar_select %p210, %s23, 1
        %s212 = smul.addr %s211, 60
        %s213 = smul.addr %s212, 4
        %s214 = scalar_lea.vmem %s0, %s213
        %p215 = pneg %p52
        %p216 = pneg %p49
        %p217 = pneg %p73
        %p218 = pneg %p70
        %p219 = pneg %p94
        %p220 = pneg %p91
        %p221 = pneg %p115
        %p222 = pneg %p112
        %p223 = pneg %p136
        %p224 = pneg %p133
        %p225 = pneg %p164
        %p226 = pneg %p161
        %s227 = sand.u32 %s151, 1
        %s228 = scalar_lea.sflag [#allocation6], %s227
        %s229 = sand.u32 %s151, 1
        %s230 = smul.addr %s229, 128
        %s231 = scalar_lea.vmem [#allocation5], %s230
        %p232 = scmp.lt.s32.totalorder %s23, 1
        %s233 = scalar_select %p232, %s23, 1
        %s234 = smul.addr %s233, 60
        %s235 = smul.addr %s234, 4
        %s236 = scalar_lea.vmem %s0, %s235
        %s237 = smul.u32 8, %s24
        %s239 = smul.u32 %s24, 8
        %s240 = smul.u32 %s239, 3
        %s241 = smul.addr %s240, 4
        %s242 = scalar_lea.vmem %s236, %s241
        %v243 = vld [vmem:[%s242] sm:$0xf]
        %v244 = vld [vmem:[%s242 + $0x4] sm:$0xf]
        %v245 = vld [vmem:[%s242 + $0xc] sm:$0xf]
        %v246 = vld [vmem:[%s242 + $0x10] sm:$0xf]
        %v247 = vld [vmem:[%s242 + $0x18] sm:$0xf]
        %v248 = vld [vmem:[%s242 + $0x1c] sm:$0xf]
        %v249 = vld [vmem:[%s242 + $0x24] sm:$0xf]
        %v250 = vld [vmem:[%s242 + $0x28] sm:$0xf]
        %v251 = vld [vmem:[%s242 + $0x30] sm:$0xf]
        %v252 = vld [vmem:[%s242 + $0x34] sm:$0xf]
        %v253 = vld [vmem:[%s242 + $0x3c] sm:$0xf]
        %v254 = vld [vmem:[%s242 + $0x40] sm:$0xf]
        %v255 = vld [vmem:[%s242 + $0x48] sm:$0xf]
        %v256 = vld [vmem:[%s242 + $0x4c] sm:$0xf]
        %v257 = vld [vmem:[%s242 + $0x54] sm:$0xf]
        %v258 = vld [vmem:[%s242 + $0x58] sm:$0xf]
        %v259 = vld [vmem:[%s242 + $0x60] sm:$0xf]
        %v260 = vld [vmem:[%s242 + $0x64] sm:$0xf]
        %v261 = vld [vmem:[%s242 + $0x6c] sm:$0xf]
        %v262 = vld [vmem:[%s242 + $0x70] sm:$0xf]
        %vm263 = vcmask 519168
        %264 = vst.msk [vmem:[#allocation2] sm:$0xf] %vm263, %v243
        %265 = vst.msk [vmem:[#allocation2 + $0x14] sm:$0xf] %vm263, %v244
        %266 = vst.msk [vmem:[#allocation2 + $0x28] sm:$0xf] %vm263, %v245
        %267 = vst.msk [vmem:[#allocation2 + $0x3c] sm:$0xf] %vm263, %v246
        %268 = vst.msk [vmem:[#allocation2 + $0x50] sm:$0xf] %vm263, %v247
        %269 = vst.msk [vmem:[#allocation2 + $0x64] sm:$0xf] %vm263, %v248
        %270 = vst.msk [vmem:[#allocation2 + $0x78] sm:$0xf] %vm263, %v249
        %271 = vst.msk [vmem:[#allocation2 + $0x8c] sm:$0xf] %vm263, %v250
        %272 = vst.msk [vmem:[#allocation2 + $0xa0] sm:$0xf] %vm263, %v251
        %273 = vst.msk [vmem:[#allocation2 + $0xb4] sm:$0xf] %vm263, %v252
        %274 = vst.msk [vmem:[#allocation2 + $0xc8] sm:$0xf] %vm263, %v253
        %275 = vst.msk [vmem:[#allocation2 + $0xdc] sm:$0xf] %vm263, %v254
        %276 = vst.msk [vmem:[#allocation2 + $0xf0] sm:$0xf] %vm263, %v255
        %277 = vst.msk [vmem:[#allocation2 + $0x104] sm:$0xf] %vm263, %v256
        %278 = vst.msk [vmem:[#allocation2 + $0x118] sm:$0xf] %vm263, %v257
        %279 = vst.msk [vmem:[#allocation2 + $0x12c] sm:$0xf] %vm263, %v258
        %280 = vst.msk [vmem:[#allocation2 + $0x140] sm:$0xf] %vm263, %v259
        %281 = vst.msk [vmem:[#allocation2 + $0x154] sm:$0xf] %vm263, %v260
        %282 = vst.msk [vmem:[#allocation2 + $0x168] sm:$0xf] %vm263, %v261
        %283 = vst.msk [vmem:[#allocation2 + $0x17c] sm:$0xf] %vm263, %v262
        %v284 = vld [vmem:[%s242] sm:$0xf]
        %v285 = vld [vmem:[%s242 + $0x4] sm:$0xf]
        %v286 = vld [vmem:[%s242 + $0x8] sm:$0x1]
        %v287 = vld [vmem:[%s242 + $0xc] sm:$0xf]
        %v288 = vld [vmem:[%s242 + $0x10] sm:$0xf]
        %v289 = vld [vmem:[%s242 + $0x14] sm:$0x1]
        %v290 = vld [vmem:[%s242 + $0x18] sm:$0xf]
        %v291 = vld [vmem:[%s242 + $0x1c] sm:$0xf]
        %v292 = vld [vmem:[%s242 + $0x20] sm:$0x1]
        %v293 = vld [vmem:[%s242 + $0x24] sm:$0xf]
        %v294 = vld [vmem:[%s242 + $0x28] sm:$0xf]
        %v295 = vld [vmem:[%s242 + $0x2c] sm:$0x1]
        %v296 = vld [vmem:[%s242 + $0x30] sm:$0xf]
        %v297 = vld [vmem:[%s242 + $0x34] sm:$0xf]
        %v298 = vld [vmem:[%s242 + $0x38] sm:$0x1]
        %v299 = vld [vmem:[%s242 + $0x3c] sm:$0xf]
        %v300 = vld [vmem:[%s242 + $0x40] sm:$0xf]
        %v301 = vld [vmem:[%s242 + $0x44] sm:$0x1]
        %v302 = vld [vmem:[%s242 + $0x48] sm:$0xf]
        %v303 = vld [vmem:[%s242 + $0x4c] sm:$0xf]
        %v304 = vld [vmem:[%s242 + $0x50] sm:$0x1]
        %v305 = vld [vmem:[%s242 + $0x54] sm:$0xf]
        %v306 = vld [vmem:[%s242 + $0x58] sm:$0xf]
        %v307 = vld [vmem:[%s242 + $0x5c] sm:$0x1]
        %v308 = vld [vmem:[%s242 + $0x60] sm:$0xf]
        %v309 = vld [vmem:[%s242 + $0x64] sm:$0xf]
        %v310 = vld [vmem:[%s242 + $0x68] sm:$0x1]
        %v311 = vld [vmem:[%s242 + $0x6c] sm:$0xf]
        %v312 = vld [vmem:[%s242 + $0x70] sm:$0xf]
        %v313 = vld [vmem:[%s242 + $0x74] sm:$0x1]
        %vm314 = vsmask.f32 3328
        %vm315 = vsmask.f32 7440
        %vm316 = vmor %vm314, %vm315
        %v318 = vshrl.u32 %v284, 16
        %v320 = vrot.slane %v318, 4
        %v321 = vshll.u32 %v284, 16
        %v323 = vrot.slane %v321, 5
        %v324 = vor.u32 %v320, %v323
        %v325 = vrot.slane %v324, 4
        %v327 = vshll.u32 %v285, 16
        %v329 = vrot.slane %v327, 5
        %v330 = vsel %vm316, %v325, %v329
        %v331 = vshrl.u32 %v285, 16
        %v333 = vrot.slane %v331, 4
        %v334 = vor.u32 %v333, %v329
        %v335 = vrot.slane %v334, 4
        %v337 = vshll.u32 %v286, 16
        %v339 = vrot.slane %v337, 5
        %v340 = vsel %vm316, %v335, %v339
        %v342 = vshrl.u32 %v287, 16
        %v344 = vrot.slane %v342, 4
        %v345 = vshll.u32 %v287, 16
        %v347 = vrot.slane %v345, 5
        %v348 = vor.u32 %v344, %v347
        %v349 = vrot.slane %v348, 4
        %v351 = vshll.u32 %v288, 16
        %v353 = vrot.slane %v351, 5
        %v354 = vsel %vm316, %v349, %v353
        %v355 = vshrl.u32 %v288, 16
        %v357 = vrot.slane %v355, 4
        %v358 = vor.u32 %v357, %v353
        %v359 = vrot.slane %v358, 4
        %v361 = vshll.u32 %v289, 16
        %v363 = vrot.slane %v361, 5
        %v364 = vsel %vm316, %v359, %v363
        %v366 = vshrl.u32 %v290, 16
        %v368 = vrot.slane %v366, 4
        %v369 = vshll.u32 %v290, 16
        %v371 = vrot.slane %v369, 5
        %v372 = vor.u32 %v368, %v371
        %v373 = vrot.slane %v372, 4
        %v375 = vshll.u32 %v291, 16
        %v377 = vrot.slane %v375, 5
        %v378 = vsel %vm316, %v373, %v377
        %v379 = vshrl.u32 %v291, 16
        %v381 = vrot.slane %v379, 4
        %v382 = vor.u32 %v381, %v377
        %v383 = vrot.slane %v382, 4
        %v385 = vshll.u32 %v292, 16
        %v387 = vrot.slane %v385, 5
        %v388 = vsel %vm316, %v383, %v387
        %v390 = vshrl.u32 %v293, 16
        %v392 = vrot.slane %v390, 4
        %v393 = vshll.u32 %v293, 16
        %v395 = vrot.slane %v393, 5
        %v396 = vor.u32 %v392, %v395
        %v397 = vrot.slane %v396, 4
        %v399 = vshll.u32 %v294, 16
        %v401 = vrot.slane %v399, 5
        %v402 = vsel %vm316, %v397, %v401
        %v403 = vshrl.u32 %v294, 16
        %v405 = vrot.slane %v403, 4
        %v406 = vor.u32 %v405, %v401
        %v407 = vrot.slane %v406, 4
        %v409 = vshll.u32 %v295, 16
        %v411 = vrot.slane %v409, 5
        %v412 = vsel %vm316, %v407, %v411
        %v414 = vshrl.u32 %v296, 16
        %v416 = vrot.slane %v414, 4
        %v417 = vshll.u32 %v296, 16
        %v419 = vrot.slane %v417, 5
        %v420 = vor.u32 %v416, %v419
        %v421 = vrot.slane %v420, 4
        %v423 = vshll.u32 %v297, 16
        %v425 = vrot.slane %v423, 5
        %v426 = vsel %vm316, %v421, %v425
        %v427 = vshrl.u32 %v297, 16
        %v429 = vrot.slane %v427, 4
        %v430 = vor.u32 %v429, %v425
        %v431 = vrot.slane %v430, 4
        %v433 = vshll.u32 %v298, 16
        %v435 = vrot.slane %v433, 5
        %v436 = vsel %vm316, %v431, %v435
        %v438 = vshrl.u32 %v299, 16
        %v440 = vrot.slane %v438, 4
        %v441 = vshll.u32 %v299, 16
        %v443 = vrot.slane %v441, 5
        %v444 = vor.u32 %v440, %v443
        %v445 = vrot.slane %v444, 4
        %v447 = vshll.u32 %v300, 16
        %v449 = vrot.slane %v447, 5
        %v450 = vsel %vm316, %v445, %v449
        %v451 = vshrl.u32 %v300, 16
        %v453 = vrot.slane %v451, 4
        %v454 = vor.u32 %v453, %v449
        %v455 = vrot.slane %v454, 4
        %v457 = vshll.u32 %v301, 16
        %v459 = vrot.slane %v457, 5
        %v460 = vsel %vm316, %v455, %v459
        %v462 = vshrl.u32 %v302, 16
        %v464 = vrot.slane %v462, 4
        %v465 = vshll.u32 %v302, 16
        %v467 = vrot.slane %v465, 5
        %v468 = vor.u32 %v464, %v467
        %v469 = vrot.slane %v468, 4
        %v471 = vshll.u32 %v303, 16
        %v473 = vrot.slane %v471, 5
        %v474 = vsel %vm316, %v469, %v473
        %v475 = vshrl.u32 %v303, 16
        %v477 = vrot.slane %v475, 4
        %v478 = vor.u32 %v477, %v473
        %v479 = vrot.slane %v478, 4
        %v481 = vshll.u32 %v304, 16
        %v483 = vrot.slane %v481, 5
        %v484 = vsel %vm316, %v479, %v483
        %v486 = vshrl.u32 %v305, 16
        %v488 = vrot.slane %v486, 4
        %v489 = vshll.u32 %v305, 16
        %v491 = vrot.slane %v489, 5
        %v492 = vor.u32 %v488, %v491
        %v493 = vrot.slane %v492, 4
        %v495 = vshll.u32 %v306, 16
        %v497 = vrot.slane %v495, 5
        %v498 = vsel %vm316, %v493, %v497
        %v499 = vshrl.u32 %v306, 16
        %v501 = vrot.slane %v499, 4
        %v502 = vor.u32 %v501, %v497
        %v503 = vrot.slane %v502, 4
        %v505 = vshll.u32 %v307, 16
        %v507 = vrot.slane %v505, 5
        %v508 = vsel %vm316, %v503, %v507
        %v510 = vshrl.u32 %v308, 16
        %v512 = vrot.slane %v510, 4
        %v513 = vshll.u32 %v308, 16
        %v515 = vrot.slane %v513, 5
        %v516 = vor.u32 %v512, %v515
        %v517 = vrot.slane %v516, 4
        %v519 = vshll.u32 %v309, 16
        %v521 = vrot.slane %v519, 5
        %v522 = vsel %vm316, %v517, %v521
        %v523 = vshrl.u32 %v309, 16
        %v525 = vrot.slane %v523, 4
        %v526 = vor.u32 %v525, %v521
        %v527 = vrot.slane %v526, 4
        %v529 = vshll.u32 %v310, 16
        %v531 = vrot.slane %v529, 5
        %v532 = vsel %vm316, %v527, %v531
        %v534 = vshrl.u32 %v311, 16
        %v536 = vrot.slane %v534, 4
        %v537 = vshll.u32 %v311, 16
        %v539 = vrot.slane %v537, 5
        %v540 = vor.u32 %v536, %v539
        %v541 = vrot.slane %v540, 4
        %v543 = vshll.u32 %v312, 16
        %v545 = vrot.slane %v543, 5
        %v546 = vsel %vm316, %v541, %v545
        %v547 = vshrl.u32 %v312, 16
        %v549 = vrot.slane %v547, 4
        %v550 = vor.u32 %v549, %v545
        %v551 = vrot.slane %v550, 4
        %v553 = vshll.u32 %v313, 16
        %v555 = vrot.slane %v553, 5
        %v556 = vsel %vm316, %v551, %v555
        %557 = vrot.lane.b32.xlu0 %v330, 64
        %v558 = vpop.permute.xlu0 %557
        %559 = vrot.lane.b32.xlu0 %v340, 64
        %v560 = vpop.permute.xlu0 %559
        %561 = vrot.lane.b32.xlu0 %v354, 64
        %v562 = vpop.permute.xlu0 %561
        %563 = vrot.lane.b32.xlu0 %v364, 64
        %v564 = vpop.permute.xlu0 %563
        %565 = vrot.lane.b32.xlu0 %v378, 64
        %v566 = vpop.permute.xlu0 %565
        %567 = vrot.lane.b32.xlu0 %v388, 64
        %v568 = vpop.permute.xlu0 %567
        %569 = vrot.lane.b32.xlu0 %v402, 64
        %v570 = vpop.permute.xlu0 %569
        %571 = vrot.lane.b32.xlu0 %v412, 64
        %v572 = vpop.permute.xlu0 %571
        %573 = vrot.lane.b32.xlu0 %v426, 64
        %v574 = vpop.permute.xlu0 %573
        %575 = vrot.lane.b32.xlu0 %v436, 64
        %v576 = vpop.permute.xlu0 %575
        %577 = vrot.lane.b32.xlu0 %v450, 64
        %v578 = vpop.permute.xlu0 %577
        %579 = vrot.lane.b32.xlu0 %v460, 64
        %v580 = vpop.permute.xlu0 %579
        %581 = vrot.lane.b32.xlu0 %v474, 64
        %v582 = vpop.permute.xlu0 %581
        %583 = vrot.lane.b32.xlu0 %v484, 64
        %v584 = vpop.permute.xlu0 %583
        %585 = vrot.lane.b32.xlu0 %v498, 64
        %v586 = vpop.permute.xlu0 %585
        %587 = vrot.lane.b32.xlu0 %v508, 64
        %v588 = vpop.permute.xlu0 %587
        %589 = vrot.lane.b32.xlu0 %v522, 64
        %v590 = vpop.permute.xlu0 %589
        %591 = vrot.lane.b32.xlu0 %v532, 64
        %v592 = vpop.permute.xlu0 %591
        %593 = vrot.lane.b32.xlu0 %v546, 64
        %v594 = vpop.permute.xlu0 %593
        %595 = vrot.lane.b32.xlu0 %v556, 64
        %v596 = vpop.permute.xlu0 %595
        %vm617 = vcmask 1043968
        %618 = vst.msk [vmem:[#allocation2] sm:$0xf] %vm617, %v558
        %619 = vst.msk [vmem:[#allocation2 + $0x14] sm:$0xf] %vm617, %v560
        %620 = vst.msk [vmem:[#allocation2 + $0x28] sm:$0xf] %vm617, %v562
        %621 = vst.msk [vmem:[#allocation2 + $0x3c] sm:$0xf] %vm617, %v564
        %622 = vst.msk [vmem:[#allocation2 + $0x50] sm:$0xf] %vm617, %v566
        %623 = vst.msk [vmem:[#allocation2 + $0x64] sm:$0xf] %vm617, %v568
        %624 = vst.msk [vmem:[#allocation2 + $0x78] sm:$0xf] %vm617, %v570
        %625 = vst.msk [vmem:[#allocation2 + $0x8c] sm:$0xf] %vm617, %v572
        %626 = vst.msk [vmem:[#allocation2 + $0xa0] sm:$0xf] %vm617, %v574
        %627 = vst.msk [vmem:[#allocation2 + $0xb4] sm:$0xf] %vm617, %v576
        %628 = vst.msk [vmem:[#allocation2 + $0xc8] sm:$0xf] %vm617, %v578
        %629 = vst.msk [vmem:[#allocation2 + $0xdc] sm:$0xf] %vm617, %v580
        %630 = vst.msk [vmem:[#allocation2 + $0xf0] sm:$0xf] %vm617, %v582
        %631 = vst.msk [vmem:[#allocation2 + $0x104] sm:$0xf] %vm617, %v584
        %632 = vst.msk [vmem:[#allocation2 + $0x118] sm:$0xf] %vm617, %v586
        %633 = vst.msk [vmem:[#allocation2 + $0x12c] sm:$0xf] %vm617, %v588
        %634 = vst.msk [vmem:[#allocation2 + $0x140] sm:$0xf] %vm617, %v590
        %635 = vst.msk [vmem:[#allocation2 + $0x154] sm:$0xf] %vm617, %v592
        %636 = vst.msk [vmem:[#allocation2 + $0x168] sm:$0xf] %vm617, %v594
        %637 = vst.msk [vmem:[#allocation2 + $0x17c] sm:$0xf] %vm617, %v596
        %v638 = vld [vmem:[%s242] sm:$0xe]
        %v639 = vld [vmem:[%s242 + $0x4] sm:$0xf]
        %v640 = vld [vmem:[%s242 + $0x8] sm:$0x1]
        %v641 = vld [vmem:[%s242 + $0xc] sm:$0xe]
        %v642 = vld [vmem:[%s242 + $0x10] sm:$0xf]
        %v643 = vld [vmem:[%s242 + $0x14] sm:$0x1]
        %v644 = vld [vmem:[%s242 + $0x18] sm:$0xe]
        %v645 = vld [vmem:[%s242 + $0x1c] sm:$0xf]
        %v646 = vld [vmem:[%s242 + $0x20] sm:$0x1]
        %v647 = vld [vmem:[%s242 + $0x24] sm:$0xe]
        %v648 = vld [vmem:[%s242 + $0x28] sm:$0xf]
        %v649 = vld [vmem:[%s242 + $0x2c] sm:$0x1]
        %v650 = vld [vmem:[%s242 + $0x30] sm:$0xe]
        %v651 = vld [vmem:[%s242 + $0x34] sm:$0xf]
        %v652 = vld [vmem:[%s242 + $0x38] sm:$0x1]
        %v653 = vld [vmem:[%s242 + $0x3c] sm:$0xe]
        %v654 = vld [vmem:[%s242 + $0x40] sm:$0xf]
        %v655 = vld [vmem:[%s242 + $0x44] sm:$0x1]
        %v656 = vld [vmem:[%s242 + $0x48] sm:$0xe]
        %v657 = vld [vmem:[%s242 + $0x4c] sm:$0xf]
        %v658 = vld [vmem:[%s242 + $0x50] sm:$0x1]
        %v659 = vld [vmem:[%s242 + $0x54] sm:$0xe]
        %v660 = vld [vmem:[%s242 + $0x58] sm:$0xf]
        %v661 = vld [vmem:[%s242 + $0x5c] sm:$0x1]
        %v662 = vld [vmem:[%s242 + $0x60] sm:$0xe]
        %v663 = vld [vmem:[%s242 + $0x64] sm:$0xf]
        %v664 = vld [vmem:[%s242 + $0x68] sm:$0x1]
        %v665 = vld [vmem:[%s242 + $0x6c] sm:$0xe]
        %v666 = vld [vmem:[%s242 + $0x70] sm:$0xf]
        %v667 = vld [vmem:[%s242 + $0x74] sm:$0x1]
        %vm698 = vcmask 1042432
        %vm699 = vcmask 1046532
        %vm700 = vmor %vm698, %vm699
        %v701 = vrot.slane %v638, 5
        %v702 = vrot.slane %v701, 4
        %v703 = vrot.slane %v639, 5
        %v704 = vsel %vm700, %v702, %v703
        %v705 = vrot.slane %v703, 4
        %v706 = vrot.slane %v640, 5
        %v707 = vsel %vm700, %v705, %v706
        %v708 = vrot.slane %v641, 5
        %v709 = vrot.slane %v708, 4
        %v710 = vrot.slane %v642, 5
        %v711 = vsel %vm700, %v709, %v710
        %v712 = vrot.slane %v710, 4
        %v713 = vrot.slane %v643, 5
        %v714 = vsel %vm700, %v712, %v713
        %v715 = vrot.slane %v644, 5
        %v716 = vrot.slane %v715, 4
        %v717 = vrot.slane %v645, 5
        %v718 = vsel %vm700, %v716, %v717
        %v719 = vrot.slane %v717, 4
        %v720 = vrot.slane %v646, 5
        %v721 = vsel %vm700, %v719, %v720
        %v722 = vrot.slane %v647, 5
        %v723 = vrot.slane %v722, 4
        %v724 = vrot.slane %v648, 5
        %v725 = vsel %vm700, %v723, %v724
        %v726 = vrot.slane %v724, 4
        %v727 = vrot.slane %v649, 5
        %v728 = vsel %vm700, %v726, %v727
        %v729 = vrot.slane %v650, 5
        %v730 = vrot.slane %v729, 4
        %v731 = vrot.slane %v651, 5
        %v732 = vsel %vm700, %v730, %v731
        %v733 = vrot.slane %v731, 4
        %v734 = vrot.slane %v652, 5
        %v735 = vsel %vm700, %v733, %v734
        %v736 = vrot.slane %v653, 5
        %v737 = vrot.slane %v736, 4
        %v738 = vrot.slane %v654, 5
        %v739 = vsel %vm700, %v737, %v738
        %v740 = vrot.slane %v738, 4
        %v741 = vrot.slane %v655, 5
        %v742 = vsel %vm700, %v740, %v741
        %v743 = vrot.slane %v656, 5
        %v744 = vrot.slane %v743, 4
        %v745 = vrot.slane %v657, 5
        %v746 = vsel %vm700, %v744, %v745
        %v747 = vrot.slane %v745, 4
        %v748 = vrot.slane %v658, 5
        %v749 = vsel %vm700, %v747, %v748
        %v750 = vrot.slane %v659, 5
        %v751 = vrot.slane %v750, 4
        %v752 = vrot.slane %v660, 5
        %v753 = vsel %vm700, %v751, %v752
        %v754 = vrot.slane %v752, 4
        %v755 = vrot.slane %v661, 5
        %v756 = vsel %vm700, %v754, %v755
        %v757 = vrot.slane %v662, 5
        %v758 = vrot.slane %v757, 4
        %v759 = vrot.slane %v663, 5
        %v760 = vsel %vm700, %v758, %v759
        %v761 = vrot.slane %v759, 4
        %v762 = vrot.slane %v664, 5
        %v763 = vsel %vm700, %v761, %v762
        %v764 = vrot.slane %v665, 5
        %v765 = vrot.slane %v764, 4
        %v766 = vrot.slane %v666, 5
        %v767 = vsel %vm700, %v765, %v766
        %v768 = vrot.slane %v766, 4
        %v769 = vrot.slane %v667, 5
        %v770 = vsel %vm700, %v768, %v769
        %791 = vst.msk [vmem:[#allocation2 + $0x4] sm:$0xf] %vm263, %v704
        %792 = vst.msk [vmem:[#allocation2 + $0x18] sm:$0xf] %vm263, %v707
        %793 = vst.msk [vmem:[#allocation2 + $0x2c] sm:$0xf] %vm263, %v711
        %794 = vst.msk [vmem:[#allocation2 + $0x40] sm:$0xf] %vm263, %v714
        %795 = vst.msk [vmem:[#allocation2 + $0x54] sm:$0xf] %vm263, %v718
        %796 = vst.msk [vmem:[#allocation2 + $0x68] sm:$0xf] %vm263, %v721
        %797 = vst.msk [vmem:[#allocation2 + $0x7c] sm:$0xf] %vm263, %v725
        %798 = vst.msk [vmem:[#allocation2 + $0x90] sm:$0xf] %vm263, %v728
        %799 = vst.msk [vmem:[#allocation2 + $0xa4] sm:$0xf] %vm263, %v732
        %800 = vst.msk [vmem:[#allocation2 + $0xb8] sm:$0xf] %vm263, %v735
        %801 = vst.msk [vmem:[#allocation2 + $0xcc] sm:$0xf] %vm263, %v739
        %802 = vst.msk [vmem:[#allocation2 + $0xe0] sm:$0xf] %vm263, %v742
        %803 = vst.msk [vmem:[#allocation2 + $0xf4] sm:$0xf] %vm263, %v746
        %804 = vst.msk [vmem:[#allocation2 + $0x108] sm:$0xf] %vm263, %v749
        %805 = vst.msk [vmem:[#allocation2 + $0x11c] sm:$0xf] %vm263, %v753
        %806 = vst.msk [vmem:[#allocation2 + $0x130] sm:$0xf] %vm263, %v756
        %807 = vst.msk [vmem:[#allocation2 + $0x144] sm:$0xf] %vm263, %v760
        %808 = vst.msk [vmem:[#allocation2 + $0x158] sm:$0xf] %vm263, %v763
        %809 = vst.msk [vmem:[#allocation2 + $0x16c] sm:$0xf] %vm263, %v767
        %810 = vst.msk [vmem:[#allocation2 + $0x180] sm:$0xf] %vm263, %v770
        %s811 = sadd.s32 %s239, 1
        %s812 = smul.u32 %s811, 3
        %s813 = smul.addr %s812, 4
        %s814 = scalar_lea.vmem %s236, %s813
        %v815 = vld [vmem:[%s814] sm:$0xf]
        %v816 = vld [vmem:[%s814 + $0x4] sm:$0xf]
        %v817 = vld [vmem:[%s814 + $0xc] sm:$0xf]
        %v818 = vld [vmem:[%s814 + $0x10] sm:$0xf]
        %v819 = vld [vmem:[%s814 + $0x18] sm:$0xf]
        %v820 = vld [vmem:[%s814 + $0x1c] sm:$0xf]
        %v821 = vld [vmem:[%s814 + $0x24] sm:$0xf]
        %v822 = vld [vmem:[%s814 + $0x28] sm:$0xf]
        %v823 = vld [vmem:[%s814 + $0x30] sm:$0xf]
        %v824 = vld [vmem:[%s814 + $0x34] sm:$0xf]
        %v825 = vld [vmem:[%s814 + $0x3c] sm:$0xf]
        %v826 = vld [vmem:[%s814 + $0x40] sm:$0xf]
        %v827 = vld [vmem:[%s814 + $0x48] sm:$0xf]
        %v828 = vld [vmem:[%s814 + $0x4c] sm:$0xf]
        %v829 = vld [vmem:[%s814 + $0x54] sm:$0xf]
        %v830 = vld [vmem:[%s814 + $0x58] sm:$0xf]
        %v831 = vld [vmem:[%s814 + $0x60] sm:$0xf]
        %v832 = vld [vmem:[%s814 + $0x64] sm:$0xf]
        %v833 = vld [vmem:[%s814 + $0x6c] sm:$0xf]
        %v834 = vld [vmem:[%s814 + $0x70] sm:$0xf]
        %855 = vrot.lane.b32.xlu0 %v815, 64
        %v856 = vpop.permute.xlu0 %855
        %857 = vrot.lane.b32.xlu0 %v816, 64
        %v858 = vpop.permute.xlu0 %857
        %859 = vrot.lane.b32.xlu0 %v817, 64
        %v860 = vpop.permute.xlu0 %859
        %861 = vrot.lane.b32.xlu0 %v818, 64
        %v862 = vpop.permute.xlu0 %861
        %863 = vrot.lane.b32.xlu0 %v819, 64
        %v864 = vpop.permute.xlu0 %863
        %865 = vrot.lane.b32.xlu0 %v820, 64
        %v866 = vpop.permute.xlu0 %865
        %867 = vrot.lane.b32.xlu0 %v821, 64
        %v868 = vpop.permute.xlu0 %867
        %869 = vrot.lane.b32.xlu0 %v822, 64
        %v870 = vpop.permute.xlu0 %869
        %871 = vrot.lane.b32.xlu0 %v823, 64
        %v872 = vpop.permute.xlu0 %871
        %873 = vrot.lane.b32.xlu0 %v824, 64
        %v874 = vpop.permute.xlu0 %873
        %875 = vrot.lane.b32.xlu0 %v825, 64
        %v876 = vpop.permute.xlu0 %875
        %877 = vrot.lane.b32.xlu0 %v826, 64
        %v878 = vpop.permute.xlu0 %877
        %879 = vrot.lane.b32.xlu0 %v827, 64
        %v880 = vpop.permute.xlu0 %879
        %881 = vrot.lane.b32.xlu0 %v828, 64
        %v882 = vpop.permute.xlu0 %881
        %883 = vrot.lane.b32.xlu0 %v829, 64
        %v884 = vpop.permute.xlu0 %883
        %885 = vrot.lane.b32.xlu0 %v830, 64
        %v886 = vpop.permute.xlu0 %885
        %887 = vrot.lane.b32.xlu0 %v831, 64
        %v888 = vpop.permute.xlu0 %887
        %889 = vrot.lane.b32.xlu0 %v832, 64
        %v890 = vpop.permute.xlu0 %889
        %891 = vrot.lane.b32.xlu0 %v833, 64
        %v892 = vpop.permute.xlu0 %891
        %893 = vrot.lane.b32.xlu0 %v834, 64
        %v894 = vpop.permute.xlu0 %893
        %915 = vst.msk [vmem:[#allocation2 + $0x4] sm:$0xf] %vm617, %v856
        %916 = vst.msk [vmem:[#allocation2 + $0x18] sm:$0xf] %vm617, %v858
        %917 = vst.msk [vmem:[#allocation2 + $0x2c] sm:$0xf] %vm617, %v860
        %918 = vst.msk [vmem:[#allocation2 + $0x40] sm:$0xf] %vm617, %v862
        %919 = vst.msk [vmem:[#allocation2 + $0x54] sm:$0xf] %vm617, %v864
        %920 = vst.msk [vmem:[#allocation2 + $0x68] sm:$0xf] %vm617, %v866
        %921 = vst.msk [vmem:[#allocation2 + $0x7c] sm:$0xf] %vm617, %v868
        %922 = vst.msk [vmem:[#allocation2 + $0x90] sm:$0xf] %vm617, %v870
        %923 = vst.msk [vmem:[#allocation2 + $0xa4] sm:$0xf] %vm617, %v872
        %924 = vst.msk [vmem:[#allocation2 + $0xb8] sm:$0xf] %vm617, %v874
        %925 = vst.msk [vmem:[#allocation2 + $0xcc] sm:$0xf] %vm617, %v876
        %926 = vst.msk [vmem:[#allocation2 + $0xe0] sm:$0xf] %vm617, %v878
        %927 = vst.msk [vmem:[#allocation2 + $0xf4] sm:$0xf] %vm617, %v880
        %928 = vst.msk [vmem:[#allocation2 + $0x108] sm:$0xf] %vm617, %v882
        %929 = vst.msk [vmem:[#allocation2 + $0x11c] sm:$0xf] %vm617, %v884
        %930 = vst.msk [vmem:[#allocation2 + $0x130] sm:$0xf] %vm617, %v886
        %931 = vst.msk [vmem:[#allocation2 + $0x144] sm:$0xf] %vm617, %v888
        %932 = vst.msk [vmem:[#allocation2 + $0x158] sm:$0xf] %vm617, %v890
        %933 = vst.msk [vmem:[#allocation2 + $0x16c] sm:$0xf] %vm617, %v892
        %934 = vst.msk [vmem:[#allocation2 + $0x180] sm:$0xf] %vm617, %v894
        %v935 = vld [vmem:[%s814] sm:$0xf]
        %v936 = vld [vmem:[%s814 + $0x4] sm:$0xf]
        %v937 = vld [vmem:[%s814 + $0x8] sm:$0x1]
        %v938 = vld [vmem:[%s814 + $0xc] sm:$0xf]
        %v939 = vld [vmem:[%s814 + $0x10] sm:$0xf]
        %v940 = vld [vmem:[%s814 + $0x14] sm:$0x1]
        %v941 = vld [vmem:[%s814 + $0x18] sm:$0xf]
        %v942 = vld [vmem:[%s814 + $0x1c] sm:$0xf]
        %v943 = vld [vmem:[%s814 + $0x20] sm:$0x1]
        %v944 = vld [vmem:[%s814 + $0x24] sm:$0xf]
        %v945 = vld [vmem:[%s814 + $0x28] sm:$0xf]
        %v946 = vld [vmem:[%s814 + $0x2c] sm:$0x1]
        %v947 = vld [vmem:[%s814 + $0x30] sm:$0xf]
        %v948 = vld [vmem:[%s814 + $0x34] sm:$0xf]
        %v949 = vld [vmem:[%s814 + $0x38] sm:$0x1]
        %v950 = vld [vmem:[%s814 + $0x3c] sm:$0xf]
        %v951 = vld [vmem:[%s814 + $0x40] sm:$0xf]
        %v952 = vld [vmem:[%s814 + $0x44] sm:$0x1]
        %v953 = vld [vmem:[%s814 + $0x48] sm:$0xf]
        %v954 = vld [vmem:[%s814 + $0x4c] sm:$0xf]
        %v955 = vld [vmem:[%s814 + $0x50] sm:$0x1]
        %v956 = vld [vmem:[%s814 + $0x54] sm:$0xf]
        %v957 = vld [vmem:[%s814 + $0x58] sm:$0xf]
        %v958 = vld [vmem:[%s814 + $0x5c] sm:$0x1]
        %v959 = vld [vmem:[%s814 + $0x60] sm:$0xf]
        %v960 = vld [vmem:[%s814 + $0x64] sm:$0xf]
        %v961 = vld [vmem:[%s814 + $0x68] sm:$0x1]
        %v962 = vld [vmem:[%s814 + $0x6c] sm:$0xf]
        %v963 = vld [vmem:[%s814 + $0x70] sm:$0xf]
        %v964 = vld [vmem:[%s814 + $0x74] sm:$0x1]
        %v966 = vshrl.u32 %v935, 16
        %v968 = vrot.slane %v966, 4
        %v969 = vshll.u32 %v935, 16
        %v971 = vrot.slane %v969, 5
        %v972 = vor.u32 %v968, %v971
        %v973 = vrot.slane %v972, 4
        %v975 = vshll.u32 %v936, 16
        %v977 = vrot.slane %v975, 5
        %v978 = vsel %vm316, %v973, %v977
        %v979 = vshrl.u32 %v936, 16
        %v981 = vrot.slane %v979, 4
        %v982 = vor.u32 %v981, %v977
        %v983 = vrot.slane %v982, 4
        %v985 = vshll.u32 %v937, 16
        %v987 = vrot.slane %v985, 5
        %v988 = vsel %vm316, %v983, %v987
        %v990 = vshrl.u32 %v938, 16
        %v992 = vrot.slane %v990, 4
        %v993 = vshll.u32 %v938, 16
        %v995 = vrot.slane %v993, 5
        %v996 = vor.u32 %v992, %v995
        %v997 = vrot.slane %v996, 4
        %v999 = vshll.u32 %v939, 16
        %v1001 = vrot.slane %v999, 5
        %v1002 = vsel %vm316, %v997, %v1001
        %v1003 = vshrl.u32 %v939, 16
        %v1005 = vrot.slane %v1003, 4
        %v1006 = vor.u32 %v1005, %v1001
        %v1007 = vrot.slane %v1006, 4
        %v1009 = vshll.u32 %v940, 16
        %v1011 = vrot.slane %v1009, 5
        %v1012 = vsel %vm316, %v1007, %v1011
        %v1014 = vshrl.u32 %v941, 16
        %v1016 = vrot.slane %v1014, 4
        %v1017 = vshll.u32 %v941, 16
        %v1019 = vrot.slane %v1017, 5
        %v1020 = vor.u32 %v1016, %v1019
        %v1021 = vrot.slane %v1020, 4
        %v1023 = vshll.u32 %v942, 16
        %v1025 = vrot.slane %v1023, 5
        %v1026 = vsel %vm316, %v1021, %v1025
        %v1027 = vshrl.u32 %v942, 16
        %v1029 = vrot.slane %v1027, 4
        %v1030 = vor.u32 %v1029, %v1025
        %v1031 = vrot.slane %v1030, 4
        %v1033 = vshll.u32 %v943, 16
        %v1035 = vrot.slane %v1033, 5
        %v1036 = vsel %vm316, %v1031, %v1035
        %v1038 = vshrl.u32 %v944, 16
        %v1040 = vrot.slane %v1038, 4
        %v1041 = vshll.u32 %v944, 16
        %v1043 = vrot.slane %v1041, 5
        %v1044 = vor.u32 %v1040, %v1043
        %v1045 = vrot.slane %v1044, 4
        %v1047 = vshll.u32 %v945, 16
        %v1049 = vrot.slane %v1047, 5
        %v1050 = vsel %vm316, %v1045, %v1049
        %v1051 = vshrl.u32 %v945, 16
        %v1053 = vrot.slane %v1051, 4
        %v1054 = vor.u32 %v1053, %v1049
        %v1055 = vrot.slane %v1054, 4
        %v1057 = vshll.u32 %v946, 16
        %v1059 = vrot.slane %v1057, 5
        %v1060 = vsel %vm316, %v1055, %v1059
        %v1062 = vshrl.u32 %v947, 16
        %v1064 = vrot.slane %v1062, 4
        %v1065 = vshll.u32 %v947, 16
        %v1067 = vrot.slane %v1065, 5
        %v1068 = vor.u32 %v1064, %v1067
        %v1069 = vrot.slane %v1068, 4
        %v1071 = vshll.u32 %v948, 16
        %v1073 = vrot.slane %v1071, 5
        %v1074 = vsel %vm316, %v1069, %v1073
        %v1075 = vshrl.u32 %v948, 16
        %v1077 = vrot.slane %v1075, 4
        %v1078 = vor.u32 %v1077, %v1073
        %v1079 = vrot.slane %v1078, 4
        %v1081 = vshll.u32 %v949, 16
        %v1083 = vrot.slane %v1081, 5
        %v1084 = vsel %vm316, %v1079, %v1083
        %v1086 = vshrl.u32 %v950, 16
        %v1088 = vrot.slane %v1086, 4
        %v1089 = vshll.u32 %v950, 16
        %v1091 = vrot.slane %v1089, 5
        %v1092 = vor.u32 %v1088, %v1091
        %v1093 = vrot.slane %v1092, 4
        %v1095 = vshll.u32 %v951, 16
        %v1097 = vrot.slane %v1095, 5
        %v1098 = vsel %vm316, %v1093, %v1097
        %v1099 = vshrl.u32 %v951, 16
        %v1101 = vrot.slane %v1099, 4
        %v1102 = vor.u32 %v1101, %v1097
        %v1103 = vrot.slane %v1102, 4
        %v1105 = vshll.u32 %v952, 16
        %v1107 = vrot.slane %v1105, 5
        %v1108 = vsel %vm316, %v1103, %v1107
        %v1110 = vshrl.u32 %v953, 16
        %v1112 = vrot.slane %v1110, 4
        %v1113 = vshll.u32 %v953, 16
        %v1115 = vrot.slane %v1113, 5
        %v1116 = vor.u32 %v1112, %v1115
        %v1117 = vrot.slane %v1116, 4
        %v1119 = vshll.u32 %v954, 16
        %v1121 = vrot.slane %v1119, 5
        %v1122 = vsel %vm316, %v1117, %v1121
        %v1123 = vshrl.u32 %v954, 16
        %v1125 = vrot.slane %v1123, 4
        %v1126 = vor.u32 %v1125, %v1121
        %v1127 = vrot.slane %v1126, 4
        %v1129 = vshll.u32 %v955, 16
        %v1131 = vrot.slane %v1129, 5
        %v1132 = vsel %vm316, %v1127, %v1131
        %v1134 = vshrl.u32 %v956, 16
        %v1136 = vrot.slane %v1134, 4
        %v1137 = vshll.u32 %v956, 16
        %v1139 = vrot.slane %v1137, 5
        %v1140 = vor.u32 %v1136, %v1139
        %v1141 = vrot.slane %v1140, 4
        %v1143 = vshll.u32 %v957, 16
        %v1145 = vrot.slane %v1143, 5
        %v1146 = vsel %vm316, %v1141, %v1145
        %v1147 = vshrl.u32 %v957, 16
        %v1149 = vrot.slane %v1147, 4
        %v1150 = vor.u32 %v1149, %v1145
        %v1151 = vrot.slane %v1150, 4
        %v1153 = vshll.u32 %v958, 16
        %v1155 = vrot.slane %v1153, 5
        %v1156 = vsel %vm316, %v1151, %v1155
        %v1158 = vshrl.u32 %v959, 16
        %v1160 = vrot.slane %v1158, 4
        %v1161 = vshll.u32 %v959, 16
        %v1163 = vrot.slane %v1161, 5
        %v1164 = vor.u32 %v1160, %v1163
        %v1165 = vrot.slane %v1164, 4
        %v1167 = vshll.u32 %v960, 16
        %v1169 = vrot.slane %v1167, 5
        %v1170 = vsel %vm316, %v1165, %v1169
        %v1171 = vshrl.u32 %v960, 16
        %v1173 = vrot.slane %v1171, 4
        %v1174 = vor.u32 %v1173, %v1169
        %v1175 = vrot.slane %v1174, 4
        %v1177 = vshll.u32 %v961, 16
        %v1179 = vrot.slane %v1177, 5
        %v1180 = vsel %vm316, %v1175, %v1179
        %v1182 = vshrl.u32 %v962, 16
        %v1184 = vrot.slane %v1182, 4
        %v1185 = vshll.u32 %v962, 16
        %v1187 = vrot.slane %v1185, 5
        %v1188 = vor.u32 %v1184, %v1187
        %v1189 = vrot.slane %v1188, 4
        %v1191 = vshll.u32 %v963, 16
        %v1193 = vrot.slane %v1191, 5
        %v1194 = vsel %vm316, %v1189, %v1193
        %v1195 = vshrl.u32 %v963, 16
        %v1197 = vrot.slane %v1195, 4
        %v1198 = vor.u32 %v1197, %v1193
        %v1199 = vrot.slane %v1198, 4
        %v1201 = vshll.u32 %v964, 16
        %v1203 = vrot.slane %v1201, 5
        %v1204 = vsel %vm316, %v1199, %v1203
        %1225 = vst.msk [vmem:[#allocation2 + $0x8] sm:$0xf] %vm263, %v978
        %1226 = vst.msk [vmem:[#allocation2 + $0x1c] sm:$0xf] %vm263, %v988
        %1227 = vst.msk [vmem:[#allocation2 + $0x30] sm:$0xf] %vm263, %v1002
        %1228 = vst.msk [vmem:[#allocation2 + $0x44] sm:$0xf] %vm263, %v1012
        %1229 = vst.msk [vmem:[#allocation2 + $0x58] sm:$0xf] %vm263, %v1026
        %1230 = vst.msk [vmem:[#allocation2 + $0x6c] sm:$0xf] %vm263, %v1036
        %1231 = vst.msk [vmem:[#allocation2 + $0x80] sm:$0xf] %vm263, %v1050
        %1232 = vst.msk [vmem:[#allocation2 + $0x94] sm:$0xf] %vm263, %v1060
        %1233 = vst.msk [vmem:[#allocation2 + $0xa8] sm:$0xf] %vm263, %v1074
        %1234 = vst.msk [vmem:[#allocation2 + $0xbc] sm:$0xf] %vm263, %v1084
        %1235 = vst.msk [vmem:[#allocation2 + $0xd0] sm:$0xf] %vm263, %v1098
        %1236 = vst.msk [vmem:[#allocation2 + $0xe4] sm:$0xf] %vm263, %v1108
        %1237 = vst.msk [vmem:[#allocation2 + $0xf8] sm:$0xf] %vm263, %v1122
        %1238 = vst.msk [vmem:[#allocation2 + $0x10c] sm:$0xf] %vm263, %v1132
        %1239 = vst.msk [vmem:[#allocation2 + $0x120] sm:$0xf] %vm263, %v1146
        %1240 = vst.msk [vmem:[#allocation2 + $0x134] sm:$0xf] %vm263, %v1156
        %1241 = vst.msk [vmem:[#allocation2 + $0x148] sm:$0xf] %vm263, %v1170
        %1242 = vst.msk [vmem:[#allocation2 + $0x15c] sm:$0xf] %vm263, %v1180
        %1243 = vst.msk [vmem:[#allocation2 + $0x170] sm:$0xf] %vm263, %v1194
        %1244 = vst.msk [vmem:[#allocation2 + $0x184] sm:$0xf] %vm263, %v1204
        %v1245 = vld [vmem:[%s814] sm:$0xe]
        %v1246 = vld [vmem:[%s814 + $0x4] sm:$0xf]
        %v1247 = vld [vmem:[%s814 + $0x8] sm:$0x1]
        %v1248 = vld [vmem:[%s814 + $0xc] sm:$0xe]
        %v1249 = vld [vmem:[%s814 + $0x10] sm:$0xf]
        %v1250 = vld [vmem:[%s814 + $0x14] sm:$0x1]
        %v1251 = vld [vmem:[%s814 + $0x18] sm:$0xe]
        %v1252 = vld [vmem:[%s814 + $0x1c] sm:$0xf]
        %v1253 = vld [vmem:[%s814 + $0x20] sm:$0x1]
        %v1254 = vld [vmem:[%s814 + $0x24] sm:$0xe]
        %v1255 = vld [vmem:[%s814 + $0x28] sm:$0xf]
        %v1256 = vld [vmem:[%s814 + $0x2c] sm:$0x1]
        %v1257 = vld [vmem:[%s814 + $0x30] sm:$0xe]
        %v1258 = vld [vmem:[%s814 + $0x34] sm:$0xf]
        %v1259 = vld [vmem:[%s814 + $0x38] sm:$0x1]
        %v1260 = vld [vmem:[%s814 + $0x3c] sm:$0xe]
        %v1261 = vld [vmem:[%s814 + $0x40] sm:$0xf]
        %v1262 = vld [vmem:[%s814 + $0x44] sm:$0x1]
        %v1263 = vld [vmem:[%s814 + $0x48] sm:$0xe]
        %v1264 = vld [vmem:[%s814 + $0x4c] sm:$0xf]
        %v1265 = vld [vmem:[%s814 + $0x50] sm:$0x1]
        %v1266 = vld [vmem:[%s814 + $0x54] sm:$0xe]
        %v1267 = vld [vmem:[%s814 + $0x58] sm:$0xf]
        %v1268 = vld [vmem:[%s814 + $0x5c] sm:$0x1]
        %v1269 = vld [vmem:[%s814 + $0x60] sm:$0xe]
        %v1270 = vld [vmem:[%s814 + $0x64] sm:$0xf]
        %v1271 = vld [vmem:[%s814 + $0x68] sm:$0x1]
        %v1272 = vld [vmem:[%s814 + $0x6c] sm:$0xe]
        %v1273 = vld [vmem:[%s814 + $0x70] sm:$0xf]
        %v1274 = vld [vmem:[%s814 + $0x74] sm:$0x1]
        %v1305 = vrot.slane %v1245, 5
        %v1306 = vrot.slane %v1305, 4
        %v1307 = vrot.slane %v1246, 5
        %v1308 = vsel %vm700, %v1306, %v1307
        %v1309 = vrot.slane %v1307, 4
        %v1310 = vrot.slane %v1247, 5
        %v1311 = vsel %vm700, %v1309, %v1310
        %v1312 = vrot.slane %v1248, 5
        %v1313 = vrot.slane %v1312, 4
        %v1314 = vrot.slane %v1249, 5
        %v1315 = vsel %vm700, %v1313, %v1314
        %v1316 = vrot.slane %v1314, 4
        %v1317 = vrot.slane %v1250, 5
        %v1318 = vsel %vm700, %v1316, %v1317
        %v1319 = vrot.slane %v1251, 5
        %v1320 = vrot.slane %v1319, 4
        %v1321 = vrot.slane %v1252, 5
        %v1322 = vsel %vm700, %v1320, %v1321
        %v1323 = vrot.slane %v1321, 4
        %v1324 = vrot.slane %v1253, 5
        %v1325 = vsel %vm700, %v1323, %v1324
        %v1326 = vrot.slane %v1254, 5
        %v1327 = vrot.slane %v1326, 4
        %v1328 = vrot.slane %v1255, 5
        %v1329 = vsel %vm700, %v1327, %v1328
        %v1330 = vrot.slane %v1328, 4
        %v1331 = vrot.slane %v1256, 5
        %v1332 = vsel %vm700, %v1330, %v1331
        %v1333 = vrot.slane %v1257, 5
        %v1334 = vrot.slane %v1333, 4
        %v1335 = vrot.slane %v1258, 5
        %v1336 = vsel %vm700, %v1334, %v1335
        %v1337 = vrot.slane %v1335, 4
        %v1338 = vrot.slane %v1259, 5
        %v1339 = vsel %vm700, %v1337, %v1338
        %v1340 = vrot.slane %v1260, 5
        %v1341 = vrot.slane %v1340, 4
        %v1342 = vrot.slane %v1261, 5
        %v1343 = vsel %vm700, %v1341, %v1342
        %v1344 = vrot.slane %v1342, 4
        %v1345 = vrot.slane %v1262, 5
        %v1346 = vsel %vm700, %v1344, %v1345
        %v1347 = vrot.slane %v1263, 5
        %v1348 = vrot.slane %v1347, 4
        %v1349 = vrot.slane %v1264, 5
        %v1350 = vsel %vm700, %v1348, %v1349
        %v1351 = vrot.slane %v1349, 4
        %v1352 = vrot.slane %v1265, 5
        %v1353 = vsel %vm700, %v1351, %v1352
        %v1354 = vrot.slane %v1266, 5
        %v1355 = vrot.slane %v1354, 4
        %v1356 = vrot.slane %v1267, 5
        %v1357 = vsel %vm700, %v1355, %v1356
        %v1358 = vrot.slane %v1356, 4
        %v1359 = vrot.slane %v1268, 5
        %v1360 = vsel %vm700, %v1358, %v1359
        %v1361 = vrot.slane %v1269, 5
        %v1362 = vrot.slane %v1361, 4
        %v1363 = vrot.slane %v1270, 5
        %v1364 = vsel %vm700, %v1362, %v1363
        %v1365 = vrot.slane %v1363, 4
        %v1366 = vrot.slane %v1271, 5
        %v1367 = vsel %vm700, %v1365, %v1366
        %v1368 = vrot.slane %v1272, 5
        %v1369 = vrot.slane %v1368, 4
        %v1370 = vrot.slane %v1273, 5
        %v1371 = vsel %vm700, %v1369, %v1370
        %v1372 = vrot.slane %v1370, 4
        %v1373 = vrot.slane %v1274, 5
        %v1374 = vsel %vm700, %v1372, %v1373
        %1375 = vrot.lane.b32.xlu0 %v1308, 64
        %v1376 = vpop.permute.xlu0 %1375
        %1377 = vrot.lane.b32.xlu0 %v1311, 64
        %v1378 = vpop.permute.xlu0 %1377
        %1379 = vrot.lane.b32.xlu0 %v1315, 64
        %v1380 = vpop.permute.xlu0 %1379
        %1381 = vrot.lane.b32.xlu0 %v1318, 64
        %v1382 = vpop.permute.xlu0 %1381
        %1383 = vrot.lane.b32.xlu0 %v1322, 64
        %v1384 = vpop.permute.xlu0 %1383
        %1385 = vrot.lane.b32.xlu0 %v1325, 64
        %v1386 = vpop.permute.xlu0 %1385
        %1387 = vrot.lane.b32.xlu0 %v1329, 64
        %v1388 = vpop.permute.xlu0 %1387
        %1389 = vrot.lane.b32.xlu0 %v1332, 64
        %v1390 = vpop.permute.xlu0 %1389
        %1391 = vrot.lane.b32.xlu0 %v1336, 64
        %v1392 = vpop.permute.xlu0 %1391
        %1393 = vrot.lane.b32.xlu0 %v1339, 64
        %v1394 = vpop.permute.xlu0 %1393
        %1395 = vrot.lane.b32.xlu0 %v1343, 64
        %v1396 = vpop.permute.xlu0 %1395
        %1397 = vrot.lane.b32.xlu0 %v1346, 64
        %v1398 = vpop.permute.xlu0 %1397
        %1399 = vrot.lane.b32.xlu0 %v1350, 64
        %v1400 = vpop.permute.xlu0 %1399
        %1401 = vrot.lane.b32.xlu0 %v1353, 64
        %v1402 = vpop.permute.xlu0 %1401
        %1403 = vrot.lane.b32.xlu0 %v1357, 64
        %v1404 = vpop.permute.xlu0 %1403
        %1405 = vrot.lane.b32.xlu0 %v1360, 64
        %v1406 = vpop.permute.xlu0 %1405
        %1407 = vrot.lane.b32.xlu0 %v1364, 64
        %v1408 = vpop.permute.xlu0 %1407
        %1409 = vrot.lane.b32.xlu0 %v1367, 64
        %v1410 = vpop.permute.xlu0 %1409
        %1411 = vrot.lane.b32.xlu0 %v1371, 64
        %v1412 = vpop.permute.xlu0 %1411
        %1413 = vrot.lane.b32.xlu0 %v1374, 64
        %v1414 = vpop.permute.xlu0 %1413
        %1435 = vst.msk [vmem:[#allocation2 + $0x8] sm:$0xf] %vm617, %v1376
        %1436 = vst.msk [vmem:[#allocation2 + $0x1c] sm:$0xf] %vm617, %v1378
        %1437 = vst.msk [vmem:[#allocation2 + $0x30] sm:$0xf] %vm617, %v1380
        %1438 = vst.msk [vmem:[#allocation2 + $0x44] sm:$0xf] %vm617, %v1382
        %1439 = vst.msk [vmem:[#allocation2 + $0x58] sm:$0xf] %vm617, %v1384
        %1440 = vst.msk [vmem:[#allocation2 + $0x6c] sm:$0xf] %vm617, %v1386
        %1441 = vst.msk [vmem:[#allocation2 + $0x80] sm:$0xf] %vm617, %v1388
        %1442 = vst.msk [vmem:[#allocation2 + $0x94] sm:$0xf] %vm617, %v1390
        %1443 = vst.msk [vmem:[#allocation2 + $0xa8] sm:$0xf] %vm617, %v1392
        %1444 = vst.msk [vmem:[#allocation2 + $0xbc] sm:$0xf] %vm617, %v1394
        %1445 = vst.msk [vmem:[#allocation2 + $0xd0] sm:$0xf] %vm617, %v1396
        %1446 = vst.msk [vmem:[#allocation2 + $0xe4] sm:$0xf] %vm617, %v1398
        %1447 = vst.msk [vmem:[#allocation2 + $0xf8] sm:$0xf] %vm617, %v1400
        %1448 = vst.msk [vmem:[#allocation2 + $0x10c] sm:$0xf] %vm617, %v1402
        %1449 = vst.msk [vmem:[#allocation2 + $0x120] sm:$0xf] %vm617, %v1404
        %1450 = vst.msk [vmem:[#allocation2 + $0x134] sm:$0xf] %vm617, %v1406
        %1451 = vst.msk [vmem:[#allocation2 + $0x148] sm:$0xf] %vm617, %v1408
        %1452 = vst.msk [vmem:[#allocation2 + $0x15c] sm:$0xf] %vm617, %v1410
        %1453 = vst.msk [vmem:[#allocation2 + $0x170] sm:$0xf] %vm617, %v1412
        %1454 = vst.msk [vmem:[#allocation2 + $0x184] sm:$0xf] %vm617, %v1414
        %s1455 = sadd.s32 %s239, 2
        %s1456 = smul.u32 %s1455, 3
        %s1457 = smul.addr %s1456, 4
        %s1458 = scalar_lea.vmem %s236, %s1457
        %v1459 = vld [vmem:[%s1458] sm:$0xf]
        %v1460 = vld [vmem:[%s1458 + $0x4] sm:$0xf]
        %v1461 = vld [vmem:[%s1458 + $0xc] sm:$0xf]
        %v1462 = vld [vmem:[%s1458 + $0x10] sm:$0xf]
        %v1463 = vld [vmem:[%s1458 + $0x18] sm:$0xf]
        %v1464 = vld [vmem:[%s1458 + $0x1c] sm:$0xf]
        %v1465 = vld [vmem:[%s1458 + $0x24] sm:$0xf]
        %v1466 = vld [vmem:[%s1458 + $0x28] sm:$0xf]
        %v1467 = vld [vmem:[%s1458 + $0x30] sm:$0xf]
        %v1468 = vld [vmem:[%s1458 + $0x34] sm:$0xf]
        %v1469 = vld [vmem:[%s1458 + $0x3c] sm:$0xf]
        %v1470 = vld [vmem:[%s1458 + $0x40] sm:$0xf]
        %v1471 = vld [vmem:[%s1458 + $0x48] sm:$0xf]
        %v1472 = vld [vmem:[%s1458 + $0x4c] sm:$0xf]
        %v1473 = vld [vmem:[%s1458 + $0x54] sm:$0xf]
        %v1474 = vld [vmem:[%s1458 + $0x58] sm:$0xf]
        %v1475 = vld [vmem:[%s1458 + $0x60] sm:$0xf]
        %v1476 = vld [vmem:[%s1458 + $0x64] sm:$0xf]
        %v1477 = vld [vmem:[%s1458 + $0x6c] sm:$0xf]
        %v1478 = vld [vmem:[%s1458 + $0x70] sm:$0xf]
        %1479 = vst.msk [vmem:[#allocation2 + $0xc] sm:$0xf] %vm263, %v1459
        %1480 = vst.msk [vmem:[#allocation2 + $0x20] sm:$0xf] %vm263, %v1460
        %1481 = vst.msk [vmem:[#allocation2 + $0x34] sm:$0xf] %vm263, %v1461
        %1482 = vst.msk [vmem:[#allocation2 + $0x48] sm:$0xf] %vm263, %v1462
        %1483 = vst.msk [vmem:[#allocation2 + $0x5c] sm:$0xf] %vm263, %v1463
        %1484 = vst.msk [vmem:[#allocation2 + $0x70] sm:$0xf] %vm263, %v1464
        %1485 = vst.msk [vmem:[#allocation2 + $0x84] sm:$0xf] %vm263, %v1465
        %1486 = vst.msk [vmem:[#allocation2 + $0x98] sm:$0xf] %vm263, %v1466
        %1487 = vst.msk [vmem:[#allocation2 + $0xac] sm:$0xf] %vm263, %v1467
        %1488 = vst.msk [vmem:[#allocation2 + $0xc0] sm:$0xf] %vm263, %v1468
        %1489 = vst.msk [vmem:[#allocation2 + $0xd4] sm:$0xf] %vm263, %v1469
        %1490 = vst.msk [vmem:[#allocation2 + $0xe8] sm:$0xf] %vm263, %v1470
        %1491 = vst.msk [vmem:[#allocation2 + $0xfc] sm:$0xf] %vm263, %v1471
        %1492 = vst.msk [vmem:[#allocation2 + $0x110] sm:$0xf] %vm263, %v1472
        %1493 = vst.msk [vmem:[#allocation2 + $0x124] sm:$0xf] %vm263, %v1473
        %1494 = vst.msk [vmem:[#allocation2 + $0x138] sm:$0xf] %vm263, %v1474
        %1495 = vst.msk [vmem:[#allocation2 + $0x14c] sm:$0xf] %vm263, %v1475
        %1496 = vst.msk [vmem:[#allocation2 + $0x160] sm:$0xf] %vm263, %v1476
        %1497 = vst.msk [vmem:[#allocation2 + $0x174] sm:$0xf] %vm263, %v1477
        %1498 = vst.msk [vmem:[#allocation2 + $0x188] sm:$0xf] %vm263, %v1478
        %v1499 = vld [vmem:[%s1458] sm:$0xf]
        %v1500 = vld [vmem:[%s1458 + $0x4] sm:$0xf]
        %v1501 = vld [vmem:[%s1458 + $0x8] sm:$0x1]
        %v1502 = vld [vmem:[%s1458 + $0xc] sm:$0xf]
        %v1503 = vld [vmem:[%s1458 + $0x10] sm:$0xf]
        %v1504 = vld [vmem:[%s1458 + $0x14] sm:$0x1]
        %v1505 = vld [vmem:[%s1458 + $0x18] sm:$0xf]
        %v1506 = vld [vmem:[%s1458 + $0x1c] sm:$0xf]
        %v1507 = vld [vmem:[%s1458 + $0x20] sm:$0x1]
        %v1508 = vld [vmem:[%s1458 + $0x24] sm:$0xf]
        %v1509 = vld [vmem:[%s1458 + $0x28] sm:$0xf]
        %v1510 = vld [vmem:[%s1458 + $0x2c] sm:$0x1]
        %v1511 = vld [vmem:[%s1458 + $0x30] sm:$0xf]
        %v1512 = vld [vmem:[%s1458 + $0x34] sm:$0xf]
        %v1513 = vld [vmem:[%s1458 + $0x38] sm:$0x1]
        %v1514 = vld [vmem:[%s1458 + $0x3c] sm:$0xf]
        %v1515 = vld [vmem:[%s1458 + $0x40] sm:$0xf]
        %v1516 = vld [vmem:[%s1458 + $0x44] sm:$0x1]
        %v1517 = vld [vmem:[%s1458 + $0x48] sm:$0xf]
        %v1518 = vld [vmem:[%s1458 + $0x4c] sm:$0xf]
        %v1519 = vld [vmem:[%s1458 + $0x50] sm:$0x1]
        %v1520 = vld [vmem:[%s1458 + $0x54] sm:$0xf]
        %v1521 = vld [vmem:[%s1458 + $0x58] sm:$0xf]
        %v1522 = vld [vmem:[%s1458 + $0x5c] sm:$0x1]
        %v1523 = vld [vmem:[%s1458 + $0x60] sm:$0xf]
        %v1524 = vld [vmem:[%s1458 + $0x64] sm:$0xf]
        %v1525 = vld [vmem:[%s1458 + $0x68] sm:$0x1]
        %v1526 = vld [vmem:[%s1458 + $0x6c] sm:$0xf]
        %v1527 = vld [vmem:[%s1458 + $0x70] sm:$0xf]
        %v1528 = vld [vmem:[%s1458 + $0x74] sm:$0x1]
        %v1530 = vshrl.u32 %v1499, 16
        %v1532 = vrot.slane %v1530, 4
        %v1533 = vshll.u32 %v1499, 16
        %v1535 = vrot.slane %v1533, 5
        %v1536 = vor.u32 %v1532, %v1535
        %v1537 = vrot.slane %v1536, 4
        %v1539 = vshll.u32 %v1500, 16
        %v1541 = vrot.slane %v1539, 5
        %v1542 = vsel %vm316, %v1537, %v1541
        %v1543 = vshrl.u32 %v1500, 16
        %v1545 = vrot.slane %v1543, 4
        %v1546 = vor.u32 %v1545, %v1541
        %v1547 = vrot.slane %v1546, 4
        %v1549 = vshll.u32 %v1501, 16
        %v1551 = vrot.slane %v1549, 5
        %v1552 = vsel %vm316, %v1547, %v1551
        %v1554 = vshrl.u32 %v1502, 16
        %v1556 = vrot.slane %v1554, 4
        %v1557 = vshll.u32 %v1502, 16
        %v1559 = vrot.slane %v1557, 5
        %v1560 = vor.u32 %v1556, %v1559
        %v1561 = vrot.slane %v1560, 4
        %v1563 = vshll.u32 %v1503, 16
        %v1565 = vrot.slane %v1563, 5
        %v1566 = vsel %vm316, %v1561, %v1565
        %v1567 = vshrl.u32 %v1503, 16
        %v1569 = vrot.slane %v1567, 4
        %v1570 = vor.u32 %v1569, %v1565
        %v1571 = vrot.slane %v1570, 4
        %v1573 = vshll.u32 %v1504, 16
        %v1575 = vrot.slane %v1573, 5
        %v1576 = vsel %vm316, %v1571, %v1575
        %v1578 = vshrl.u32 %v1505, 16
        %v1580 = vrot.slane %v1578, 4
        %v1581 = vshll.u32 %v1505, 16
        %v1583 = vrot.slane %v1581, 5
        %v1584 = vor.u32 %v1580, %v1583
        %v1585 = vrot.slane %v1584, 4
        %v1587 = vshll.u32 %v1506, 16
        %v1589 = vrot.slane %v1587, 5
        %v1590 = vsel %vm316, %v1585, %v1589
        %v1591 = vshrl.u32 %v1506, 16
        %v1593 = vrot.slane %v1591, 4
        %v1594 = vor.u32 %v1593, %v1589
        %v1595 = vrot.slane %v1594, 4
        %v1597 = vshll.u32 %v1507, 16
        %v1599 = vrot.slane %v1597, 5
        %v1600 = vsel %vm316, %v1595, %v1599
        %v1602 = vshrl.u32 %v1508, 16
        %v1604 = vrot.slane %v1602, 4
        %v1605 = vshll.u32 %v1508, 16
        %v1607 = vrot.slane %v1605, 5
        %v1608 = vor.u32 %v1604, %v1607
        %v1609 = vrot.slane %v1608, 4
        %v1611 = vshll.u32 %v1509, 16
        %v1613 = vrot.slane %v1611, 5
        %v1614 = vsel %vm316, %v1609, %v1613
        %v1615 = vshrl.u32 %v1509, 16
        %v1617 = vrot.slane %v1615, 4
        %v1618 = vor.u32 %v1617, %v1613
        %v1619 = vrot.slane %v1618, 4
        %v1621 = vshll.u32 %v1510, 16
        %v1623 = vrot.slane %v1621, 5
        %v1624 = vsel %vm316, %v1619, %v1623
        %v1626 = vshrl.u32 %v1511, 16
        %v1628 = vrot.slane %v1626, 4
        %v1629 = vshll.u32 %v1511, 16
        %v1631 = vrot.slane %v1629, 5
        %v1632 = vor.u32 %v1628, %v1631
        %v1633 = vrot.slane %v1632, 4
        %v1635 = vshll.u32 %v1512, 16
        %v1637 = vrot.slane %v1635, 5
        %v1638 = vsel %vm316, %v1633, %v1637
        %v1639 = vshrl.u32 %v1512, 16
        %v1641 = vrot.slane %v1639, 4
        %v1642 = vor.u32 %v1641, %v1637
        %v1643 = vrot.slane %v1642, 4
        %v1645 = vshll.u32 %v1513, 16
        %v1647 = vrot.slane %v1645, 5
        %v1648 = vsel %vm316, %v1643, %v1647
        %v1650 = vshrl.u32 %v1514, 16
        %v1652 = vrot.slane %v1650, 4
        %v1653 = vshll.u32 %v1514, 16
        %v1655 = vrot.slane %v1653, 5
        %v1656 = vor.u32 %v1652, %v1655
        %v1657 = vrot.slane %v1656, 4
        %v1659 = vshll.u32 %v1515, 16
        %v1661 = vrot.slane %v1659, 5
        %v1662 = vsel %vm316, %v1657, %v1661
        %v1663 = vshrl.u32 %v1515, 16
        %v1665 = vrot.slane %v1663, 4
        %v1666 = vor.u32 %v1665, %v1661
        %v1667 = vrot.slane %v1666, 4
        %v1669 = vshll.u32 %v1516, 16
        %v1671 = vrot.slane %v1669, 5
        %v1672 = vsel %vm316, %v1667, %v1671
        %v1674 = vshrl.u32 %v1517, 16
        %v1676 = vrot.slane %v1674, 4
        %v1677 = vshll.u32 %v1517, 16
        %v1679 = vrot.slane %v1677, 5
        %v1680 = vor.u32 %v1676, %v1679
        %v1681 = vrot.slane %v1680, 4
        %v1683 = vshll.u32 %v1518, 16
        %v1685 = vrot.slane %v1683, 5
        %v1686 = vsel %vm316, %v1681, %v1685
        %v1687 = vshrl.u32 %v1518, 16
        %v1689 = vrot.slane %v1687, 4
        %v1690 = vor.u32 %v1689, %v1685
        %v1691 = vrot.slane %v1690, 4
        %v1693 = vshll.u32 %v1519, 16
        %v1695 = vrot.slane %v1693, 5
        %v1696 = vsel %vm316, %v1691, %v1695
        %v1698 = vshrl.u32 %v1520, 16
        %v1700 = vrot.slane %v1698, 4
        %v1701 = vshll.u32 %v1520, 16
        %v1703 = vrot.slane %v1701, 5
        %v1704 = vor.u32 %v1700, %v1703
        %v1705 = vrot.slane %v1704, 4
        %v1707 = vshll.u32 %v1521, 16
        %v1709 = vrot.slane %v1707, 5
        %v1710 = vsel %vm316, %v1705, %v1709
        %v1711 = vshrl.u32 %v1521, 16
        %v1713 = vrot.slane %v1711, 4
        %v1714 = vor.u32 %v1713, %v1709
        %v1715 = vrot.slane %v1714, 4
        %v1717 = vshll.u32 %v1522, 16
        %v1719 = vrot.slane %v1717, 5
        %v1720 = vsel %vm316, %v1715, %v1719
        %v1722 = vshrl.u32 %v1523, 16
        %v1724 = vrot.slane %v1722, 4
        %v1725 = vshll.u32 %v1523, 16
        %v1727 = vrot.slane %v1725, 5
        %v1728 = vor.u32 %v1724, %v1727
        %v1729 = vrot.slane %v1728, 4
        %v1731 = vshll.u32 %v1524, 16
        %v1733 = vrot.slane %v1731, 5
        %v1734 = vsel %vm316, %v1729, %v1733
        %v1735 = vshrl.u32 %v1524, 16
        %v1737 = vrot.slane %v1735, 4
        %v1738 = vor.u32 %v1737, %v1733
        %v1739 = vrot.slane %v1738, 4
        %v1741 = vshll.u32 %v1525, 16
        %v1743 = vrot.slane %v1741, 5
        %v1744 = vsel %vm316, %v1739, %v1743
        %v1746 = vshrl.u32 %v1526, 16
        %v1748 = vrot.slane %v1746, 4
        %v1749 = vshll.u32 %v1526, 16
        %v1751 = vrot.slane %v1749, 5
        %v1752 = vor.u32 %v1748, %v1751
        %v1753 = vrot.slane %v1752, 4
        %v1755 = vshll.u32 %v1527, 16
        %v1757 = vrot.slane %v1755, 5
        %v1758 = vsel %vm316, %v1753, %v1757
        %v1759 = vshrl.u32 %v1527, 16
        %v1761 = vrot.slane %v1759, 4
        %v1762 = vor.u32 %v1761, %v1757
        %v1763 = vrot.slane %v1762, 4
        %v1765 = vshll.u32 %v1528, 16
        %v1767 = vrot.slane %v1765, 5
        %v1768 = vsel %vm316, %v1763, %v1767
        %1769 = vrot.lane.b32.xlu0 %v1542, 64
        %v1770 = vpop.permute.xlu0 %1769
        %1771 = vrot.lane.b32.xlu0 %v1552, 64
        %v1772 = vpop.permute.xlu0 %1771
        %1773 = vrot.lane.b32.xlu0 %v1566, 64
        %v1774 = vpop.permute.xlu0 %1773
        %1775 = vrot.lane.b32.xlu0 %v1576, 64
        %v1776 = vpop.permute.xlu0 %1775
        %1777 = vrot.lane.b32.xlu0 %v1590, 64
        %v1778 = vpop.permute.xlu0 %1777
        %1779 = vrot.lane.b32.xlu0 %v1600, 64
        %v1780 = vpop.permute.xlu0 %1779
        %1781 = vrot.lane.b32.xlu0 %v1614, 64
        %v1782 = vpop.permute.xlu0 %1781
        %1783 = vrot.lane.b32.xlu0 %v1624, 64
        %v1784 = vpop.permute.xlu0 %1783
        %1785 = vrot.lane.b32.xlu0 %v1638, 64
        %v1786 = vpop.permute.xlu0 %1785
        %1787 = vrot.lane.b32.xlu0 %v1648, 64
        %v1788 = vpop.permute.xlu0 %1787
        %1789 = vrot.lane.b32.xlu0 %v1662, 64
        %v1790 = vpop.permute.xlu0 %1789
        %1791 = vrot.lane.b32.xlu0 %v1672, 64
        %v1792 = vpop.permute.xlu0 %1791
        %1793 = vrot.lane.b32.xlu0 %v1686, 64
        %v1794 = vpop.permute.xlu0 %1793
        %1795 = vrot.lane.b32.xlu0 %v1696, 64
        %v1796 = vpop.permute.xlu0 %1795
        %1797 = vrot.lane.b32.xlu0 %v1710, 64
        %v1798 = vpop.permute.xlu0 %1797
        %1799 = vrot.lane.b32.xlu0 %v1720, 64
        %v1800 = vpop.permute.xlu0 %1799
        %1801 = vrot.lane.b32.xlu0 %v1734, 64
        %v1802 = vpop.permute.xlu0 %1801
        %1803 = vrot.lane.b32.xlu0 %v1744, 64
        %v1804 = vpop.permute.xlu0 %1803
        %1805 = vrot.lane.b32.xlu0 %v1758, 64
        %v1806 = vpop.permute.xlu0 %1805
        %1807 = vrot.lane.b32.xlu0 %v1768, 64
        %v1808 = vpop.permute.xlu0 %1807
        %1829 = vst.msk [vmem:[#allocation2 + $0xc] sm:$0xf] %vm617, %v1770
        %1830 = vst.msk [vmem:[#allocation2 + $0x20] sm:$0xf] %vm617, %v1772
        %1831 = vst.msk [vmem:[#allocation2 + $0x34] sm:$0xf] %vm617, %v1774
        %1832 = vst.msk [vmem:[#allocation2 + $0x48] sm:$0xf] %vm617, %v1776
        %1833 = vst.msk [vmem:[#allocation2 + $0x5c] sm:$0xf] %vm617, %v1778
        %1834 = vst.msk [vmem:[#allocation2 + $0x70] sm:$0xf] %vm617, %v1780
        %1835 = vst.msk [vmem:[#allocation2 + $0x84] sm:$0xf] %vm617, %v1782
        %1836 = vst.msk [vmem:[#allocation2 + $0x98] sm:$0xf] %vm617, %v1784
        %1837 = vst.msk [vmem:[#allocation2 + $0xac] sm:$0xf] %vm617, %v1786
        %1838 = vst.msk [vmem:[#allocation2 + $0xc0] sm:$0xf] %vm617, %v1788
        %1839 = vst.msk [vmem:[#allocation2 + $0xd4] sm:$0xf] %vm617, %v1790
        %1840 = vst.msk [vmem:[#allocation2 + $0xe8] sm:$0xf] %vm617, %v1792
        %1841 = vst.msk [vmem:[#allocation2 + $0xfc] sm:$0xf] %vm617, %v1794
        %1842 = vst.msk [vmem:[#allocation2 + $0x110] sm:$0xf] %vm617, %v1796
        %1843 = vst.msk [vmem:[#allocation2 + $0x124] sm:$0xf] %vm617, %v1798
        %1844 = vst.msk [vmem:[#allocation2 + $0x138] sm:$0xf] %vm617, %v1800
        %1845 = vst.msk [vmem:[#allocation2 + $0x14c] sm:$0xf] %vm617, %v1802
        %1846 = vst.msk [vmem:[#allocation2 + $0x160] sm:$0xf] %vm617, %v1804
        %1847 = vst.msk [vmem:[#allocation2 + $0x174] sm:$0xf] %vm617, %v1806
        %1848 = vst.msk [vmem:[#allocation2 + $0x188] sm:$0xf] %vm617, %v1808
        %v1849 = vld [vmem:[%s1458] sm:$0xe]
        %v1850 = vld [vmem:[%s1458 + $0x4] sm:$0xf]
        %v1851 = vld [vmem:[%s1458 + $0x8] sm:$0x1]
        %v1852 = vld [vmem:[%s1458 + $0xc] sm:$0xe]
        %v1853 = vld [vmem:[%s1458 + $0x10] sm:$0xf]
        %v1854 = vld [vmem:[%s1458 + $0x14] sm:$0x1]
        %v1855 = vld [vmem:[%s1458 + $0x18] sm:$0xe]
        %v1856 = vld [vmem:[%s1458 + $0x1c] sm:$0xf]
        %v1857 = vld [vmem:[%s1458 + $0x20] sm:$0x1]
        %v1858 = vld [vmem:[%s1458 + $0x24] sm:$0xe]
        %v1859 = vld [vmem:[%s1458 + $0x28] sm:$0xf]
        %v1860 = vld [vmem:[%s1458 + $0x2c] sm:$0x1]
        %v1861 = vld [vmem:[%s1458 + $0x30] sm:$0xe]
        %v1862 = vld [vmem:[%s1458 + $0x34] sm:$0xf]
        %v1863 = vld [vmem:[%s1458 + $0x38] sm:$0x1]
        %v1864 = vld [vmem:[%s1458 + $0x3c] sm:$0xe]
        %v1865 = vld [vmem:[%s1458 + $0x40] sm:$0xf]
        %v1866 = vld [vmem:[%s1458 + $0x44] sm:$0x1]
        %v1867 = vld [vmem:[%s1458 + $0x48] sm:$0xe]
        %v1868 = vld [vmem:[%s1458 + $0x4c] sm:$0xf]
        %v1869 = vld [vmem:[%s1458 + $0x50] sm:$0x1]
        %v1870 = vld [vmem:[%s1458 + $0x54] sm:$0xe]
        %v1871 = vld [vmem:[%s1458 + $0x58] sm:$0xf]
        %v1872 = vld [vmem:[%s1458 + $0x5c] sm:$0x1]
        %v1873 = vld [vmem:[%s1458 + $0x60] sm:$0xe]
        %v1874 = vld [vmem:[%s1458 + $0x64] sm:$0xf]
        %v1875 = vld [vmem:[%s1458 + $0x68] sm:$0x1]
        %v1876 = vld [vmem:[%s1458 + $0x6c] sm:$0xe]
        %v1877 = vld [vmem:[%s1458 + $0x70] sm:$0xf]
        %v1878 = vld [vmem:[%s1458 + $0x74] sm:$0x1]
        %v1909 = vrot.slane %v1849, 5
        %v1910 = vrot.slane %v1909, 4
        %v1911 = vrot.slane %v1850, 5
        %v1912 = vsel %vm700, %v1910, %v1911
        %v1913 = vrot.slane %v1911, 4
        %v1914 = vrot.slane %v1851, 5
        %v1915 = vsel %vm700, %v1913, %v1914
        %v1916 = vrot.slane %v1852, 5
        %v1917 = vrot.slane %v1916, 4
        %v1918 = vrot.slane %v1853, 5
        %v1919 = vsel %vm700, %v1917, %v1918
        %v1920 = vrot.slane %v1918, 4
        %v1921 = vrot.slane %v1854, 5
        %v1922 = vsel %vm700, %v1920, %v1921
        %v1923 = vrot.slane %v1855, 5
        %v1924 = vrot.slane %v1923, 4
        %v1925 = vrot.slane %v1856, 5
        %v1926 = vsel %vm700, %v1924, %v1925
        %v1927 = vrot.slane %v1925, 4
        %v1928 = vrot.slane %v1857, 5
        %v1929 = vsel %vm700, %v1927, %v1928
        %v1930 = vrot.slane %v1858, 5
        %v1931 = vrot.slane %v1930, 4
        %v1932 = vrot.slane %v1859, 5
        %v1933 = vsel %vm700, %v1931, %v1932
        %v1934 = vrot.slane %v1932, 4
        %v1935 = vrot.slane %v1860, 5
        %v1936 = vsel %vm700, %v1934, %v1935
        %v1937 = vrot.slane %v1861, 5
        %v1938 = vrot.slane %v1937, 4
        %v1939 = vrot.slane %v1862, 5
        %v1940 = vsel %vm700, %v1938, %v1939
        %v1941 = vrot.slane %v1939, 4
        %v1942 = vrot.slane %v1863, 5
        %v1943 = vsel %vm700, %v1941, %v1942
        %v1944 = vrot.slane %v1864, 5
        %v1945 = vrot.slane %v1944, 4
        %v1946 = vrot.slane %v1865, 5
        %v1947 = vsel %vm700, %v1945, %v1946
        %v1948 = vrot.slane %v1946, 4
        %v1949 = vrot.slane %v1866, 5
        %v1950 = vsel %vm700, %v1948, %v1949
        %v1951 = vrot.slane %v1867, 5
        %v1952 = vrot.slane %v1951, 4
        %v1953 = vrot.slane %v1868, 5
        %v1954 = vsel %vm700, %v1952, %v1953
        %v1955 = vrot.slane %v1953, 4
        %v1956 = vrot.slane %v1869, 5
        %v1957 = vsel %vm700, %v1955, %v1956
        %v1958 = vrot.slane %v1870, 5
        %v1959 = vrot.slane %v1958, 4
        %v1960 = vrot.slane %v1871, 5
        %v1961 = vsel %vm700, %v1959, %v1960
        %v1962 = vrot.slane %v1960, 4
        %v1963 = vrot.slane %v1872, 5
        %v1964 = vsel %vm700, %v1962, %v1963
        %v1965 = vrot.slane %v1873, 5
        %v1966 = vrot.slane %v1965, 4
        %v1967 = vrot.slane %v1874, 5
        %v1968 = vsel %vm700, %v1966, %v1967
        %v1969 = vrot.slane %v1967, 4
        %v1970 = vrot.slane %v1875, 5
        %v1971 = vsel %vm700, %v1969, %v1970
        %v1972 = vrot.slane %v1876, 5
        %v1973 = vrot.slane %v1972, 4
        %v1974 = vrot.slane %v1877, 5
        %v1975 = vsel %vm700, %v1973, %v1974
        %v1976 = vrot.slane %v1974, 4
        %v1977 = vrot.slane %v1878, 5
        %v1978 = vsel %vm700, %v1976, %v1977
        %1999 = vst.msk [vmem:[#allocation2 + $0x10] sm:$0xf] %vm263, %v1912
        %2000 = vst.msk [vmem:[#allocation2 + $0x24] sm:$0xf] %vm263, %v1915
        %2001 = vst.msk [vmem:[#allocation2 + $0x38] sm:$0xf] %vm263, %v1919
        %2002 = vst.msk [vmem:[#allocation2 + $0x4c] sm:$0xf] %vm263, %v1922
        %2003 = vst.msk [vmem:[#allocation2 + $0x60] sm:$0xf] %vm263, %v1926
        %2004 = vst.msk [vmem:[#allocation2 + $0x74] sm:$0xf] %vm263, %v1929
        %2005 = vst.msk [vmem:[#allocation2 + $0x88] sm:$0xf] %vm263, %v1933
        %2006 = vst.msk [vmem:[#allocation2 + $0x9c] sm:$0xf] %vm263, %v1936
        %2007 = vst.msk [vmem:[#allocation2 + $0xb0] sm:$0xf] %vm263, %v1940
        %2008 = vst.msk [vmem:[#allocation2 + $0xc4] sm:$0xf] %vm263, %v1943
        %2009 = vst.msk [vmem:[#allocation2 + $0xd8] sm:$0xf] %vm263, %v1947
        %2010 = vst.msk [vmem:[#allocation2 + $0xec] sm:$0xf] %vm263, %v1950
        %2011 = vst.msk [vmem:[#allocation2 + $0x100] sm:$0xf] %vm263, %v1954
        %2012 = vst.msk [vmem:[#allocation2 + $0x114] sm:$0xf] %vm263, %v1957
        %2013 = vst.msk [vmem:[#allocation2 + $0x128] sm:$0xf] %vm263, %v1961
        %2014 = vst.msk [vmem:[#allocation2 + $0x13c] sm:$0xf] %vm263, %v1964
        %2015 = vst.msk [vmem:[#allocation2 + $0x150] sm:$0xf] %vm263, %v1968
        %2016 = vst.msk [vmem:[#allocation2 + $0x164] sm:$0xf] %vm263, %v1971
        %2017 = vst.msk [vmem:[#allocation2 + $0x178] sm:$0xf] %vm263, %v1975
        %2018 = vst.msk [vmem:[#allocation2 + $0x18c] sm:$0xf] %vm263, %v1978
        %v2019 = vld [vmem:[#allocation2] sm:$0xff]
        %v2020 = vld [vmem:[#allocation2 + $0x8] sm:$0xff]
        %v2021 = vld [vmem:[#allocation2 + $0x10] sm:$0xf]
        %v2022 = vld [vmem:[#allocation2 + $0x14] sm:$0xff]
        %v2023 = vld [vmem:[#allocation2 + $0x1c] sm:$0xff]
        %v2024 = vld [vmem:[#allocation2 + $0x24] sm:$0xf]
        %v2025 = vld [vmem:[#allocation2 + $0x28] sm:$0xff]
        %v2026 = vld [vmem:[#allocation2 + $0x30] sm:$0xff]
        %v2027 = vld [vmem:[#allocation2 + $0x38] sm:$0xf]
        %v2028 = vld [vmem:[#allocation2 + $0x3c] sm:$0xff]
        %v2029 = vld [vmem:[#allocation2 + $0x44] sm:$0xff]
        %v2030 = vld [vmem:[#allocation2 + $0x4c] sm:$0xf]
        %v2031 = vld [vmem:[#allocation2 + $0x50] sm:$0xff]
        %v2032 = vld [vmem:[#allocation2 + $0x58] sm:$0xff]
        %v2033 = vld [vmem:[#allocation2 + $0x60] sm:$0xf]
        %v2034 = vld [vmem:[#allocation2 + $0x64] sm:$0xff]
        %v2035 = vld [vmem:[#allocation2 + $0x6c] sm:$0xff]
        %v2036 = vld [vmem:[#allocation2 + $0x74] sm:$0xf]
        %v2037 = vld [vmem:[#allocation2 + $0x78] sm:$0xff]
        %v2038 = vld [vmem:[#allocation2 + $0x80] sm:$0xff]
        %v2039 = vld [vmem:[#allocation2 + $0x88] sm:$0xf]
        %v2040 = vld [vmem:[#allocation2 + $0x8c] sm:$0xff]
        %v2041 = vld [vmem:[#allocation2 + $0x94] sm:$0xff]
        %v2042 = vld [vmem:[#allocation2 + $0x9c] sm:$0xf]
        %v2043 = vld [vmem:[#allocation2 + $0xa0] sm:$0xff]
        %v2044 = vld [vmem:[#allocation2 + $0xa8] sm:$0xff]
        %v2045 = vld [vmem:[#allocation2 + $0xb0] sm:$0xf]
        %v2046 = vld [vmem:[#allocation2 + $0xb4] sm:$0xff]
        %v2047 = vld [vmem:[#allocation2 + $0xbc] sm:$0xff]
        %v2048 = vld [vmem:[#allocation2 + $0xc4] sm:$0xf]
        %v2049 = vld [vmem:[#allocation2 + $0xc8] sm:$0xff]
        %v2050 = vld [vmem:[#allocation2 + $0xd0] sm:$0xff]
        %v2051 = vld [vmem:[#allocation2 + $0xd8] sm:$0xf]
        %v2052 = vld [vmem:[#allocation2 + $0xdc] sm:$0xff]
        %v2053 = vld [vmem:[#allocation2 + $0xe4] sm:$0xff]
        %v2054 = vld [vmem:[#allocation2 + $0xec] sm:$0xf]
        %v2055 = vld [vmem:[#allocation2 + $0xf0] sm:$0xff]
        %v2056 = vld [vmem:[#allocation2 + $0xf8] sm:$0xff]
        %v2057 = vld [vmem:[#allocation2 + $0x100] sm:$0xf]
        %v2058 = vld [vmem:[#allocation2 + $0x104] sm:$0xff]
        %v2059 = vld [vmem:[#allocation2 + $0x10c] sm:$0xff]
        %v2060 = vld [vmem:[#allocation2 + $0x114] sm:$0xf]
        %v2061 = vld [vmem:[#allocation2 + $0x118] sm:$0xff]
        %v2062 = vld [vmem:[#allocation2 + $0x120] sm:$0xff]
        %v2063 = vld [vmem:[#allocation2 + $0x128] sm:$0xf]
        %v2064 = vld [vmem:[#allocation2 + $0x12c] sm:$0xff]
        %v2065 = vld [vmem:[#allocation2 + $0x134] sm:$0xff]
        %v2066 = vld [vmem:[#allocation2 + $0x13c] sm:$0xf]
        %v2067 = vld [vmem:[#allocation2 + $0x140] sm:$0xff]
        %v2068 = vld [vmem:[#allocation2 + $0x148] sm:$0xff]
        %v2069 = vld [vmem:[#allocation2 + $0x150] sm:$0xf]
        %v2070 = vld [vmem:[#allocation2 + $0x154] sm:$0xff]
        %v2071 = vld [vmem:[#allocation2 + $0x15c] sm:$0xff]
        %v2072 = vld [vmem:[#allocation2 + $0x164] sm:$0xf]
        %v2073 = vld [vmem:[#allocation2 + $0x168] sm:$0xff]
        %v2074 = vld [vmem:[#allocation2 + $0x170] sm:$0xff]
        %v2075 = vld [vmem:[#allocation2 + $0x178] sm:$0xf]
        %v2076 = vld [vmem:[#allocation2 + $0x17c] sm:$0xff]
        %v2077 = vld [vmem:[#allocation2 + $0x184] sm:$0xff]
        %v2078 = vld [vmem:[#allocation2 + $0x18c] sm:$0xf]
        %v2079 = vld [vmem:[%s1] sm:$0xf]
        %v2080 = vld [vmem:[%s1 + $0x4] sm:$0xf]
        %v2081 = vld [vmem:[%s1 + $0x8] sm:$0xf]
        %v2082 = vld [vmem:[%s1 + $0xc] sm:$0xf]
        %v2083 = vld [vmem:[%s1 + $0x10] sm:$0xf]
        %v2084 = vld [vmem:[%s1 + $0x14] sm:$0xf]
        %v2085 = vld [vmem:[%s1 + $0x18] sm:$0xf]
        %v2086 = vld [vmem:[%s1 + $0x1c] sm:$0xf]
        %v2087 = vld [vmem:[%s1 + $0x20] sm:$0xf]
        %v2088 = vld [vmem:[%s1 + $0x24] sm:$0xf]
        %v2089 = vld [vmem:[%s1 + $0x28] sm:$0xf]
        %v2090 = vld [vmem:[%s1 + $0x2c] sm:$0xf]
        %v2091 = vld [vmem:[%s1 + $0x30] sm:$0xf]
        %v2092 = vld [vmem:[%s1 + $0x34] sm:$0xf]
        %v2093 = vld [vmem:[%s1 + $0x38] sm:$0xf]
        %v2094 = vld [vmem:[%s1 + $0x3c] sm:$0xf]
        %v2095 = vld [vmem:[%s1 + $0x40] sm:$0xf]
        %v2096 = vld [vmem:[%s1 + $0x44] sm:$0xf]
        %v2097 = vld [vmem:[%s1 + $0x48] sm:$0xf]
        %v2098 = vld [vmem:[%s1 + $0x4c] sm:$0xf]
        %v2099 = vld [vmem:[%s1 + $0x50] sm:$0xf]
        %v2100 = vld [vmem:[%s1 + $0x54] sm:$0xf]
        %v2101 = vld [vmem:[%s1 + $0x58] sm:$0xf]
        %v2102 = vld [vmem:[%s1 + $0x5c] sm:$0xf]
        %v2103 = vld [vmem:[%s1 + $0x60] sm:$0xf]
        %v2104 = vld [vmem:[%s1 + $0x64] sm:$0xf]
        %v2105 = vld [vmem:[%s1 + $0x68] sm:$0xf]
        %v2106 = vld [vmem:[%s1 + $0x6c] sm:$0xf]
        %v2107 = vld [vmem:[%s1 + $0x70] sm:$0xf]
        %v2108 = vld [vmem:[%s1 + $0x74] sm:$0xf]
        %v2109 = vld [vmem:[%s1 + $0x78] sm:$0xf]
        %v2110 = vld [vmem:[%s1 + $0x7c] sm:$0xf]
        %v2111 = vld [vmem:[%s1 + $0x80] sm:$0xf]
        %v2112 = vld [vmem:[%s1 + $0x84] sm:$0xf]
        %v2113 = vld [vmem:[%s1 + $0x88] sm:$0xf]
        %v2114 = vld [vmem:[%s1 + $0x8c] sm:$0xf]
        %v2115 = vld [vmem:[%s1 + $0x90] sm:$0xf]
        %v2116 = vld [vmem:[%s1 + $0x94] sm:$0xf]
        %v2117 = vld [vmem:[%s1 + $0x98] sm:$0xf]
        %v2118 = vld [vmem:[%s1 + $0x9c] sm:$0xf]
        %v2119 = vld [vmem:[%s1 + $0xa0] sm:$0xf]
        %v2120 = vld [vmem:[%s1 + $0xa4] sm:$0xf]
        %v2121 = vld [vmem:[%s1 + $0xa8] sm:$0xf]
        %v2122 = vld [vmem:[%s1 + $0xac] sm:$0xf]
        %v2123 = vld [vmem:[%s1 + $0xb0] sm:$0xf]
        %v2124 = vld [vmem:[%s1 + $0xb4] sm:$0xf]
        %v2125 = vld [vmem:[%s1 + $0xb8] sm:$0xf]
        %v2126 = vld [vmem:[%s1 + $0xbc] sm:$0xf]
        %v2127 = vld [vmem:[%s1 + $0xc0] sm:$0xf]
        %v2128 = vld [vmem:[%s1 + $0xc4] sm:$0xf]
        %v2129 = vld [vmem:[%s1 + $0xc8] sm:$0xf]
        %v2130 = vld [vmem:[%s1 + $0xcc] sm:$0xf]
        %v2131 = vld [vmem:[%s1 + $0xd0] sm:$0xf]
        %v2132 = vld [vmem:[%s1 + $0xd4] sm:$0xf]
        %v2133 = vld [vmem:[%s1 + $0xd8] sm:$0xf]
        %v2134 = vld [vmem:[%s1 + $0xdc] sm:$0xf]
        %v2135 = vld [vmem:[%s1 + $0xe0] sm:$0xf]
        %v2136 = vld [vmem:[%s1 + $0xe4] sm:$0xf]
        %v2137 = vld [vmem:[%s1 + $0xe8] sm:$0xf]
        %v2138 = vld [vmem:[%s1 + $0xec] sm:$0xf]
        %v2139 = vld [vmem:[%s1 + $0xf0] sm:$0xf]
        %v2140 = vld [vmem:[%s1 + $0xf4] sm:$0xf]
        %v2141 = vld [vmem:[%s1 + $0xf8] sm:$0xf]
        %v2142 = vld [vmem:[%s1 + $0xfc] sm:$0xf]
        %v2143 = vld [vmem:[%s1 + $0x100] sm:$0xf]
        %v2144 = vld [vmem:[%s1 + $0x104] sm:$0xf]
        %v2145 = vld [vmem:[%s1 + $0x108] sm:$0xf]
        %v2146 = vld [vmem:[%s1 + $0x10c] sm:$0xf]
        %v2147 = vld [vmem:[%s1 + $0x110] sm:$0xf]
        %v2148 = vld [vmem:[%s1 + $0x114] sm:$0xf]
        %v2149 = vld [vmem:[%s1 + $0x118] sm:$0xf]
        %v2150 = vld [vmem:[%s1 + $0x11c] sm:$0xf]
        %v2151 = vld [vmem:[%s2] sm:$0x1]
        %v2153 = vperm.slane %v2151, 0
        %v2215 = vunpack.c.l.b16 %v2019
        %v2216 = vunpack.c.h.b16 %v2019
        %v2217 = vunpack.c.l.b16 %v2020
        %v2218 = vunpack.c.h.b16 %v2020
        %v2219 = vunpack.c.l.b16 %v2021
        %v2220 = vunpack.c.l.b16 %v2022
        %v2221 = vunpack.c.h.b16 %v2022
        %v2222 = vunpack.c.l.b16 %v2023
        %v2223 = vunpack.c.h.b16 %v2023
        %v2224 = vunpack.c.l.b16 %v2024
        %v2225 = vunpack.c.l.b16 %v2025
        %v2226 = vunpack.c.h.b16 %v2025
        %v2227 = vunpack.c.l.b16 %v2026
        %v2228 = vunpack.c.h.b16 %v2026
        %v2229 = vunpack.c.l.b16 %v2027
        %v2230 = vunpack.c.l.b16 %v2028
        %v2231 = vunpack.c.h.b16 %v2028
        %v2232 = vunpack.c.l.b16 %v2029
        %v2233 = vunpack.c.h.b16 %v2029
        %v2234 = vunpack.c.l.b16 %v2030
        %v2235 = vunpack.c.l.b16 %v2031
        %v2236 = vunpack.c.h.b16 %v2031
        %v2237 = vunpack.c.l.b16 %v2032
        %v2238 = vunpack.c.h.b16 %v2032
        %v2239 = vunpack.c.l.b16 %v2033
        %v2240 = vunpack.c.l.b16 %v2034
        %v2241 = vunpack.c.h.b16 %v2034
        %v2242 = vunpack.c.l.b16 %v2035
        %v2243 = vunpack.c.h.b16 %v2035
        %v2244 = vunpack.c.l.b16 %v2036
        %v2245 = vunpack.c.l.b16 %v2037
        %v2246 = vunpack.c.h.b16 %v2037
        %v2247 = vunpack.c.l.b16 %v2038
        %v2248 = vunpack.c.h.b16 %v2038
        %v2249 = vunpack.c.l.b16 %v2039
        %v2250 = vunpack.c.l.b16 %v2040
        %v2251 = vunpack.c.h.b16 %v2040
        %v2252 = vunpack.c.l.b16 %v2041
        %v2253 = vunpack.c.h.b16 %v2041
        %v2254 = vunpack.c.l.b16 %v2042
        %v2255 = vunpack.c.l.b16 %v2043
        %v2256 = vunpack.c.h.b16 %v2043
        %v2257 = vunpack.c.l.b16 %v2044
        %v2258 = vunpack.c.h.b16 %v2044
        %v2259 = vunpack.c.l.b16 %v2045
        %v2260 = vunpack.c.l.b16 %v2046
        %v2261 = vunpack.c.h.b16 %v2046
        %v2262 = vunpack.c.l.b16 %v2047
        %v2263 = vunpack.c.h.b16 %v2047
        %v2264 = vunpack.c.l.b16 %v2048
        %v2265 = vunpack.c.l.b16 %v2049
        %v2266 = vunpack.c.h.b16 %v2049
        %v2267 = vunpack.c.l.b16 %v2050
        %v2268 = vunpack.c.h.b16 %v2050
        %v2269 = vunpack.c.l.b16 %v2051
        %v2270 = vunpack.c.l.b16 %v2052
        %v2271 = vunpack.c.h.b16 %v2052
        %v2272 = vunpack.c.l.b16 %v2053
        %v2273 = vunpack.c.h.b16 %v2053
        %v2274 = vunpack.c.l.b16 %v2054
        %v2275 = vunpack.c.l.b16 %v2055
        %v2276 = vunpack.c.h.b16 %v2055
        %v2277 = vunpack.c.l.b16 %v2056
        %v2278 = vunpack.c.h.b16 %v2056
        %v2279 = vunpack.c.l.b16 %v2057
        %v2280 = vunpack.c.l.b16 %v2058
        %v2281 = vunpack.c.h.b16 %v2058
        %v2282 = vunpack.c.l.b16 %v2059
        %v2283 = vunpack.c.h.b16 %v2059
        %v2284 = vunpack.c.l.b16 %v2060
        %v2285 = vunpack.c.l.b16 %v2061
        %v2286 = vunpack.c.h.b16 %v2061
        %v2287 = vunpack.c.l.b16 %v2062
        %v2288 = vunpack.c.h.b16 %v2062
        %v2289 = vunpack.c.l.b16 %v2063
        %v2290 = vunpack.c.l.b16 %v2064
        %v2291 = vunpack.c.h.b16 %v2064
        %v2292 = vunpack.c.l.b16 %v2065
        %v2293 = vunpack.c.h.b16 %v2065
        %v2294 = vunpack.c.l.b16 %v2066
        %v2295 = vunpack.c.l.b16 %v2067
        %v2296 = vunpack.c.h.b16 %v2067
        %v2297 = vunpack.c.l.b16 %v2068
        %v2298 = vunpack.c.h.b16 %v2068
        %v2299 = vunpack.c.l.b16 %v2069
        %v2300 = vunpack.c.l.b16 %v2070
        %v2301 = vunpack.c.h.b16 %v2070
        %v2302 = vunpack.c.l.b16 %v2071
        %v2303 = vunpack.c.h.b16 %v2071
        %v2304 = vunpack.c.l.b16 %v2072
        %v2305 = vunpack.c.l.b16 %v2073
        %v2306 = vunpack.c.h.b16 %v2073
        %v2307 = vunpack.c.l.b16 %v2074
        %v2308 = vunpack.c.h.b16 %v2074
        %v2309 = vunpack.c.l.b16 %v2075
        %v2310 = vunpack.c.l.b16 %v2076
        %v2311 = vunpack.c.h.b16 %v2076
        %v2312 = vunpack.c.l.b16 %v2077
        %v2313 = vunpack.c.h.b16 %v2077
        %v2314 = vunpack.c.l.b16 %v2078
        %v2315 = vpack.c.b16 %v2220, %v2215
        %v2316 = vpack.c.b16 %v2221, %v2216
        %v2317 = vpack.c.b16 %v2222, %v2217
        %v2318 = vpack.c.b16 %v2223, %v2218
        %v2319 = vpack.c.b16 %v2224, %v2219
        %v2320 = vpack.c.b16 %v2230, %v2225
        %v2321 = vpack.c.b16 %v2231, %v2226
        %v2322 = vpack.c.b16 %v2232, %v2227
        %v2323 = vpack.c.b16 %v2233, %v2228
        %v2324 = vpack.c.b16 %v2234, %v2229
        %v2325 = vpack.c.b16 %v2240, %v2235
        %v2326 = vpack.c.b16 %v2241, %v2236
        %v2327 = vpack.c.b16 %v2242, %v2237
        %v2328 = vpack.c.b16 %v2243, %v2238
        %v2329 = vpack.c.b16 %v2244, %v2239
        %v2330 = vpack.c.b16 %v2250, %v2245
        %v2331 = vpack.c.b16 %v2251, %v2246
        %v2332 = vpack.c.b16 %v2252, %v2247
        %v2333 = vpack.c.b16 %v2253, %v2248
        %v2334 = vpack.c.b16 %v2254, %v2249
        %v2335 = vpack.c.b16 %v2260, %v2255
        %v2336 = vpack.c.b16 %v2261, %v2256
        %v2337 = vpack.c.b16 %v2262, %v2257
        %v2338 = vpack.c.b16 %v2263, %v2258
        %v2339 = vpack.c.b16 %v2264, %v2259
        %v2340 = vpack.c.b16 %v2270, %v2265
        %v2341 = vpack.c.b16 %v2271, %v2266
        %v2342 = vpack.c.b16 %v2272, %v2267
        %v2343 = vpack.c.b16 %v2273, %v2268
        %v2344 = vpack.c.b16 %v2274, %v2269
        %v2345 = vpack.c.b16 %v2280, %v2275
        %v2346 = vpack.c.b16 %v2281, %v2276
        %v2347 = vpack.c.b16 %v2282, %v2277
        %v2348 = vpack.c.b16 %v2283, %v2278
        %v2349 = vpack.c.b16 %v2284, %v2279
        %v2350 = vpack.c.b16 %v2290, %v2285
        %v2351 = vpack.c.b16 %v2291, %v2286
        %v2352 = vpack.c.b16 %v2292, %v2287
        %v2353 = vpack.c.b16 %v2293, %v2288
        %v2354 = vpack.c.b16 %v2294, %v2289
        %v2355 = vpack.c.b16 %v2300, %v2295
        %v2356 = vpack.c.b16 %v2301, %v2296
        %v2357 = vpack.c.b16 %v2302, %v2297
        %v2358 = vpack.c.b16 %v2303, %v2298
        %v2359 = vpack.c.b16 %v2304, %v2299
        %v2360 = vpack.c.b16 %v2310, %v2305
        %v2361 = vpack.c.b16 %v2311, %v2306
        %v2362 = vpack.c.b16 %v2312, %v2307
        %v2363 = vpack.c.b16 %v2313, %v2308
        %v2364 = vpack.c.b16 %v2314, %v2309
        %v2477 = vunpack.c.l.b16 %v2079
        %v2478 = vunpack.c.l.b16 %v2080
        %v2479 = vunpack.c.l.b16 %v2081
        %v2480 = vunpack.c.l.b16 %v2082
        %v2481 = vunpack.c.l.b16 %v2083
        %v2482 = vunpack.c.l.b16 %v2084
        %v2483 = vunpack.c.l.b16 %v2085
        %v2484 = vunpack.c.l.b16 %v2086
        %v2485 = vunpack.c.l.b16 %v2087
        %v2486 = vunpack.c.l.b16 %v2088
        %v2487 = vunpack.c.l.b16 %v2089
        %v2488 = vunpack.c.l.b16 %v2090
        %v2489 = vunpack.c.l.b16 %v2091
        %v2490 = vunpack.c.l.b16 %v2092
        %v2491 = vunpack.c.l.b16 %v2093
        %v2492 = vunpack.c.l.b16 %v2094
        %v2493 = vunpack.c.l.b16 %v2095
        %v2494 = vunpack.c.l.b16 %v2096
        %v2495 = vunpack.c.l.b16 %v2097
        %v2496 = vunpack.c.l.b16 %v2098
        %v2497 = vunpack.c.l.b16 %v2099
        %v2498 = vunpack.c.l.b16 %v2100
        %v2499 = vunpack.c.l.b16 %v2101
        %v2500 = vunpack.c.l.b16 %v2102
        %v2501 = vunpack.c.l.b16 %v2103
        %v2502 = vunpack.c.l.b16 %v2104
        %v2503 = vunpack.c.l.b16 %v2105
        %v2504 = vunpack.c.l.b16 %v2106
        %v2505 = vunpack.c.l.b16 %v2107
        %v2506 = vunpack.c.l.b16 %v2108
        %v2507 = vunpack.c.l.b16 %v2109
        %v2508 = vunpack.c.l.b16 %v2110
        %v2509 = vunpack.c.l.b16 %v2111
        %v2510 = vunpack.c.l.b16 %v2112
        %v2511 = vunpack.c.l.b16 %v2113
        %v2512 = vunpack.c.l.b16 %v2114
        %v2513 = vunpack.c.l.b16 %v2115
        %v2514 = vunpack.c.l.b16 %v2116
        %v2515 = vunpack.c.l.b16 %v2117
        %v2516 = vunpack.c.l.b16 %v2118
        %v2517 = vunpack.c.l.b16 %v2119
        %v2518 = vunpack.c.l.b16 %v2120
        %v2519 = vunpack.c.l.b16 %v2121
        %v2520 = vunpack.c.l.b16 %v2122
        %v2521 = vunpack.c.l.b16 %v2123
        %v2522 = vunpack.c.l.b16 %v2124
        %v2523 = vunpack.c.l.b16 %v2125
        %v2524 = vunpack.c.l.b16 %v2126
        %v2525 = vunpack.c.l.b16 %v2127
        %v2526 = vunpack.c.l.b16 %v2128
        %v2527 = vunpack.c.l.b16 %v2129
        %v2528 = vunpack.c.l.b16 %v2130
        %v2529 = vunpack.c.l.b16 %v2131
        %v2530 = vunpack.c.l.b16 %v2132
        %v2531 = vunpack.c.l.b16 %v2133
        %v2532 = vunpack.c.l.b16 %v2134
        %v2533 = vunpack.c.l.b16 %v2135
        %v2534 = vunpack.c.l.b16 %v2136
        %v2535 = vunpack.c.l.b16 %v2137
        %v2536 = vunpack.c.l.b16 %v2138
        %v2537 = vunpack.c.l.b16 %v2139
        %v2538 = vunpack.c.l.b16 %v2140
        %v2539 = vunpack.c.l.b16 %v2141
        %v2540 = vunpack.c.l.b16 %v2142
        %v2541 = vunpack.c.l.b16 %v2143
        %v2542 = vunpack.c.l.b16 %v2144
        %v2543 = vunpack.c.l.b16 %v2145
        %v2544 = vunpack.c.l.b16 %v2146
        %v2545 = vunpack.c.l.b16 %v2147
        %v2546 = vunpack.c.l.b16 %v2148
        %v2547 = vunpack.c.l.b16 %v2149
        %v2548 = vunpack.c.l.b16 %v2150
        %v2549 = vpack.c.b16 %v2478, %v2477
        %v2550 = vpack.c.b16 %v2480, %v2479
        %v2551 = vpack.c.b16 %v2482, %v2481
        %v2552 = vpack.c.b16 %v2484, %v2483
        %v2553 = vpack.c.b16 %v2486, %v2485
        %v2554 = vpack.c.b16 %v2488, %v2487
        %v2555 = vpack.c.b16 %v2490, %v2489
        %v2556 = vpack.c.b16 %v2492, %v2491
        %v2557 = vpack.c.b16 %v2494, %v2493
        %v2558 = vpack.c.b16 %v2496, %v2495
        %v2559 = vpack.c.b16 %v2498, %v2497
        %v2560 = vpack.c.b16 %v2500, %v2499
        %v2561 = vpack.c.b16 %v2502, %v2501
        %v2562 = vpack.c.b16 %v2504, %v2503
        %v2563 = vpack.c.b16 %v2506, %v2505
        %v2564 = vpack.c.b16 %v2508, %v2507
        %v2565 = vpack.c.b16 %v2510, %v2509
        %v2566 = vpack.c.b16 %v2512, %v2511
        %v2567 = vpack.c.b16 %v2514, %v2513
        %v2568 = vpack.c.b16 %v2516, %v2515
        %v2569 = vpack.c.b16 %v2518, %v2517
        %v2570 = vpack.c.b16 %v2520, %v2519
        %v2571 = vpack.c.b16 %v2522, %v2521
        %v2572 = vpack.c.b16 %v2524, %v2523
        %v2573 = vpack.c.b16 %v2526, %v2525
        %v2574 = vpack.c.b16 %v2528, %v2527
        %v2575 = vpack.c.b16 %v2530, %v2529
        %v2576 = vpack.c.b16 %v2532, %v2531
        %v2577 = vpack.c.b16 %v2534, %v2533
        %v2578 = vpack.c.b16 %v2536, %v2535
        %v2579 = vpack.c.b16 %v2538, %v2537
        %v2580 = vpack.c.b16 %v2540, %v2539
        %v2581 = vpack.c.b16 %v2542, %v2541
        %v2582 = vpack.c.b16 %v2544, %v2543
        %v2583 = vpack.c.b16 %v2546, %v2545
        %v2584 = vpack.c.b16 %v2548, %v2547
        %vm2621 = vcmask 523264
        %v2623 = vsel %vm2621, %v2319, 0
        %v2626 = vsel %vm2621, %v2324, 0
        %v2629 = vsel %vm2621, %v2329, 0
        %v2632 = vsel %vm2621, %v2334, 0
        %v2635 = vsel %vm2621, %v2339, 0
        %v2638 = vsel %vm2621, %v2344, 0
        %v2641 = vsel %vm2621, %v2349, 0
        %v2644 = vsel %vm2621, %v2354, 0
        %v2647 = vsel %vm2621, %v2359, 0
        %v2650 = vsel %vm2621, %v2364, 0
        %2652 = vmatpush.bf16.msra.mxu0 %v2556
        %2653 = vmatpush.bf16.msra.mxu0 %v2555
        %2654 = vmatpush.bf16.msra.mxu0 %v2554
        %2655 = vmatpush.bf16.msra.mxu0 %v2553
        %2656 = vmatpush.bf16.msra.mxu0 %v2552
        %2657 = vmatpush.bf16.msra.mxu0 %v2551
        %2658 = vmatpush.bf16.msra.mxu0 %v2550
        %2659 = vmatpush.bf16.msra.mxu0 %v2549
        %2660 = vmatmul.bf16.gmra.mxu0 %v2315
        %v2661 = vpop.f32.mrf.mxu0
        %v2662 = vadd.f32 %v2153, %v2661
        %v2663 = vpop.f32.mrf.mxu0
        %v2664 = vadd.f32 %v2153, %v2663
        %2665 = vmatmul.bf16.gmra.mxu0 %v2320
        %v2666 = vpop.f32.mrf.mxu0
        %v2667 = vadd.f32 %v2153, %v2666
        %v2668 = vpop.f32.mrf.mxu0
        %v2669 = vadd.f32 %v2153, %v2668
        %2670 = vmatmul.bf16.gmra.mxu0 %v2325
        %v2671 = vpop.f32.mrf.mxu0
        %v2672 = vadd.f32 %v2153, %v2671
        %v2673 = vpop.f32.mrf.mxu0
        %v2674 = vadd.f32 %v2153, %v2673
        %2675 = vmatmul.bf16.gmra.mxu0 %v2330
        %v2676 = vpop.f32.mrf.mxu0
        %v2677 = vadd.f32 %v2153, %v2676
        %v2678 = vpop.f32.mrf.mxu0
        %v2679 = vadd.f32 %v2153, %v2678
        %2680 = vmatmul.bf16.gmra.mxu0 %v2335
        %v2681 = vpop.f32.mrf.mxu0
        %v2682 = vadd.f32 %v2153, %v2681
        %v2683 = vpop.f32.mrf.mxu0
        %v2684 = vadd.f32 %v2153, %v2683
        %2685 = vmatmul.bf16.gmra.mxu0 %v2340
        %v2686 = vpop.f32.mrf.mxu0
        %v2687 = vadd.f32 %v2153, %v2686
        %v2688 = vpop.f32.mrf.mxu0
        %v2689 = vadd.f32 %v2153, %v2688
        %2690 = vmatmul.bf16.gmra.mxu0 %v2345
        %v2691 = vpop.f32.mrf.mxu0
        %v2692 = vadd.f32 %v2153, %v2691
        %v2693 = vpop.f32.mrf.mxu0
        %v2694 = vadd.f32 %v2153, %v2693
        %2695 = vmatmul.bf16.gmra.mxu0 %v2350
        %v2696 = vpop.f32.mrf.mxu0
        %v2697 = vadd.f32 %v2153, %v2696
        %v2698 = vpop.f32.mrf.mxu0
        %v2699 = vadd.f32 %v2153, %v2698
        %2700 = vmatmul.bf16.gmra.mxu0 %v2355
        %v2701 = vpop.f32.mrf.mxu0
        %v2702 = vadd.f32 %v2153, %v2701
        %v2703 = vpop.f32.mrf.mxu0
        %v2704 = vadd.f32 %v2153, %v2703
        %2705 = vmatmul.bf16.gmra.mxu0 %v2360
        %v2706 = vpop.f32.mrf.mxu0
        %v2707 = vadd.f32 %v2153, %v2706
        %v2708 = vpop.f32.mrf.mxu0
        %v2709 = vadd.f32 %v2153, %v2708
        %2710 = vdwg.mxu0
        %2711 = vmatpush.bf16.msra.mxu0 %v2564
        %2712 = vmatpush.bf16.msra.mxu0 %v2563
        %2713 = vmatpush.bf16.msra.mxu0 %v2562
        %2714 = vmatpush.bf16.msra.mxu0 %v2561
        %2715 = vmatpush.bf16.msra.mxu0 %v2560
        %2716 = vmatpush.bf16.msra.mxu0 %v2559
        %2717 = vmatpush.bf16.msra.mxu0 %v2558
        %2718 = vmatpush.bf16.msra.mxu0 %v2557
        %2719 = vmatmul.bf16.gmra.mxu0 %v2316
        %v2720 = vpop.f32.mrf.mxu0
        %v2721 = vadd.f32 %v2662, %v2720
        %v2722 = vpop.f32.mrf.mxu0
        %v2723 = vadd.f32 %v2664, %v2722
        %2724 = vmatmul.bf16.gmra.mxu0 %v2321
        %v2725 = vpop.f32.mrf.mxu0
        %v2726 = vadd.f32 %v2667, %v2725
        %v2727 = vpop.f32.mrf.mxu0
        %v2728 = vadd.f32 %v2669, %v2727
        %2729 = vmatmul.bf16.gmra.mxu0 %v2326
        %v2730 = vpop.f32.mrf.mxu0
        %v2731 = vadd.f32 %v2672, %v2730
        %v2732 = vpop.f32.mrf.mxu0
        %v2733 = vadd.f32 %v2674, %v2732
        %2734 = vmatmul.bf16.gmra.mxu0 %v2331
        %v2735 = vpop.f32.mrf.mxu0
        %v2736 = vadd.f32 %v2677, %v2735
        %v2737 = vpop.f32.mrf.mxu0
        %v2738 = vadd.f32 %v2679, %v2737
        %2739 = vmatmul.bf16.gmra.mxu0 %v2336
        %v2740 = vpop.f32.mrf.mxu0
        %v2741 = vadd.f32 %v2682, %v2740
        %v2742 = vpop.f32.mrf.mxu0
        %v2743 = vadd.f32 %v2684, %v2742
        %2744 = vmatmul.bf16.gmra.mxu0 %v2341
        %v2745 = vpop.f32.mrf.mxu0
        %v2746 = vadd.f32 %v2687, %v2745
        %v2747 = vpop.f32.mrf.mxu0
        %v2748 = vadd.f32 %v2689, %v2747
        %2749 = vmatmul.bf16.gmra.mxu0 %v2346
        %v2750 = vpop.f32.mrf.mxu0
        %v2751 = vadd.f32 %v2692, %v2750
        %v2752 = vpop.f32.mrf.mxu0
        %v2753 = vadd.f32 %v2694, %v2752
        %2754 = vmatmul.bf16.gmra.mxu0 %v2351
        %v2755 = vpop.f32.mrf.mxu0
        %v2756 = vadd.f32 %v2697, %v2755
        %v2757 = vpop.f32.mrf.mxu0
        %v2758 = vadd.f32 %v2699, %v2757
        %2759 = vmatmul.bf16.gmra.mxu0 %v2356
        %v2760 = vpop.f32.mrf.mxu0
        %v2761 = vadd.f32 %v2702, %v2760
        %v2762 = vpop.f32.mrf.mxu0
        %v2763 = vadd.f32 %v2704, %v2762
        %2764 = vmatmul.bf16.gmra.mxu0 %v2361
        %v2765 = vpop.f32.mrf.mxu0
        %v2766 = vadd.f32 %v2707, %v2765
        %v2767 = vpop.f32.mrf.mxu0
        %v2768 = vadd.f32 %v2709, %v2767
        %2769 = vdwg.mxu0
        %2770 = vmatpush.bf16.msra.mxu0 %v2572
        %2771 = vmatpush.bf16.msra.mxu0 %v2571
        %2772 = vmatpush.bf16.msra.mxu0 %v2570
        %2773 = vmatpush.bf16.msra.mxu0 %v2569
        %2774 = vmatpush.bf16.msra.mxu0 %v2568
        %2775 = vmatpush.bf16.msra.mxu0 %v2567
        %2776 = vmatpush.bf16.msra.mxu0 %v2566
        %2777 = vmatpush.bf16.msra.mxu0 %v2565
        %2778 = vmatmul.bf16.gmra.mxu0 %v2317
        %v2779 = vpop.f32.mrf.mxu0
        %v2780 = vadd.f32 %v2721, %v2779
        %v2781 = vpop.f32.mrf.mxu0
        %v2782 = vadd.f32 %v2723, %v2781
        %2783 = vmatmul.bf16.gmra.mxu0 %v2322
        %v2784 = vpop.f32.mrf.mxu0
        %v2785 = vadd.f32 %v2726, %v2784
        %v2786 = vpop.f32.mrf.mxu0
        %v2787 = vadd.f32 %v2728, %v2786
        %2788 = vmatmul.bf16.gmra.mxu0 %v2327
        %v2789 = vpop.f32.mrf.mxu0
        %v2790 = vadd.f32 %v2731, %v2789
        %v2791 = vpop.f32.mrf.mxu0
        %v2792 = vadd.f32 %v2733, %v2791
        %2793 = vmatmul.bf16.gmra.mxu0 %v2332
        %v2794 = vpop.f32.mrf.mxu0
        %v2795 = vadd.f32 %v2736, %v2794
        %v2796 = vpop.f32.mrf.mxu0
        %v2797 = vadd.f32 %v2738, %v2796
        %2798 = vmatmul.bf16.gmra.mxu0 %v2337
        %v2799 = vpop.f32.mrf.mxu0
        %v2800 = vadd.f32 %v2741, %v2799
        %v2801 = vpop.f32.mrf.mxu0
        %v2802 = vadd.f32 %v2743, %v2801
        %2803 = vmatmul.bf16.gmra.mxu0 %v2342
        %v2804 = vpop.f32.mrf.mxu0
        %v2805 = vadd.f32 %v2746, %v2804
        %v2806 = vpop.f32.mrf.mxu0
        %v2807 = vadd.f32 %v2748, %v2806
        %2808 = vmatmul.bf16.gmra.mxu0 %v2347
        %v2809 = vpop.f32.mrf.mxu0
        %v2810 = vadd.f32 %v2751, %v2809
        %v2811 = vpop.f32.mrf.mxu0
        %v2812 = vadd.f32 %v2753, %v2811
        %2813 = vmatmul.bf16.gmra.mxu0 %v2352
        %v2814 = vpop.f32.mrf.mxu0
        %v2815 = vadd.f32 %v2756, %v2814
        %v2816 = vpop.f32.mrf.mxu0
        %v2817 = vadd.f32 %v2758, %v2816
        %2818 = vmatmul.bf16.gmra.mxu0 %v2357
        %v2819 = vpop.f32.mrf.mxu0
        %v2820 = vadd.f32 %v2761, %v2819
        %v2821 = vpop.f32.mrf.mxu0
        %v2822 = vadd.f32 %v2763, %v2821
        %2823 = vmatmul.bf16.gmra.mxu0 %v2362
        %v2824 = vpop.f32.mrf.mxu0
        %v2825 = vadd.f32 %v2766, %v2824
        %v2826 = vpop.f32.mrf.mxu0
        %v2827 = vadd.f32 %v2768, %v2826
        %2828 = vdwg.mxu0
        %2829 = vmatpush.bf16.msra.mxu0 %v2580
        %2830 = vmatpush.bf16.msra.mxu0 %v2579
        %2831 = vmatpush.bf16.msra.mxu0 %v2578
        %2832 = vmatpush.bf16.msra.mxu0 %v2577
        %2833 = vmatpush.bf16.msra.mxu0 %v2576
        %2834 = vmatpush.bf16.msra.mxu0 %v2575
        %2835 = vmatpush.bf16.msra.mxu0 %v2574
        %2836 = vmatpush.bf16.msra.mxu0 %v2573
        %2837 = vmatmul.bf16.gmra.mxu0 %v2318
        %v2838 = vpop.f32.mrf.mxu0
        %v2839 = vadd.f32 %v2780, %v2838
        %v2840 = vpop.f32.mrf.mxu0
        %v2841 = vadd.f32 %v2782, %v2840
        %2842 = vmatmul.bf16.gmra.mxu0 %v2323
        %v2843 = vpop.f32.mrf.mxu0
        %v2844 = vadd.f32 %v2785, %v2843
        %v2845 = vpop.f32.mrf.mxu0
        %v2846 = vadd.f32 %v2787, %v2845
        %2847 = vmatmul.bf16.gmra.mxu0 %v2328
        %v2848 = vpop.f32.mrf.mxu0
        %v2849 = vadd.f32 %v2790, %v2848
        %v2850 = vpop.f32.mrf.mxu0
        %v2851 = vadd.f32 %v2792, %v2850
        %2852 = vmatmul.bf16.gmra.mxu0 %v2333
        %v2853 = vpop.f32.mrf.mxu0
        %v2854 = vadd.f32 %v2795, %v2853
        %v2855 = vpop.f32.mrf.mxu0
        %v2856 = vadd.f32 %v2797, %v2855
        %2857 = vmatmul.bf16.gmra.mxu0 %v2338
        %v2858 = vpop.f32.mrf.mxu0
        %v2859 = vadd.f32 %v2800, %v2858
        %v2860 = vpop.f32.mrf.mxu0
        %v2861 = vadd.f32 %v2802, %v2860
        %2862 = vmatmul.bf16.gmra.mxu0 %v2343
        %v2863 = vpop.f32.mrf.mxu0
        %v2864 = vadd.f32 %v2805, %v2863
        %v2865 = vpop.f32.mrf.mxu0
        %v2866 = vadd.f32 %v2807, %v2865
        %2867 = vmatmul.bf16.gmra.mxu0 %v2348
        %v2868 = vpop.f32.mrf.mxu0
        %v2869 = vadd.f32 %v2810, %v2868
        %v2870 = vpop.f32.mrf.mxu0
        %v2871 = vadd.f32 %v2812, %v2870
        %2872 = vmatmul.bf16.gmra.mxu0 %v2353
        %v2873 = vpop.f32.mrf.mxu0
        %v2874 = vadd.f32 %v2815, %v2873
        %v2875 = vpop.f32.mrf.mxu0
        %v2876 = vadd.f32 %v2817, %v2875
        %2877 = vmatmul.bf16.gmra.mxu0 %v2358
        %v2878 = vpop.f32.mrf.mxu0
        %v2879 = vadd.f32 %v2820, %v2878
        %v2880 = vpop.f32.mrf.mxu0
        %v2881 = vadd.f32 %v2822, %v2880
        %2882 = vmatmul.bf16.gmra.mxu0 %v2363
        %v2883 = vpop.f32.mrf.mxu0
        %v2884 = vadd.f32 %v2825, %v2883
        %v2885 = vpop.f32.mrf.mxu0
        %v2886 = vadd.f32 %v2827, %v2885
        %2887 = vdwg.mxu0
        %2888 = vmatpush.bf16.msra.mxu0 0
        %2889 = vmatpush.bf16.msra.mxu0 0
        %2890 = vmatpush.bf16.msra.mxu0 0
        %2891 = vmatpush.bf16.msra.mxu0 0
        %2892 = vmatpush.bf16.msra.mxu0 %v2584
        %2893 = vmatpush.bf16.msra.mxu0 %v2583
        %2894 = vmatpush.bf16.msra.mxu0 %v2582
        %2895 = vmatpush.bf16.msra.mxu0 %v2581
        %2896 = vmatmul.bf16.gmra.mxu0 %v2623
        %v2897 = vpop.f32.mrf.mxu0
        %v2898 = vadd.f32 %v2839, %v2897
        %v2899 = vpop.f32.mrf.mxu0
        %v2900 = vadd.f32 %v2841, %v2899
        %2901 = vmatmul.bf16.gmra.mxu0 %v2626
        %v2902 = vpop.f32.mrf.mxu0
        %v2903 = vadd.f32 %v2844, %v2902
        %v2904 = vpop.f32.mrf.mxu0
        %v2905 = vadd.f32 %v2846, %v2904
        %2906 = vmatmul.bf16.gmra.mxu0 %v2629
        %v2907 = vpop.f32.mrf.mxu0
        %v2908 = vadd.f32 %v2849, %v2907
        %v2909 = vpop.f32.mrf.mxu0
        %v2910 = vadd.f32 %v2851, %v2909
        %2911 = vmatmul.bf16.gmra.mxu0 %v2632
        %v2912 = vpop.f32.mrf.mxu0
        %v2913 = vadd.f32 %v2854, %v2912
        %v2914 = vpop.f32.mrf.mxu0
        %v2915 = vadd.f32 %v2856, %v2914
        %2916 = vmatmul.bf16.gmra.mxu0 %v2635
        %v2917 = vpop.f32.mrf.mxu0
        %v2918 = vadd.f32 %v2859, %v2917
        %v2919 = vpop.f32.mrf.mxu0
        %v2920 = vadd.f32 %v2861, %v2919
        %2921 = vmatmul.bf16.gmra.mxu0 %v2638
        %v2922 = vpop.f32.mrf.mxu0
        %v2923 = vadd.f32 %v2864, %v2922
        %v2924 = vpop.f32.mrf.mxu0
        %v2925 = vadd.f32 %v2866, %v2924
        %2926 = vmatmul.bf16.gmra.mxu0 %v2641
        %v2927 = vpop.f32.mrf.mxu0
        %v2928 = vadd.f32 %v2869, %v2927
        %v2929 = vpop.f32.mrf.mxu0
        %v2930 = vadd.f32 %v2871, %v2929
        %2931 = vmatmul.bf16.gmra.mxu0 %v2644
        %v2932 = vpop.f32.mrf.mxu0
        %v2933 = vadd.f32 %v2874, %v2932
        %v2934 = vpop.f32.mrf.mxu0
        %v2935 = vadd.f32 %v2876, %v2934
        %2936 = vmatmul.bf16.gmra.mxu0 %v2647
        %v2937 = vpop.f32.mrf.mxu0
        %v2938 = vadd.f32 %v2879, %v2937
        %v2939 = vpop.f32.mrf.mxu0
        %v2940 = vadd.f32 %v2881, %v2939
        %2941 = vmatmul.bf16.gmra.mxu0 %v2650
        %v2942 = vpop.f32.mrf.mxu0
        %v2943 = vadd.f32 %v2884, %v2942
        %v2944 = vpop.f32.mrf.mxu0
        %v2945 = vadd.f32 %v2886, %v2944
        %2946 = vdwg.mxu0
        %v2947 = vmax.f32 %v2898, 0.0
        %v2948 = vmax.f32 %v2900, 0.0
        %v2949 = vmax.f32 %v2903, 0.0
        %v2950 = vmax.f32 %v2905, 0.0
        %v2951 = vmax.f32 %v2908, 0.0
        %v2952 = vmax.f32 %v2910, 0.0
        %v2953 = vmax.f32 %v2913, 0.0
        %v2954 = vmax.f32 %v2915, 0.0
        %v2955 = vmax.f32 %v2918, 0.0
        %v2956 = vmax.f32 %v2920, 0.0
        %v2957 = vmax.f32 %v2923, 0.0
        %v2958 = vmax.f32 %v2925, 0.0
        %v2959 = vmax.f32 %v2928, 0.0
        %v2960 = vmax.f32 %v2930, 0.0
        %v2961 = vmax.f32 %v2933, 0.0
        %v2962 = vmax.f32 %v2935, 0.0
        %v2963 = vmax.f32 %v2938, 0.0
        %v2964 = vmax.f32 %v2940, 0.0
        %v2965 = vmax.f32 %v2943, 0.0
        %v2966 = vmax.f32 %v2945, 0.0
        %2967 = vst [vmem:[#allocation3] sm:$0x1] 0.0
        %2968 = vst [vmem:[#allocation3 + $0x18] sm:$0x1] 0.0
        %2969 = vst [vmem:[#allocation3 + $0x30] sm:$0x1] 0.0
        %2970 = vst [vmem:[#allocation3 + $0x48] sm:$0x1] 0.0
        %2971 = vst [vmem:[#allocation3 + $0x60] sm:$0x1] 0.0
        %2972 = vst [vmem:[#allocation3 + $0x78] sm:$0x1] 0.0
        %2973 = vst [vmem:[#allocation3 + $0x90] sm:$0x1] 0.0
        %2974 = vst [vmem:[#allocation3 + $0xa8] sm:$0x1] 0.0
        %2975 = vst [vmem:[#allocation3 + $0xc0] sm:$0x1] 0.0
        %2976 = vst [vmem:[#allocation3 + $0xd8] sm:$0x1] 0.0
        %2977 = vst [vmem:[#allocation3 + $0x1] sm:$0xff] %v2947
        %2978 = vst [vmem:[#allocation3 + $0x9] sm:$0xff] %v2948
        %2979 = vst [vmem:[#allocation3 + $0x19] sm:$0xff] %v2949
        %2980 = vst [vmem:[#allocation3 + $0x21] sm:$0xff] %v2950
        %2981 = vst [vmem:[#allocation3 + $0x31] sm:$0xff] %v2951
        %2982 = vst [vmem:[#allocation3 + $0x39] sm:$0xff] %v2952
        %2983 = vst [vmem:[#allocation3 + $0x49] sm:$0xff] %v2953
        %2984 = vst [vmem:[#allocation3 + $0x51] sm:$0xff] %v2954
        %2985 = vst [vmem:[#allocation3 + $0x61] sm:$0xff] %v2955
        %2986 = vst [vmem:[#allocation3 + $0x69] sm:$0xff] %v2956
        %2987 = vst [vmem:[#allocation3 + $0x79] sm:$0xff] %v2957
        %2988 = vst [vmem:[#allocation3 + $0x81] sm:$0xff] %v2958
        %2989 = vst [vmem:[#allocation3 + $0x91] sm:$0xff] %v2959
        %2990 = vst [vmem:[#allocation3 + $0x99] sm:$0xff] %v2960
        %2991 = vst [vmem:[#allocation3 + $0xa9] sm:$0xff] %v2961
        %2992 = vst [vmem:[#allocation3 + $0xb1] sm:$0xff] %v2962
        %2993 = vst [vmem:[#allocation3 + $0xc1] sm:$0xff] %v2963
        %2994 = vst [vmem:[#allocation3 + $0xc9] sm:$0xff] %v2964
        %2995 = vst [vmem:[#allocation3 + $0xd9] sm:$0xff] %v2965
        %2996 = vst [vmem:[#allocation3 + $0xe1] sm:$0xff] %v2966
        %2997 = vst [vmem:[#allocation3 + $0x11] sm:$0x1] 0.0
        %2998 = vst [vmem:[#allocation3 + $0x29] sm:$0x1] 0.0
        %2999 = vst [vmem:[#allocation3 + $0x41] sm:$0x1] 0.0
        %3000 = vst [vmem:[#allocation3 + $0x59] sm:$0x1] 0.0
        %3001 = vst [vmem:[#allocation3 + $0x71] sm:$0x1] 0.0
        %3002 = vst [vmem:[#allocation3 + $0x89] sm:$0x1] 0.0
        %3003 = vst [vmem:[#allocation3 + $0xa1] sm:$0x1] 0.0
        %3004 = vst [vmem:[#allocation3 + $0xb9] sm:$0x1] 0.0
        %3005 = vst [vmem:[#allocation3 + $0xd1] sm:$0x1] 0.0
        %3006 = vst [vmem:[#allocation3 + $0xe9] sm:$0x1] 0.0
        %p3007 = scmp.eq.s32.totalorder %s24, 0
        // Predicated region
        $region41: #{truncated_vgg19_forward.3} parent=39 // pred_check
          %p3008 = pneg %p3007
        $region42: #{truncated_vgg19_forward.3} parent=39 // pred_check_branch
          %3010 = sbr.rel (%p3008) target = $region44
        $region43: #{truncated_vgg19_forward.3} parent=39 // pred_region
          %3011 = vst [vmem:[#allocation3] sm:$0xff] 0.0
          %3012 = vst [vmem:[#allocation3 + $0x8] sm:$0xff] 0.0
          %3013 = vst [vmem:[#allocation3 + $0x10] sm:$0x3] 0.0
        $region44: #{truncated_vgg19_forward.3} parent=39 // pred_fallthru
          _
        %p3014 = scmp.eq.s32.totalorder %s24, 1
        // Predicated region
        $region45: #{truncated_vgg19_forward.3} parent=39 // pred_check
          %p3015 = pneg %p3014
        $region46: #{truncated_vgg19_forward.3} parent=39 // pred_check_branch
          %3017 = sbr.rel (%p3015) target = $region48
        $region47: #{truncated_vgg19_forward.3} parent=39 // pred_region
          %s3018 = scalar_lea.vmem [#allocation3], 216
          %3019 = vst [vmem:[%s3018] sm:$0xff] 0.0
          %3020 = vst [vmem:[%s3018 + $0x8] sm:$0xff] 0.0
          %3021 = vst [vmem:[%s3018 + $0x10] sm:$0x3] 0.0
        $region48: #{truncated_vgg19_forward.3} parent=39 // pred_fallthru
          _
        %v3022 = vld [vmem:[#allocation3] sm:$0xff]
        %v3023 = vld [vmem:[#allocation3 + $0x8] sm:$0xff]
        %v3024 = vld [vmem:[#allocation3 + $0x18] sm:$0xff]
        %v3025 = vld [vmem:[#allocation3 + $0x20] sm:$0xff]
        %v3026 = vld [vmem:[#allocation3 + $0x30] sm:$0xff]
        %v3027 = vld [vmem:[#allocation3 + $0x38] sm:$0xff]
        %v3028 = vld [vmem:[#allocation3 + $0x48] sm:$0xff]
        %v3029 = vld [vmem:[#allocation3 + $0x50] sm:$0xff]
        %v3030 = vld [vmem:[#allocation3 + $0x60] sm:$0xff]
        %v3031 = vld [vmem:[#allocation3 + $0x68] sm:$0xff]
        %v3032 = vld [vmem:[#allocation3 + $0x78] sm:$0xff]
        %v3033 = vld [vmem:[#allocation3 + $0x80] sm:$0xff]
        %v3034 = vld [vmem:[#allocation3 + $0x90] sm:$0xff]
        %v3035 = vld [vmem:[#allocation3 + $0x98] sm:$0xff]
        %v3036 = vld [vmem:[#allocation3 + $0xa8] sm:$0xff]
        %v3037 = vld [vmem:[#allocation3 + $0xb0] sm:$0xff]
        %v3038 = vpack.c.bf16 %v3022, %v3022
        %v3039 = vpack.c.bf16 %v3023, %v3023
        %v3040 = vpack.c.bf16 %v3024, %v3024
        %v3041 = vpack.c.bf16 %v3025, %v3025
        %v3042 = vpack.c.bf16 %v3026, %v3026
        %v3043 = vpack.c.bf16 %v3027, %v3027
        %v3044 = vpack.c.bf16 %v3028, %v3028
        %v3045 = vpack.c.bf16 %v3029, %v3029
        %v3046 = vpack.c.bf16 %v3030, %v3030
        %v3047 = vpack.c.bf16 %v3031, %v3031
        %v3048 = vpack.c.bf16 %v3032, %v3032
        %v3049 = vpack.c.bf16 %v3033, %v3033
        %v3050 = vpack.c.bf16 %v3034, %v3034
        %v3051 = vpack.c.bf16 %v3035, %v3035
        %v3052 = vpack.c.bf16 %v3036, %v3036
        %v3053 = vpack.c.bf16 %v3037, %v3037
        %3054 = vst [vmem:[#allocation4] sm:$0xf] %v3038
        %3055 = vst [vmem:[#allocation4 + $0x24] sm:$0xf] %v3039
        %3056 = vst [vmem:[#allocation4 + $0x48] sm:$0xf] %v3040
        %3057 = vst [vmem:[#allocation4 + $0x6c] sm:$0xf] %v3041
        %3058 = vst [vmem:[#allocation4 + $0x90] sm:$0xf] %v3042
        %3059 = vst [vmem:[#allocation4 + $0xb4] sm:$0xf] %v3043
        %3060 = vst [vmem:[#allocation4 + $0xd8] sm:$0xf] %v3044
        %3061 = vst [vmem:[#allocation4 + $0xfc] sm:$0xf] %v3045
        %3062 = vst [vmem:[#allocation4 + $0x120] sm:$0xf] %v3046
        %3063 = vst [vmem:[#allocation4 + $0x144] sm:$0xf] %v3047
        %3064 = vst [vmem:[#allocation4 + $0x168] sm:$0xf] %v3048
        %3065 = vst [vmem:[#allocation4 + $0x18c] sm:$0xf] %v3049
        %3066 = vst [vmem:[#allocation4 + $0x1b0] sm:$0xf] %v3050
        %3067 = vst [vmem:[#allocation4 + $0x1d4] sm:$0xf] %v3051
        %3068 = vst [vmem:[#allocation4 + $0x1f8] sm:$0xf] %v3052
        %3069 = vst [vmem:[#allocation4 + $0x21c] sm:$0xf] %v3053
        %v3070 = vld [vmem:[#allocation3 + $0x1] sm:$0xff]
        %v3071 = vld [vmem:[#allocation3 + $0x9] sm:$0xff]
        %v3072 = vld [vmem:[#allocation3 + $0x19] sm:$0xff]
        %v3073 = vld [vmem:[#allocation3 + $0x21] sm:$0xff]
        %v3074 = vld [vmem:[#allocation3 + $0x31] sm:$0xff]
        %v3075 = vld [vmem:[#allocation3 + $0x39] sm:$0xff]
        %v3076 = vld [vmem:[#allocation3 + $0x49] sm:$0xff]
        %v3077 = vld [vmem:[#allocation3 + $0x51] sm:$0xff]
        %v3078 = vld [vmem:[#allocation3 + $0x61] sm:$0xff]
        %v3079 = vld [vmem:[#allocation3 + $0x69] sm:$0xff]
        %v3080 = vld [vmem:[#allocation3 + $0x79] sm:$0xff]
        %v3081 = vld [vmem:[#allocation3 + $0x81] sm:$0xff]
        %v3082 = vld [vmem:[#allocation3 + $0x91] sm:$0xff]
        %v3083 = vld [vmem:[#allocation3 + $0x99] sm:$0xff]
        %v3084 = vld [vmem:[#allocation3 + $0xa9] sm:$0xff]
        %v3085 = vld [vmem:[#allocation3 + $0xb1] sm:$0xff]
        %v3086 = vpack.c.bf16 %v3070, %v3070
        %v3087 = vpack.c.bf16 %v3071, %v3071
        %v3088 = vpack.c.bf16 %v3072, %v3072
        %v3089 = vpack.c.bf16 %v3073, %v3073
        %v3090 = vpack.c.bf16 %v3074, %v3074
        %v3091 = vpack.c.bf16 %v3075, %v3075
        %v3092 = vpack.c.bf16 %v3076, %v3076
        %v3093 = vpack.c.bf16 %v3077, %v3077
        %v3094 = vpack.c.bf16 %v3078, %v3078
        %v3095 = vpack.c.bf16 %v3079, %v3079
        %v3096 = vpack.c.bf16 %v3080, %v3080
        %v3097 = vpack.c.bf16 %v3081, %v3081
        %v3098 = vpack.c.bf16 %v3082, %v3082
        %v3099 = vpack.c.bf16 %v3083, %v3083
        %v3100 = vpack.c.bf16 %v3084, %v3084
        %v3101 = vpack.c.bf16 %v3085, %v3085
        %3102 = vst [vmem:[#allocation4 + $0x4] sm:$0xf] %v3086
        %3103 = vst [vmem:[#allocation4 + $0x28] sm:$0xf] %v3087
        %3104 = vst [vmem:[#allocation4 + $0x4c] sm:$0xf] %v3088
        %3105 = vst [vmem:[#allocation4 + $0x70] sm:$0xf] %v3089
        %3106 = vst [vmem:[#allocation4 + $0x94] sm:$0xf] %v3090
        %3107 = vst [vmem:[#allocation4 + $0xb8] sm:$0xf] %v3091
        %3108 = vst [vmem:[#allocation4 + $0xdc] sm:$0xf] %v3092
        %3109 = vst [vmem:[#allocation4 + $0x100] sm:$0xf] %v3093
        %3110 = vst [vmem:[#allocation4 + $0x124] sm:$0xf] %v3094
        %3111 = vst [vmem:[#allocation4 + $0x148] sm:$0xf] %v3095
        %3112 = vst [vmem:[#allocation4 + $0x16c] sm:$0xf] %v3096
        %3113 = vst [vmem:[#allocation4 + $0x190] sm:$0xf] %v3097
        %3114 = vst [vmem:[#allocation4 + $0x1b4] sm:$0xf] %v3098
        %3115 = vst [vmem:[#allocation4 + $0x1d8] sm:$0xf] %v3099
        %3116 = vst [vmem:[#allocation4 + $0x1fc] sm:$0xf] %v3100
        %3117 = vst [vmem:[#allocation4 + $0x220] sm:$0xf] %v3101
        %v3118 = vld [vmem:[#allocation3 + $0x2] sm:$0xff]
        %v3119 = vld [vmem:[#allocation3 + $0xa] sm:$0xff]
        %v3120 = vld [vmem:[#allocation3 + $0x1a] sm:$0xff]
        %v3121 = vld [vmem:[#allocation3 + $0x22] sm:$0xff]
        %v3122 = vld [vmem:[#allocation3 + $0x32] sm:$0xff]
        %v3123 = vld [vmem:[#allocation3 + $0x3a] sm:$0xff]
        %v3124 = vld [vmem:[#allocation3 + $0x4a] sm:$0xff]
        %v3125 = vld [vmem:[#allocation3 + $0x52] sm:$0xff]
        %v3126 = vld [vmem:[#allocation3 + $0x62] sm:$0xff]
        %v3127 = vld [vmem:[#allocation3 + $0x6a] sm:$0xff]
        %v3128 = vld [vmem:[#allocation3 + $0x7a] sm:$0xff]
        %v3129 = vld [vmem:[#allocation3 + $0x82] sm:$0xff]
        %v3130 = vld [vmem:[#allocation3 + $0x92] sm:$0xff]
        %v3131 = vld [vmem:[#allocation3 + $0x9a] sm:$0xff]
        %v3132 = vld [vmem:[#allocation3 + $0xaa] sm:$0xff]
        %v3133 = vld [vmem:[#allocation3 + $0xb2] sm:$0xff]
        %v3134 = vpack.c.bf16 %v3118, %v3118
        %v3135 = vpack.c.bf16 %v3119, %v3119
        %v3136 = vpack.c.bf16 %v3120, %v3120
        %v3137 = vpack.c.bf16 %v3121, %v3121
        %v3138 = vpack.c.bf16 %v3122, %v3122
        %v3139 = vpack.c.bf16 %v3123, %v3123
        %v3140 = vpack.c.bf16 %v3124, %v3124
        %v3141 = vpack.c.bf16 %v3125, %v3125
        %v3142 = vpack.c.bf16 %v3126, %v3126
        %v3143 = vpack.c.bf16 %v3127, %v3127
        %v3144 = vpack.c.bf16 %v3128, %v3128
        %v3145 = vpack.c.bf16 %v3129, %v3129
        %v3146 = vpack.c.bf16 %v3130, %v3130
        %v3147 = vpack.c.bf16 %v3131, %v3131
        %v3148 = vpack.c.bf16 %v3132, %v3132
        %v3149 = vpack.c.bf16 %v3133, %v3133
        %3150 = vst [vmem:[#allocation4 + $0x8] sm:$0xf] %v3134
        %3151 = vst [vmem:[#allocation4 + $0x2c] sm:$0xf] %v3135
        %3152 = vst [vmem:[#allocation4 + $0x50] sm:$0xf] %v3136
        %3153 = vst [vmem:[#allocation4 + $0x74] sm:$0xf] %v3137
        %3154 = vst [vmem:[#allocation4 + $0x98] sm:$0xf] %v3138
        %3155 = vst [vmem:[#allocation4 + $0xbc] sm:$0xf] %v3139
        %3156 = vst [vmem:[#allocation4 + $0xe0] sm:$0xf] %v3140
        %3157 = vst [vmem:[#allocation4 + $0x104] sm:$0xf] %v3141
        %3158 = vst [vmem:[#allocation4 + $0x128] sm:$0xf] %v3142
        %3159 = vst [vmem:[#allocation4 + $0x14c] sm:$0xf] %v3143
        %3160 = vst [vmem:[#allocation4 + $0x170] sm:$0xf] %v3144
        %3161 = vst [vmem:[#allocation4 + $0x194] sm:$0xf] %v3145
        %3162 = vst [vmem:[#allocation4 + $0x1b8] sm:$0xf] %v3146
        %3163 = vst [vmem:[#allocation4 + $0x1dc] sm:$0xf] %v3147
        %3164 = vst [vmem:[#allocation4 + $0x200] sm:$0xf] %v3148
        %3165 = vst [vmem:[#allocation4 + $0x224] sm:$0xf] %v3149
        %s3166 = scalar_lea.vmem [#allocation3], 24
        %v3167 = vld [vmem:[%s3166] sm:$0xff]
        %v3168 = vld [vmem:[%s3166 + $0x8] sm:$0xff]
        %v3169 = vld [vmem:[%s3166 + $0x18] sm:$0xff]
        %v3170 = vld [vmem:[%s3166 + $0x20] sm:$0xff]
        %v3171 = vld [vmem:[%s3166 + $0x30] sm:$0xff]
        %v3172 = vld [vmem:[%s3166 + $0x38] sm:$0xff]
        %v3173 = vld [vmem:[%s3166 + $0x48] sm:$0xff]
        %v3174 = vld [vmem:[%s3166 + $0x50] sm:$0xff]
        %v3175 = vld [vmem:[%s3166 + $0x60] sm:$0xff]
        %v3176 = vld [vmem:[%s3166 + $0x68] sm:$0xff]
        %v3177 = vld [vmem:[%s3166 + $0x78] sm:$0xff]
        %v3178 = vld [vmem:[%s3166 + $0x80] sm:$0xff]
        %v3179 = vld [vmem:[%s3166 + $0x90] sm:$0xff]
        %v3180 = vld [vmem:[%s3166 + $0x98] sm:$0xff]
        %v3181 = vld [vmem:[%s3166 + $0xa8] sm:$0xff]
        %v3182 = vld [vmem:[%s3166 + $0xb0] sm:$0xff]
        %v3183 = vpack.c.bf16 %v3167, %v3167
        %v3184 = vpack.c.bf16 %v3168, %v3168
        %v3185 = vpack.c.bf16 %v3169, %v3169
        %v3186 = vpack.c.bf16 %v3170, %v3170
        %v3187 = vpack.c.bf16 %v3171, %v3171
        %v3188 = vpack.c.bf16 %v3172, %v3172
        %v3189 = vpack.c.bf16 %v3173, %v3173
        %v3190 = vpack.c.bf16 %v3174, %v3174
        %v3191 = vpack.c.bf16 %v3175, %v3175
        %v3192 = vpack.c.bf16 %v3176, %v3176
        %v3193 = vpack.c.bf16 %v3177, %v3177
        %v3194 = vpack.c.bf16 %v3178, %v3178
        %v3195 = vpack.c.bf16 %v3179, %v3179
        %v3196 = vpack.c.bf16 %v3180, %v3180
        %v3197 = vpack.c.bf16 %v3181, %v3181
        %v3198 = vpack.c.bf16 %v3182, %v3182
        %3199 = vst [vmem:[#allocation4 + $0xc] sm:$0xf] %v3183
        %3200 = vst [vmem:[#allocation4 + $0x30] sm:$0xf] %v3184
        %3201 = vst [vmem:[#allocation4 + $0x54] sm:$0xf] %v3185
        %3202 = vst [vmem:[#allocation4 + $0x78] sm:$0xf] %v3186
        %3203 = vst [vmem:[#allocation4 + $0x9c] sm:$0xf] %v3187
        %3204 = vst [vmem:[#allocation4 + $0xc0] sm:$0xf] %v3188
        %3205 = vst [vmem:[#allocation4 + $0xe4] sm:$0xf] %v3189
        %3206 = vst [vmem:[#allocation4 + $0x108] sm:$0xf] %v3190
        %3207 = vst [vmem:[#allocation4 + $0x12c] sm:$0xf] %v3191
        %3208 = vst [vmem:[#allocation4 + $0x150] sm:$0xf] %v3192
        %3209 = vst [vmem:[#allocation4 + $0x174] sm:$0xf] %v3193
        %3210 = vst [vmem:[#allocation4 + $0x198] sm:$0xf] %v3194
        %3211 = vst [vmem:[#allocation4 + $0x1bc] sm:$0xf] %v3195
        %3212 = vst [vmem:[#allocation4 + $0x1e0] sm:$0xf] %v3196
        %3213 = vst [vmem:[#allocation4 + $0x204] sm:$0xf] %v3197
        %3214 = vst [vmem:[#allocation4 + $0x228] sm:$0xf] %v3198
        %v3215 = vld [vmem:[%s3166 + $0x1] sm:$0xff]
        %v3216 = vld [vmem:[%s3166 + $0x9] sm:$0xff]
        %v3217 = vld [vmem:[%s3166 + $0x19] sm:$0xff]
        %v3218 = vld [vmem:[%s3166 + $0x21] sm:$0xff]
        %v3219 = vld [vmem:[%s3166 + $0x31] sm:$0xff]
        %v3220 = vld [vmem:[%s3166 + $0x39] sm:$0xff]
        %v3221 = vld [vmem:[%s3166 + $0x49] sm:$0xff]
        %v3222 = vld [vmem:[%s3166 + $0x51] sm:$0xff]
        %v3223 = vld [vmem:[%s3166 + $0x61] sm:$0xff]
        %v3224 = vld [vmem:[%s3166 + $0x69] sm:$0xff]
        %v3225 = vld [vmem:[%s3166 + $0x79] sm:$0xff]
        %v3226 = vld [vmem:[%s3166 + $0x81] sm:$0xff]
        %v3227 = vld [vmem:[%s3166 + $0x91] sm:$0xff]
        %v3228 = vld [vmem:[%s3166 + $0x99] sm:$0xff]
        %v3229 = vld [vmem:[%s3166 + $0xa9] sm:$0xff]
        %v3230 = vld [vmem:[%s3166 + $0xb1] sm:$0xff]
        %v3231 = vpack.c.bf16 %v3215, %v3215
        %v3232 = vpack.c.bf16 %v3216, %v3216
        %v3233 = vpack.c.bf16 %v3217, %v3217
        %v3234 = vpack.c.bf16 %v3218, %v3218
        %v3235 = vpack.c.bf16 %v3219, %v3219
        %v3236 = vpack.c.bf16 %v3220, %v3220
        %v3237 = vpack.c.bf16 %v3221, %v3221
        %v3238 = vpack.c.bf16 %v3222, %v3222
        %v3239 = vpack.c.bf16 %v3223, %v3223
        %v3240 = vpack.c.bf16 %v3224, %v3224
        %v3241 = vpack.c.bf16 %v3225, %v3225
        %v3242 = vpack.c.bf16 %v3226, %v3226
        %v3243 = vpack.c.bf16 %v3227, %v3227
        %v3244 = vpack.c.bf16 %v3228, %v3228
        %v3245 = vpack.c.bf16 %v3229, %v3229
        %v3246 = vpack.c.bf16 %v3230, %v3230
        %3247 = vst [vmem:[#allocation4 + $0x10] sm:$0xf] %v3231
        %3248 = vst [vmem:[#allocation4 + $0x34] sm:$0xf] %v3232
        %3249 = vst [vmem:[#allocation4 + $0x58] sm:$0xf] %v3233
        %3250 = vst [vmem:[#allocation4 + $0x7c] sm:$0xf] %v3234
        %3251 = vst [vmem:[#allocation4 + $0xa0] sm:$0xf] %v3235
        %3252 = vst [vmem:[#allocation4 + $0xc4] sm:$0xf] %v3236
        %3253 = vst [vmem:[#allocation4 + $0xe8] sm:$0xf] %v3237
        %3254 = vst [vmem:[#allocation4 + $0x10c] sm:$0xf] %v3238
        %3255 = vst [vmem:[#allocation4 + $0x130] sm:$0xf] %v3239
        %3256 = vst [vmem:[#allocation4 + $0x154] sm:$0xf] %v3240
        %3257 = vst [vmem:[#allocation4 + $0x178] sm:$0xf] %v3241
        %3258 = vst [vmem:[#allocation4 + $0x19c] sm:$0xf] %v3242
        %3259 = vst [vmem:[#allocation4 + $0x1c0] sm:$0xf] %v3243
        %3260 = vst [vmem:[#allocation4 + $0x1e4] sm:$0xf] %v3244
        %3261 = vst [vmem:[#allocation4 + $0x208] sm:$0xf] %v3245
        %3262 = vst [vmem:[#allocation4 + $0x22c] sm:$0xf] %v3246
        %v3263 = vld [vmem:[%s3166 + $0x2] sm:$0xff]
        %v3264 = vld [vmem:[%s3166 + $0xa] sm:$0xff]
        %v3265 = vld [vmem:[%s3166 + $0x1a] sm:$0xff]
        %v3266 = vld [vmem:[%s3166 + $0x22] sm:$0xff]
        %v3267 = vld [vmem:[%s3166 + $0x32] sm:$0xff]
        %v3268 = vld [vmem:[%s3166 + $0x3a] sm:$0xff]
        %v3269 = vld [vmem:[%s3166 + $0x4a] sm:$0xff]
        %v3270 = vld [vmem:[%s3166 + $0x52] sm:$0xff]
        %v3271 = vld [vmem:[%s3166 + $0x62] sm:$0xff]
        %v3272 = vld [vmem:[%s3166 + $0x6a] sm:$0xff]
        %v3273 = vld [vmem:[%s3166 + $0x7a] sm:$0xff]
        %v3274 = vld [vmem:[%s3166 + $0x82] sm:$0xff]
        %v3275 = vld [vmem:[%s3166 + $0x92] sm:$0xff]
        %v3276 = vld [vmem:[%s3166 + $0x9a] sm:$0xff]
        %v3277 = vld [vmem:[%s3166 + $0xaa] sm:$0xff]
        %v3278 = vld [vmem:[%s3166 + $0xb2] sm:$0xff]
        %v3279 = vpack.c.bf16 %v3263, %v3263
        %v3280 = vpack.c.bf16 %v3264, %v3264
        %v3281 = vpack.c.bf16 %v3265, %v3265
        %v3282 = vpack.c.bf16 %v3266, %v3266
        %v3283 = vpack.c.bf16 %v3267, %v3267
        %v3284 = vpack.c.bf16 %v3268, %v3268
        %v3285 = vpack.c.bf16 %v3269, %v3269
        %v3286 = vpack.c.bf16 %v3270, %v3270
        %v3287 = vpack.c.bf16 %v3271, %v3271
        %v3288 = vpack.c.bf16 %v3272, %v3272
        %v3289 = vpack.c.bf16 %v3273, %v3273
        %v3290 = vpack.c.bf16 %v3274, %v3274
        %v3291 = vpack.c.bf16 %v3275, %v3275
        %v3292 = vpack.c.bf16 %v3276, %v3276
        %v3293 = vpack.c.bf16 %v3277, %v3277
        %v3294 = vpack.c.bf16 %v3278, %v3278
        %3295 = vst [vmem:[#allocation4 + $0x14] sm:$0xf] %v3279
        %3296 = vst [vmem:[#allocation4 + $0x38] sm:$0xf] %v3280
        %3297 = vst [vmem:[#allocation4 + $0x5c] sm:$0xf] %v3281
        %3298 = vst [vmem:[#allocation4 + $0x80] sm:$0xf] %v3282
        %3299 = vst [vmem:[#allocation4 + $0xa4] sm:$0xf] %v3283
        %3300 = vst [vmem:[#allocation4 + $0xc8] sm:$0xf] %v3284
        %3301 = vst [vmem:[#allocation4 + $0xec] sm:$0xf] %v3285
        %3302 = vst [vmem:[#allocation4 + $0x110] sm:$0xf] %v3286
        %3303 = vst [vmem:[#allocation4 + $0x134] sm:$0xf] %v3287
        %3304 = vst [vmem:[#allocation4 + $0x158] sm:$0xf] %v3288
        %3305 = vst [vmem:[#allocation4 + $0x17c] sm:$0xf] %v3289
        %3306 = vst [vmem:[#allocation4 + $0x1a0] sm:$0xf] %v3290
        %3307 = vst [vmem:[#allocation4 + $0x1c4] sm:$0xf] %v3291
        %3308 = vst [vmem:[#allocation4 + $0x1e8] sm:$0xf] %v3292
        %3309 = vst [vmem:[#allocation4 + $0x20c] sm:$0xf] %v3293
        %3310 = vst [vmem:[#allocation4 + $0x230] sm:$0xf] %v3294
        %s3311 = scalar_lea.vmem [#allocation3], 48
        %v3312 = vld [vmem:[%s3311] sm:$0xff]
        %v3313 = vld [vmem:[%s3311 + $0x8] sm:$0xff]
        %v3314 = vld [vmem:[%s3311 + $0x18] sm:$0xff]
        %v3315 = vld [vmem:[%s3311 + $0x20] sm:$0xff]
        %v3316 = vld [vmem:[%s3311 + $0x30] sm:$0xff]
        %v3317 = vld [vmem:[%s3311 + $0x38] sm:$0xff]
        %v3318 = vld [vmem:[%s3311 + $0x48] sm:$0xff]
        %v3319 = vld [vmem:[%s3311 + $0x50] sm:$0xff]
        %v3320 = vld [vmem:[%s3311 + $0x60] sm:$0xff]
        %v3321 = vld [vmem:[%s3311 + $0x68] sm:$0xff]
        %v3322 = vld [vmem:[%s3311 + $0x78] sm:$0xff]
        %v3323 = vld [vmem:[%s3311 + $0x80] sm:$0xff]
        %v3324 = vld [vmem:[%s3311 + $0x90] sm:$0xff]
        %v3325 = vld [vmem:[%s3311 + $0x98] sm:$0xff]
        %v3326 = vld [vmem:[%s3311 + $0xa8] sm:$0xff]
        %v3327 = vld [vmem:[%s3311 + $0xb0] sm:$0xff]
        %v3328 = vpack.c.bf16 %v3312, %v3312
        %v3329 = vpack.c.bf16 %v3313, %v3313
        %v3330 = vpack.c.bf16 %v3314, %v3314
        %v3331 = vpack.c.bf16 %v3315, %v3315
        %v3332 = vpack.c.bf16 %v3316, %v3316
        %v3333 = vpack.c.bf16 %v3317, %v3317
        %v3334 = vpack.c.bf16 %v3318, %v3318
        %v3335 = vpack.c.bf16 %v3319, %v3319
        %v3336 = vpack.c.bf16 %v3320, %v3320
        %v3337 = vpack.c.bf16 %v3321, %v3321
        %v3338 = vpack.c.bf16 %v3322, %v3322
        %v3339 = vpack.c.bf16 %v3323, %v3323
        %v3340 = vpack.c.bf16 %v3324, %v3324
        %v3341 = vpack.c.bf16 %v3325, %v3325
        %v3342 = vpack.c.bf16 %v3326, %v3326
        %v3343 = vpack.c.bf16 %v3327, %v3327
        %3344 = vst [vmem:[#allocation4 + $0x18] sm:$0xf] %v3328
        %3345 = vst [vmem:[#allocation4 + $0x3c] sm:$0xf] %v3329
        %3346 = vst [vmem:[#allocation4 + $0x60] sm:$0xf] %v3330
        %3347 = vst [vmem:[#allocation4 + $0x84] sm:$0xf] %v3331
        %3348 = vst [vmem:[#allocation4 + $0xa8] sm:$0xf] %v3332
        %3349 = vst [vmem:[#allocation4 + $0xcc] sm:$0xf] %v3333
        %3350 = vst [vmem:[#allocation4 + $0xf0] sm:$0xf] %v3334
        %3351 = vst [vmem:[#allocation4 + $0x114] sm:$0xf] %v3335
        %3352 = vst [vmem:[#allocation4 + $0x138] sm:$0xf] %v3336
        %3353 = vst [vmem:[#allocation4 + $0x15c] sm:$0xf] %v3337
        %3354 = vst [vmem:[#allocation4 + $0x180] sm:$0xf] %v3338
        %3355 = vst [vmem:[#allocation4 + $0x1a4] sm:$0xf] %v3339
        %3356 = vst [vmem:[#allocation4 + $0x1c8] sm:$0xf] %v3340
        %3357 = vst [vmem:[#allocation4 + $0x1ec] sm:$0xf] %v3341
        %3358 = vst [vmem:[#allocation4 + $0x210] sm:$0xf] %v3342
        %3359 = vst [vmem:[#allocation4 + $0x234] sm:$0xf] %v3343
        %v3360 = vld [vmem:[%s3311 + $0x1] sm:$0xff]
        %v3361 = vld [vmem:[%s3311 + $0x9] sm:$0xff]
        %v3362 = vld [vmem:[%s3311 + $0x19] sm:$0xff]
        %v3363 = vld [vmem:[%s3311 + $0x21] sm:$0xff]
        %v3364 = vld [vmem:[%s3311 + $0x31] sm:$0xff]
        %v3365 = vld [vmem:[%s3311 + $0x39] sm:$0xff]
        %v3366 = vld [vmem:[%s3311 + $0x49] sm:$0xff]
        %v3367 = vld [vmem:[%s3311 + $0x51] sm:$0xff]
        %v3368 = vld [vmem:[%s3311 + $0x61] sm:$0xff]
        %v3369 = vld [vmem:[%s3311 + $0x69] sm:$0xff]
        %v3370 = vld [vmem:[%s3311 + $0x79] sm:$0xff]
        %v3371 = vld [vmem:[%s3311 + $0x81] sm:$0xff]
        %v3372 = vld [vmem:[%s3311 + $0x91] sm:$0xff]
        %v3373 = vld [vmem:[%s3311 + $0x99] sm:$0xff]
        %v3374 = vld [vmem:[%s3311 + $0xa9] sm:$0xff]
        %v3375 = vld [vmem:[%s3311 + $0xb1] sm:$0xff]
        %v3376 = vpack.c.bf16 %v3360, %v3360
        %v3377 = vpack.c.bf16 %v3361, %v3361
        %v3378 = vpack.c.bf16 %v3362, %v3362
        %v3379 = vpack.c.bf16 %v3363, %v3363
        %v3380 = vpack.c.bf16 %v3364, %v3364
        %v3381 = vpack.c.bf16 %v3365, %v3365
        %v3382 = vpack.c.bf16 %v3366, %v3366
        %v3383 = vpack.c.bf16 %v3367, %v3367
        %v3384 = vpack.c.bf16 %v3368, %v3368
        %v3385 = vpack.c.bf16 %v3369, %v3369
        %v3386 = vpack.c.bf16 %v3370, %v3370
        %v3387 = vpack.c.bf16 %v3371, %v3371
        %v3388 = vpack.c.bf16 %v3372, %v3372
        %v3389 = vpack.c.bf16 %v3373, %v3373
        %v3390 = vpack.c.bf16 %v3374, %v3374
        %v3391 = vpack.c.bf16 %v3375, %v3375
        %3392 = vst [vmem:[#allocation4 + $0x1c] sm:$0xf] %v3376
        %3393 = vst [vmem:[#allocation4 + $0x40] sm:$0xf] %v3377
        %3394 = vst [vmem:[#allocation4 + $0x64] sm:$0xf] %v3378
        %3395 = vst [vmem:[#allocation4 + $0x88] sm:$0xf] %v3379
        %3396 = vst [vmem:[#allocation4 + $0xac] sm:$0xf] %v3380
        %3397 = vst [vmem:[#allocation4 + $0xd0] sm:$0xf] %v3381
        %3398 = vst [vmem:[#allocation4 + $0xf4] sm:$0xf] %v3382
        %3399 = vst [vmem:[#allocation4 + $0x118] sm:$0xf] %v3383
        %3400 = vst [vmem:[#allocation4 + $0x13c] sm:$0xf] %v3384
        %3401 = vst [vmem:[#allocation4 + $0x160] sm:$0xf] %v3385
        %3402 = vst [vmem:[#allocation4 + $0x184] sm:$0xf] %v3386
        %3403 = vst [vmem:[#allocation4 + $0x1a8] sm:$0xf] %v3387
        %3404 = vst [vmem:[#allocation4 + $0x1cc] sm:$0xf] %v3388
        %3405 = vst [vmem:[#allocation4 + $0x1f0] sm:$0xf] %v3389
        %3406 = vst [vmem:[#allocation4 + $0x214] sm:$0xf] %v3390
        %3407 = vst [vmem:[#allocation4 + $0x238] sm:$0xf] %v3391
        %v3408 = vld [vmem:[%s3311 + $0x2] sm:$0xff]
        %v3409 = vld [vmem:[%s3311 + $0xa] sm:$0xff]
        %v3410 = vld [vmem:[%s3311 + $0x1a] sm:$0xff]
        %v3411 = vld [vmem:[%s3311 + $0x22] sm:$0xff]
        %v3412 = vld [vmem:[%s3311 + $0x32] sm:$0xff]
        %v3413 = vld [vmem:[%s3311 + $0x3a] sm:$0xff]
        %v3414 = vld [vmem:[%s3311 + $0x4a] sm:$0xff]
        %v3415 = vld [vmem:[%s3311 + $0x52] sm:$0xff]
        %v3416 = vld [vmem:[%s3311 + $0x62] sm:$0xff]
        %v3417 = vld [vmem:[%s3311 + $0x6a] sm:$0xff]
        %v3418 = vld [vmem:[%s3311 + $0x7a] sm:$0xff]
        %v3419 = vld [vmem:[%s3311 + $0x82] sm:$0xff]
        %v3420 = vld [vmem:[%s3311 + $0x92] sm:$0xff]
        %v3421 = vld [vmem:[%s3311 + $0x9a] sm:$0xff]
        %v3422 = vld [vmem:[%s3311 + $0xaa] sm:$0xff]
        %v3423 = vld [vmem:[%s3311 + $0xb2] sm:$0xff]
        %v3424 = vpack.c.bf16 %v3408, %v3408
        %v3425 = vpack.c.bf16 %v3409, %v3409
        %v3426 = vpack.c.bf16 %v3410, %v3410
        %v3427 = vpack.c.bf16 %v3411, %v3411
        %v3428 = vpack.c.bf16 %v3412, %v3412
        %v3429 = vpack.c.bf16 %v3413, %v3413
        %v3430 = vpack.c.bf16 %v3414, %v3414
        %v3431 = vpack.c.bf16 %v3415, %v3415
        %v3432 = vpack.c.bf16 %v3416, %v3416
        %v3433 = vpack.c.bf16 %v3417, %v3417
        %v3434 = vpack.c.bf16 %v3418, %v3418
        %v3435 = vpack.c.bf16 %v3419, %v3419
        %v3436 = vpack.c.bf16 %v3420, %v3420
        %v3437 = vpack.c.bf16 %v3421, %v3421
        %v3438 = vpack.c.bf16 %v3422, %v3422
        %v3439 = vpack.c.bf16 %v3423, %v3423
        %3440 = vst [vmem:[#allocation4 + $0x20] sm:$0xf] %v3424
        %3441 = vst [vmem:[#allocation4 + $0x44] sm:$0xf] %v3425
        %3442 = vst [vmem:[#allocation4 + $0x68] sm:$0xf] %v3426
        %3443 = vst [vmem:[#allocation4 + $0x8c] sm:$0xf] %v3427
        %3444 = vst [vmem:[#allocation4 + $0xb0] sm:$0xf] %v3428
        %3445 = vst [vmem:[#allocation4 + $0xd4] sm:$0xf] %v3429
        %3446 = vst [vmem:[#allocation4 + $0xf8] sm:$0xf] %v3430
        %3447 = vst [vmem:[#allocation4 + $0x11c] sm:$0xf] %v3431
        %3448 = vst [vmem:[#allocation4 + $0x140] sm:$0xf] %v3432
        %3449 = vst [vmem:[#allocation4 + $0x164] sm:$0xf] %v3433
        %3450 = vst [vmem:[#allocation4 + $0x188] sm:$0xf] %v3434
        %3451 = vst [vmem:[#allocation4 + $0x1ac] sm:$0xf] %v3435
        %3452 = vst [vmem:[#allocation4 + $0x1d0] sm:$0xf] %v3436
        %3453 = vst [vmem:[#allocation4 + $0x1f4] sm:$0xf] %v3437
        %3454 = vst [vmem:[#allocation4 + $0x218] sm:$0xf] %v3438
        %3455 = vst [vmem:[#allocation4 + $0x23c] sm:$0xf] %v3439
        %v3456 = vld [vmem:[#allocation4] sm:$0xff]
        %v3457 = vld [vmem:[#allocation4 + $0x8] sm:$0xff]
        %v3458 = vld [vmem:[#allocation4 + $0x10] sm:$0xff]
        %v3459 = vld [vmem:[#allocation4 + $0x18] sm:$0xff]
        %v3460 = vld [vmem:[#allocation4 + $0x20] sm:$0xf]
        %v3461 = vld [vmem:[#allocation4 + $0x24] sm:$0xff]
        %v3462 = vld [vmem:[#allocation4 + $0x2c] sm:$0xff]
        %v3463 = vld [vmem:[#allocation4 + $0x34] sm:$0xff]
        %v3464 = vld [vmem:[#allocation4 + $0x3c] sm:$0xff]
        %v3465 = vld [vmem:[#allocation4 + $0x44] sm:$0xf]
        %v3466 = vld [vmem:[#allocation4 + $0x48] sm:$0xff]
        %v3467 = vld [vmem:[#allocation4 + $0x50] sm:$0xff]
        %v3468 = vld [vmem:[#allocation4 + $0x58] sm:$0xff]
        %v3469 = vld [vmem:[#allocation4 + $0x60] sm:$0xff]
        %v3470 = vld [vmem:[#allocation4 + $0x68] sm:$0xf]
        %v3471 = vld [vmem:[#allocation4 + $0x6c] sm:$0xff]
        %v3472 = vld [vmem:[#allocation4 + $0x74] sm:$0xff]
        %v3473 = vld [vmem:[#allocation4 + $0x7c] sm:$0xff]
        %v3474 = vld [vmem:[#allocation4 + $0x84] sm:$0xff]
        %v3475 = vld [vmem:[#allocation4 + $0x8c] sm:$0xf]
        %v3476 = vld [vmem:[#allocation4 + $0x90] sm:$0xff]
        %v3477 = vld [vmem:[#allocation4 + $0x98] sm:$0xff]
        %v3478 = vld [vmem:[#allocation4 + $0xa0] sm:$0xff]
        %v3479 = vld [vmem:[#allocation4 + $0xa8] sm:$0xff]
        %v3480 = vld [vmem:[#allocation4 + $0xb0] sm:$0xf]
        %v3481 = vld [vmem:[#allocation4 + $0xb4] sm:$0xff]
        %v3482 = vld [vmem:[#allocation4 + $0xbc] sm:$0xff]
        %v3483 = vld [vmem:[#allocation4 + $0xc4] sm:$0xff]
        %v3484 = vld [vmem:[#allocation4 + $0xcc] sm:$0xff]
        %v3485 = vld [vmem:[#allocation4 + $0xd4] sm:$0xf]
        %v3486 = vld [vmem:[#allocation4 + $0xd8] sm:$0xff]
        %v3487 = vld [vmem:[#allocation4 + $0xe0] sm:$0xff]
        %v3488 = vld [vmem:[#allocation4 + $0xe8] sm:$0xff]
        %v3489 = vld [vmem:[#allocation4 + $0xf0] sm:$0xff]
        %v3490 = vld [vmem:[#allocation4 + $0xf8] sm:$0xf]
        %v3491 = vld [vmem:[#allocation4 + $0xfc] sm:$0xff]
        %v3492 = vld [vmem:[#allocation4 + $0x104] sm:$0xff]
        %v3493 = vld [vmem:[#allocation4 + $0x10c] sm:$0xff]
        %v3494 = vld [vmem:[#allocation4 + $0x114] sm:$0xff]
        %v3495 = vld [vmem:[#allocation4 + $0x11c] sm:$0xf]
        %v3496 = vld [vmem:[#allocation4 + $0x120] sm:$0xff]
        %v3497 = vld [vmem:[#allocation4 + $0x128] sm:$0xff]
        %v3498 = vld [vmem:[#allocation4 + $0x130] sm:$0xff]
        %v3499 = vld [vmem:[#allocation4 + $0x138] sm:$0xff]
        %v3500 = vld [vmem:[#allocation4 + $0x140] sm:$0xf]
        %v3501 = vld [vmem:[#allocation4 + $0x144] sm:$0xff]
        %v3502 = vld [vmem:[#allocation4 + $0x14c] sm:$0xff]
        %v3503 = vld [vmem:[#allocation4 + $0x154] sm:$0xff]
        %v3504 = vld [vmem:[#allocation4 + $0x15c] sm:$0xff]
        %v3505 = vld [vmem:[#allocation4 + $0x164] sm:$0xf]
        %v3506 = vld [vmem:[#allocation4 + $0x168] sm:$0xff]
        %v3507 = vld [vmem:[#allocation4 + $0x170] sm:$0xff]
        %v3508 = vld [vmem:[#allocation4 + $0x178] sm:$0xff]
        %v3509 = vld [vmem:[#allocation4 + $0x180] sm:$0xff]
        %v3510 = vld [vmem:[#allocation4 + $0x188] sm:$0xf]
        %v3511 = vld [vmem:[#allocation4 + $0x18c] sm:$0xff]
        %v3512 = vld [vmem:[#allocation4 + $0x194] sm:$0xff]
        %v3513 = vld [vmem:[#allocation4 + $0x19c] sm:$0xff]
        %v3514 = vld [vmem:[#allocation4 + $0x1a4] sm:$0xff]
        %v3515 = vld [vmem:[#allocation4 + $0x1ac] sm:$0xf]
        %v3516 = vld [vmem:[#allocation4 + $0x1b0] sm:$0xff]
        %v3517 = vld [vmem:[#allocation4 + $0x1b8] sm:$0xff]
        %v3518 = vld [vmem:[#allocation4 + $0x1c0] sm:$0xff]
        %v3519 = vld [vmem:[#allocation4 + $0x1c8] sm:$0xff]
        %v3520 = vld [vmem:[#allocation4 + $0x1d0] sm:$0xf]
        %v3521 = vld [vmem:[#allocation4 + $0x1d4] sm:$0xff]
        %v3522 = vld [vmem:[#allocation4 + $0x1dc] sm:$0xff]
        %v3523 = vld [vmem:[#allocation4 + $0x1e4] sm:$0xff]
        %v3524 = vld [vmem:[#allocation4 + $0x1ec] sm:$0xff]
        %v3525 = vld [vmem:[#allocation4 + $0x1f4] sm:$0xf]
        %v3526 = vld [vmem:[#allocation4 + $0x1f8] sm:$0xff]
        %v3527 = vld [vmem:[#allocation4 + $0x200] sm:$0xff]
        %v3528 = vld [vmem:[#allocation4 + $0x208] sm:$0xff]
        %v3529 = vld [vmem:[#allocation4 + $0x210] sm:$0xff]
        %v3530 = vld [vmem:[#allocation4 + $0x218] sm:$0xf]
        %v3531 = vld [vmem:[#allocation4 + $0x21c] sm:$0xff]
        %v3532 = vld [vmem:[#allocation4 + $0x224] sm:$0xff]
        %v3533 = vld [vmem:[#allocation4 + $0x22c] sm:$0xff]
        %v3534 = vld [vmem:[#allocation4 + $0x234] sm:$0xff]
        %v3535 = vld [vmem:[#allocation4 + $0x23c] sm:$0xf]
        %v3536 = vld [vmem:[%s3] sm:$0xf]
        %v3537 = vld [vmem:[%s3 + $0x4] sm:$0xf]
        %v3538 = vld [vmem:[%s3 + $0x8] sm:$0xf]
        %v3539 = vld [vmem:[%s3 + $0xc] sm:$0xf]
        %v3540 = vld [vmem:[%s3 + $0x10] sm:$0xf]
        %v3541 = vld [vmem:[%s3 + $0x14] sm:$0xf]
        %v3542 = vld [vmem:[%s3 + $0x18] sm:$0xf]
        %v3543 = vld [vmem:[%s3 + $0x1c] sm:$0xf]
        %v3544 = vld [vmem:[%s3 + $0x20] sm:$0xf]
        %v3545 = vld [vmem:[%s3 + $0x24] sm:$0xf]
        %v3546 = vld [vmem:[%s3 + $0x28] sm:$0xf]
        %v3547 = vld [vmem:[%s3 + $0x2c] sm:$0xf]
        %v3548 = vld [vmem:[%s3 + $0x30] sm:$0xf]
        %v3549 = vld [vmem:[%s3 + $0x34] sm:$0xf]
        %v3550 = vld [vmem:[%s3 + $0x38] sm:$0xf]
        %v3551 = vld [vmem:[%s3 + $0x3c] sm:$0xf]
        %v3552 = vld [vmem:[%s3 + $0x40] sm:$0xf]
        %v3553 = vld [vmem:[%s3 + $0x44] sm:$0xf]
        %v3554 = vld [vmem:[%s3 + $0x48] sm:$0xf]
        %v3555 = vld [vmem:[%s3 + $0x4c] sm:$0xf]
        %v3556 = vld [vmem:[%s3 + $0x50] sm:$0xf]
        %v3557 = vld [vmem:[%s3 + $0x54] sm:$0xf]
        %v3558 = vld [vmem:[%s3 + $0x58] sm:$0xf]
        %v3559 = vld [vmem:[%s3 + $0x5c] sm:$0xf]
        %v3560 = vld [vmem:[%s3 + $0x60] sm:$0xf]
        %v3561 = vld [vmem:[%s3 + $0x64] sm:$0xf]
        %v3562 = vld [vmem:[%s3 + $0x68] sm:$0xf]
        %v3563 = vld [vmem:[%s3 + $0x6c] sm:$0xf]
        %v3564 = vld [vmem:[%s3 + $0x70] sm:$0xf]
        %v3565 = vld [vmem:[%s3 + $0x74] sm:$0xf]
        %v3566 = vld [vmem:[%s3 + $0x78] sm:$0xf]
        %v3567 = vld [vmem:[%s3 + $0x7c] sm:$0xf]
        %v3568 = vld [vmem:[%s3 + $0x80] sm:$0xf]
        %v3569 = vld [vmem:[%s3 + $0x84] sm:$0xf]
        %v3570 = vld [vmem:[%s3 + $0x88] sm:$0xf]
        %v3571 = vld [vmem:[%s3 + $0x8c] sm:$0xf]
        %v3572 = vld [vmem:[%s3 + $0x90] sm:$0xf]
        %v3573 = vld [vmem:[%s3 + $0x94] sm:$0xf]
        %v3574 = vld [vmem:[%s3 + $0x98] sm:$0xf]
        %v3575 = vld [vmem:[%s3 + $0x9c] sm:$0xf]
        %v3576 = vld [vmem:[%s3 + $0xa0] sm:$0xf]
        %v3577 = vld [vmem:[%s3 + $0xa4] sm:$0xf]
        %v3578 = vld [vmem:[%s3 + $0xa8] sm:$0xf]
        %v3579 = vld [vmem:[%s3 + $0xac] sm:$0xf]
        %v3580 = vld [vmem:[%s3 + $0xb0] sm:$0xf]
        %v3581 = vld [vmem:[%s3 + $0xb4] sm:$0xf]
        %v3582 = vld [vmem:[%s3 + $0xb8] sm:$0xf]
        %v3583 = vld [vmem:[%s3 + $0xbc] sm:$0xf]
        %v3584 = vld [vmem:[%s3 + $0xc0] sm:$0xf]
        %v3585 = vld [vmem:[%s3 + $0xc4] sm:$0xf]
        %v3586 = vld [vmem:[%s3 + $0xc8] sm:$0xf]
        %v3587 = vld [vmem:[%s3 + $0xcc] sm:$0xf]
        %v3588 = vld [vmem:[%s3 + $0xd0] sm:$0xf]
        %v3589 = vld [vmem:[%s3 + $0xd4] sm:$0xf]
        %v3590 = vld [vmem:[%s3 + $0xd8] sm:$0xf]
        %v3591 = vld [vmem:[%s3 + $0xdc] sm:$0xf]
        %v3592 = vld [vmem:[%s3 + $0xe0] sm:$0xf]
        %v3593 = vld [vmem:[%s3 + $0xe4] sm:$0xf]
        %v3594 = vld [vmem:[%s3 + $0xe8] sm:$0xf]
        %v3595 = vld [vmem:[%s3 + $0xec] sm:$0xf]
        %v3596 = vld [vmem:[%s3 + $0xf0] sm:$0xf]
        %v3597 = vld [vmem:[%s3 + $0xf4] sm:$0xf]
        %v3598 = vld [vmem:[%s3 + $0xf8] sm:$0xf]
        %v3599 = vld [vmem:[%s3 + $0xfc] sm:$0xf]
        %v3600 = vld [vmem:[%s3 + $0x100] sm:$0xf]
        %v3601 = vld [vmem:[%s3 + $0x104] sm:$0xf]
        %v3602 = vld [vmem:[%s3 + $0x108] sm:$0xf]
        %v3603 = vld [vmem:[%s3 + $0x10c] sm:$0xf]
        %v3604 = vld [vmem:[%s3 + $0x110] sm:$0xf]
        %v3605 = vld [vmem:[%s3 + $0x114] sm:$0xf]
        %v3606 = vld [vmem:[%s3 + $0x118] sm:$0xf]
        %v3607 = vld [vmem:[%s3 + $0x11c] sm:$0xf]
        %v3608 = vld [vmem:[%s3 + $0x120] sm:$0xf]
        %v3609 = vld [vmem:[%s3 + $0x124] sm:$0xf]
        %v3610 = vld [vmem:[%s3 + $0x128] sm:$0xf]
        %v3611 = vld [vmem:[%s3 + $0x12c] sm:$0xf]
        %v3612 = vld [vmem:[%s3 + $0x130] sm:$0xf]
        %v3613 = vld [vmem:[%s3 + $0x134] sm:$0xf]
        %v3614 = vld [vmem:[%s3 + $0x138] sm:$0xf]
        %v3615 = vld [vmem:[%s3 + $0x13c] sm:$0xf]
        %v3616 = vld [vmem:[%s3 + $0x140] sm:$0xf]
        %v3617 = vld [vmem:[%s3 + $0x144] sm:$0xf]
        %v3618 = vld [vmem:[%s3 + $0x148] sm:$0xf]
        %v3619 = vld [vmem:[%s3 + $0x14c] sm:$0xf]
        %v3620 = vld [vmem:[%s3 + $0x150] sm:$0xf]
        %v3621 = vld [vmem:[%s3 + $0x154] sm:$0xf]
        %v3622 = vld [vmem:[%s3 + $0x158] sm:$0xf]
        %v3623 = vld [vmem:[%s3 + $0x15c] sm:$0xf]
        %v3624 = vld [vmem:[%s3 + $0x160] sm:$0xf]
        %v3625 = vld [vmem:[%s3 + $0x164] sm:$0xf]
        %v3626 = vld [vmem:[%s3 + $0x168] sm:$0xf]
        %v3627 = vld [vmem:[%s3 + $0x16c] sm:$0xf]
        %v3628 = vld [vmem:[%s3 + $0x170] sm:$0xf]
        %v3629 = vld [vmem:[%s3 + $0x174] sm:$0xf]
        %v3630 = vld [vmem:[%s3 + $0x178] sm:$0xf]
        %v3631 = vld [vmem:[%s3 + $0x17c] sm:$0xf]
        %v3632 = vld [vmem:[%s3 + $0x180] sm:$0xf]
        %v3633 = vld [vmem:[%s3 + $0x184] sm:$0xf]
        %v3634 = vld [vmem:[%s3 + $0x188] sm:$0xf]
        %v3635 = vld [vmem:[%s3 + $0x18c] sm:$0xf]
        %v3636 = vld [vmem:[%s3 + $0x190] sm:$0xf]
        %v3637 = vld [vmem:[%s3 + $0x194] sm:$0xf]
        %v3638 = vld [vmem:[%s3 + $0x198] sm:$0xf]
        %v3639 = vld [vmem:[%s3 + $0x19c] sm:$0xf]
        %v3640 = vld [vmem:[%s3 + $0x1a0] sm:$0xf]
        %v3641 = vld [vmem:[%s3 + $0x1a4] sm:$0xf]
        %v3642 = vld [vmem:[%s3 + $0x1a8] sm:$0xf]
        %v3643 = vld [vmem:[%s3 + $0x1ac] sm:$0xf]
        %v3644 = vld [vmem:[%s3 + $0x1b0] sm:$0xf]
        %v3645 = vld [vmem:[%s3 + $0x1b4] sm:$0xf]
        %v3646 = vld [vmem:[%s3 + $0x1b8] sm:$0xf]
        %v3647 = vld [vmem:[%s3 + $0x1bc] sm:$0xf]
        %v3648 = vld [vmem:[%s3 + $0x1c0] sm:$0xf]
        %v3649 = vld [vmem:[%s3 + $0x1c4] sm:$0xf]
        %v3650 = vld [vmem:[%s3 + $0x1c8] sm:$0xf]
        %v3651 = vld [vmem:[%s3 + $0x1cc] sm:$0xf]
        %v3652 = vld [vmem:[%s3 + $0x1d0] sm:$0xf]
        %v3653 = vld [vmem:[%s3 + $0x1d4] sm:$0xf]
        %v3654 = vld [vmem:[%s3 + $0x1d8] sm:$0xf]
        %v3655 = vld [vmem:[%s3 + $0x1dc] sm:$0xf]
        %v3656 = vld [vmem:[%s3 + $0x1e0] sm:$0xf]
        %v3657 = vld [vmem:[%s3 + $0x1e4] sm:$0xf]
        %v3658 = vld [vmem:[%s3 + $0x1e8] sm:$0xf]
        %v3659 = vld [vmem:[%s3 + $0x1ec] sm:$0xf]
        %v3660 = vld [vmem:[%s3 + $0x1f0] sm:$0xf]
        %v3661 = vld [vmem:[%s3 + $0x1f4] sm:$0xf]
        %v3662 = vld [vmem:[%s3 + $0x1f8] sm:$0xf]
        %v3663 = vld [vmem:[%s3 + $0x1fc] sm:$0xf]
        %v3664 = vld [vmem:[%s3 + $0x200] sm:$0xf]
        %v3665 = vld [vmem:[%s3 + $0x204] sm:$0xf]
        %v3666 = vld [vmem:[%s3 + $0x208] sm:$0xf]
        %v3667 = vld [vmem:[%s3 + $0x20c] sm:$0xf]
        %v3668 = vld [vmem:[%s3 + $0x210] sm:$0xf]
        %v3669 = vld [vmem:[%s3 + $0x214] sm:$0xf]
        %v3670 = vld [vmem:[%s3 + $0x218] sm:$0xf]
        %v3671 = vld [vmem:[%s3 + $0x21c] sm:$0xf]
        %v3672 = vld [vmem:[%s3 + $0x220] sm:$0xf]
        %v3673 = vld [vmem:[%s3 + $0x224] sm:$0xf]
        %v3674 = vld [vmem:[%s3 + $0x228] sm:$0xf]
        %v3675 = vld [vmem:[%s3 + $0x22c] sm:$0xf]
        %v3676 = vld [vmem:[%s3 + $0x230] sm:$0xf]
        %v3677 = vld [vmem:[%s3 + $0x234] sm:$0xf]
        %v3678 = vld [vmem:[%s3 + $0x238] sm:$0xf]
        %v3679 = vld [vmem:[%s3 + $0x23c] sm:$0xf]
        %v3680 = vld [vmem:[%s4] sm:$0x1]
        %v3682 = vperm.slane %v3680, 0
        %v3764 = vunpack.c.l.b16 %v3456
        %v3765 = vunpack.c.h.b16 %v3456
        %v3766 = vunpack.c.l.b16 %v3457
        %v3767 = vunpack.c.h.b16 %v3457
        %v3768 = vunpack.c.l.b16 %v3458
        %v3769 = vunpack.c.h.b16 %v3458
        %v3770 = vunpack.c.l.b16 %v3459
        %v3771 = vunpack.c.h.b16 %v3459
        %v3772 = vunpack.c.l.b16 %v3460
        %v3773 = vunpack.c.l.b16 %v3461
        %v3774 = vunpack.c.h.b16 %v3461
        %v3775 = vunpack.c.l.b16 %v3462
        %v3776 = vunpack.c.h.b16 %v3462
        %v3777 = vunpack.c.l.b16 %v3463
        %v3778 = vunpack.c.h.b16 %v3463
        %v3779 = vunpack.c.l.b16 %v3464
        %v3780 = vunpack.c.h.b16 %v3464
        %v3781 = vunpack.c.l.b16 %v3465
        %v3782 = vunpack.c.l.b16 %v3466
        %v3783 = vunpack.c.h.b16 %v3466
        %v3784 = vunpack.c.l.b16 %v3467
        %v3785 = vunpack.c.h.b16 %v3467
        %v3786 = vunpack.c.l.b16 %v3468
        %v3787 = vunpack.c.h.b16 %v3468
        %v3788 = vunpack.c.l.b16 %v3469
        %v3789 = vunpack.c.h.b16 %v3469
        %v3790 = vunpack.c.l.b16 %v3470
        %v3791 = vunpack.c.l.b16 %v3471
        %v3792 = vunpack.c.h.b16 %v3471
        %v3793 = vunpack.c.l.b16 %v3472
        %v3794 = vunpack.c.h.b16 %v3472
        %v3795 = vunpack.c.l.b16 %v3473
        %v3796 = vunpack.c.h.b16 %v3473
        %v3797 = vunpack.c.l.b16 %v3474
        %v3798 = vunpack.c.h.b16 %v3474
        %v3799 = vunpack.c.l.b16 %v3475
        %v3800 = vunpack.c.l.b16 %v3476
        %v3801 = vunpack.c.h.b16 %v3476
        %v3802 = vunpack.c.l.b16 %v3477
        %v3803 = vunpack.c.h.b16 %v3477
        %v3804 = vunpack.c.l.b16 %v3478
        %v3805 = vunpack.c.h.b16 %v3478
        %v3806 = vunpack.c.l.b16 %v3479
        %v3807 = vunpack.c.h.b16 %v3479
        %v3808 = vunpack.c.l.b16 %v3480
        %v3809 = vunpack.c.l.b16 %v3481
        %v3810 = vunpack.c.h.b16 %v3481
        %v3811 = vunpack.c.l.b16 %v3482
        %v3812 = vunpack.c.h.b16 %v3482
        %v3813 = vunpack.c.l.b16 %v3483
        %v3814 = vunpack.c.h.b16 %v3483
        %v3815 = vunpack.c.l.b16 %v3484
        %v3816 = vunpack.c.h.b16 %v3484
        %v3817 = vunpack.c.l.b16 %v3485
        %v3818 = vunpack.c.l.b16 %v3486
        %v3819 = vunpack.c.h.b16 %v3486
        %v3820 = vunpack.c.l.b16 %v3487
        %v3821 = vunpack.c.h.b16 %v3487
        %v3822 = vunpack.c.l.b16 %v3488
        %v3823 = vunpack.c.h.b16 %v3488
        %v3824 = vunpack.c.l.b16 %v3489
        %v3825 = vunpack.c.h.b16 %v3489
        %v3826 = vunpack.c.l.b16 %v3490
        %v3827 = vunpack.c.l.b16 %v3491
        %v3828 = vunpack.c.h.b16 %v3491
        %v3829 = vunpack.c.l.b16 %v3492
        %v3830 = vunpack.c.h.b16 %v3492
        %v3831 = vunpack.c.l.b16 %v3493
        %v3832 = vunpack.c.h.b16 %v3493
        %v3833 = vunpack.c.l.b16 %v3494
        %v3834 = vunpack.c.h.b16 %v3494
        %v3835 = vunpack.c.l.b16 %v3495
        %v3836 = vunpack.c.l.b16 %v3496
        %v3837 = vunpack.c.h.b16 %v3496
        %v3838 = vunpack.c.l.b16 %v3497
        %v3839 = vunpack.c.h.b16 %v3497
        %v3840 = vunpack.c.l.b16 %v3498
        %v3841 = vunpack.c.h.b16 %v3498
        %v3842 = vunpack.c.l.b16 %v3499
        %v3843 = vunpack.c.h.b16 %v3499
        %v3844 = vunpack.c.l.b16 %v3500
        %v3845 = vunpack.c.l.b16 %v3501
        %v3846 = vunpack.c.h.b16 %v3501
        %v3847 = vunpack.c.l.b16 %v3502
        %v3848 = vunpack.c.h.b16 %v3502
        %v3849 = vunpack.c.l.b16 %v3503
        %v3850 = vunpack.c.h.b16 %v3503
        %v3851 = vunpack.c.l.b16 %v3504
        %v3852 = vunpack.c.h.b16 %v3504
        %v3853 = vunpack.c.l.b16 %v3505
        %v3854 = vunpack.c.l.b16 %v3506
        %v3855 = vunpack.c.h.b16 %v3506
        %v3856 = vunpack.c.l.b16 %v3507
        %v3857 = vunpack.c.h.b16 %v3507
        %v3858 = vunpack.c.l.b16 %v3508
        %v3859 = vunpack.c.h.b16 %v3508
        %v3860 = vunpack.c.l.b16 %v3509
        %v3861 = vunpack.c.h.b16 %v3509
        %v3862 = vunpack.c.l.b16 %v3510
        %v3863 = vunpack.c.l.b16 %v3511
        %v3864 = vunpack.c.h.b16 %v3511
        %v3865 = vunpack.c.l.b16 %v3512
        %v3866 = vunpack.c.h.b16 %v3512
        %v3867 = vunpack.c.l.b16 %v3513
        %v3868 = vunpack.c.h.b16 %v3513
        %v3869 = vunpack.c.l.b16 %v3514
        %v3870 = vunpack.c.h.b16 %v3514
        %v3871 = vunpack.c.l.b16 %v3515
        %v3872 = vunpack.c.l.b16 %v3516
        %v3873 = vunpack.c.h.b16 %v3516
        %v3874 = vunpack.c.l.b16 %v3517
        %v3875 = vunpack.c.h.b16 %v3517
        %v3876 = vunpack.c.l.b16 %v3518
        %v3877 = vunpack.c.h.b16 %v3518
        %v3878 = vunpack.c.l.b16 %v3519
        %v3879 = vunpack.c.h.b16 %v3519
        %v3880 = vunpack.c.l.b16 %v3520
        %v3881 = vunpack.c.l.b16 %v3521
        %v3882 = vunpack.c.h.b16 %v3521
        %v3883 = vunpack.c.l.b16 %v3522
        %v3884 = vunpack.c.h.b16 %v3522
        %v3885 = vunpack.c.l.b16 %v3523
        %v3886 = vunpack.c.h.b16 %v3523
        %v3887 = vunpack.c.l.b16 %v3524
        %v3888 = vunpack.c.h.b16 %v3524
        %v3889 = vunpack.c.l.b16 %v3525
        %v3890 = vunpack.c.l.b16 %v3526
        %v3891 = vunpack.c.h.b16 %v3526
        %v3892 = vunpack.c.l.b16 %v3527
        %v3893 = vunpack.c.h.b16 %v3527
        %v3894 = vunpack.c.l.b16 %v3528
        %v3895 = vunpack.c.h.b16 %v3528
        %v3896 = vunpack.c.l.b16 %v3529
        %v3897 = vunpack.c.h.b16 %v3529
        %v3898 = vunpack.c.l.b16 %v3530
        %v3899 = vunpack.c.l.b16 %v3531
        %v3900 = vunpack.c.h.b16 %v3531
        %v3901 = vunpack.c.l.b16 %v3532
        %v3902 = vunpack.c.h.b16 %v3532
        %v3903 = vunpack.c.l.b16 %v3533
        %v3904 = vunpack.c.h.b16 %v3533
        %v3905 = vunpack.c.l.b16 %v3534
        %v3906 = vunpack.c.h.b16 %v3534
        %v3907 = vunpack.c.l.b16 %v3535
        %v3908 = vpack.c.b16 %v3773, %v3764
        %v3909 = vpack.c.b16 %v3774, %v3765
        %v3910 = vpack.c.b16 %v3775, %v3766
        %v3911 = vpack.c.b16 %v3776, %v3767
        %v3912 = vpack.c.b16 %v3777, %v3768
        %v3913 = vpack.c.b16 %v3778, %v3769
        %v3914 = vpack.c.b16 %v3779, %v3770
        %v3915 = vpack.c.b16 %v3780, %v3771
        %v3916 = vpack.c.b16 %v3781, %v3772
        %v3917 = vpack.c.b16 %v3791, %v3782
        %v3918 = vpack.c.b16 %v3792, %v3783
        %v3919 = vpack.c.b16 %v3793, %v3784
        %v3920 = vpack.c.b16 %v3794, %v3785
        %v3921 = vpack.c.b16 %v3795, %v3786
        %v3922 = vpack.c.b16 %v3796, %v3787
        %v3923 = vpack.c.b16 %v3797, %v3788
        %v3924 = vpack.c.b16 %v3798, %v3789
        %v3925 = vpack.c.b16 %v3799, %v3790
        %v3926 = vpack.c.b16 %v3809, %v3800
        %v3927 = vpack.c.b16 %v3810, %v3801
        %v3928 = vpack.c.b16 %v3811, %v3802
        %v3929 = vpack.c.b16 %v3812, %v3803
        %v3930 = vpack.c.b16 %v3813, %v3804
        %v3931 = vpack.c.b16 %v3814, %v3805
        %v3932 = vpack.c.b16 %v3815, %v3806
        %v3933 = vpack.c.b16 %v3816, %v3807
        %v3934 = vpack.c.b16 %v3817, %v3808
        %v3935 = vpack.c.b16 %v3827, %v3818
        %v3936 = vpack.c.b16 %v3828, %v3819
        %v3937 = vpack.c.b16 %v3829, %v3820
        %v3938 = vpack.c.b16 %v3830, %v3821
        %v3939 = vpack.c.b16 %v3831, %v3822
        %v3940 = vpack.c.b16 %v3832, %v3823
        %v3941 = vpack.c.b16 %v3833, %v3824
        %v3942 = vpack.c.b16 %v3834, %v3825
        %v3943 = vpack.c.b16 %v3835, %v3826
        %v3944 = vpack.c.b16 %v3845, %v3836
        %v3945 = vpack.c.b16 %v3846, %v3837
        %v3946 = vpack.c.b16 %v3847, %v3838
        %v3947 = vpack.c.b16 %v3848, %v3839
        %v3948 = vpack.c.b16 %v3849, %v3840
        %v3949 = vpack.c.b16 %v3850, %v3841
        %v3950 = vpack.c.b16 %v3851, %v3842
        %v3951 = vpack.c.b16 %v3852, %v3843
        %v3952 = vpack.c.b16 %v3853, %v3844
        %v3953 = vpack.c.b16 %v3863, %v3854
        %v3954 = vpack.c.b16 %v3864, %v3855
        %v3955 = vpack.c.b16 %v3865, %v3856
        %v3956 = vpack.c.b16 %v3866, %v3857
        %v3957 = vpack.c.b16 %v3867, %v3858
        %v3958 = vpack.c.b16 %v3868, %v3859
        %v3959 = vpack.c.b16 %v3869, %v3860
        %v3960 = vpack.c.b16 %v3870, %v3861
        %v3961 = vpack.c.b16 %v3871, %v3862
        %v3962 = vpack.c.b16 %v3881, %v3872
        %v3963 = vpack.c.b16 %v3882, %v3873
        %v3964 = vpack.c.b16 %v3883, %v3874
        %v3965 = vpack.c.b16 %v3884, %v3875
        %v3966 = vpack.c.b16 %v3885, %v3876
        %v3967 = vpack.c.b16 %v3886, %v3877
        %v3968 = vpack.c.b16 %v3887, %v3878
        %v3969 = vpack.c.b16 %v3888, %v3879
        %v3970 = vpack.c.b16 %v3889, %v3880
        %v3971 = vpack.c.b16 %v3899, %v3890
        %v3972 = vpack.c.b16 %v3900, %v3891
        %v3973 = vpack.c.b16 %v3901, %v3892
        %v3974 = vpack.c.b16 %v3902, %v3893
        %v3975 = vpack.c.b16 %v3903, %v3894
        %v3976 = vpack.c.b16 %v3904, %v3895
        %v3977 = vpack.c.b16 %v3905, %v3896
        %v3978 = vpack.c.b16 %v3906, %v3897
        %v3979 = vpack.c.b16 %v3907, %v3898
        %v4196 = vunpack.c.l.b16 %v3536
        %v4197 = vunpack.c.l.b16 %v3537
        %v4198 = vunpack.c.l.b16 %v3538
        %v4199 = vunpack.c.l.b16 %v3539
        %v4200 = vunpack.c.l.b16 %v3540
        %v4201 = vunpack.c.l.b16 %v3541
        %v4202 = vunpack.c.l.b16 %v3542
        %v4203 = vunpack.c.l.b16 %v3543
        %v4204 = vunpack.c.l.b16 %v3544
        %v4205 = vunpack.c.l.b16 %v3545
        %v4206 = vunpack.c.l.b16 %v3546
        %v4207 = vunpack.c.l.b16 %v3547
        %v4208 = vunpack.c.l.b16 %v3548
        %v4209 = vunpack.c.l.b16 %v3549
        %v4210 = vunpack.c.l.b16 %v3550
        %v4211 = vunpack.c.l.b16 %v3551
        %v4212 = vunpack.c.l.b16 %v3552
        %v4213 = vunpack.c.l.b16 %v3553
        %v4214 = vunpack.c.l.b16 %v3554
        %v4215 = vunpack.c.l.b16 %v3555
        %v4216 = vunpack.c.l.b16 %v3556
        %v4217 = vunpack.c.l.b16 %v3557
        %v4218 = vunpack.c.l.b16 %v3558
        %v4219 = vunpack.c.l.b16 %v3559
        %v4220 = vunpack.c.l.b16 %v3560
        %v4221 = vunpack.c.l.b16 %v3561
        %v4222 = vunpack.c.l.b16 %v3562
        %v4223 = vunpack.c.l.b16 %v3563
        %v4224 = vunpack.c.l.b16 %v3564
        %v4225 = vunpack.c.l.b16 %v3565
        %v4226 = vunpack.c.l.b16 %v3566
        %v4227 = vunpack.c.l.b16 %v3567
        %v4228 = vunpack.c.l.b16 %v3568
        %v4229 = vunpack.c.l.b16 %v3569
        %v4230 = vunpack.c.l.b16 %v3570
        %v4231 = vunpack.c.l.b16 %v3571
        %v4232 = vunpack.c.l.b16 %v3572
        %v4233 = vunpack.c.l.b16 %v3573
        %v4234 = vunpack.c.l.b16 %v3574
        %v4235 = vunpack.c.l.b16 %v3575
        %v4236 = vunpack.c.l.b16 %v3576
        %v4237 = vunpack.c.l.b16 %v3577
        %v4238 = vunpack.c.l.b16 %v3578
        %v4239 = vunpack.c.l.b16 %v3579
        %v4240 = vunpack.c.l.b16 %v3580
        %v4241 = vunpack.c.l.b16 %v3581
        %v4242 = vunpack.c.l.b16 %v3582
        %v4243 = vunpack.c.l.b16 %v3583
        %v4244 = vunpack.c.l.b16 %v3584
        %v4245 = vunpack.c.l.b16 %v3585
        %v4246 = vunpack.c.l.b16 %v3586
        %v4247 = vunpack.c.l.b16 %v3587
        %v4248 = vunpack.c.l.b16 %v3588
        %v4249 = vunpack.c.l.b16 %v3589
        %v4250 = vunpack.c.l.b16 %v3590
        %v4251 = vunpack.c.l.b16 %v3591
        %v4252 = vunpack.c.l.b16 %v3592
        %v4253 = vunpack.c.l.b16 %v3593
        %v4254 = vunpack.c.l.b16 %v3594
        %v4255 = vunpack.c.l.b16 %v3595
        %v4256 = vunpack.c.l.b16 %v3596
        %v4257 = vunpack.c.l.b16 %v3597
        %v4258 = vunpack.c.l.b16 %v3598
        %v4259 = vunpack.c.l.b16 %v3599
        %v4260 = vunpack.c.l.b16 %v3600
        %v4261 = vunpack.c.l.b16 %v3601
        %v4262 = vunpack.c.l.b16 %v3602
        %v4263 = vunpack.c.l.b16 %v3603
        %v4264 = vunpack.c.l.b16 %v3604
        %v4265 = vunpack.c.l.b16 %v3605
        %v4266 = vunpack.c.l.b16 %v3606
        %v4267 = vunpack.c.l.b16 %v3607
        %v4268 = vunpack.c.l.b16 %v3608
        %v4269 = vunpack.c.l.b16 %v3609
        %v4270 = vunpack.c.l.b16 %v3610
        %v4271 = vunpack.c.l.b16 %v3611
        %v4272 = vunpack.c.l.b16 %v3612
        %v4273 = vunpack.c.l.b16 %v3613
        %v4274 = vunpack.c.l.b16 %v3614
        %v4275 = vunpack.c.l.b16 %v3615
        %v4276 = vunpack.c.l.b16 %v3616
        %v4277 = vunpack.c.l.b16 %v3617
        %v4278 = vunpack.c.l.b16 %v3618
        %v4279 = vunpack.c.l.b16 %v3619
        %v4280 = vunpack.c.l.b16 %v3620
        %v4281 = vunpack.c.l.b16 %v3621
        %v4282 = vunpack.c.l.b16 %v3622
        %v4283 = vunpack.c.l.b16 %v3623
        %v4284 = vunpack.c.l.b16 %v3624
        %v4285 = vunpack.c.l.b16 %v3625
        %v4286 = vunpack.c.l.b16 %v3626
        %v4287 = vunpack.c.l.b16 %v3627
        %v4288 = vunpack.c.l.b16 %v3628
        %v4289 = vunpack.c.l.b16 %v3629
        %v4290 = vunpack.c.l.b16 %v3630
        %v4291 = vunpack.c.l.b16 %v3631
        %v4292 = vunpack.c.l.b16 %v3632
        %v4293 = vunpack.c.l.b16 %v3633
        %v4294 = vunpack.c.l.b16 %v3634
        %v4295 = vunpack.c.l.b16 %v3635
        %v4296 = vunpack.c.l.b16 %v3636
        %v4297 = vunpack.c.l.b16 %v3637
        %v4298 = vunpack.c.l.b16 %v3638
        %v4299 = vunpack.c.l.b16 %v3639
        %v4300 = vunpack.c.l.b16 %v3640
        %v4301 = vunpack.c.l.b16 %v3641
        %v4302 = vunpack.c.l.b16 %v3642
        %v4303 = vunpack.c.l.b16 %v3643
        %v4304 = vunpack.c.l.b16 %v3644
        %v4305 = vunpack.c.l.b16 %v3645
        %v4306 = vunpack.c.l.b16 %v3646
        %v4307 = vunpack.c.l.b16 %v3647
        %v4308 = vunpack.c.l.b16 %v3648
        %v4309 = vunpack.c.l.b16 %v3649
        %v4310 = vunpack.c.l.b16 %v3650
        %v4311 = vunpack.c.l.b16 %v3651
        %v4312 = vunpack.c.l.b16 %v3652
        %v4313 = vunpack.c.l.b16 %v3653
        %v4314 = vunpack.c.l.b16 %v3654
        %v4315 = vunpack.c.l.b16 %v3655
        %v4316 = vunpack.c.l.b16 %v3656
        %v4317 = vunpack.c.l.b16 %v3657
        %v4318 = vunpack.c.l.b16 %v3658
        %v4319 = vunpack.c.l.b16 %v3659
        %v4320 = vunpack.c.l.b16 %v3660
        %v4321 = vunpack.c.l.b16 %v3661
        %v4322 = vunpack.c.l.b16 %v3662
        %v4323 = vunpack.c.l.b16 %v3663
        %v4324 = vunpack.c.l.b16 %v3664
        %v4325 = vunpack.c.l.b16 %v3665
        %v4326 = vunpack.c.l.b16 %v3666
        %v4327 = vunpack.c.l.b16 %v3667
        %v4328 = vunpack.c.l.b16 %v3668
        %v4329 = vunpack.c.l.b16 %v3669
        %v4330 = vunpack.c.l.b16 %v3670
        %v4331 = vunpack.c.l.b16 %v3671
        %v4332 = vunpack.c.l.b16 %v3672
        %v4333 = vunpack.c.l.b16 %v3673
        %v4334 = vunpack.c.l.b16 %v3674
        %v4335 = vunpack.c.l.b16 %v3675
        %v4336 = vunpack.c.l.b16 %v3676
        %v4337 = vunpack.c.l.b16 %v3677
        %v4338 = vunpack.c.l.b16 %v3678
        %v4339 = vunpack.c.l.b16 %v3679
        %v4340 = vpack.c.b16 %v4197, %v4196
        %v4341 = vpack.c.b16 %v4199, %v4198
        %v4342 = vpack.c.b16 %v4201, %v4200
        %v4343 = vpack.c.b16 %v4203, %v4202
        %v4344 = vpack.c.b16 %v4205, %v4204
        %v4345 = vpack.c.b16 %v4207, %v4206
        %v4346 = vpack.c.b16 %v4209, %v4208
        %v4347 = vpack.c.b16 %v4211, %v4210
        %v4348 = vpack.c.b16 %v4213, %v4212
        %v4349 = vpack.c.b16 %v4215, %v4214
        %v4350 = vpack.c.b16 %v4217, %v4216
        %v4351 = vpack.c.b16 %v4219, %v4218
        %v4352 = vpack.c.b16 %v4221, %v4220
        %v4353 = vpack.c.b16 %v4223, %v4222
        %v4354 = vpack.c.b16 %v4225, %v4224
        %v4355 = vpack.c.b16 %v4227, %v4226
        %v4356 = vpack.c.b16 %v4229, %v4228
        %v4357 = vpack.c.b16 %v4231, %v4230
        %v4358 = vpack.c.b16 %v4233, %v4232
        %v4359 = vpack.c.b16 %v4235, %v4234
        %v4360 = vpack.c.b16 %v4237, %v4236
        %v4361 = vpack.c.b16 %v4239, %v4238
        %v4362 = vpack.c.b16 %v4241, %v4240
        %v4363 = vpack.c.b16 %v4243, %v4242
        %v4364 = vpack.c.b16 %v4245, %v4244
        %v4365 = vpack.c.b16 %v4247, %v4246
        %v4366 = vpack.c.b16 %v4249, %v4248
        %v4367 = vpack.c.b16 %v4251, %v4250
        %v4368 = vpack.c.b16 %v4253, %v4252
        %v4369 = vpack.c.b16 %v4255, %v4254
        %v4370 = vpack.c.b16 %v4257, %v4256
        %v4371 = vpack.c.b16 %v4259, %v4258
        %v4372 = vpack.c.b16 %v4261, %v4260
        %v4373 = vpack.c.b16 %v4263, %v4262
        %v4374 = vpack.c.b16 %v4265, %v4264
        %v4375 = vpack.c.b16 %v4267, %v4266
        %v4376 = vpack.c.b16 %v4269, %v4268
        %v4377 = vpack.c.b16 %v4271, %v4270
        %v4378 = vpack.c.b16 %v4273, %v4272
        %v4379 = vpack.c.b16 %v4275, %v4274
        %v4380 = vpack.c.b16 %v4277, %v4276
        %v4381 = vpack.c.b16 %v4279, %v4278
        %v4382 = vpack.c.b16 %v4281, %v4280
        %v4383 = vpack.c.b16 %v4283, %v4282
        %v4384 = vpack.c.b16 %v4285, %v4284
        %v4385 = vpack.c.b16 %v4287, %v4286
        %v4386 = vpack.c.b16 %v4289, %v4288
        %v4387 = vpack.c.b16 %v4291, %v4290
        %v4388 = vpack.c.b16 %v4293, %v4292
        %v4389 = vpack.c.b16 %v4295, %v4294
        %v4390 = vpack.c.b16 %v4297, %v4296
        %v4391 = vpack.c.b16 %v4299, %v4298
        %v4392 = vpack.c.b16 %v4301, %v4300
        %v4393 = vpack.c.b16 %v4303, %v4302
        %v4394 = vpack.c.b16 %v4305, %v4304
        %v4395 = vpack.c.b16 %v4307, %v4306
        %v4396 = vpack.c.b16 %v4309, %v4308
        %v4397 = vpack.c.b16 %v4311, %v4310
        %v4398 = vpack.c.b16 %v4313, %v4312
        %v4399 = vpack.c.b16 %v4315, %v4314
        %v4400 = vpack.c.b16 %v4317, %v4316
        %v4401 = vpack.c.b16 %v4319, %v4318
        %v4402 = vpack.c.b16 %v4321, %v4320
        %v4403 = vpack.c.b16 %v4323, %v4322
        %v4404 = vpack.c.b16 %v4325, %v4324
        %v4405 = vpack.c.b16 %v4327, %v4326
        %v4406 = vpack.c.b16 %v4329, %v4328
        %v4407 = vpack.c.b16 %v4331, %v4330
        %v4408 = vpack.c.b16 %v4333, %v4332
        %v4409 = vpack.c.b16 %v4335, %v4334
        %v4410 = vpack.c.b16 %v4337, %v4336
        %v4411 = vpack.c.b16 %v4339, %v4338
        %4484 = vmatpush.bf16.msra.mxu0 %v4347
        %4485 = vmatpush.bf16.msra.mxu0 %v4346
        %4486 = vmatpush.bf16.msra.mxu0 %v4345
        %4487 = vmatpush.bf16.msra.mxu0 %v4344
        %4488 = vmatpush.bf16.msra.mxu0 %v4343
        %4489 = vmatpush.bf16.msra.mxu0 %v4342
        %4490 = vmatpush.bf16.msra.mxu0 %v4341
        %4491 = vmatpush.bf16.msra.mxu0 %v4340
        %4492 = vmatmul.bf16.gmra.mxu0 %v3908
        %v4493 = vpop.f32.mrf.mxu0
        %v4494 = vadd.f32 %v3682, %v4493
        %v4495 = vpop.f32.mrf.mxu0
        %v4496 = vadd.f32 %v3682, %v4495
        %4497 = vmatmul.bf16.gmra.mxu0 %v3917
        %v4498 = vpop.f32.mrf.mxu0
        %v4499 = vadd.f32 %v3682, %v4498
        %v4500 = vpop.f32.mrf.mxu0
        %v4501 = vadd.f32 %v3682, %v4500
        %4502 = vmatmul.bf16.gmra.mxu0 %v3926
        %v4503 = vpop.f32.mrf.mxu0
        %v4504 = vadd.f32 %v3682, %v4503
        %v4505 = vpop.f32.mrf.mxu0
        %v4506 = vadd.f32 %v3682, %v4505
        %4507 = vmatmul.bf16.gmra.mxu0 %v3935
        %v4508 = vpop.f32.mrf.mxu0
        %v4509 = vadd.f32 %v3682, %v4508
        %v4510 = vpop.f32.mrf.mxu0
        %v4511 = vadd.f32 %v3682, %v4510
        %4512 = vmatmul.bf16.gmra.mxu0 %v3944
        %v4513 = vpop.f32.mrf.mxu0
        %v4514 = vadd.f32 %v3682, %v4513
        %v4515 = vpop.f32.mrf.mxu0
        %v4516 = vadd.f32 %v3682, %v4515
        %4517 = vmatmul.bf16.gmra.mxu0 %v3953
        %v4518 = vpop.f32.mrf.mxu0
        %v4519 = vadd.f32 %v3682, %v4518
        %v4520 = vpop.f32.mrf.mxu0
        %v4521 = vadd.f32 %v3682, %v4520
        %4522 = vmatmul.bf16.gmra.mxu0 %v3962
        %v4523 = vpop.f32.mrf.mxu0
        %v4524 = vadd.f32 %v3682, %v4523
        %v4525 = vpop.f32.mrf.mxu0
        %v4526 = vadd.f32 %v3682, %v4525
        %4527 = vmatmul.bf16.gmra.mxu0 %v3971
        %v4528 = vpop.f32.mrf.mxu0
        %v4529 = vadd.f32 %v3682, %v4528
        %v4530 = vpop.f32.mrf.mxu0
        %v4531 = vadd.f32 %v3682, %v4530
        %4532 = vdwg.mxu0
        %4533 = vmatpush.bf16.msra.mxu0 %v4355
        %4534 = vmatpush.bf16.msra.mxu0 %v4354
        %4535 = vmatpush.bf16.msra.mxu0 %v4353
        %4536 = vmatpush.bf16.msra.mxu0 %v4352
        %4537 = vmatpush.bf16.msra.mxu0 %v4351
        %4538 = vmatpush.bf16.msra.mxu0 %v4350
        %4539 = vmatpush.bf16.msra.mxu0 %v4349
        %4540 = vmatpush.bf16.msra.mxu0 %v4348
        %4541 = vmatmul.bf16.gmra.mxu0 %v3909
        %v4542 = vpop.f32.mrf.mxu0
        %v4543 = vadd.f32 %v4494, %v4542
        %v4544 = vpop.f32.mrf.mxu0
        %v4545 = vadd.f32 %v4496, %v4544
        %4546 = vmatmul.bf16.gmra.mxu0 %v3918
        %v4547 = vpop.f32.mrf.mxu0
        %v4548 = vadd.f32 %v4499, %v4547
        %v4549 = vpop.f32.mrf.mxu0
        %v4550 = vadd.f32 %v4501, %v4549
        %4551 = vmatmul.bf16.gmra.mxu0 %v3927
        %v4552 = vpop.f32.mrf.mxu0
        %v4553 = vadd.f32 %v4504, %v4552
        %v4554 = vpop.f32.mrf.mxu0
        %v4555 = vadd.f32 %v4506, %v4554
        %4556 = vmatmul.bf16.gmra.mxu0 %v3936
        %v4557 = vpop.f32.mrf.mxu0
        %v4558 = vadd.f32 %v4509, %v4557
        %v4559 = vpop.f32.mrf.mxu0
        %v4560 = vadd.f32 %v4511, %v4559
        %4561 = vmatmul.bf16.gmra.mxu0 %v3945
        %v4562 = vpop.f32.mrf.mxu0
        %v4563 = vadd.f32 %v4514, %v4562
        %v4564 = vpop.f32.mrf.mxu0
        %v4565 = vadd.f32 %v4516, %v4564
        %4566 = vmatmul.bf16.gmra.mxu0 %v3954
        %v4567 = vpop.f32.mrf.mxu0
        %v4568 = vadd.f32 %v4519, %v4567
        %v4569 = vpop.f32.mrf.mxu0
        %v4570 = vadd.f32 %v4521, %v4569
        %4571 = vmatmul.bf16.gmra.mxu0 %v3963
        %v4572 = vpop.f32.mrf.mxu0
        %v4573 = vadd.f32 %v4524, %v4572
        %v4574 = vpop.f32.mrf.mxu0
        %v4575 = vadd.f32 %v4526, %v4574
        %4576 = vmatmul.bf16.gmra.mxu0 %v3972
        %v4577 = vpop.f32.mrf.mxu0
        %v4578 = vadd.f32 %v4529, %v4577
        %v4579 = vpop.f32.mrf.mxu0
        %v4580 = vadd.f32 %v4531, %v4579
        %4581 = vdwg.mxu0
        %4582 = vmatpush.bf16.msra.mxu0 %v4363
        %4583 = vmatpush.bf16.msra.mxu0 %v4362
        %4584 = vmatpush.bf16.msra.mxu0 %v4361
        %4585 = vmatpush.bf16.msra.mxu0 %v4360
        %4586 = vmatpush.bf16.msra.mxu0 %v4359
        %4587 = vmatpush.bf16.msra.mxu0 %v4358
        %4588 = vmatpush.bf16.msra.mxu0 %v4357
        %4589 = vmatpush.bf16.msra.mxu0 %v4356
        %4590 = vmatmul.bf16.gmra.mxu0 %v3910
        %v4591 = vpop.f32.mrf.mxu0
        %v4592 = vadd.f32 %v4543, %v4591
        %v4593 = vpop.f32.mrf.mxu0
        %v4594 = vadd.f32 %v4545, %v4593
        %4595 = vmatmul.bf16.gmra.mxu0 %v3919
        %v4596 = vpop.f32.mrf.mxu0
        %v4597 = vadd.f32 %v4548, %v4596
        %v4598 = vpop.f32.mrf.mxu0
        %v4599 = vadd.f32 %v4550, %v4598
        %4600 = vmatmul.bf16.gmra.mxu0 %v3928
        %v4601 = vpop.f32.mrf.mxu0
        %v4602 = vadd.f32 %v4553, %v4601
        %v4603 = vpop.f32.mrf.mxu0
        %v4604 = vadd.f32 %v4555, %v4603
        %4605 = vmatmul.bf16.gmra.mxu0 %v3937
        %v4606 = vpop.f32.mrf.mxu0
        %v4607 = vadd.f32 %v4558, %v4606
        %v4608 = vpop.f32.mrf.mxu0
        %v4609 = vadd.f32 %v4560, %v4608
        %4610 = vmatmul.bf16.gmra.mxu0 %v3946
        %v4611 = vpop.f32.mrf.mxu0
        %v4612 = vadd.f32 %v4563, %v4611
        %v4613 = vpop.f32.mrf.mxu0
        %v4614 = vadd.f32 %v4565, %v4613
        %4615 = vmatmul.bf16.gmra.mxu0 %v3955
        %v4616 = vpop.f32.mrf.mxu0
        %v4617 = vadd.f32 %v4568, %v4616
        %v4618 = vpop.f32.mrf.mxu0
        %v4619 = vadd.f32 %v4570, %v4618
        %4620 = vmatmul.bf16.gmra.mxu0 %v3964
        %v4621 = vpop.f32.mrf.mxu0
        %v4622 = vadd.f32 %v4573, %v4621
        %v4623 = vpop.f32.mrf.mxu0
        %v4624 = vadd.f32 %v4575, %v4623
        %4625 = vmatmul.bf16.gmra.mxu0 %v3973
        %v4626 = vpop.f32.mrf.mxu0
        %v4627 = vadd.f32 %v4578, %v4626
        %v4628 = vpop.f32.mrf.mxu0
        %v4629 = vadd.f32 %v4580, %v4628
        %4630 = vdwg.mxu0
        %4631 = vmatpush.bf16.msra.mxu0 %v4371
        %4632 = vmatpush.bf16.msra.mxu0 %v4370
        %4633 = vmatpush.bf16.msra.mxu0 %v4369
        %4634 = vmatpush.bf16.msra.mxu0 %v4368
        %4635 = vmatpush.bf16.msra.mxu0 %v4367
        %4636 = vmatpush.bf16.msra.mxu0 %v4366
        %4637 = vmatpush.bf16.msra.mxu0 %v4365
        %4638 = vmatpush.bf16.msra.mxu0 %v4364
        %4639 = vmatmul.bf16.gmra.mxu0 %v3911
        %v4640 = vpop.f32.mrf.mxu0
        %v4641 = vadd.f32 %v4592, %v4640
        %v4642 = vpop.f32.mrf.mxu0
        %v4643 = vadd.f32 %v4594, %v4642
        %4644 = vmatmul.bf16.gmra.mxu0 %v3920
        %v4645 = vpop.f32.mrf.mxu0
        %v4646 = vadd.f32 %v4597, %v4645
        %v4647 = vpop.f32.mrf.mxu0
        %v4648 = vadd.f32 %v4599, %v4647
        %4649 = vmatmul.bf16.gmra.mxu0 %v3929
        %v4650 = vpop.f32.mrf.mxu0
        %v4651 = vadd.f32 %v4602, %v4650
        %v4652 = vpop.f32.mrf.mxu0
        %v4653 = vadd.f32 %v4604, %v4652
        %4654 = vmatmul.bf16.gmra.mxu0 %v3938
        %v4655 = vpop.f32.mrf.mxu0
        %v4656 = vadd.f32 %v4607, %v4655
        %v4657 = vpop.f32.mrf.mxu0
        %v4658 = vadd.f32 %v4609, %v4657
        %4659 = vmatmul.bf16.gmra.mxu0 %v3947
        %v4660 = vpop.f32.mrf.mxu0
        %v4661 = vadd.f32 %v4612, %v4660
        %v4662 = vpop.f32.mrf.mxu0
        %v4663 = vadd.f32 %v4614, %v4662
        %4664 = vmatmul.bf16.gmra.mxu0 %v3956
        %v4665 = vpop.f32.mrf.mxu0
        %v4666 = vadd.f32 %v4617, %v4665
        %v4667 = vpop.f32.mrf.mxu0
        %v4668 = vadd.f32 %v4619, %v4667
        %4669 = vmatmul.bf16.gmra.mxu0 %v3965
        %v4670 = vpop.f32.mrf.mxu0
        %v4671 = vadd.f32 %v4622, %v4670
        %v4672 = vpop.f32.mrf.mxu0
        %v4673 = vadd.f32 %v4624, %v4672
        %4674 = vmatmul.bf16.gmra.mxu0 %v3974
        %v4675 = vpop.f32.mrf.mxu0
        %v4676 = vadd.f32 %v4627, %v4675
        %v4677 = vpop.f32.mrf.mxu0
        %v4678 = vadd.f32 %v4629, %v4677
        %4679 = vdwg.mxu0
        %4680 = vmatpush.bf16.msra.mxu0 %v4379
        %4681 = vmatpush.bf16.msra.mxu0 %v4378
        %4682 = vmatpush.bf16.msra.mxu0 %v4377
        %4683 = vmatpush.bf16.msra.mxu0 %v4376
        %4684 = vmatpush.bf16.msra.mxu0 %v4375
        %4685 = vmatpush.bf16.msra.mxu0 %v4374
        %4686 = vmatpush.bf16.msra.mxu0 %v4373
        %4687 = vmatpush.bf16.msra.mxu0 %v4372
        %4688 = vmatmul.bf16.gmra.mxu0 %v3912
        %v4689 = vpop.f32.mrf.mxu0
        %v4690 = vadd.f32 %v4641, %v4689
        %v4691 = vpop.f32.mrf.mxu0
        %v4692 = vadd.f32 %v4643, %v4691
        %4693 = vmatmul.bf16.gmra.mxu0 %v3921
        %v4694 = vpop.f32.mrf.mxu0
        %v4695 = vadd.f32 %v4646, %v4694
        %v4696 = vpop.f32.mrf.mxu0
        %v4697 = vadd.f32 %v4648, %v4696
        %4698 = vmatmul.bf16.gmra.mxu0 %v3930
        %v4699 = vpop.f32.mrf.mxu0
        %v4700 = vadd.f32 %v4651, %v4699
        %v4701 = vpop.f32.mrf.mxu0
        %v4702 = vadd.f32 %v4653, %v4701
        %4703 = vmatmul.bf16.gmra.mxu0 %v3939
        %v4704 = vpop.f32.mrf.mxu0
        %v4705 = vadd.f32 %v4656, %v4704
        %v4706 = vpop.f32.mrf.mxu0
        %v4707 = vadd.f32 %v4658, %v4706
        %4708 = vmatmul.bf16.gmra.mxu0 %v3948
        %v4709 = vpop.f32.mrf.mxu0
        %v4710 = vadd.f32 %v4661, %v4709
        %v4711 = vpop.f32.mrf.mxu0
        %v4712 = vadd.f32 %v4663, %v4711
        %4713 = vmatmul.bf16.gmra.mxu0 %v3957
        %v4714 = vpop.f32.mrf.mxu0
        %v4715 = vadd.f32 %v4666, %v4714
        %v4716 = vpop.f32.mrf.mxu0
        %v4717 = vadd.f32 %v4668, %v4716
        %4718 = vmatmul.bf16.gmra.mxu0 %v3966
        %v4719 = vpop.f32.mrf.mxu0
        %v4720 = vadd.f32 %v4671, %v4719
        %v4721 = vpop.f32.mrf.mxu0
        %v4722 = vadd.f32 %v4673, %v4721
        %4723 = vmatmul.bf16.gmra.mxu0 %v3975
        %v4724 = vpop.f32.mrf.mxu0
        %v4725 = vadd.f32 %v4676, %v4724
        %v4726 = vpop.f32.mrf.mxu0
        %v4727 = vadd.f32 %v4678, %v4726
        %4728 = vdwg.mxu0
        %4729 = vmatpush.bf16.msra.mxu0 %v4387
        %4730 = vmatpush.bf16.msra.mxu0 %v4386
        %4731 = vmatpush.bf16.msra.mxu0 %v4385
        %4732 = vmatpush.bf16.msra.mxu0 %v4384
        %4733 = vmatpush.bf16.msra.mxu0 %v4383
        %4734 = vmatpush.bf16.msra.mxu0 %v4382
        %4735 = vmatpush.bf16.msra.mxu0 %v4381
        %4736 = vmatpush.bf16.msra.mxu0 %v4380
        %4737 = vmatmul.bf16.gmra.mxu0 %v3913
        %v4738 = vpop.f32.mrf.mxu0
        %v4739 = vadd.f32 %v4690, %v4738
        %v4740 = vpop.f32.mrf.mxu0
        %v4741 = vadd.f32 %v4692, %v4740
        %4742 = vmatmul.bf16.gmra.mxu0 %v3922
        %v4743 = vpop.f32.mrf.mxu0
        %v4744 = vadd.f32 %v4695, %v4743
        %v4745 = vpop.f32.mrf.mxu0
        %v4746 = vadd.f32 %v4697, %v4745
        %4747 = vmatmul.bf16.gmra.mxu0 %v3931
        %v4748 = vpop.f32.mrf.mxu0
        %v4749 = vadd.f32 %v4700, %v4748
        %v4750 = vpop.f32.mrf.mxu0
        %v4751 = vadd.f32 %v4702, %v4750
        %4752 = vmatmul.bf16.gmra.mxu0 %v3940
        %v4753 = vpop.f32.mrf.mxu0
        %v4754 = vadd.f32 %v4705, %v4753
        %v4755 = vpop.f32.mrf.mxu0
        %v4756 = vadd.f32 %v4707, %v4755
        %4757 = vmatmul.bf16.gmra.mxu0 %v3949
        %v4758 = vpop.f32.mrf.mxu0
        %v4759 = vadd.f32 %v4710, %v4758
        %v4760 = vpop.f32.mrf.mxu0
        %v4761 = vadd.f32 %v4712, %v4760
        %4762 = vmatmul.bf16.gmra.mxu0 %v3958
        %v4763 = vpop.f32.mrf.mxu0
        %v4764 = vadd.f32 %v4715, %v4763
        %v4765 = vpop.f32.mrf.mxu0
        %v4766 = vadd.f32 %v4717, %v4765
        %4767 = vmatmul.bf16.gmra.mxu0 %v3967
        %v4768 = vpop.f32.mrf.mxu0
        %v4769 = vadd.f32 %v4720, %v4768
        %v4770 = vpop.f32.mrf.mxu0
        %v4771 = vadd.f32 %v4722, %v4770
        %4772 = vmatmul.bf16.gmra.mxu0 %v3976
        %v4773 = vpop.f32.mrf.mxu0
        %v4774 = vadd.f32 %v4725, %v4773
        %v4775 = vpop.f32.mrf.mxu0
        %v4776 = vadd.f32 %v4727, %v4775
        %4777 = vdwg.mxu0
        %4778 = vmatpush.bf16.msra.mxu0 %v4395
        %4779 = vmatpush.bf16.msra.mxu0 %v4394
        %4780 = vmatpush.bf16.msra.mxu0 %v4393
        %4781 = vmatpush.bf16.msra.mxu0 %v4392
        %4782 = vmatpush.bf16.msra.mxu0 %v4391
        %4783 = vmatpush.bf16.msra.mxu0 %v4390
        %4784 = vmatpush.bf16.msra.mxu0 %v4389
        %4785 = vmatpush.bf16.msra.mxu0 %v4388
        %4786 = vmatmul.bf16.gmra.mxu0 %v3914
        %v4787 = vpop.f32.mrf.mxu0
        %v4788 = vadd.f32 %v4739, %v4787
        %v4789 = vpop.f32.mrf.mxu0
        %v4790 = vadd.f32 %v4741, %v4789
        %4791 = vmatmul.bf16.gmra.mxu0 %v3923
        %v4792 = vpop.f32.mrf.mxu0
        %v4793 = vadd.f32 %v4744, %v4792
        %v4794 = vpop.f32.mrf.mxu0
        %v4795 = vadd.f32 %v4746, %v4794
        %4796 = vmatmul.bf16.gmra.mxu0 %v3932
        %v4797 = vpop.f32.mrf.mxu0
        %v4798 = vadd.f32 %v4749, %v4797
        %v4799 = vpop.f32.mrf.mxu0
        %v4800 = vadd.f32 %v4751, %v4799
        %4801 = vmatmul.bf16.gmra.mxu0 %v3941
        %v4802 = vpop.f32.mrf.mxu0
        %v4803 = vadd.f32 %v4754, %v4802
        %v4804 = vpop.f32.mrf.mxu0
        %v4805 = vadd.f32 %v4756, %v4804
        %4806 = vmatmul.bf16.gmra.mxu0 %v3950
        %v4807 = vpop.f32.mrf.mxu0
        %v4808 = vadd.f32 %v4759, %v4807
        %v4809 = vpop.f32.mrf.mxu0
        %v4810 = vadd.f32 %v4761, %v4809
        %4811 = vmatmul.bf16.gmra.mxu0 %v3959
        %v4812 = vpop.f32.mrf.mxu0
        %v4813 = vadd.f32 %v4764, %v4812
        %v4814 = vpop.f32.mrf.mxu0
        %v4815 = vadd.f32 %v4766, %v4814
        %4816 = vmatmul.bf16.gmra.mxu0 %v3968
        %v4817 = vpop.f32.mrf.mxu0
        %v4818 = vadd.f32 %v4769, %v4817
        %v4819 = vpop.f32.mrf.mxu0
        %v4820 = vadd.f32 %v4771, %v4819
        %4821 = vmatmul.bf16.gmra.mxu0 %v3977
        %v4822 = vpop.f32.mrf.mxu0
        %v4823 = vadd.f32 %v4774, %v4822
        %v4824 = vpop.f32.mrf.mxu0
        %v4825 = vadd.f32 %v4776, %v4824
        %4826 = vdwg.mxu0
        %4827 = vmatpush.bf16.msra.mxu0 %v4403
        %4828 = vmatpush.bf16.msra.mxu0 %v4402
        %4829 = vmatpush.bf16.msra.mxu0 %v4401
        %4830 = vmatpush.bf16.msra.mxu0 %v4400
        %4831 = vmatpush.bf16.msra.mxu0 %v4399
        %4832 = vmatpush.bf16.msra.mxu0 %v4398
        %4833 = vmatpush.bf16.msra.mxu0 %v4397
        %4834 = vmatpush.bf16.msra.mxu0 %v4396
        %4835 = vmatmul.bf16.gmra.mxu0 %v3915
        %v4836 = vpop.f32.mrf.mxu0
        %v4837 = vadd.f32 %v4788, %v4836
        %v4838 = vpop.f32.mrf.mxu0
        %v4839 = vadd.f32 %v4790, %v4838
        %4840 = vmatmul.bf16.gmra.mxu0 %v3924
        %v4841 = vpop.f32.mrf.mxu0
        %v4842 = vadd.f32 %v4793, %v4841
        %v4843 = vpop.f32.mrf.mxu0
        %v4844 = vadd.f32 %v4795, %v4843
        %4845 = vmatmul.bf16.gmra.mxu0 %v3933
        %v4846 = vpop.f32.mrf.mxu0
        %v4847 = vadd.f32 %v4798, %v4846
        %v4848 = vpop.f32.mrf.mxu0
        %v4849 = vadd.f32 %v4800, %v4848
        %4850 = vmatmul.bf16.gmra.mxu0 %v3942
        %v4851 = vpop.f32.mrf.mxu0
        %v4852 = vadd.f32 %v4803, %v4851
        %v4853 = vpop.f32.mrf.mxu0
        %v4854 = vadd.f32 %v4805, %v4853
        %4855 = vmatmul.bf16.gmra.mxu0 %v3951
        %v4856 = vpop.f32.mrf.mxu0
        %v4857 = vadd.f32 %v4808, %v4856
        %v4858 = vpop.f32.mrf.mxu0
        %v4859 = vadd.f32 %v4810, %v4858
        %4860 = vmatmul.bf16.gmra.mxu0 %v3960
        %v4861 = vpop.f32.mrf.mxu0
        %v4862 = vadd.f32 %v4813, %v4861
        %v4863 = vpop.f32.mrf.mxu0
        %v4864 = vadd.f32 %v4815, %v4863
        %4865 = vmatmul.bf16.gmra.mxu0 %v3969
        %v4866 = vpop.f32.mrf.mxu0
        %v4867 = vadd.f32 %v4818, %v4866
        %v4868 = vpop.f32.mrf.mxu0
        %v4869 = vadd.f32 %v4820, %v4868
        %4870 = vmatmul.bf16.gmra.mxu0 %v3978
        %v4871 = vpop.f32.mrf.mxu0
        %v4872 = vadd.f32 %v4823, %v4871
        %v4873 = vpop.f32.mrf.mxu0
        %v4874 = vadd.f32 %v4825, %v4873
        %4875 = vdwg.mxu0
        %4876 = vmatpush.bf16.msra.mxu0 %v4411
        %4877 = vmatpush.bf16.msra.mxu0 %v4410
        %4878 = vmatpush.bf16.msra.mxu0 %v4409
        %4879 = vmatpush.bf16.msra.mxu0 %v4408
        %4880 = vmatpush.bf16.msra.mxu0 %v4407
        %4881 = vmatpush.bf16.msra.mxu0 %v4406
        %4882 = vmatpush.bf16.msra.mxu0 %v4405
        %4883 = vmatpush.bf16.msra.mxu0 %v4404
        %4884 = vmatmul.bf16.gmra.mxu0 %v3916
        %v4885 = vpop.f32.mrf.mxu0
        %v4886 = vadd.f32 %v4837, %v4885
        %v4887 = vpop.f32.mrf.mxu0
        %v4888 = vadd.f32 %v4839, %v4887
        %4889 = vmatmul.bf16.gmra.mxu0 %v3925
        %v4890 = vpop.f32.mrf.mxu0
        %v4891 = vadd.f32 %v4842, %v4890
        %v4892 = vpop.f32.mrf.mxu0
        %v4893 = vadd.f32 %v4844, %v4892
        %4894 = vmatmul.bf16.gmra.mxu0 %v3934
        %v4895 = vpop.f32.mrf.mxu0
        %v4896 = vadd.f32 %v4847, %v4895
        %v4897 = vpop.f32.mrf.mxu0
        %v4898 = vadd.f32 %v4849, %v4897
        %4899 = vmatmul.bf16.gmra.mxu0 %v3943
        %v4900 = vpop.f32.mrf.mxu0
        %v4901 = vadd.f32 %v4852, %v4900
        %v4902 = vpop.f32.mrf.mxu0
        %v4903 = vadd.f32 %v4854, %v4902
        %4904 = vmatmul.bf16.gmra.mxu0 %v3952
        %v4905 = vpop.f32.mrf.mxu0
        %v4906 = vadd.f32 %v4857, %v4905
        %v4907 = vpop.f32.mrf.mxu0
        %v4908 = vadd.f32 %v4859, %v4907
        %4909 = vmatmul.bf16.gmra.mxu0 %v3961
        %v4910 = vpop.f32.mrf.mxu0
        %v4911 = vadd.f32 %v4862, %v4910
        %v4912 = vpop.f32.mrf.mxu0
        %v4913 = vadd.f32 %v4864, %v4912
        %4914 = vmatmul.bf16.gmra.mxu0 %v3970
        %v4915 = vpop.f32.mrf.mxu0
        %v4916 = vadd.f32 %v4867, %v4915
        %v4917 = vpop.f32.mrf.mxu0
        %v4918 = vadd.f32 %v4869, %v4917
        %4919 = vmatmul.bf16.gmra.mxu0 %v3979
        %v4920 = vpop.f32.mrf.mxu0
        %v4921 = vadd.f32 %v4872, %v4920
        %v4922 = vpop.f32.mrf.mxu0
        %v4923 = vadd.f32 %v4874, %v4922
        %4924 = vdwg.mxu0
        %v4925 = vmax.f32 %v4886, 0.0
        %v4926 = vmax.f32 %v4888, 0.0
        %v4927 = vmax.f32 %v4891, 0.0
        %v4928 = vmax.f32 %v4893, 0.0
        %v4929 = vmax.f32 %v4896, 0.0
        %v4930 = vmax.f32 %v4898, 0.0
        %v4931 = vmax.f32 %v4901, 0.0
        %v4932 = vmax.f32 %v4903, 0.0
        %v4933 = vmax.f32 %v4906, 0.0
        %v4934 = vmax.f32 %v4908, 0.0
        %v4935 = vmax.f32 %v4911, 0.0
        %v4936 = vmax.f32 %v4913, 0.0
        %v4937 = vmax.f32 %v4916, 0.0
        %v4938 = vmax.f32 %v4918, 0.0
        %v4939 = vmax.f32 %v4921, 0.0
        %v4940 = vmax.f32 %v4923, 0.0
        %4941 = vst [vmem:[%s231] sm:$0xff] %v4925
        %4942 = vst [vmem:[%s231 + $0x8] sm:$0xff] %v4926
        %4943 = vst [vmem:[%s231 + $0x10] sm:$0xff] %v4927
        %4944 = vst [vmem:[%s231 + $0x18] sm:$0xff] %v4928
        %4945 = vst [vmem:[%s231 + $0x20] sm:$0xff] %v4929
        %4946 = vst [vmem:[%s231 + $0x28] sm:$0xff] %v4930
        %4947 = vst [vmem:[%s231 + $0x30] sm:$0xff] %v4931
        %4948 = vst [vmem:[%s231 + $0x38] sm:$0xff] %v4932
        %4949 = vst [vmem:[%s231 + $0x40] sm:$0xff] %v4933
        %4950 = vst [vmem:[%s231 + $0x48] sm:$0xff] %v4934
        %4951 = vst [vmem:[%s231 + $0x50] sm:$0xff] %v4935
        %4952 = vst [vmem:[%s231 + $0x58] sm:$0xff] %v4936
        %4953 = vst [vmem:[%s231 + $0x60] sm:$0xff] %v4937
        %4954 = vst [vmem:[%s231 + $0x68] sm:$0xff] %v4938
        %4955 = vst [vmem:[%s231 + $0x70] sm:$0xff] %v4939
        %4956 = vst [vmem:[%s231 + $0x78] sm:$0xff] %v4940
        %s4957 = sand.u32 %s151, 1
        %s4958 = scalar_lea.sflag [#allocation6], %s4957
        %s4959 = sand.u32 %s151, 1
        %s4960 = smul.addr %s4959, 128
        %s4961 = scalar_lea.vmem [#allocation5], %s4960
        // Predicated region
        $region49: #{truncated_vgg19_forward.3} parent=39 // pred_check
          %p4962 = pneg %p161
        $region50: #{truncated_vgg19_forward.3} parent=39 // pred_check_branch
          %4964 = sbr.rel (%p4962) target = $region52
        $region51: #{truncated_vgg19_forward.3} parent=39 // pred_region
          %s4965 = smul.u32 8, %s24
          %4967 = vsyncadd %s4958, 0
          %s4968 = smul.addr %s4965, 2
          %s4969 = smul.addr %s23, 32
          %s4970 = sadd.s32 %s4968, %s4969
          %s4971 = smul.addr %s4970, 8
          %s4972 = scalar_lea.hbm %s5, %s4971
          %s4973 = sshll.u32 %s4961, 4
          %s4974 = int_to_ptr.vmem [resolvable:$true] %s4973
          %s4975 = sshll.u32 %s4972, 4
          %s4976 = int_to_ptr.hbm [resolvable:$true] %s4975
          %4981 = dma.vmem_to_hbm [thread:$0]  %s4974, 2048, %s4976, %s4958, 128, 128, 8
        $region52: #{truncated_vgg19_forward.3} parent=39 // pred_fallthru
          _
      $region40: #{truncated_vgg19_forward.3} parent=5 // pred_fallthru
        _
      %p4982 = scmp.le.s32.totalorder 2, %s14
      // Predicated region
      $region53: #{truncated_vgg19_forward.3} parent=5 // pred_check
        %p4983 = pneg %p4982
      $region54: #{truncated_vgg19_forward.3} parent=5 // pred_check_branch
        %4985 = sbr.rel (%p4983) target = $region56
      $region55: #{truncated_vgg19_forward.3} parent=5 // pred_region
        %s4986 = ssub.s32 %s14, 2
        // Predicated region
        $region57: #{truncated_vgg19_forward.3} parent=55 // pred_check
          %p4987 = pneg %p167
        $region58: #{truncated_vgg19_forward.3} parent=55 // pred_check_branch
          %4989 = sbr.rel (%p4987) target = $region60
        $region59: #{truncated_vgg19_forward.3} parent=55 // pred_region
          %s4990 = sand.u32 %s152, 1
          %s4991 = scalar_lea.sflag [#allocation6], %s4990
          %s4992 = sand.u32 %s152, 1
          %s4993 = smul.addr %s4992, 128
          %s4994 = scalar_lea.vmem [#allocation5], %s4993
          %4996 = dma.done %s4991, 2048
        $region60: #{truncated_vgg19_forward.3} parent=55 // pred_fallthru
          _
      $region56: #{truncated_vgg19_forward.3} parent=5 // pred_fallthru
        _
    $region6: #{truncated_vgg19_forward.3} parent=1 // loop_footer
      %s18 = sadd.s32 1, %s14
    $region7: #{truncated_vgg19_forward.3} parent=1 // loop_footer_branch
      %13 = sbr.rel target = $region3
    $region8: #{truncated_vgg19_forward.3} parent=1 // loop_exit
      _
    %4997 = vsyncpa [#allocation6], 1
    %s4998 = scalar_lea.sflag [#allocation6], 1
    %4999 = vsyncpa %s4998, 1

// kernel: truncated_vgg19_forward.2
$region0: #{truncated_vgg19_forward.2}
  #allocation0 [shape = 'u32[]', space=smem, size = 0x4, offset = 0x4, fixed_abs, tag = 'smem constant byte address 0x4 - core index']
  #allocation1 [shape = 'u32[72,128]{1,0:T(1,128)}', space=vmem, size = 0x9000, scoped, tag = 'internal scratch']
  #allocation2 [shape = 'f32[18,34,64]{2,1,0:T(8,128)}', space=vmem, size = 0x5a000, scoped, tag = 'scratch operand']
  #allocation3 [shape = 'bf16[256,576]{1,0:T(8,128)(2,1)}', space=vmem, size = 0x50000, scoped, tag = 'scratch operand']
  #allocation4 [shape = 'bf16[256,576]{1,0:T(8,128)(2,1)}', space=vmem, size = 0x50000, scoped, tag = 'scratch operand']
  %s0 = inlined_call_operand.vmem [shape: bf16[2,34,32,27], index: 0, kind: input, shape index: {}]
  %s1 = inlined_call_operand.vmem [shape: bf16[27,64], index: 1, kind: input, shape index: {}]
  %s2 = inlined_call_operand.vmem [shape: f32[1,64], index: 2, kind: input, shape index: {}]
  %s3 = inlined_call_operand.vmem [shape: bf16[576,64], index: 3, kind: input, shape index: {}]
  %s4 = inlined_call_operand.vmem [shape: f32[1,64], index: 4, kind: input, shape index: {}]
  %s5 = inlined_call_operand.vmem [shape: bf16[2,16,16,64], index: 5, kind: output, shape index: {}]
  %s6 = sld [smem:[#allocation0]]
  $region61: #{truncated_vgg19_forward.2} parent=0
    _
  %s8 = ssub.s32 1, %s6
  %s9 = scalar_select 0, %s8, %s6
  loop: start=0, step=1, limit=6
  $region2: #{truncated_vgg19_forward.2} parent=0 // loop_pre_header
    _
  $region3: #{truncated_vgg19_forward.2} parent=0 // loop_header
    %s11 = sphi 0, %s15
    %p12 = scmp.ge.s32.totalorder %s11, 6
    %s18 = sphi 0, %s30
    %s19 = sphi 0, %s26
    %s20 = sphi 0, %s18
    %s21 = sphi 0, %s19
    %s22 = sphi 0, %s20
    %s23 = sphi 0, %s21
    %s33 = sphi 0, %s35
    %s36 = sphi 0, %s33
    %s37 = sphi 0, %s36
    %s53 = sphi 0, %s37
    %s57 = sphi 0, %s57
    %s59 = sphi 0, %s57
    %s60 = sphi 0, %s59
    %s74 = sphi 0, %s60
    %s78 = sphi 0, %s78
    %s80 = sphi 0, %s78
    %s81 = sphi 0, %s80
    %s95 = sphi 0, %s81
    %s99 = sphi 0, %s99
    %s101 = sphi 0, %s99
    %s102 = sphi 0, %s101
    %s116 = sphi 0, %s102
    %s120 = sphi 0, %s120
    %s122 = sphi 0, %s120
    %s123 = sphi 0, %s122
    %s137 = sphi 0, %s123
    %s145 = sphi 0, %s147
    %s148 = sphi 0, %s145
    %s149 = sphi 0, %s148
    %s165 = sphi 0, %s149
  $region4: #{truncated_vgg19_forward.2} parent=0 // loop_header_branch
    %14 = sbr.rel (%p12) target = $region8
  $region5: #{truncated_vgg19_forward.2} parent=0 // loop_body
    %s16 = ssub.s32 %s11, 1
    %s17 = ssub.s32 %s11, 2
    %s24 = sadd.s32 1, %s19
    %p25 = scmp.ge.s32.totalorder %s24, 2
    %s26 = scalar_select %p25, 0, %s24
    %s27 = sadd.s32 1, %s18
    %s28 = scalar_select %p25, %s27, %s18
    %p29 = scmp.ge.s32.totalorder %s28, 2
    %s30 = scalar_select %p29, 0, %s28
    %s31 = ssub.s32 %s18, %s30
    %p32 = scmp.eq.s32.totalorder %s31, 0
    %s34 = sadd.s32 %s33, 1
    %s35 = scalar_select %p32, %s33, %s34
    %p38 = pneg %p32
    %p39 = scmp.eq.s32.totalorder %s11, 3
    %p40 = por %p38, %p39
    %p41 = scmp.ne.s32.totalorder %s33, %s36
    %p42 = scmp.eq.s32.totalorder %s11, 0
    %p43 = por %p41, %p42
    %p44 = scmp.ne.s32.totalorder %s33, %s36
    %p45 = scmp.eq.s32.totalorder %s16, 3
    %p46 = por %p44, %p45
    %p47 = scmp.ne.s32.totalorder %s36, %s37
    %p48 = scmp.eq.s32.totalorder %s16, 0
    %p49 = por %p47, %p48
    %p50 = scmp.ne.s32.totalorder %s36, %s37
    %p51 = scmp.eq.s32.totalorder %s17, 3
    %p52 = por %p50, %p51
    %p54 = scmp.ne.s32.totalorder %s37, %s53
    %p55 = scmp.eq.s32.totalorder %s17, 0
    %p56 = por %p54, %p55
    %s58 = sadd.s32 %s57, 1
    %p61 = scmp.eq.s32.totalorder %s11, 3
    %p62 = scmp.ne.s32.totalorder %s57, %s59
    %p63 = scmp.eq.s32.totalorder %s11, 0
    %p64 = por %p62, %p63
    %p65 = scmp.ne.s32.totalorder %s57, %s59
    %p66 = scmp.eq.s32.totalorder %s16, 3
    %p67 = por %p65, %p66
    %p68 = scmp.ne.s32.totalorder %s59, %s60
    %p69 = scmp.eq.s32.totalorder %s16, 0
    %p70 = por %p68, %p69
    %p71 = scmp.ne.s32.totalorder %s59, %s60
    %p72 = scmp.eq.s32.totalorder %s17, 3
    %p73 = por %p71, %p72
    %p75 = scmp.ne.s32.totalorder %s60, %s74
    %p76 = scmp.eq.s32.totalorder %s17, 0
    %p77 = por %p75, %p76
    %s79 = sadd.s32 %s78, 1
    %p82 = scmp.eq.s32.totalorder %s11, 3
    %p83 = scmp.ne.s32.totalorder %s78, %s80
    %p84 = scmp.eq.s32.totalorder %s11, 0
    %p85 = por %p83, %p84
    %p86 = scmp.ne.s32.totalorder %s78, %s80
    %p87 = scmp.eq.s32.totalorder %s16, 3
    %p88 = por %p86, %p87
    %p89 = scmp.ne.s32.totalorder %s80, %s81
    %p90 = scmp.eq.s32.totalorder %s16, 0
    %p91 = por %p89, %p90
    %p92 = scmp.ne.s32.totalorder %s80, %s81
    %p93 = scmp.eq.s32.totalorder %s17, 3
    %p94 = por %p92, %p93
    %p96 = scmp.ne.s32.totalorder %s81, %s95
    %p97 = scmp.eq.s32.totalorder %s17, 0
    %p98 = por %p96, %p97
    %s100 = sadd.s32 %s99, 1
    %p103 = scmp.eq.s32.totalorder %s11, 3
    %p104 = scmp.ne.s32.totalorder %s99, %s101
    %p105 = scmp.eq.s32.totalorder %s11, 0
    %p106 = por %p104, %p105
    %p107 = scmp.ne.s32.totalorder %s99, %s101
    %p108 = scmp.eq.s32.totalorder %s16, 3
    %p109 = por %p107, %p108
    %p110 = scmp.ne.s32.totalorder %s101, %s102
    %p111 = scmp.eq.s32.totalorder %s16, 0
    %p112 = por %p110, %p111
    %p113 = scmp.ne.s32.totalorder %s101, %s102
    %p114 = scmp.eq.s32.totalorder %s17, 3
    %p115 = por %p113, %p114
    %p117 = scmp.ne.s32.totalorder %s102, %s116
    %p118 = scmp.eq.s32.totalorder %s17, 0
    %p119 = por %p117, %p118
    %s121 = sadd.s32 %s120, 1
    %p124 = scmp.eq.s32.totalorder %s11, 3
    %p125 = scmp.ne.s32.totalorder %s120, %s122
    %p126 = scmp.eq.s32.totalorder %s11, 0
    %p127 = por %p125, %p126
    %p128 = scmp.ne.s32.totalorder %s120, %s122
    %p129 = scmp.eq.s32.totalorder %s16, 3
    %p130 = por %p128, %p129
    %p131 = scmp.ne.s32.totalorder %s122, %s123
    %p132 = scmp.eq.s32.totalorder %s16, 0
    %p133 = por %p131, %p132
    %p134 = scmp.ne.s32.totalorder %s122, %s123
    %p135 = scmp.eq.s32.totalorder %s17, 3
    %p136 = por %p134, %p135
    %p138 = scmp.ne.s32.totalorder %s123, %s137
    %p139 = scmp.eq.s32.totalorder %s17, 0
    %p140 = por %p138, %p139
    %s141 = ssub.s32 %s18, %s30
    %s142 = ssub.s32 %s19, %s26
    %s143 = sor.u32 %s141, %s142
    %p144 = scmp.eq.s32.totalorder %s143, 0
    %s146 = sadd.s32 %s145, 1
    %s147 = scalar_select %p144, %s145, %s146
    %p150 = pneg %p144
    %p151 = scmp.eq.s32.totalorder %s11, 3
    %p152 = por %p150, %p151
    %p153 = scmp.ne.s32.totalorder %s145, %s148
    %p154 = scmp.eq.s32.totalorder %s11, 0
    %p155 = por %p153, %p154
    %p156 = scmp.ne.s32.totalorder %s145, %s148
    %p157 = scmp.eq.s32.totalorder %s16, 3
    %p158 = por %p156, %p157
    %p159 = scmp.ne.s32.totalorder %s148, %s149
    %p160 = scmp.eq.s32.totalorder %s16, 0
    %p161 = por %p159, %p160
    %p162 = scmp.ne.s32.totalorder %s148, %s149
    %p163 = scmp.eq.s32.totalorder %s17, 3
    %p164 = por %p162, %p163
    %p166 = scmp.ne.s32.totalorder %s149, %s165
    %p167 = scmp.eq.s32.totalorder %s17, 0
    %p168 = por %p166, %p167
    %p169 = scmp.le.s32.totalorder 1, %s11
    %p170 = scmp.lt.s32.totalorder %s11, 5
    %p171 = pnand %p169, %p170
    %p172 = pneg %p171
    // Predicated region
    $region9: #{truncated_vgg19_forward.2} parent=5 // pred_check
      _
    $region10: #{truncated_vgg19_forward.2} parent=5 // pred_check_branch
      %174 = sbr.rel (%p171) target = $region12
    $region11: #{truncated_vgg19_forward.2} parent=5 // pred_region
      %s175 = ssub.s32 %s11, 1
      // Predicated region
      $region13: #{truncated_vgg19_forward.2} parent=11 // pred_check
        %p176 = pneg %p70
      $region14: #{truncated_vgg19_forward.2} parent=11 // pred_check_branch
        %178 = sbr.rel (%p176) target = $region16
      $region15: #{truncated_vgg19_forward.2} parent=11 // pred_region
        _
      $region16: #{truncated_vgg19_forward.2} parent=11 // pred_fallthru
        _
      // Predicated region
      $region17: #{truncated_vgg19_forward.2} parent=11 // pred_check
        %p179 = pneg %p91
      $region18: #{truncated_vgg19_forward.2} parent=11 // pred_check_branch
        %181 = sbr.rel (%p179) target = $region20
      $region19: #{truncated_vgg19_forward.2} parent=11 // pred_region
        _
      $region20: #{truncated_vgg19_forward.2} parent=11 // pred_fallthru
        _
      // Predicated region
      $region21: #{truncated_vgg19_forward.2} parent=11 // pred_check
        %p182 = pneg %p112
      $region22: #{truncated_vgg19_forward.2} parent=11 // pred_check_branch
        %184 = sbr.rel (%p182) target = $region24
      $region23: #{truncated_vgg19_forward.2} parent=11 // pred_region
        _
      $region24: #{truncated_vgg19_forward.2} parent=11 // pred_fallthru
        _
      // Predicated region
      $region25: #{truncated_vgg19_forward.2} parent=11 // pred_check
        %p185 = pneg %p133
      $region26: #{truncated_vgg19_forward.2} parent=11 // pred_check_branch
        %187 = sbr.rel (%p185) target = $region28
      $region27: #{truncated_vgg19_forward.2} parent=11 // pred_region
        _
      $region28: #{truncated_vgg19_forward.2} parent=11 // pred_fallthru
        _
    $region12: #{truncated_vgg19_forward.2} parent=5 // pred_fallthru
      _
    %p188 = scmp.lt.s32.totalorder %s11, 4
    // Predicated region
    $region29: #{truncated_vgg19_forward.2} parent=5 // pred_check
      %p189 = pneg %p188
    $region30: #{truncated_vgg19_forward.2} parent=5 // pred_check_branch
      %191 = sbr.rel (%p189) target = $region32
    $region31: #{truncated_vgg19_forward.2} parent=5 // pred_region
      // Predicated region
      $region33: #{truncated_vgg19_forward.2} parent=31 // pred_check
        %p192 = pneg %p43
      $region34: #{truncated_vgg19_forward.2} parent=31 // pred_check_branch
        %194 = sbr.rel (%p192) target = $region36
      $region35: #{truncated_vgg19_forward.2} parent=31 // pred_region
        %p195 = scmp.lt.s32.totalorder %s18, 1
        %s196 = scalar_select %p195, %s18, 1
        %s197 = smul.addr %s196, 136
        %s198 = smul.addr %s197, 4
        %s199 = scalar_lea.vmem %s0, %s198
      $region36: #{truncated_vgg19_forward.2} parent=31 // pred_fallthru
        _
    $region32: #{truncated_vgg19_forward.2} parent=5 // pred_fallthru
      _
    %p200 = scmp.le.s32.totalorder 1, %s11
    %p201 = scmp.lt.s32.totalorder %s11, 5
    %p202 = pnand %p200, %p201
    %p203 = pneg %p202
    // Predicated region
    $region37: #{truncated_vgg19_forward.2} parent=5 // pred_check
      _
    $region38: #{truncated_vgg19_forward.2} parent=5 // pred_check_branch
      %205 = sbr.rel (%p202) target = $region40
    $region39: #{truncated_vgg19_forward.2} parent=5 // pred_region
      %s206 = ssub.s32 %s11, 1
      %p207 = scmp.lt.s32.totalorder %s20, 1
      %s208 = scalar_select %p207, %s20, 1
      %s209 = smul.addr %s208, 136
      %s210 = smul.addr %s209, 4
      %s211 = scalar_lea.vmem %s0, %s210
      %p212 = pneg %p49
      %p213 = pneg %p46
      %p214 = pneg %p70
      %p215 = pneg %p67
      %p216 = pneg %p91
      %p217 = pneg %p88
      %p218 = pneg %p112
      %p219 = pneg %p109
      %p220 = pneg %p133
      %p221 = pneg %p130
      %p222 = pneg %p161
      %p223 = pneg %p158
      %s224 = smul.u32 8, %s21
      %p225 = scmp.lt.s32.totalorder %s20, 1
      %s226 = scalar_select %p225, %s20, 1
      %p227 = scmp.lt.s32.totalorder %s224, 15
      %s228 = scalar_select %p227, %s224, 15
      %s229 = smul.addr %s228, 2
      %s230 = smul.addr %s226, 32
      %s231 = sadd.s32 %s229, %s230
      %s232 = smul.addr %s231, 4
      %s233 = scalar_lea.vmem %s5, %s232
      %p234 = scmp.lt.s32.totalorder %s20, 1
      %s235 = scalar_select %p234, %s20, 1
      %s236 = smul.addr %s235, 136
      %s237 = smul.addr %s236, 4
      %s238 = scalar_lea.vmem %s0, %s237
      %s239 = smul.u32 8, %s21
      %p240 = scmp.lt.s32.totalorder %s20, 1
      %s241 = scalar_select %p240, %s20, 1
      %p242 = scmp.lt.s32.totalorder %s239, 15
      %s243 = scalar_select %p242, %s239, 15
      %s244 = smul.addr %s243, 2
      %s245 = smul.addr %s241, 32
      %s246 = sadd.s32 %s244, %s245
      %s247 = smul.addr %s246, 4
      %s248 = scalar_lea.vmem %s5, %s247
      %s249 = smul.u32 8, %s21
      %s251 = smul.u32 %s21, 16
      %s252 = smul.u32 %s251, 4
      %s253 = smul.addr %s252, 4
      %s254 = scalar_lea.vmem %s238, %s253
      %v255 = vld [vmem:[%s254] sm:$0xf]
      %v256 = vld [vmem:[%s254 + $0x4] sm:$0xf]
      %v257 = vld [vmem:[%s254 + $0x8] sm:$0xf]
      %v258 = vld [vmem:[%s254 + $0xc] sm:$0xf]
      %v259 = vld [vmem:[%s254 + $0x10] sm:$0xf]
      %v260 = vld [vmem:[%s254 + $0x14] sm:$0xf]
      %v261 = vld [vmem:[%s254 + $0x18] sm:$0xf]
      %v262 = vld [vmem:[%s254 + $0x1c] sm:$0xf]
      %v263 = vld [vmem:[%s254 + $0x20] sm:$0xf]
      %v264 = vld [vmem:[%s254 + $0x24] sm:$0xf]
      %v265 = vld [vmem:[%s254 + $0x28] sm:$0xf]
      %v266 = vld [vmem:[%s254 + $0x2c] sm:$0xf]
      %v267 = vld [vmem:[%s254 + $0x30] sm:$0xf]
      %v268 = vld [vmem:[%s254 + $0x34] sm:$0xf]
      %v269 = vld [vmem:[%s254 + $0x38] sm:$0xf]
      %v270 = vld [vmem:[%s254 + $0x3c] sm:$0xf]
      %v271 = vld [vmem:[%s254 + $0x40] sm:$0xf]
      %v272 = vld [vmem:[%s254 + $0x44] sm:$0xf]
      %v273 = vld [vmem:[%s254 + $0x48] sm:$0xf]
      %v274 = vld [vmem:[%s254 + $0x4c] sm:$0xf]
      %v275 = vld [vmem:[%s254 + $0x50] sm:$0xf]
      %v276 = vld [vmem:[%s254 + $0x54] sm:$0xf]
      %v277 = vld [vmem:[%s254 + $0x58] sm:$0xf]
      %v278 = vld [vmem:[%s254 + $0x5c] sm:$0xf]
      %v279 = vld [vmem:[%s254 + $0x60] sm:$0xf]
      %v280 = vld [vmem:[%s254 + $0x64] sm:$0xf]
      %v281 = vld [vmem:[%s254 + $0x68] sm:$0xf]
      %v282 = vld [vmem:[%s254 + $0x6c] sm:$0xf]
      %v283 = vld [vmem:[%s254 + $0x70] sm:$0xf]
      %v284 = vld [vmem:[%s254 + $0x74] sm:$0xf]
      %v285 = vld [vmem:[%s254 + $0x78] sm:$0xf]
      %v286 = vld [vmem:[%s254 + $0x7c] sm:$0xf]
      %v287 = vld [vmem:[%s254 + $0x80] sm:$0xf]
      %v288 = vld [vmem:[%s254 + $0x84] sm:$0xf]
      %v289 = vld [vmem:[%s254 + $0x88] sm:$0xf]
      %v290 = vld [vmem:[%s254 + $0x8c] sm:$0xf]
      %v291 = vld [vmem:[%s254 + $0x90] sm:$0xf]
      %v292 = vld [vmem:[%s254 + $0x94] sm:$0xf]
      %v293 = vld [vmem:[%s254 + $0x98] sm:$0xf]
      %v294 = vld [vmem:[%s254 + $0x9c] sm:$0xf]
      %v295 = vld [vmem:[%s254 + $0xa0] sm:$0xf]
      %v296 = vld [vmem:[%s254 + $0xa4] sm:$0xf]
      %v297 = vld [vmem:[%s254 + $0xa8] sm:$0xf]
      %v298 = vld [vmem:[%s254 + $0xac] sm:$0xf]
      %v299 = vld [vmem:[%s254 + $0xb0] sm:$0xf]
      %v300 = vld [vmem:[%s254 + $0xb4] sm:$0xf]
      %v301 = vld [vmem:[%s254 + $0xb8] sm:$0xf]
      %v302 = vld [vmem:[%s254 + $0xbc] sm:$0xf]
      %v303 = vld [vmem:[%s254 + $0xc0] sm:$0xf]
      %v304 = vld [vmem:[%s254 + $0xc4] sm:$0xf]
      %v305 = vld [vmem:[%s254 + $0xc8] sm:$0xf]
      %v306 = vld [vmem:[%s254 + $0xcc] sm:$0xf]
      %v307 = vld [vmem:[%s254 + $0xd0] sm:$0xf]
      %v308 = vld [vmem:[%s254 + $0xd4] sm:$0xf]
      %v309 = vld [vmem:[%s254 + $0xd8] sm:$0xf]
      %v310 = vld [vmem:[%s254 + $0xdc] sm:$0xf]
      %v311 = vld [vmem:[%s254 + $0xe0] sm:$0xf]
      %v312 = vld [vmem:[%s254 + $0xe4] sm:$0xf]
      %v313 = vld [vmem:[%s254 + $0xe8] sm:$0xf]
      %v314 = vld [vmem:[%s254 + $0xec] sm:$0xf]
      %v315 = vld [vmem:[%s254 + $0xf0] sm:$0xf]
      %v316 = vld [vmem:[%s254 + $0xf4] sm:$0xf]
      %v317 = vld [vmem:[%s254 + $0xf8] sm:$0xf]
      %v318 = vld [vmem:[%s254 + $0xfc] sm:$0xf]
      %v319 = vld [vmem:[%s254 + $0x100] sm:$0xf]
      %v320 = vld [vmem:[%s254 + $0x104] sm:$0xf]
      %v321 = vld [vmem:[%s254 + $0x108] sm:$0xf]
      %v322 = vld [vmem:[%s254 + $0x10c] sm:$0xf]
      %v323 = vld [vmem:[%s254 + $0x110] sm:$0xf]
      %v324 = vld [vmem:[%s254 + $0x114] sm:$0xf]
      %v325 = vld [vmem:[%s254 + $0x118] sm:$0xf]
      %v326 = vld [vmem:[%s254 + $0x11c] sm:$0xf]
      %v327 = vld [vmem:[%s1] sm:$0xf]
      %v328 = vld [vmem:[%s1 + $0x4] sm:$0xf]
      %v329 = vld [vmem:[%s1 + $0x8] sm:$0xf]
      %v330 = vld [vmem:[%s1 + $0xc] sm:$0x3]
      %v331 = vld [vmem:[%s2] sm:$0x1]
      %v333 = vperm.slane %v331, 0
      %v407 = vunpack.c.l.b16 %v255
      %v408 = vunpack.c.l.b16 %v256
      %v409 = vunpack.c.l.b16 %v257
      %v410 = vunpack.c.l.b16 %v258
      %v411 = vunpack.c.l.b16 %v259
      %v412 = vunpack.c.l.b16 %v260
      %v413 = vunpack.c.l.b16 %v261
      %v414 = vunpack.c.l.b16 %v262
      %v415 = vunpack.c.l.b16 %v263
      %v416 = vunpack.c.l.b16 %v264
      %v417 = vunpack.c.l.b16 %v265
      %v418 = vunpack.c.l.b16 %v266
      %v419 = vunpack.c.l.b16 %v267
      %v420 = vunpack.c.l.b16 %v268
      %v421 = vunpack.c.l.b16 %v269
      %v422 = vunpack.c.l.b16 %v270
      %v423 = vunpack.c.l.b16 %v271
      %v424 = vunpack.c.l.b16 %v272
      %v425 = vunpack.c.l.b16 %v273
      %v426 = vunpack.c.l.b16 %v274
      %v427 = vunpack.c.l.b16 %v275
      %v428 = vunpack.c.l.b16 %v276
      %v429 = vunpack.c.l.b16 %v277
      %v430 = vunpack.c.l.b16 %v278
      %v431 = vunpack.c.l.b16 %v279
      %v432 = vunpack.c.l.b16 %v280
      %v433 = vunpack.c.l.b16 %v281
      %v434 = vunpack.c.l.b16 %v282
      %v435 = vunpack.c.l.b16 %v283
      %v436 = vunpack.c.l.b16 %v284
      %v437 = vunpack.c.l.b16 %v285
      %v438 = vunpack.c.l.b16 %v286
      %v439 = vunpack.c.l.b16 %v287
      %v440 = vunpack.c.l.b16 %v288
      %v441 = vunpack.c.l.b16 %v289
      %v442 = vunpack.c.l.b16 %v290
      %v443 = vunpack.c.l.b16 %v291
      %v444 = vunpack.c.l.b16 %v292
      %v445 = vunpack.c.l.b16 %v293
      %v446 = vunpack.c.l.b16 %v294
      %v447 = vunpack.c.l.b16 %v295
      %v448 = vunpack.c.l.b16 %v296
      %v449 = vunpack.c.l.b16 %v297
      %v450 = vunpack.c.l.b16 %v298
      %v451 = vunpack.c.l.b16 %v299
      %v452 = vunpack.c.l.b16 %v300
      %v453 = vunpack.c.l.b16 %v301
      %v454 = vunpack.c.l.b16 %v302
      %v455 = vunpack.c.l.b16 %v303
      %v456 = vunpack.c.l.b16 %v304
      %v457 = vunpack.c.l.b16 %v305
      %v458 = vunpack.c.l.b16 %v306
      %v459 = vunpack.c.l.b16 %v307
      %v460 = vunpack.c.l.b16 %v308
      %v461 = vunpack.c.l.b16 %v309
      %v462 = vunpack.c.l.b16 %v310
      %v463 = vunpack.c.l.b16 %v311
      %v464 = vunpack.c.l.b16 %v312
      %v465 = vunpack.c.l.b16 %v313
      %v466 = vunpack.c.l.b16 %v314
      %v467 = vunpack.c.l.b16 %v315
      %v468 = vunpack.c.l.b16 %v316
      %v469 = vunpack.c.l.b16 %v317
      %v470 = vunpack.c.l.b16 %v318
      %v471 = vunpack.c.l.b16 %v319
      %v472 = vunpack.c.l.b16 %v320
      %v473 = vunpack.c.l.b16 %v321
      %v474 = vunpack.c.l.b16 %v322
      %v475 = vunpack.c.l.b16 %v323
      %v476 = vunpack.c.l.b16 %v324
      %v477 = vunpack.c.l.b16 %v325
      %v478 = vunpack.c.l.b16 %v326
      %v479 = vpack.c.b16 %v408, %v407
      %v480 = vpack.c.b16 %v410, %v409
      %v481 = vpack.c.b16 %v412, %v411
      %v482 = vpack.c.b16 %v414, %v413
      %v483 = vpack.c.b16 %v416, %v415
      %v484 = vpack.c.b16 %v418, %v417
      %v485 = vpack.c.b16 %v420, %v419
      %v486 = vpack.c.b16 %v422, %v421
      %v487 = vpack.c.b16 %v424, %v423
      %v488 = vpack.c.b16 %v426, %v425
      %v489 = vpack.c.b16 %v428, %v427
      %v490 = vpack.c.b16 %v430, %v429
      %v491 = vpack.c.b16 %v432, %v431
      %v492 = vpack.c.b16 %v434, %v433
      %v493 = vpack.c.b16 %v436, %v435
      %v494 = vpack.c.b16 %v438, %v437
      %v495 = vpack.c.b16 %v440, %v439
      %v496 = vpack.c.b16 %v442, %v441
      %v497 = vpack.c.b16 %v444, %v443
      %v498 = vpack.c.b16 %v446, %v445
      %v499 = vpack.c.b16 %v448, %v447
      %v500 = vpack.c.b16 %v450, %v449
      %v501 = vpack.c.b16 %v452, %v451
      %v502 = vpack.c.b16 %v454, %v453
      %v503 = vpack.c.b16 %v456, %v455
      %v504 = vpack.c.b16 %v458, %v457
      %v505 = vpack.c.b16 %v460, %v459
      %v506 = vpack.c.b16 %v462, %v461
      %v507 = vpack.c.b16 %v464, %v463
      %v508 = vpack.c.b16 %v466, %v465
      %v509 = vpack.c.b16 %v468, %v467
      %v510 = vpack.c.b16 %v470, %v469
      %v511 = vpack.c.b16 %v472, %v471
      %v512 = vpack.c.b16 %v474, %v473
      %v513 = vpack.c.b16 %v476, %v475
      %v514 = vpack.c.b16 %v478, %v477
      %v519 = vunpack.c.l.b16 %v327
      %v520 = vunpack.c.l.b16 %v328
      %v521 = vunpack.c.l.b16 %v329
      %v522 = vunpack.c.l.b16 %v330
      %v523 = vpack.c.b16 %v520, %v519
      %v524 = vpack.c.b16 %v522, %v521
      %vm526 = vcmask 220160
      %v528 = vsel %vm526, %v479, 0
      %v531 = vsel %vm526, %v480, 0
      %v534 = vsel %vm526, %v481, 0
      %v537 = vsel %vm526, %v482, 0
      %v540 = vsel %vm526, %v483, 0
      %v543 = vsel %vm526, %v484, 0
      %v546 = vsel %vm526, %v485, 0
      %v549 = vsel %vm526, %v486, 0
      %v552 = vsel %vm526, %v487, 0
      %v555 = vsel %vm526, %v488, 0
      %v558 = vsel %vm526, %v489, 0
      %v561 = vsel %vm526, %v490, 0
      %v564 = vsel %vm526, %v491, 0
      %v567 = vsel %vm526, %v492, 0
      %v570 = vsel %vm526, %v493, 0
      %v573 = vsel %vm526, %v494, 0
      %v576 = vsel %vm526, %v495, 0
      %v579 = vsel %vm526, %v496, 0
      %v582 = vsel %vm526, %v497, 0
      %v585 = vsel %vm526, %v498, 0
      %v588 = vsel %vm526, %v499, 0
      %v591 = vsel %vm526, %v500, 0
      %v594 = vsel %vm526, %v501, 0
      %v597 = vsel %vm526, %v502, 0
      %v600 = vsel %vm526, %v503, 0
      %v603 = vsel %vm526, %v504, 0
      %v606 = vsel %vm526, %v505, 0
      %v609 = vsel %vm526, %v506, 0
      %v612 = vsel %vm526, %v507, 0
      %v615 = vsel %vm526, %v508, 0
      %v618 = vsel %vm526, %v509, 0
      %v621 = vsel %vm526, %v510, 0
      %v624 = vsel %vm526, %v511, 0
      %v627 = vsel %vm526, %v512, 0
      %v630 = vsel %vm526, %v513, 0
      %v633 = vsel %vm526, %v514, 0
      %vm635 = vcmask 1044480
      %vm636 = vcmask 1045504
      %v637 = vsel %vm635, 4294967295, 65535
      %v638 = vsel %vm636, %v637, 0
      %v640 = vand.u32 %v524, %v638
      %642 = vmatpush.bf16.msra.mxu0 0
      %643 = vmatpush.bf16.msra.mxu0 0
      %644 = vmatpush.bf16.msra.mxu0 0
      %645 = vmatpush.bf16.msra.mxu0 0
      %646 = vmatpush.bf16.msra.mxu0 0
      %647 = vmatpush.bf16.msra.mxu0 0
      %648 = vmatpush.bf16.msra.mxu0 %v640
      %649 = vmatpush.bf16.msra.mxu0 %v523
      %650 = vmatmul.bf16.gmra.mxu0 %v528
      %v651 = vpop.f32.mrf.mxu0
      %v652 = vadd.f32 %v333, %v651
      %v653 = vpop.f32.mrf.mxu0
      %v654 = vadd.f32 %v333, %v653
      %655 = vmatmul.bf16.gmra.mxu0 %v531
      %v656 = vpop.f32.mrf.mxu0
      %v657 = vadd.f32 %v333, %v656
      %v658 = vpop.f32.mrf.mxu0
      %v659 = vadd.f32 %v333, %v658
      %660 = vmatmul.bf16.gmra.mxu0 %v534
      %v661 = vpop.f32.mrf.mxu0
      %v662 = vadd.f32 %v333, %v661
      %v663 = vpop.f32.mrf.mxu0
      %v664 = vadd.f32 %v333, %v663
      %665 = vmatmul.bf16.gmra.mxu0 %v537
      %v666 = vpop.f32.mrf.mxu0
      %v667 = vadd.f32 %v333, %v666
      %v668 = vpop.f32.mrf.mxu0
      %v669 = vadd.f32 %v333, %v668
      %670 = vmatmul.bf16.gmra.mxu0 %v540
      %v671 = vpop.f32.mrf.mxu0
      %v672 = vadd.f32 %v333, %v671
      %v673 = vpop.f32.mrf.mxu0
      %v674 = vadd.f32 %v333, %v673
      %675 = vmatmul.bf16.gmra.mxu0 %v543
      %v676 = vpop.f32.mrf.mxu0
      %v677 = vadd.f32 %v333, %v676
      %v678 = vpop.f32.mrf.mxu0
      %v679 = vadd.f32 %v333, %v678
      %680 = vmatmul.bf16.gmra.mxu0 %v546
      %v681 = vpop.f32.mrf.mxu0
      %v682 = vadd.f32 %v333, %v681
      %v683 = vpop.f32.mrf.mxu0
      %v684 = vadd.f32 %v333, %v683
      %685 = vmatmul.bf16.gmra.mxu0 %v549
      %v686 = vpop.f32.mrf.mxu0
      %v687 = vadd.f32 %v333, %v686
      %v688 = vpop.f32.mrf.mxu0
      %v689 = vadd.f32 %v333, %v688
      %690 = vmatmul.bf16.gmra.mxu0 %v552
      %v691 = vpop.f32.mrf.mxu0
      %v692 = vadd.f32 %v333, %v691
      %v693 = vpop.f32.mrf.mxu0
      %v694 = vadd.f32 %v333, %v693
      %695 = vmatmul.bf16.gmra.mxu0 %v555
      %v696 = vpop.f32.mrf.mxu0
      %v697 = vadd.f32 %v333, %v696
      %v698 = vpop.f32.mrf.mxu0
      %v699 = vadd.f32 %v333, %v698
      %700 = vmatmul.bf16.gmra.mxu0 %v558
      %v701 = vpop.f32.mrf.mxu0
      %v702 = vadd.f32 %v333, %v701
      %v703 = vpop.f32.mrf.mxu0
      %v704 = vadd.f32 %v333, %v703
      %705 = vmatmul.bf16.gmra.mxu0 %v561
      %v706 = vpop.f32.mrf.mxu0
      %v707 = vadd.f32 %v333, %v706
      %v708 = vpop.f32.mrf.mxu0
      %v709 = vadd.f32 %v333, %v708
      %710 = vmatmul.bf16.gmra.mxu0 %v564
      %v711 = vpop.f32.mrf.mxu0
      %v712 = vadd.f32 %v333, %v711
      %v713 = vpop.f32.mrf.mxu0
      %v714 = vadd.f32 %v333, %v713
      %715 = vmatmul.bf16.gmra.mxu0 %v567
      %v716 = vpop.f32.mrf.mxu0
      %v717 = vadd.f32 %v333, %v716
      %v718 = vpop.f32.mrf.mxu0
      %v719 = vadd.f32 %v333, %v718
      %720 = vmatmul.bf16.gmra.mxu0 %v570
      %v721 = vpop.f32.mrf.mxu0
      %v722 = vadd.f32 %v333, %v721
      %v723 = vpop.f32.mrf.mxu0
      %v724 = vadd.f32 %v333, %v723
      %725 = vmatmul.bf16.gmra.mxu0 %v573
      %v726 = vpop.f32.mrf.mxu0
      %v727 = vadd.f32 %v333, %v726
      %v728 = vpop.f32.mrf.mxu0
      %v729 = vadd.f32 %v333, %v728
      %730 = vmatmul.bf16.gmra.mxu0 %v576
      %v731 = vpop.f32.mrf.mxu0
      %v732 = vadd.f32 %v333, %v731
      %v733 = vpop.f32.mrf.mxu0
      %v734 = vadd.f32 %v333, %v733
      %735 = vmatmul.bf16.gmra.mxu0 %v579
      %v736 = vpop.f32.mrf.mxu0
      %v737 = vadd.f32 %v333, %v736
      %v738 = vpop.f32.mrf.mxu0
      %v739 = vadd.f32 %v333, %v738
      %740 = vmatmul.bf16.gmra.mxu0 %v582
      %v741 = vpop.f32.mrf.mxu0
      %v742 = vadd.f32 %v333, %v741
      %v743 = vpop.f32.mrf.mxu0
      %v744 = vadd.f32 %v333, %v743
      %745 = vmatmul.bf16.gmra.mxu0 %v585
      %v746 = vpop.f32.mrf.mxu0
      %v747 = vadd.f32 %v333, %v746
      %v748 = vpop.f32.mrf.mxu0
      %v749 = vadd.f32 %v333, %v748
      %750 = vmatmul.bf16.gmra.mxu0 %v588
      %v751 = vpop.f32.mrf.mxu0
      %v752 = vadd.f32 %v333, %v751
      %v753 = vpop.f32.mrf.mxu0
      %v754 = vadd.f32 %v333, %v753
      %755 = vmatmul.bf16.gmra.mxu0 %v591
      %v756 = vpop.f32.mrf.mxu0
      %v757 = vadd.f32 %v333, %v756
      %v758 = vpop.f32.mrf.mxu0
      %v759 = vadd.f32 %v333, %v758
      %760 = vmatmul.bf16.gmra.mxu0 %v594
      %v761 = vpop.f32.mrf.mxu0
      %v762 = vadd.f32 %v333, %v761
      %v763 = vpop.f32.mrf.mxu0
      %v764 = vadd.f32 %v333, %v763
      %765 = vmatmul.bf16.gmra.mxu0 %v597
      %v766 = vpop.f32.mrf.mxu0
      %v767 = vadd.f32 %v333, %v766
      %v768 = vpop.f32.mrf.mxu0
      %v769 = vadd.f32 %v333, %v768
      %770 = vmatmul.bf16.gmra.mxu0 %v600
      %v771 = vpop.f32.mrf.mxu0
      %v772 = vadd.f32 %v333, %v771
      %v773 = vpop.f32.mrf.mxu0
      %v774 = vadd.f32 %v333, %v773
      %775 = vmatmul.bf16.gmra.mxu0 %v603
      %v776 = vpop.f32.mrf.mxu0
      %v777 = vadd.f32 %v333, %v776
      %v778 = vpop.f32.mrf.mxu0
      %v779 = vadd.f32 %v333, %v778
      %780 = vmatmul.bf16.gmra.mxu0 %v606
      %v781 = vpop.f32.mrf.mxu0
      %v782 = vadd.f32 %v333, %v781
      %v783 = vpop.f32.mrf.mxu0
      %v784 = vadd.f32 %v333, %v783
      %785 = vmatmul.bf16.gmra.mxu0 %v609
      %v786 = vpop.f32.mrf.mxu0
      %v787 = vadd.f32 %v333, %v786
      %v788 = vpop.f32.mrf.mxu0
      %v789 = vadd.f32 %v333, %v788
      %790 = vmatmul.bf16.gmra.mxu0 %v612
      %v791 = vpop.f32.mrf.mxu0
      %v792 = vadd.f32 %v333, %v791
      %v793 = vpop.f32.mrf.mxu0
      %v794 = vadd.f32 %v333, %v793
      %795 = vmatmul.bf16.gmra.mxu0 %v615
      %v796 = vpop.f32.mrf.mxu0
      %v797 = vadd.f32 %v333, %v796
      %v798 = vpop.f32.mrf.mxu0
      %v799 = vadd.f32 %v333, %v798
      %800 = vmatmul.bf16.gmra.mxu0 %v618
      %v801 = vpop.f32.mrf.mxu0
      %v802 = vadd.f32 %v333, %v801
      %v803 = vpop.f32.mrf.mxu0
      %v804 = vadd.f32 %v333, %v803
      %805 = vmatmul.bf16.gmra.mxu0 %v621
      %v806 = vpop.f32.mrf.mxu0
      %v807 = vadd.f32 %v333, %v806
      %v808 = vpop.f32.mrf.mxu0
      %v809 = vadd.f32 %v333, %v808
      %810 = vmatmul.bf16.gmra.mxu0 %v624
      %v811 = vpop.f32.mrf.mxu0
      %v812 = vadd.f32 %v333, %v811
      %v813 = vpop.f32.mrf.mxu0
      %v814 = vadd.f32 %v333, %v813
      %815 = vmatmul.bf16.gmra.mxu0 %v627
      %v816 = vpop.f32.mrf.mxu0
      %v817 = vadd.f32 %v333, %v816
      %v818 = vpop.f32.mrf.mxu0
      %v819 = vadd.f32 %v333, %v818
      %820 = vmatmul.bf16.gmra.mxu0 %v630
      %v821 = vpop.f32.mrf.mxu0
      %v822 = vadd.f32 %v333, %v821
      %v823 = vpop.f32.mrf.mxu0
      %v824 = vadd.f32 %v333, %v823
      %825 = vmatmul.bf16.gmra.mxu0 %v633
      %v826 = vpop.f32.mrf.mxu0
      %v827 = vadd.f32 %v333, %v826
      %v828 = vpop.f32.mrf.mxu0
      %v829 = vadd.f32 %v333, %v828
      %830 = vdwg.mxu0
      %v831 = vmax.f32 %v652, 0.0
      %v832 = vmax.f32 %v654, 0.0
      %v833 = vmax.f32 %v657, 0.0
      %v834 = vmax.f32 %v659, 0.0
      %v835 = vmax.f32 %v662, 0.0
      %v836 = vmax.f32 %v664, 0.0
      %v837 = vmax.f32 %v667, 0.0
      %v838 = vmax.f32 %v669, 0.0
      %v839 = vmax.f32 %v672, 0.0
      %v840 = vmax.f32 %v674, 0.0
      %v841 = vmax.f32 %v677, 0.0
      %v842 = vmax.f32 %v679, 0.0
      %v843 = vmax.f32 %v682, 0.0
      %v844 = vmax.f32 %v684, 0.0
      %v845 = vmax.f32 %v687, 0.0
      %v846 = vmax.f32 %v689, 0.0
      %v847 = vmax.f32 %v692, 0.0
      %v848 = vmax.f32 %v694, 0.0
      %v849 = vmax.f32 %v697, 0.0
      %v850 = vmax.f32 %v699, 0.0
      %v851 = vmax.f32 %v702, 0.0
      %v852 = vmax.f32 %v704, 0.0
      %v853 = vmax.f32 %v707, 0.0
      %v854 = vmax.f32 %v709, 0.0
      %v855 = vmax.f32 %v712, 0.0
      %v856 = vmax.f32 %v714, 0.0
      %v857 = vmax.f32 %v717, 0.0
      %v858 = vmax.f32 %v719, 0.0
      %v859 = vmax.f32 %v722, 0.0
      %v860 = vmax.f32 %v724, 0.0
      %v861 = vmax.f32 %v727, 0.0
      %v862 = vmax.f32 %v729, 0.0
      %v863 = vmax.f32 %v732, 0.0
      %v864 = vmax.f32 %v734, 0.0
      %v865 = vmax.f32 %v737, 0.0
      %v866 = vmax.f32 %v739, 0.0
      %v867 = vmax.f32 %v742, 0.0
      %v868 = vmax.f32 %v744, 0.0
      %v869 = vmax.f32 %v747, 0.0
      %v870 = vmax.f32 %v749, 0.0
      %v871 = vmax.f32 %v752, 0.0
      %v872 = vmax.f32 %v754, 0.0
      %v873 = vmax.f32 %v757, 0.0
      %v874 = vmax.f32 %v759, 0.0
      %v875 = vmax.f32 %v762, 0.0
      %v876 = vmax.f32 %v764, 0.0
      %v877 = vmax.f32 %v767, 0.0
      %v878 = vmax.f32 %v769, 0.0
      %v879 = vmax.f32 %v772, 0.0
      %v880 = vmax.f32 %v774, 0.0
      %v881 = vmax.f32 %v777, 0.0
      %v882 = vmax.f32 %v779, 0.0
      %v883 = vmax.f32 %v782, 0.0
      %v884 = vmax.f32 %v784, 0.0
      %v885 = vmax.f32 %v787, 0.0
      %v886 = vmax.f32 %v789, 0.0
      %v887 = vmax.f32 %v792, 0.0
      %v888 = vmax.f32 %v794, 0.0
      %v889 = vmax.f32 %v797, 0.0
      %v890 = vmax.f32 %v799, 0.0
      %v891 = vmax.f32 %v802, 0.0
      %v892 = vmax.f32 %v804, 0.0
      %v893 = vmax.f32 %v807, 0.0
      %v894 = vmax.f32 %v809, 0.0
      %v895 = vmax.f32 %v812, 0.0
      %v896 = vmax.f32 %v814, 0.0
      %v897 = vmax.f32 %v817, 0.0
      %v898 = vmax.f32 %v819, 0.0
      %v899 = vmax.f32 %v822, 0.0
      %v900 = vmax.f32 %v824, 0.0
      %v901 = vmax.f32 %v827, 0.0
      %v902 = vmax.f32 %v829, 0.0
      %vm903 = vcmask 523264
      %904 = vst.msk [vmem:[#allocation2] sm:$0xff] %vm903, %v831
      %905 = vst.msk [vmem:[#allocation2 + $0x8] sm:$0xff] %vm903, %v832
      %906 = vst.msk [vmem:[#allocation2 + $0x28] sm:$0xff] %vm903, %v835
      %907 = vst.msk [vmem:[#allocation2 + $0x30] sm:$0xff] %vm903, %v836
      %908 = vst.msk [vmem:[#allocation2 + $0x50] sm:$0xff] %vm903, %v839
      %909 = vst.msk [vmem:[#allocation2 + $0x58] sm:$0xff] %vm903, %v840
      %910 = vst.msk [vmem:[#allocation2 + $0x78] sm:$0xff] %vm903, %v843
      %911 = vst.msk [vmem:[#allocation2 + $0x80] sm:$0xff] %vm903, %v844
      %912 = vst.msk [vmem:[#allocation2 + $0xa0] sm:$0xff] %vm903, %v847
      %913 = vst.msk [vmem:[#allocation2 + $0xa8] sm:$0xff] %vm903, %v848
      %914 = vst.msk [vmem:[#allocation2 + $0xc8] sm:$0xff] %vm903, %v851
      %915 = vst.msk [vmem:[#allocation2 + $0xd0] sm:$0xff] %vm903, %v852
      %916 = vst.msk [vmem:[#allocation2 + $0xf0] sm:$0xff] %vm903, %v855
      %917 = vst.msk [vmem:[#allocation2 + $0xf8] sm:$0xff] %vm903, %v856
      %918 = vst.msk [vmem:[#allocation2 + $0x118] sm:$0xff] %vm903, %v859
      %919 = vst.msk [vmem:[#allocation2 + $0x120] sm:$0xff] %vm903, %v860
      %920 = vst.msk [vmem:[#allocation2 + $0x140] sm:$0xff] %vm903, %v863
      %921 = vst.msk [vmem:[#allocation2 + $0x148] sm:$0xff] %vm903, %v864
      %922 = vst.msk [vmem:[#allocation2 + $0x168] sm:$0xff] %vm903, %v867
      %923 = vst.msk [vmem:[#allocation2 + $0x170] sm:$0xff] %vm903, %v868
      %924 = vst.msk [vmem:[#allocation2 + $0x190] sm:$0xff] %vm903, %v871
      %925 = vst.msk [vmem:[#allocation2 + $0x198] sm:$0xff] %vm903, %v872
      %926 = vst.msk [vmem:[#allocation2 + $0x1b8] sm:$0xff] %vm903, %v875
      %927 = vst.msk [vmem:[#allocation2 + $0x1c0] sm:$0xff] %vm903, %v876
      %928 = vst.msk [vmem:[#allocation2 + $0x1e0] sm:$0xff] %vm903, %v879
      %929 = vst.msk [vmem:[#allocation2 + $0x1e8] sm:$0xff] %vm903, %v880
      %930 = vst.msk [vmem:[#allocation2 + $0x208] sm:$0xff] %vm903, %v883
      %931 = vst.msk [vmem:[#allocation2 + $0x210] sm:$0xff] %vm903, %v884
      %932 = vst.msk [vmem:[#allocation2 + $0x230] sm:$0xff] %vm903, %v887
      %933 = vst.msk [vmem:[#allocation2 + $0x238] sm:$0xff] %vm903, %v888
      %934 = vst.msk [vmem:[#allocation2 + $0x258] sm:$0xff] %vm903, %v891
      %935 = vst.msk [vmem:[#allocation2 + $0x260] sm:$0xff] %vm903, %v892
      %936 = vst.msk [vmem:[#allocation2 + $0x280] sm:$0xff] %vm903, %v895
      %937 = vst.msk [vmem:[#allocation2 + $0x288] sm:$0xff] %vm903, %v896
      %938 = vst.msk [vmem:[#allocation2 + $0x2a8] sm:$0xff] %vm903, %v899
      %939 = vst.msk [vmem:[#allocation2 + $0x2b0] sm:$0xff] %vm903, %v900
      %vm940 = vcmask 517120
      %941 = vst.msk [vmem:[#allocation2 + $0x10] sm:$0x3] %vm940, 0.0
      %942 = vst.msk [vmem:[#allocation2 + $0x38] sm:$0x3] %vm940, 0.0
      %943 = vst.msk [vmem:[#allocation2 + $0x60] sm:$0x3] %vm940, 0.0
      %944 = vst.msk [vmem:[#allocation2 + $0x88] sm:$0x3] %vm940, 0.0
      %945 = vst.msk [vmem:[#allocation2 + $0xb0] sm:$0x3] %vm940, 0.0
      %946 = vst.msk [vmem:[#allocation2 + $0xd8] sm:$0x3] %vm940, 0.0
      %947 = vst.msk [vmem:[#allocation2 + $0x100] sm:$0x3] %vm940, 0.0
      %948 = vst.msk [vmem:[#allocation2 + $0x128] sm:$0x3] %vm940, 0.0
      %949 = vst.msk [vmem:[#allocation2 + $0x150] sm:$0x3] %vm940, 0.0
      %950 = vst.msk [vmem:[#allocation2 + $0x178] sm:$0x3] %vm940, 0.0
      %951 = vst.msk [vmem:[#allocation2 + $0x1a0] sm:$0x3] %vm940, 0.0
      %952 = vst.msk [vmem:[#allocation2 + $0x1c8] sm:$0x3] %vm940, 0.0
      %953 = vst.msk [vmem:[#allocation2 + $0x1f0] sm:$0x3] %vm940, 0.0
      %954 = vst.msk [vmem:[#allocation2 + $0x218] sm:$0x3] %vm940, 0.0
      %955 = vst.msk [vmem:[#allocation2 + $0x240] sm:$0x3] %vm940, 0.0
      %956 = vst.msk [vmem:[#allocation2 + $0x268] sm:$0x3] %vm940, 0.0
      %957 = vst.msk [vmem:[#allocation2 + $0x290] sm:$0x3] %vm940, 0.0
      %958 = vst.msk [vmem:[#allocation2 + $0x2b8] sm:$0x3] %vm940, 0.0
      %959 = vst.msk [vmem:[#allocation2 + $0x12] sm:$0xff] %vm903, %v833
      %960 = vst.msk [vmem:[#allocation2 + $0x1a] sm:$0xff] %vm903, %v834
      %961 = vst.msk [vmem:[#allocation2 + $0x3a] sm:$0xff] %vm903, %v837
      %962 = vst.msk [vmem:[#allocation2 + $0x42] sm:$0xff] %vm903, %v838
      %963 = vst.msk [vmem:[#allocation2 + $0x62] sm:$0xff] %vm903, %v841
      %964 = vst.msk [vmem:[#allocation2 + $0x6a] sm:$0xff] %vm903, %v842
      %965 = vst.msk [vmem:[#allocation2 + $0x8a] sm:$0xff] %vm903, %v845
      %966 = vst.msk [vmem:[#allocation2 + $0x92] sm:$0xff] %vm903, %v846
      %967 = vst.msk [vmem:[#allocation2 + $0xb2] sm:$0xff] %vm903, %v849
      %968 = vst.msk [vmem:[#allocation2 + $0xba] sm:$0xff] %vm903, %v850
      %969 = vst.msk [vmem:[#allocation2 + $0xda] sm:$0xff] %vm903, %v853
      %970 = vst.msk [vmem:[#allocation2 + $0xe2] sm:$0xff] %vm903, %v854
      %971 = vst.msk [vmem:[#allocation2 + $0x102] sm:$0xff] %vm903, %v857
      %972 = vst.msk [vmem:[#allocation2 + $0x10a] sm:$0xff] %vm903, %v858
      %973 = vst.msk [vmem:[#allocation2 + $0x12a] sm:$0xff] %vm903, %v861
      %974 = vst.msk [vmem:[#allocation2 + $0x132] sm:$0xff] %vm903, %v862
      %975 = vst.msk [vmem:[#allocation2 + $0x152] sm:$0xff] %vm903, %v865
      %976 = vst.msk [vmem:[#allocation2 + $0x15a] sm:$0xff] %vm903, %v866
      %977 = vst.msk [vmem:[#allocation2 + $0x17a] sm:$0xff] %vm903, %v869
      %978 = vst.msk [vmem:[#allocation2 + $0x182] sm:$0xff] %vm903, %v870
      %979 = vst.msk [vmem:[#allocation2 + $0x1a2] sm:$0xff] %vm903, %v873
      %980 = vst.msk [vmem:[#allocation2 + $0x1aa] sm:$0xff] %vm903, %v874
      %981 = vst.msk [vmem:[#allocation2 + $0x1ca] sm:$0xff] %vm903, %v877
      %982 = vst.msk [vmem:[#allocation2 + $0x1d2] sm:$0xff] %vm903, %v878
      %983 = vst.msk [vmem:[#allocation2 + $0x1f2] sm:$0xff] %vm903, %v881
      %984 = vst.msk [vmem:[#allocation2 + $0x1fa] sm:$0xff] %vm903, %v882
      %985 = vst.msk [vmem:[#allocation2 + $0x21a] sm:$0xff] %vm903, %v885
      %986 = vst.msk [vmem:[#allocation2 + $0x222] sm:$0xff] %vm903, %v886
      %987 = vst.msk [vmem:[#allocation2 + $0x242] sm:$0xff] %vm903, %v889
      %988 = vst.msk [vmem:[#allocation2 + $0x24a] sm:$0xff] %vm903, %v890
      %989 = vst.msk [vmem:[#allocation2 + $0x26a] sm:$0xff] %vm903, %v893
      %990 = vst.msk [vmem:[#allocation2 + $0x272] sm:$0xff] %vm903, %v894
      %991 = vst.msk [vmem:[#allocation2 + $0x292] sm:$0xff] %vm903, %v897
      %992 = vst.msk [vmem:[#allocation2 + $0x29a] sm:$0xff] %vm903, %v898
      %993 = vst.msk [vmem:[#allocation2 + $0x2ba] sm:$0xff] %vm903, %v901
      %994 = vst.msk [vmem:[#allocation2 + $0x2c2] sm:$0xff] %vm903, %v902
      %p995 = scmp.eq.s32.totalorder %s21, 0
      // Predicated region
      $region41: #{truncated_vgg19_forward.2} parent=39 // pred_check
        %p996 = pneg %p995
      $region42: #{truncated_vgg19_forward.2} parent=39 // pred_check_branch
        %998 = sbr.rel (%p996) target = $region44
      $region43: #{truncated_vgg19_forward.2} parent=39 // pred_region
        %999 = vst.msk [vmem:[#allocation2] sm:$0xff] %vm903, 0.0
        %1000 = vst.msk [vmem:[#allocation2 + $0x8] sm:$0xff] %vm903, 0.0
        %1001 = vst.msk [vmem:[#allocation2 + $0x10] sm:$0xff] %vm903, 0.0
        %1002 = vst.msk [vmem:[#allocation2 + $0x18] sm:$0xff] %vm903, 0.0
        %1003 = vst.msk [vmem:[#allocation2 + $0x20] sm:$0x3] %vm940, 0.0
      $region44: #{truncated_vgg19_forward.2} parent=39 // pred_fallthru
        _
      %p1004 = scmp.eq.s32.totalorder %s21, 1
      // Predicated region
      $region45: #{truncated_vgg19_forward.2} parent=39 // pred_check
        %p1005 = pneg %p1004
      $region46: #{truncated_vgg19_forward.2} parent=39 // pred_check_branch
        %1007 = sbr.rel (%p1005) target = $region48
      $region47: #{truncated_vgg19_forward.2} parent=39 // pred_region
        %s1008 = scalar_lea.vmem [#allocation2], 680
        %1009 = vst.msk [vmem:[%s1008] sm:$0xff] %vm903, 0.0
        %1010 = vst.msk [vmem:[%s1008 + $0x8] sm:$0xff] %vm903, 0.0
        %1011 = vst.msk [vmem:[%s1008 + $0x10] sm:$0xff] %vm903, 0.0
        %1012 = vst.msk [vmem:[%s1008 + $0x18] sm:$0xff] %vm903, 0.0
        %1013 = vst.msk [vmem:[%s1008 + $0x20] sm:$0x3] %vm940, 0.0
      $region48: #{truncated_vgg19_forward.2} parent=39 // pred_fallthru
        _
      %v1014 = vld [vmem:[#allocation2 + $0x11] sm:$0xff]
      %v1015 = vld [vmem:[#allocation2 + $0x19] sm:$0xff]
      %v1016 = vld [vmem:[#allocation2 + $0x39] sm:$0xff]
      %v1017 = vld [vmem:[#allocation2 + $0x41] sm:$0xff]
      %v1018 = vld [vmem:[#allocation2 + $0x61] sm:$0xff]
      %v1019 = vld [vmem:[#allocation2 + $0x69] sm:$0xff]
      %v1020 = vld [vmem:[#allocation2 + $0x89] sm:$0xff]
      %v1021 = vld [vmem:[#allocation2 + $0x91] sm:$0xff]
      %v1022 = vld [vmem:[#allocation2 + $0xb1] sm:$0xff]
      %v1023 = vld [vmem:[#allocation2 + $0xb9] sm:$0xff]
      %v1024 = vld [vmem:[#allocation2 + $0xd9] sm:$0xff]
      %v1025 = vld [vmem:[#allocation2 + $0xe1] sm:$0xff]
      %v1026 = vld [vmem:[#allocation2 + $0x101] sm:$0xff]
      %v1027 = vld [vmem:[#allocation2 + $0x109] sm:$0xff]
      %v1028 = vld [vmem:[#allocation2 + $0x129] sm:$0xff]
      %v1029 = vld [vmem:[#allocation2 + $0x131] sm:$0xff]
      %v1030 = vld [vmem:[#allocation2 + $0x151] sm:$0xff]
      %v1031 = vld [vmem:[#allocation2 + $0x159] sm:$0xff]
      %v1032 = vld [vmem:[#allocation2 + $0x179] sm:$0xff]
      %v1033 = vld [vmem:[#allocation2 + $0x181] sm:$0xff]
      %v1034 = vld [vmem:[#allocation2 + $0x1a1] sm:$0xff]
      %v1035 = vld [vmem:[#allocation2 + $0x1a9] sm:$0xff]
      %v1036 = vld [vmem:[#allocation2 + $0x1c9] sm:$0xff]
      %v1037 = vld [vmem:[#allocation2 + $0x1d1] sm:$0xff]
      %v1038 = vld [vmem:[#allocation2 + $0x1f1] sm:$0xff]
      %v1039 = vld [vmem:[#allocation2 + $0x1f9] sm:$0xff]
      %v1040 = vld [vmem:[#allocation2 + $0x219] sm:$0xff]
      %v1041 = vld [vmem:[#allocation2 + $0x221] sm:$0xff]
      %v1042 = vld [vmem:[#allocation2 + $0x241] sm:$0xff]
      %v1043 = vld [vmem:[#allocation2 + $0x249] sm:$0xff]
      %v1044 = vld [vmem:[#allocation2 + $0x269] sm:$0xff]
      %v1045 = vld [vmem:[#allocation2 + $0x271] sm:$0xff]
      %v1046 = vld [vmem:[#allocation2] sm:$0xff]
      %v1047 = vld [vmem:[#allocation2 + $0x8] sm:$0xff]
      %v1048 = vld [vmem:[#allocation2 + $0x28] sm:$0xff]
      %v1049 = vld [vmem:[#allocation2 + $0x30] sm:$0xff]
      %v1050 = vld [vmem:[#allocation2 + $0x50] sm:$0xff]
      %v1051 = vld [vmem:[#allocation2 + $0x58] sm:$0xff]
      %v1052 = vld [vmem:[#allocation2 + $0x78] sm:$0xff]
      %v1053 = vld [vmem:[#allocation2 + $0x80] sm:$0xff]
      %v1054 = vld [vmem:[#allocation2 + $0xa0] sm:$0xff]
      %v1055 = vld [vmem:[#allocation2 + $0xa8] sm:$0xff]
      %v1056 = vld [vmem:[#allocation2 + $0xc8] sm:$0xff]
      %v1057 = vld [vmem:[#allocation2 + $0xd0] sm:$0xff]
      %v1058 = vld [vmem:[#allocation2 + $0xf0] sm:$0xff]
      %v1059 = vld [vmem:[#allocation2 + $0xf8] sm:$0xff]
      %v1060 = vld [vmem:[#allocation2 + $0x118] sm:$0xff]
      %v1061 = vld [vmem:[#allocation2 + $0x120] sm:$0xff]
      %v1062 = vld [vmem:[#allocation2 + $0x140] sm:$0xff]
      %v1063 = vld [vmem:[#allocation2 + $0x148] sm:$0xff]
      %v1064 = vld [vmem:[#allocation2 + $0x168] sm:$0xff]
      %v1065 = vld [vmem:[#allocation2 + $0x170] sm:$0xff]
      %v1066 = vld [vmem:[#allocation2 + $0x190] sm:$0xff]
      %v1067 = vld [vmem:[#allocation2 + $0x198] sm:$0xff]
      %v1068 = vld [vmem:[#allocation2 + $0x1b8] sm:$0xff]
      %v1069 = vld [vmem:[#allocation2 + $0x1c0] sm:$0xff]
      %v1070 = vld [vmem:[#allocation2 + $0x1e0] sm:$0xff]
      %v1071 = vld [vmem:[#allocation2 + $0x1e8] sm:$0xff]
      %v1072 = vld [vmem:[#allocation2 + $0x208] sm:$0xff]
      %v1073 = vld [vmem:[#allocation2 + $0x210] sm:$0xff]
      %v1074 = vld [vmem:[#allocation2 + $0x230] sm:$0xff]
      %v1075 = vld [vmem:[#allocation2 + $0x238] sm:$0xff]
      %v1076 = vld [vmem:[#allocation2 + $0x258] sm:$0xff]
      %v1077 = vld [vmem:[#allocation2 + $0x260] sm:$0xff]
      %v1078 = vpack.c.bf16 %v1014, %v1014
      %v1079 = vpack.c.bf16 %v1015, %v1015
      %v1080 = vpack.c.bf16 %v1016, %v1016
      %v1081 = vpack.c.bf16 %v1017, %v1017
      %v1082 = vpack.c.bf16 %v1018, %v1018
      %v1083 = vpack.c.bf16 %v1019, %v1019
      %v1084 = vpack.c.bf16 %v1020, %v1020
      %v1085 = vpack.c.bf16 %v1021, %v1021
      %v1086 = vpack.c.bf16 %v1022, %v1022
      %v1087 = vpack.c.bf16 %v1023, %v1023
      %v1088 = vpack.c.bf16 %v1024, %v1024
      %v1089 = vpack.c.bf16 %v1025, %v1025
      %v1090 = vpack.c.bf16 %v1026, %v1026
      %v1091 = vpack.c.bf16 %v1027, %v1027
      %v1092 = vpack.c.bf16 %v1028, %v1028
      %v1093 = vpack.c.bf16 %v1029, %v1029
      %v1094 = vpack.c.bf16 %v1030, %v1030
      %v1095 = vpack.c.bf16 %v1031, %v1031
      %v1096 = vpack.c.bf16 %v1032, %v1032
      %v1097 = vpack.c.bf16 %v1033, %v1033
      %v1098 = vpack.c.bf16 %v1034, %v1034
      %v1099 = vpack.c.bf16 %v1035, %v1035
      %v1100 = vpack.c.bf16 %v1036, %v1036
      %v1101 = vpack.c.bf16 %v1037, %v1037
      %v1102 = vpack.c.bf16 %v1038, %v1038
      %v1103 = vpack.c.bf16 %v1039, %v1039
      %v1104 = vpack.c.bf16 %v1040, %v1040
      %v1105 = vpack.c.bf16 %v1041, %v1041
      %v1106 = vpack.c.bf16 %v1042, %v1042
      %v1107 = vpack.c.bf16 %v1043, %v1043
      %v1108 = vpack.c.bf16 %v1044, %v1044
      %v1109 = vpack.c.bf16 %v1045, %v1045
      %vm1110 = vcmask 519168
      %1111 = vst.msk [vmem:[#allocation3] sm:$0xf] %vm1110, %v1078
      %1112 = vst.msk [vmem:[#allocation3 + $0x14] sm:$0xf] %vm1110, %v1079
      %1113 = vst.msk [vmem:[#allocation3 + $0x28] sm:$0xf] %vm1110, %v1080
      %1114 = vst.msk [vmem:[#allocation3 + $0x3c] sm:$0xf] %vm1110, %v1081
      %1115 = vst.msk [vmem:[#allocation3 + $0x50] sm:$0xf] %vm1110, %v1082
      %1116 = vst.msk [vmem:[#allocation3 + $0x64] sm:$0xf] %vm1110, %v1083
      %1117 = vst.msk [vmem:[#allocation3 + $0x78] sm:$0xf] %vm1110, %v1084
      %1118 = vst.msk [vmem:[#allocation3 + $0x8c] sm:$0xf] %vm1110, %v1085
      %1119 = vst.msk [vmem:[#allocation3 + $0xa0] sm:$0xf] %vm1110, %v1086
      %1120 = vst.msk [vmem:[#allocation3 + $0xb4] sm:$0xf] %vm1110, %v1087
      %1121 = vst.msk [vmem:[#allocation3 + $0xc8] sm:$0xf] %vm1110, %v1088
      %1122 = vst.msk [vmem:[#allocation3 + $0xdc] sm:$0xf] %vm1110, %v1089
      %1123 = vst.msk [vmem:[#allocation3 + $0xf0] sm:$0xf] %vm1110, %v1090
      %1124 = vst.msk [vmem:[#allocation3 + $0x104] sm:$0xf] %vm1110, %v1091
      %1125 = vst.msk [vmem:[#allocation3 + $0x118] sm:$0xf] %vm1110, %v1092
      %1126 = vst.msk [vmem:[#allocation3 + $0x12c] sm:$0xf] %vm1110, %v1093
      %1127 = vst.msk [vmem:[#allocation3 + $0x140] sm:$0xf] %vm1110, %v1094
      %1128 = vst.msk [vmem:[#allocation3 + $0x154] sm:$0xf] %vm1110, %v1095
      %1129 = vst.msk [vmem:[#allocation3 + $0x168] sm:$0xf] %vm1110, %v1096
      %1130 = vst.msk [vmem:[#allocation3 + $0x17c] sm:$0xf] %vm1110, %v1097
      %1131 = vst.msk [vmem:[#allocation3 + $0x190] sm:$0xf] %vm1110, %v1098
      %1132 = vst.msk [vmem:[#allocation3 + $0x1a4] sm:$0xf] %vm1110, %v1099
      %1133 = vst.msk [vmem:[#allocation3 + $0x1b8] sm:$0xf] %vm1110, %v1100
      %1134 = vst.msk [vmem:[#allocation3 + $0x1cc] sm:$0xf] %vm1110, %v1101
      %1135 = vst.msk [vmem:[#allocation3 + $0x1e0] sm:$0xf] %vm1110, %v1102
      %1136 = vst.msk [vmem:[#allocation3 + $0x1f4] sm:$0xf] %vm1110, %v1103
      %1137 = vst.msk [vmem:[#allocation3 + $0x208] sm:$0xf] %vm1110, %v1104
      %1138 = vst.msk [vmem:[#allocation3 + $0x21c] sm:$0xf] %vm1110, %v1105
      %1139 = vst.msk [vmem:[#allocation3 + $0x230] sm:$0xf] %vm1110, %v1106
      %1140 = vst.msk [vmem:[#allocation3 + $0x244] sm:$0xf] %vm1110, %v1107
      %1141 = vst.msk [vmem:[#allocation3 + $0x258] sm:$0xf] %vm1110, %v1108
      %1142 = vst.msk [vmem:[#allocation3 + $0x26c] sm:$0xf] %vm1110, %v1109
      %v1143 = vpack.c.bf16 %v1046, %v1046
      %v1144 = vpack.c.bf16 %v1047, %v1047
      %v1145 = vpack.c.bf16 %v1048, %v1048
      %v1146 = vpack.c.bf16 %v1049, %v1049
      %v1147 = vpack.c.bf16 %v1050, %v1050
      %v1148 = vpack.c.bf16 %v1051, %v1051
      %v1149 = vpack.c.bf16 %v1052, %v1052
      %v1150 = vpack.c.bf16 %v1053, %v1053
      %v1151 = vpack.c.bf16 %v1054, %v1054
      %v1152 = vpack.c.bf16 %v1055, %v1055
      %v1153 = vpack.c.bf16 %v1056, %v1056
      %v1154 = vpack.c.bf16 %v1057, %v1057
      %v1155 = vpack.c.bf16 %v1058, %v1058
      %v1156 = vpack.c.bf16 %v1059, %v1059
      %v1157 = vpack.c.bf16 %v1060, %v1060
      %v1158 = vpack.c.bf16 %v1061, %v1061
      %v1159 = vpack.c.bf16 %v1062, %v1062
      %v1160 = vpack.c.bf16 %v1063, %v1063
      %v1161 = vpack.c.bf16 %v1064, %v1064
      %v1162 = vpack.c.bf16 %v1065, %v1065
      %v1163 = vpack.c.bf16 %v1066, %v1066
      %v1164 = vpack.c.bf16 %v1067, %v1067
      %v1165 = vpack.c.bf16 %v1068, %v1068
      %v1166 = vpack.c.bf16 %v1069, %v1069
      %v1167 = vpack.c.bf16 %v1070, %v1070
      %v1168 = vpack.c.bf16 %v1071, %v1071
      %v1169 = vpack.c.bf16 %v1072, %v1072
      %v1170 = vpack.c.bf16 %v1073, %v1073
      %v1171 = vpack.c.bf16 %v1074, %v1074
      %v1172 = vpack.c.bf16 %v1075, %v1075
      %v1173 = vpack.c.bf16 %v1076, %v1076
      %v1174 = vpack.c.bf16 %v1077, %v1077
      %1175 = vst.msk [vmem:[#allocation4] sm:$0xf] %vm1110, %v1143
      %1176 = vst.msk [vmem:[#allocation4 + $0x14] sm:$0xf] %vm1110, %v1144
      %1177 = vst.msk [vmem:[#allocation4 + $0x28] sm:$0xf] %vm1110, %v1145
      %1178 = vst.msk [vmem:[#allocation4 + $0x3c] sm:$0xf] %vm1110, %v1146
      %1179 = vst.msk [vmem:[#allocation4 + $0x50] sm:$0xf] %vm1110, %v1147
      %1180 = vst.msk [vmem:[#allocation4 + $0x64] sm:$0xf] %vm1110, %v1148
      %1181 = vst.msk [vmem:[#allocation4 + $0x78] sm:$0xf] %vm1110, %v1149
      %1182 = vst.msk [vmem:[#allocation4 + $0x8c] sm:$0xf] %vm1110, %v1150
      %1183 = vst.msk [vmem:[#allocation4 + $0xa0] sm:$0xf] %vm1110, %v1151
      %1184 = vst.msk [vmem:[#allocation4 + $0xb4] sm:$0xf] %vm1110, %v1152
      %1185 = vst.msk [vmem:[#allocation4 + $0xc8] sm:$0xf] %vm1110, %v1153
      %1186 = vst.msk [vmem:[#allocation4 + $0xdc] sm:$0xf] %vm1110, %v1154
      %1187 = vst.msk [vmem:[#allocation4 + $0xf0] sm:$0xf] %vm1110, %v1155
      %1188 = vst.msk [vmem:[#allocation4 + $0x104] sm:$0xf] %vm1110, %v1156
      %1189 = vst.msk [vmem:[#allocation4 + $0x118] sm:$0xf] %vm1110, %v1157
      %1190 = vst.msk [vmem:[#allocation4 + $0x12c] sm:$0xf] %vm1110, %v1158
      %1191 = vst.msk [vmem:[#allocation4 + $0x140] sm:$0xf] %vm1110, %v1159
      %1192 = vst.msk [vmem:[#allocation4 + $0x154] sm:$0xf] %vm1110, %v1160
      %1193 = vst.msk [vmem:[#allocation4 + $0x168] sm:$0xf] %vm1110, %v1161
      %1194 = vst.msk [vmem:[#allocation4 + $0x17c] sm:$0xf] %vm1110, %v1162
      %1195 = vst.msk [vmem:[#allocation4 + $0x190] sm:$0xf] %vm1110, %v1163
      %1196 = vst.msk [vmem:[#allocation4 + $0x1a4] sm:$0xf] %vm1110, %v1164
      %1197 = vst.msk [vmem:[#allocation4 + $0x1b8] sm:$0xf] %vm1110, %v1165
      %1198 = vst.msk [vmem:[#allocation4 + $0x1cc] sm:$0xf] %vm1110, %v1166
      %1199 = vst.msk [vmem:[#allocation4 + $0x1e0] sm:$0xf] %vm1110, %v1167
      %1200 = vst.msk [vmem:[#allocation4 + $0x1f4] sm:$0xf] %vm1110, %v1168
      %1201 = vst.msk [vmem:[#allocation4 + $0x208] sm:$0xf] %vm1110, %v1169
      %1202 = vst.msk [vmem:[#allocation4 + $0x21c] sm:$0xf] %vm1110, %v1170
      %1203 = vst.msk [vmem:[#allocation4 + $0x230] sm:$0xf] %vm1110, %v1171
      %1204 = vst.msk [vmem:[#allocation4 + $0x244] sm:$0xf] %vm1110, %v1172
      %1205 = vst.msk [vmem:[#allocation4 + $0x258] sm:$0xf] %vm1110, %v1173
      %1206 = vst.msk [vmem:[#allocation4 + $0x26c] sm:$0xf] %vm1110, %v1174
      %v1207 = vld [vmem:[#allocation2] sm:$0xff]
      %v1208 = vld [vmem:[#allocation2 + $0x8] sm:$0xff]
      %v1209 = vld [vmem:[#allocation2 + $0x28] sm:$0xff]
      %v1210 = vld [vmem:[#allocation2 + $0x30] sm:$0xff]
      %v1211 = vld [vmem:[#allocation2 + $0x50] sm:$0xff]
      %v1212 = vld [vmem:[#allocation2 + $0x58] sm:$0xff]
      %v1213 = vld [vmem:[#allocation2 + $0x78] sm:$0xff]
      %v1214 = vld [vmem:[#allocation2 + $0x80] sm:$0xff]
      %v1215 = vld [vmem:[#allocation2 + $0xa0] sm:$0xff]
      %v1216 = vld [vmem:[#allocation2 + $0xa8] sm:$0xff]
      %v1217 = vld [vmem:[#allocation2 + $0xc8] sm:$0xff]
      %v1218 = vld [vmem:[#allocation2 + $0xd0] sm:$0xff]
      %v1219 = vld [vmem:[#allocation2 + $0xf0] sm:$0xff]
      %v1220 = vld [vmem:[#allocation2 + $0xf8] sm:$0xff]
      %v1221 = vld [vmem:[#allocation2 + $0x118] sm:$0xff]
      %v1222 = vld [vmem:[#allocation2 + $0x120] sm:$0xff]
      %v1223 = vld [vmem:[#allocation2 + $0x140] sm:$0xff]
      %v1224 = vld [vmem:[#allocation2 + $0x148] sm:$0xff]
      %v1225 = vld [vmem:[#allocation2 + $0x168] sm:$0xff]
      %v1226 = vld [vmem:[#allocation2 + $0x170] sm:$0xff]
      %v1227 = vld [vmem:[#allocation2 + $0x190] sm:$0xff]
      %v1228 = vld [vmem:[#allocation2 + $0x198] sm:$0xff]
      %v1229 = vld [vmem:[#allocation2 + $0x1b8] sm:$0xff]
      %v1230 = vld [vmem:[#allocation2 + $0x1c0] sm:$0xff]
      %v1231 = vld [vmem:[#allocation2 + $0x1e0] sm:$0xff]
      %v1232 = vld [vmem:[#allocation2 + $0x1e8] sm:$0xff]
      %v1233 = vld [vmem:[#allocation2 + $0x208] sm:$0xff]
      %v1234 = vld [vmem:[#allocation2 + $0x210] sm:$0xff]
      %v1235 = vld [vmem:[#allocation2 + $0x230] sm:$0xff]
      %v1236 = vld [vmem:[#allocation2 + $0x238] sm:$0xff]
      %v1237 = vld [vmem:[#allocation2 + $0x258] sm:$0xff]
      %v1238 = vld [vmem:[#allocation2 + $0x260] sm:$0xff]
      %v1239 = vld [vmem:[#allocation2 + $0x12] sm:$0xff]
      %v1240 = vld [vmem:[#allocation2 + $0x1a] sm:$0xff]
      %v1241 = vld [vmem:[#allocation2 + $0x3a] sm:$0xff]
      %v1242 = vld [vmem:[#allocation2 + $0x42] sm:$0xff]
      %v1243 = vld [vmem:[#allocation2 + $0x62] sm:$0xff]
      %v1244 = vld [vmem:[#allocation2 + $0x6a] sm:$0xff]
      %v1245 = vld [vmem:[#allocation2 + $0x8a] sm:$0xff]
      %v1246 = vld [vmem:[#allocation2 + $0x92] sm:$0xff]
      %v1247 = vld [vmem:[#allocation2 + $0xb2] sm:$0xff]
      %v1248 = vld [vmem:[#allocation2 + $0xba] sm:$0xff]
      %v1249 = vld [vmem:[#allocation2 + $0xda] sm:$0xff]
      %v1250 = vld [vmem:[#allocation2 + $0xe2] sm:$0xff]
      %v1251 = vld [vmem:[#allocation2 + $0x102] sm:$0xff]
      %v1252 = vld [vmem:[#allocation2 + $0x10a] sm:$0xff]
      %v1253 = vld [vmem:[#allocation2 + $0x12a] sm:$0xff]
      %v1254 = vld [vmem:[#allocation2 + $0x132] sm:$0xff]
      %v1255 = vld [vmem:[#allocation2 + $0x152] sm:$0xff]
      %v1256 = vld [vmem:[#allocation2 + $0x15a] sm:$0xff]
      %v1257 = vld [vmem:[#allocation2 + $0x17a] sm:$0xff]
      %v1258 = vld [vmem:[#allocation2 + $0x182] sm:$0xff]
      %v1259 = vld [vmem:[#allocation2 + $0x1a2] sm:$0xff]
      %v1260 = vld [vmem:[#allocation2 + $0x1aa] sm:$0xff]
      %v1261 = vld [vmem:[#allocation2 + $0x1ca] sm:$0xff]
      %v1262 = vld [vmem:[#allocation2 + $0x1d2] sm:$0xff]
      %v1263 = vld [vmem:[#allocation2 + $0x1f2] sm:$0xff]
      %v1264 = vld [vmem:[#allocation2 + $0x1fa] sm:$0xff]
      %v1265 = vld [vmem:[#allocation2 + $0x21a] sm:$0xff]
      %v1266 = vld [vmem:[#allocation2 + $0x222] sm:$0xff]
      %v1267 = vld [vmem:[#allocation2 + $0x242] sm:$0xff]
      %v1268 = vld [vmem:[#allocation2 + $0x24a] sm:$0xff]
      %v1269 = vld [vmem:[#allocation2 + $0x26a] sm:$0xff]
      %v1270 = vld [vmem:[#allocation2 + $0x272] sm:$0xff]
      %v1271 = vpack.c.bf16 %v1207, %v1207
      %v1272 = vpack.c.bf16 %v1208, %v1208
      %v1273 = vpack.c.bf16 %v1209, %v1209
      %v1274 = vpack.c.bf16 %v1210, %v1210
      %v1275 = vpack.c.bf16 %v1211, %v1211
      %v1276 = vpack.c.bf16 %v1212, %v1212
      %v1277 = vpack.c.bf16 %v1213, %v1213
      %v1278 = vpack.c.bf16 %v1214, %v1214
      %v1279 = vpack.c.bf16 %v1215, %v1215
      %v1280 = vpack.c.bf16 %v1216, %v1216
      %v1281 = vpack.c.bf16 %v1217, %v1217
      %v1282 = vpack.c.bf16 %v1218, %v1218
      %v1283 = vpack.c.bf16 %v1219, %v1219
      %v1284 = vpack.c.bf16 %v1220, %v1220
      %v1285 = vpack.c.bf16 %v1221, %v1221
      %v1286 = vpack.c.bf16 %v1222, %v1222
      %v1287 = vpack.c.bf16 %v1223, %v1223
      %v1288 = vpack.c.bf16 %v1224, %v1224
      %v1289 = vpack.c.bf16 %v1225, %v1225
      %v1290 = vpack.c.bf16 %v1226, %v1226
      %v1291 = vpack.c.bf16 %v1227, %v1227
      %v1292 = vpack.c.bf16 %v1228, %v1228
      %v1293 = vpack.c.bf16 %v1229, %v1229
      %v1294 = vpack.c.bf16 %v1230, %v1230
      %v1295 = vpack.c.bf16 %v1231, %v1231
      %v1296 = vpack.c.bf16 %v1232, %v1232
      %v1297 = vpack.c.bf16 %v1233, %v1233
      %v1298 = vpack.c.bf16 %v1234, %v1234
      %v1299 = vpack.c.bf16 %v1235, %v1235
      %v1300 = vpack.c.bf16 %v1236, %v1236
      %v1301 = vpack.c.bf16 %v1237, %v1237
      %v1302 = vpack.c.bf16 %v1238, %v1238
      %1335 = vrot.lane.b32.xlu0 %v1271, 64
      %v1336 = vpop.permute.xlu0 %1335
      %1337 = vrot.lane.b32.xlu0 %v1272, 64
      %v1338 = vpop.permute.xlu0 %1337
      %1339 = vrot.lane.b32.xlu0 %v1273, 64
      %v1340 = vpop.permute.xlu0 %1339
      %1341 = vrot.lane.b32.xlu0 %v1274, 64
      %v1342 = vpop.permute.xlu0 %1341
      %1343 = vrot.lane.b32.xlu0 %v1275, 64
      %v1344 = vpop.permute.xlu0 %1343
      %1345 = vrot.lane.b32.xlu0 %v1276, 64
      %v1346 = vpop.permute.xlu0 %1345
      %1347 = vrot.lane.b32.xlu0 %v1277, 64
      %v1348 = vpop.permute.xlu0 %1347
      %1349 = vrot.lane.b32.xlu0 %v1278, 64
      %v1350 = vpop.permute.xlu0 %1349
      %1351 = vrot.lane.b32.xlu0 %v1279, 64
      %v1352 = vpop.permute.xlu0 %1351
      %1353 = vrot.lane.b32.xlu0 %v1280, 64
      %v1354 = vpop.permute.xlu0 %1353
      %1355 = vrot.lane.b32.xlu0 %v1281, 64
      %v1356 = vpop.permute.xlu0 %1355
      %1357 = vrot.lane.b32.xlu0 %v1282, 64
      %v1358 = vpop.permute.xlu0 %1357
      %1359 = vrot.lane.b32.xlu0 %v1283, 64
      %v1360 = vpop.permute.xlu0 %1359
      %1361 = vrot.lane.b32.xlu0 %v1284, 64
      %v1362 = vpop.permute.xlu0 %1361
      %1363 = vrot.lane.b32.xlu0 %v1285, 64
      %v1364 = vpop.permute.xlu0 %1363
      %1365 = vrot.lane.b32.xlu0 %v1286, 64
      %v1366 = vpop.permute.xlu0 %1365
      %1367 = vrot.lane.b32.xlu0 %v1287, 64
      %v1368 = vpop.permute.xlu0 %1367
      %1369 = vrot.lane.b32.xlu0 %v1288, 64
      %v1370 = vpop.permute.xlu0 %1369
      %1371 = vrot.lane.b32.xlu0 %v1289, 64
      %v1372 = vpop.permute.xlu0 %1371
      %1373 = vrot.lane.b32.xlu0 %v1290, 64
      %v1374 = vpop.permute.xlu0 %1373
      %1375 = vrot.lane.b32.xlu0 %v1291, 64
      %v1376 = vpop.permute.xlu0 %1375
      %1377 = vrot.lane.b32.xlu0 %v1292, 64
      %v1378 = vpop.permute.xlu0 %1377
      %1379 = vrot.lane.b32.xlu0 %v1293, 64
      %v1380 = vpop.permute.xlu0 %1379
      %1381 = vrot.lane.b32.xlu0 %v1294, 64
      %v1382 = vpop.permute.xlu0 %1381
      %1383 = vrot.lane.b32.xlu0 %v1295, 64
      %v1384 = vpop.permute.xlu0 %1383
      %1385 = vrot.lane.b32.xlu0 %v1296, 64
      %v1386 = vpop.permute.xlu0 %1385
      %1387 = vrot.lane.b32.xlu0 %v1297, 64
      %v1388 = vpop.permute.xlu0 %1387
      %1389 = vrot.lane.b32.xlu0 %v1298, 64
      %v1390 = vpop.permute.xlu0 %1389
      %1391 = vrot.lane.b32.xlu0 %v1299, 64
      %v1392 = vpop.permute.xlu0 %1391
      %1393 = vrot.lane.b32.xlu0 %v1300, 64
      %v1394 = vpop.permute.xlu0 %1393
      %1395 = vrot.lane.b32.xlu0 %v1301, 64
      %v1396 = vpop.permute.xlu0 %1395
      %1397 = vrot.lane.b32.xlu0 %v1302, 64
      %v1398 = vpop.permute.xlu0 %1397
      %vm1431 = vcmask 1043968
      %1432 = vst.msk [vmem:[#allocation3] sm:$0xf] %vm1431, %v1336
      %1433 = vst.msk [vmem:[#allocation3 + $0x14] sm:$0xf] %vm1431, %v1338
      %1434 = vst.msk [vmem:[#allocation3 + $0x28] sm:$0xf] %vm1431, %v1340
      %1435 = vst.msk [vmem:[#allocation3 + $0x3c] sm:$0xf] %vm1431, %v1342
      %1436 = vst.msk [vmem:[#allocation3 + $0x50] sm:$0xf] %vm1431, %v1344
      %1437 = vst.msk [vmem:[#allocation3 + $0x64] sm:$0xf] %vm1431, %v1346
      %1438 = vst.msk [vmem:[#allocation3 + $0x78] sm:$0xf] %vm1431, %v1348
      %1439 = vst.msk [vmem:[#allocation3 + $0x8c] sm:$0xf] %vm1431, %v1350
      %1440 = vst.msk [vmem:[#allocation3 + $0xa0] sm:$0xf] %vm1431, %v1352
      %1441 = vst.msk [vmem:[#allocation3 + $0xb4] sm:$0xf] %vm1431, %v1354
      %1442 = vst.msk [vmem:[#allocation3 + $0xc8] sm:$0xf] %vm1431, %v1356
      %1443 = vst.msk [vmem:[#allocation3 + $0xdc] sm:$0xf] %vm1431, %v1358
      %1444 = vst.msk [vmem:[#allocation3 + $0xf0] sm:$0xf] %vm1431, %v1360
      %1445 = vst.msk [vmem:[#allocation3 + $0x104] sm:$0xf] %vm1431, %v1362
      %1446 = vst.msk [vmem:[#allocation3 + $0x118] sm:$0xf] %vm1431, %v1364
      %1447 = vst.msk [vmem:[#allocation3 + $0x12c] sm:$0xf] %vm1431, %v1366
      %1448 = vst.msk [vmem:[#allocation3 + $0x140] sm:$0xf] %vm1431, %v1368
      %1449 = vst.msk [vmem:[#allocation3 + $0x154] sm:$0xf] %vm1431, %v1370
      %1450 = vst.msk [vmem:[#allocation3 + $0x168] sm:$0xf] %vm1431, %v1372
      %1451 = vst.msk [vmem:[#allocation3 + $0x17c] sm:$0xf] %vm1431, %v1374
      %1452 = vst.msk [vmem:[#allocation3 + $0x190] sm:$0xf] %vm1431, %v1376
      %1453 = vst.msk [vmem:[#allocation3 + $0x1a4] sm:$0xf] %vm1431, %v1378
      %1454 = vst.msk [vmem:[#allocation3 + $0x1b8] sm:$0xf] %vm1431, %v1380
      %1455 = vst.msk [vmem:[#allocation3 + $0x1cc] sm:$0xf] %vm1431, %v1382
      %1456 = vst.msk [vmem:[#allocation3 + $0x1e0] sm:$0xf] %vm1431, %v1384
      %1457 = vst.msk [vmem:[#allocation3 + $0x1f4] sm:$0xf] %vm1431, %v1386
      %1458 = vst.msk [vmem:[#allocation3 + $0x208] sm:$0xf] %vm1431, %v1388
      %1459 = vst.msk [vmem:[#allocation3 + $0x21c] sm:$0xf] %vm1431, %v1390
      %1460 = vst.msk [vmem:[#allocation3 + $0x230] sm:$0xf] %vm1431, %v1392
      %1461 = vst.msk [vmem:[#allocation3 + $0x244] sm:$0xf] %vm1431, %v1394
      %1462 = vst.msk [vmem:[#allocation3 + $0x258] sm:$0xf] %vm1431, %v1396
      %1463 = vst.msk [vmem:[#allocation3 + $0x26c] sm:$0xf] %vm1431, %v1398
      %v1464 = vpack.c.bf16 %v1239, %v1239
      %v1465 = vpack.c.bf16 %v1240, %v1240
      %v1466 = vpack.c.bf16 %v1241, %v1241
      %v1467 = vpack.c.bf16 %v1242, %v1242
      %v1468 = vpack.c.bf16 %v1243, %v1243
      %v1469 = vpack.c.bf16 %v1244, %v1244
      %v1470 = vpack.c.bf16 %v1245, %v1245
      %v1471 = vpack.c.bf16 %v1246, %v1246
      %v1472 = vpack.c.bf16 %v1247, %v1247
      %v1473 = vpack.c.bf16 %v1248, %v1248
      %v1474 = vpack.c.bf16 %v1249, %v1249
      %v1475 = vpack.c.bf16 %v1250, %v1250
      %v1476 = vpack.c.bf16 %v1251, %v1251
      %v1477 = vpack.c.bf16 %v1252, %v1252
      %v1478 = vpack.c.bf16 %v1253, %v1253
      %v1479 = vpack.c.bf16 %v1254, %v1254
      %v1480 = vpack.c.bf16 %v1255, %v1255
      %v1481 = vpack.c.bf16 %v1256, %v1256
      %v1482 = vpack.c.bf16 %v1257, %v1257
      %v1483 = vpack.c.bf16 %v1258, %v1258
      %v1484 = vpack.c.bf16 %v1259, %v1259
      %v1485 = vpack.c.bf16 %v1260, %v1260
      %v1486 = vpack.c.bf16 %v1261, %v1261
      %v1487 = vpack.c.bf16 %v1262, %v1262
      %v1488 = vpack.c.bf16 %v1263, %v1263
      %v1489 = vpack.c.bf16 %v1264, %v1264
      %v1490 = vpack.c.bf16 %v1265, %v1265
      %v1491 = vpack.c.bf16 %v1266, %v1266
      %v1492 = vpack.c.bf16 %v1267, %v1267
      %v1493 = vpack.c.bf16 %v1268, %v1268
      %v1494 = vpack.c.bf16 %v1269, %v1269
      %v1495 = vpack.c.bf16 %v1270, %v1270
      %1528 = vrot.lane.b32.xlu0 %v1464, 64
      %v1529 = vpop.permute.xlu0 %1528
      %1530 = vrot.lane.b32.xlu0 %v1465, 64
      %v1531 = vpop.permute.xlu0 %1530
      %1532 = vrot.lane.b32.xlu0 %v1466, 64
      %v1533 = vpop.permute.xlu0 %1532
      %1534 = vrot.lane.b32.xlu0 %v1467, 64
      %v1535 = vpop.permute.xlu0 %1534
      %1536 = vrot.lane.b32.xlu0 %v1468, 64
      %v1537 = vpop.permute.xlu0 %1536
      %1538 = vrot.lane.b32.xlu0 %v1469, 64
      %v1539 = vpop.permute.xlu0 %1538
      %1540 = vrot.lane.b32.xlu0 %v1470, 64
      %v1541 = vpop.permute.xlu0 %1540
      %1542 = vrot.lane.b32.xlu0 %v1471, 64
      %v1543 = vpop.permute.xlu0 %1542
      %1544 = vrot.lane.b32.xlu0 %v1472, 64
      %v1545 = vpop.permute.xlu0 %1544
      %1546 = vrot.lane.b32.xlu0 %v1473, 64
      %v1547 = vpop.permute.xlu0 %1546
      %1548 = vrot.lane.b32.xlu0 %v1474, 64
      %v1549 = vpop.permute.xlu0 %1548
      %1550 = vrot.lane.b32.xlu0 %v1475, 64
      %v1551 = vpop.permute.xlu0 %1550
      %1552 = vrot.lane.b32.xlu0 %v1476, 64
      %v1553 = vpop.permute.xlu0 %1552
      %1554 = vrot.lane.b32.xlu0 %v1477, 64
      %v1555 = vpop.permute.xlu0 %1554
      %1556 = vrot.lane.b32.xlu0 %v1478, 64
      %v1557 = vpop.permute.xlu0 %1556
      %1558 = vrot.lane.b32.xlu0 %v1479, 64
      %v1559 = vpop.permute.xlu0 %1558
      %1560 = vrot.lane.b32.xlu0 %v1480, 64
      %v1561 = vpop.permute.xlu0 %1560
      %1562 = vrot.lane.b32.xlu0 %v1481, 64
      %v1563 = vpop.permute.xlu0 %1562
      %1564 = vrot.lane.b32.xlu0 %v1482, 64
      %v1565 = vpop.permute.xlu0 %1564
      %1566 = vrot.lane.b32.xlu0 %v1483, 64
      %v1567 = vpop.permute.xlu0 %1566
      %1568 = vrot.lane.b32.xlu0 %v1484, 64
      %v1569 = vpop.permute.xlu0 %1568
      %1570 = vrot.lane.b32.xlu0 %v1485, 64
      %v1571 = vpop.permute.xlu0 %1570
      %1572 = vrot.lane.b32.xlu0 %v1486, 64
      %v1573 = vpop.permute.xlu0 %1572
      %1574 = vrot.lane.b32.xlu0 %v1487, 64
      %v1575 = vpop.permute.xlu0 %1574
      %1576 = vrot.lane.b32.xlu0 %v1488, 64
      %v1577 = vpop.permute.xlu0 %1576
      %1578 = vrot.lane.b32.xlu0 %v1489, 64
      %v1579 = vpop.permute.xlu0 %1578
      %1580 = vrot.lane.b32.xlu0 %v1490, 64
      %v1581 = vpop.permute.xlu0 %1580
      %1582 = vrot.lane.b32.xlu0 %v1491, 64
      %v1583 = vpop.permute.xlu0 %1582
      %1584 = vrot.lane.b32.xlu0 %v1492, 64
      %v1585 = vpop.permute.xlu0 %1584
      %1586 = vrot.lane.b32.xlu0 %v1493, 64
      %v1587 = vpop.permute.xlu0 %1586
      %1588 = vrot.lane.b32.xlu0 %v1494, 64
      %v1589 = vpop.permute.xlu0 %1588
      %1590 = vrot.lane.b32.xlu0 %v1495, 64
      %v1591 = vpop.permute.xlu0 %1590
      %1624 = vst.msk [vmem:[#allocation4] sm:$0xf] %vm1431, %v1529
      %1625 = vst.msk [vmem:[#allocation4 + $0x14] sm:$0xf] %vm1431, %v1531
      %1626 = vst.msk [vmem:[#allocation4 + $0x28] sm:$0xf] %vm1431, %v1533
      %1627 = vst.msk [vmem:[#allocation4 + $0x3c] sm:$0xf] %vm1431, %v1535
      %1628 = vst.msk [vmem:[#allocation4 + $0x50] sm:$0xf] %vm1431, %v1537
      %1629 = vst.msk [vmem:[#allocation4 + $0x64] sm:$0xf] %vm1431, %v1539
      %1630 = vst.msk [vmem:[#allocation4 + $0x78] sm:$0xf] %vm1431, %v1541
      %1631 = vst.msk [vmem:[#allocation4 + $0x8c] sm:$0xf] %vm1431, %v1543
      %1632 = vst.msk [vmem:[#allocation4 + $0xa0] sm:$0xf] %vm1431, %v1545
      %1633 = vst.msk [vmem:[#allocation4 + $0xb4] sm:$0xf] %vm1431, %v1547
      %1634 = vst.msk [vmem:[#allocation4 + $0xc8] sm:$0xf] %vm1431, %v1549
      %1635 = vst.msk [vmem:[#allocation4 + $0xdc] sm:$0xf] %vm1431, %v1551
      %1636 = vst.msk [vmem:[#allocation4 + $0xf0] sm:$0xf] %vm1431, %v1553
      %1637 = vst.msk [vmem:[#allocation4 + $0x104] sm:$0xf] %vm1431, %v1555
      %1638 = vst.msk [vmem:[#allocation4 + $0x118] sm:$0xf] %vm1431, %v1557
      %1639 = vst.msk [vmem:[#allocation4 + $0x12c] sm:$0xf] %vm1431, %v1559
      %1640 = vst.msk [vmem:[#allocation4 + $0x140] sm:$0xf] %vm1431, %v1561
      %1641 = vst.msk [vmem:[#allocation4 + $0x154] sm:$0xf] %vm1431, %v1563
      %1642 = vst.msk [vmem:[#allocation4 + $0x168] sm:$0xf] %vm1431, %v1565
      %1643 = vst.msk [vmem:[#allocation4 + $0x17c] sm:$0xf] %vm1431, %v1567
      %1644 = vst.msk [vmem:[#allocation4 + $0x190] sm:$0xf] %vm1431, %v1569
      %1645 = vst.msk [vmem:[#allocation4 + $0x1a4] sm:$0xf] %vm1431, %v1571
      %1646 = vst.msk [vmem:[#allocation4 + $0x1b8] sm:$0xf] %vm1431, %v1573
      %1647 = vst.msk [vmem:[#allocation4 + $0x1cc] sm:$0xf] %vm1431, %v1575
      %1648 = vst.msk [vmem:[#allocation4 + $0x1e0] sm:$0xf] %vm1431, %v1577
      %1649 = vst.msk [vmem:[#allocation4 + $0x1f4] sm:$0xf] %vm1431, %v1579
      %1650 = vst.msk [vmem:[#allocation4 + $0x208] sm:$0xf] %vm1431, %v1581
      %1651 = vst.msk [vmem:[#allocation4 + $0x21c] sm:$0xf] %vm1431, %v1583
      %1652 = vst.msk [vmem:[#allocation4 + $0x230] sm:$0xf] %vm1431, %v1585
      %1653 = vst.msk [vmem:[#allocation4 + $0x244] sm:$0xf] %vm1431, %v1587
      %1654 = vst.msk [vmem:[#allocation4 + $0x258] sm:$0xf] %vm1431, %v1589
      %1655 = vst.msk [vmem:[#allocation4 + $0x26c] sm:$0xf] %vm1431, %v1591
      %v1656 = vld [vmem:[#allocation2 + $0x12] sm:$0xff]
      %v1657 = vld [vmem:[#allocation2 + $0x1a] sm:$0xff]
      %v1658 = vld [vmem:[#allocation2 + $0x3a] sm:$0xff]
      %v1659 = vld [vmem:[#allocation2 + $0x42] sm:$0xff]
      %v1660 = vld [vmem:[#allocation2 + $0x62] sm:$0xff]
      %v1661 = vld [vmem:[#allocation2 + $0x6a] sm:$0xff]
      %v1662 = vld [vmem:[#allocation2 + $0x8a] sm:$0xff]
      %v1663 = vld [vmem:[#allocation2 + $0x92] sm:$0xff]
      %v1664 = vld [vmem:[#allocation2 + $0xb2] sm:$0xff]
      %v1665 = vld [vmem:[#allocation2 + $0xba] sm:$0xff]
      %v1666 = vld [vmem:[#allocation2 + $0xda] sm:$0xff]
      %v1667 = vld [vmem:[#allocation2 + $0xe2] sm:$0xff]
      %v1668 = vld [vmem:[#allocation2 + $0x102] sm:$0xff]
      %v1669 = vld [vmem:[#allocation2 + $0x10a] sm:$0xff]
      %v1670 = vld [vmem:[#allocation2 + $0x12a] sm:$0xff]
      %v1671 = vld [vmem:[#allocation2 + $0x132] sm:$0xff]
      %v1672 = vld [vmem:[#allocation2 + $0x152] sm:$0xff]
      %v1673 = vld [vmem:[#allocation2 + $0x15a] sm:$0xff]
      %v1674 = vld [vmem:[#allocation2 + $0x17a] sm:$0xff]
      %v1675 = vld [vmem:[#allocation2 + $0x182] sm:$0xff]
      %v1676 = vld [vmem:[#allocation2 + $0x1a2] sm:$0xff]
      %v1677 = vld [vmem:[#allocation2 + $0x1aa] sm:$0xff]
      %v1678 = vld [vmem:[#allocation2 + $0x1ca] sm:$0xff]
      %v1679 = vld [vmem:[#allocation2 + $0x1d2] sm:$0xff]
      %v1680 = vld [vmem:[#allocation2 + $0x1f2] sm:$0xff]
      %v1681 = vld [vmem:[#allocation2 + $0x1fa] sm:$0xff]
      %v1682 = vld [vmem:[#allocation2 + $0x21a] sm:$0xff]
      %v1683 = vld [vmem:[#allocation2 + $0x222] sm:$0xff]
      %v1684 = vld [vmem:[#allocation2 + $0x242] sm:$0xff]
      %v1685 = vld [vmem:[#allocation2 + $0x24a] sm:$0xff]
      %v1686 = vld [vmem:[#allocation2 + $0x26a] sm:$0xff]
      %v1687 = vld [vmem:[#allocation2 + $0x272] sm:$0xff]
      %v1688 = vld [vmem:[#allocation2 + $0x1] sm:$0xff]
      %v1689 = vld [vmem:[#allocation2 + $0x9] sm:$0xff]
      %v1690 = vld [vmem:[#allocation2 + $0x29] sm:$0xff]
      %v1691 = vld [vmem:[#allocation2 + $0x31] sm:$0xff]
      %v1692 = vld [vmem:[#allocation2 + $0x51] sm:$0xff]
      %v1693 = vld [vmem:[#allocation2 + $0x59] sm:$0xff]
      %v1694 = vld [vmem:[#allocation2 + $0x79] sm:$0xff]
      %v1695 = vld [vmem:[#allocation2 + $0x81] sm:$0xff]
      %v1696 = vld [vmem:[#allocation2 + $0xa1] sm:$0xff]
      %v1697 = vld [vmem:[#allocation2 + $0xa9] sm:$0xff]
      %v1698 = vld [vmem:[#allocation2 + $0xc9] sm:$0xff]
      %v1699 = vld [vmem:[#allocation2 + $0xd1] sm:$0xff]
      %v1700 = vld [vmem:[#allocation2 + $0xf1] sm:$0xff]
      %v1701 = vld [vmem:[#allocation2 + $0xf9] sm:$0xff]
      %v1702 = vld [vmem:[#allocation2 + $0x119] sm:$0xff]
      %v1703 = vld [vmem:[#allocation2 + $0x121] sm:$0xff]
      %v1704 = vld [vmem:[#allocation2 + $0x141] sm:$0xff]
      %v1705 = vld [vmem:[#allocation2 + $0x149] sm:$0xff]
      %v1706 = vld [vmem:[#allocation2 + $0x169] sm:$0xff]
      %v1707 = vld [vmem:[#allocation2 + $0x171] sm:$0xff]
      %v1708 = vld [vmem:[#allocation2 + $0x191] sm:$0xff]
      %v1709 = vld [vmem:[#allocation2 + $0x199] sm:$0xff]
      %v1710 = vld [vmem:[#allocation2 + $0x1b9] sm:$0xff]
      %v1711 = vld [vmem:[#allocation2 + $0x1c1] sm:$0xff]
      %v1712 = vld [vmem:[#allocation2 + $0x1e1] sm:$0xff]
      %v1713 = vld [vmem:[#allocation2 + $0x1e9] sm:$0xff]
      %v1714 = vld [vmem:[#allocation2 + $0x209] sm:$0xff]
      %v1715 = vld [vmem:[#allocation2 + $0x211] sm:$0xff]
      %v1716 = vld [vmem:[#allocation2 + $0x231] sm:$0xff]
      %v1717 = vld [vmem:[#allocation2 + $0x239] sm:$0xff]
      %v1718 = vld [vmem:[#allocation2 + $0x259] sm:$0xff]
      %v1719 = vld [vmem:[#allocation2 + $0x261] sm:$0xff]
      %v1720 = vpack.c.bf16 %v1656, %v1656
      %v1721 = vpack.c.bf16 %v1657, %v1657
      %v1722 = vpack.c.bf16 %v1658, %v1658
      %v1723 = vpack.c.bf16 %v1659, %v1659
      %v1724 = vpack.c.bf16 %v1660, %v1660
      %v1725 = vpack.c.bf16 %v1661, %v1661
      %v1726 = vpack.c.bf16 %v1662, %v1662
      %v1727 = vpack.c.bf16 %v1663, %v1663
      %v1728 = vpack.c.bf16 %v1664, %v1664
      %v1729 = vpack.c.bf16 %v1665, %v1665
      %v1730 = vpack.c.bf16 %v1666, %v1666
      %v1731 = vpack.c.bf16 %v1667, %v1667
      %v1732 = vpack.c.bf16 %v1668, %v1668
      %v1733 = vpack.c.bf16 %v1669, %v1669
      %v1734 = vpack.c.bf16 %v1670, %v1670
      %v1735 = vpack.c.bf16 %v1671, %v1671
      %v1736 = vpack.c.bf16 %v1672, %v1672
      %v1737 = vpack.c.bf16 %v1673, %v1673
      %v1738 = vpack.c.bf16 %v1674, %v1674
      %v1739 = vpack.c.bf16 %v1675, %v1675
      %v1740 = vpack.c.bf16 %v1676, %v1676
      %v1741 = vpack.c.bf16 %v1677, %v1677
      %v1742 = vpack.c.bf16 %v1678, %v1678
      %v1743 = vpack.c.bf16 %v1679, %v1679
      %v1744 = vpack.c.bf16 %v1680, %v1680
      %v1745 = vpack.c.bf16 %v1681, %v1681
      %v1746 = vpack.c.bf16 %v1682, %v1682
      %v1747 = vpack.c.bf16 %v1683, %v1683
      %v1748 = vpack.c.bf16 %v1684, %v1684
      %v1749 = vpack.c.bf16 %v1685, %v1685
      %v1750 = vpack.c.bf16 %v1686, %v1686
      %v1751 = vpack.c.bf16 %v1687, %v1687
      %1752 = vst.msk [vmem:[#allocation3 + $0x4] sm:$0xf] %vm1110, %v1720
      %1753 = vst.msk [vmem:[#allocation3 + $0x18] sm:$0xf] %vm1110, %v1721
      %1754 = vst.msk [vmem:[#allocation3 + $0x2c] sm:$0xf] %vm1110, %v1722
      %1755 = vst.msk [vmem:[#allocation3 + $0x40] sm:$0xf] %vm1110, %v1723
      %1756 = vst.msk [vmem:[#allocation3 + $0x54] sm:$0xf] %vm1110, %v1724
      %1757 = vst.msk [vmem:[#allocation3 + $0x68] sm:$0xf] %vm1110, %v1725
      %1758 = vst.msk [vmem:[#allocation3 + $0x7c] sm:$0xf] %vm1110, %v1726
      %1759 = vst.msk [vmem:[#allocation3 + $0x90] sm:$0xf] %vm1110, %v1727
      %1760 = vst.msk [vmem:[#allocation3 + $0xa4] sm:$0xf] %vm1110, %v1728
      %1761 = vst.msk [vmem:[#allocation3 + $0xb8] sm:$0xf] %vm1110, %v1729
      %1762 = vst.msk [vmem:[#allocation3 + $0xcc] sm:$0xf] %vm1110, %v1730
      %1763 = vst.msk [vmem:[#allocation3 + $0xe0] sm:$0xf] %vm1110, %v1731
      %1764 = vst.msk [vmem:[#allocation3 + $0xf4] sm:$0xf] %vm1110, %v1732
      %1765 = vst.msk [vmem:[#allocation3 + $0x108] sm:$0xf] %vm1110, %v1733
      %1766 = vst.msk [vmem:[#allocation3 + $0x11c] sm:$0xf] %vm1110, %v1734
      %1767 = vst.msk [vmem:[#allocation3 + $0x130] sm:$0xf] %vm1110, %v1735
      %1768 = vst.msk [vmem:[#allocation3 + $0x144] sm:$0xf] %vm1110, %v1736
      %1769 = vst.msk [vmem:[#allocation3 + $0x158] sm:$0xf] %vm1110, %v1737
      %1770 = vst.msk [vmem:[#allocation3 + $0x16c] sm:$0xf] %vm1110, %v1738
      %1771 = vst.msk [vmem:[#allocation3 + $0x180] sm:$0xf] %vm1110, %v1739
      %1772 = vst.msk [vmem:[#allocation3 + $0x194] sm:$0xf] %vm1110, %v1740
      %1773 = vst.msk [vmem:[#allocation3 + $0x1a8] sm:$0xf] %vm1110, %v1741
      %1774 = vst.msk [vmem:[#allocation3 + $0x1bc] sm:$0xf] %vm1110, %v1742
      %1775 = vst.msk [vmem:[#allocation3 + $0x1d0] sm:$0xf] %vm1110, %v1743
      %1776 = vst.msk [vmem:[#allocation3 + $0x1e4] sm:$0xf] %vm1110, %v1744
      %1777 = vst.msk [vmem:[#allocation3 + $0x1f8] sm:$0xf] %vm1110, %v1745
      %1778 = vst.msk [vmem:[#allocation3 + $0x20c] sm:$0xf] %vm1110, %v1746
      %1779 = vst.msk [vmem:[#allocation3 + $0x220] sm:$0xf] %vm1110, %v1747
      %1780 = vst.msk [vmem:[#allocation3 + $0x234] sm:$0xf] %vm1110, %v1748
      %1781 = vst.msk [vmem:[#allocation3 + $0x248] sm:$0xf] %vm1110, %v1749
      %1782 = vst.msk [vmem:[#allocation3 + $0x25c] sm:$0xf] %vm1110, %v1750
      %1783 = vst.msk [vmem:[#allocation3 + $0x270] sm:$0xf] %vm1110, %v1751
      %v1784 = vpack.c.bf16 %v1688, %v1688
      %v1785 = vpack.c.bf16 %v1689, %v1689
      %v1786 = vpack.c.bf16 %v1690, %v1690
      %v1787 = vpack.c.bf16 %v1691, %v1691
      %v1788 = vpack.c.bf16 %v1692, %v1692
      %v1789 = vpack.c.bf16 %v1693, %v1693
      %v1790 = vpack.c.bf16 %v1694, %v1694
      %v1791 = vpack.c.bf16 %v1695, %v1695
      %v1792 = vpack.c.bf16 %v1696, %v1696
      %v1793 = vpack.c.bf16 %v1697, %v1697
      %v1794 = vpack.c.bf16 %v1698, %v1698
      %v1795 = vpack.c.bf16 %v1699, %v1699
      %v1796 = vpack.c.bf16 %v1700, %v1700
      %v1797 = vpack.c.bf16 %v1701, %v1701
      %v1798 = vpack.c.bf16 %v1702, %v1702
      %v1799 = vpack.c.bf16 %v1703, %v1703
      %v1800 = vpack.c.bf16 %v1704, %v1704
      %v1801 = vpack.c.bf16 %v1705, %v1705
      %v1802 = vpack.c.bf16 %v1706, %v1706
      %v1803 = vpack.c.bf16 %v1707, %v1707
      %v1804 = vpack.c.bf16 %v1708, %v1708
      %v1805 = vpack.c.bf16 %v1709, %v1709
      %v1806 = vpack.c.bf16 %v1710, %v1710
      %v1807 = vpack.c.bf16 %v1711, %v1711
      %v1808 = vpack.c.bf16 %v1712, %v1712
      %v1809 = vpack.c.bf16 %v1713, %v1713
      %v1810 = vpack.c.bf16 %v1714, %v1714
      %v1811 = vpack.c.bf16 %v1715, %v1715
      %v1812 = vpack.c.bf16 %v1716, %v1716
      %v1813 = vpack.c.bf16 %v1717, %v1717
      %v1814 = vpack.c.bf16 %v1718, %v1718
      %v1815 = vpack.c.bf16 %v1719, %v1719
      %1816 = vst.msk [vmem:[#allocation4 + $0x4] sm:$0xf] %vm1110, %v1784
      %1817 = vst.msk [vmem:[#allocation4 + $0x18] sm:$0xf] %vm1110, %v1785
      %1818 = vst.msk [vmem:[#allocation4 + $0x2c] sm:$0xf] %vm1110, %v1786
      %1819 = vst.msk [vmem:[#allocation4 + $0x40] sm:$0xf] %vm1110, %v1787
      %1820 = vst.msk [vmem:[#allocation4 + $0x54] sm:$0xf] %vm1110, %v1788
      %1821 = vst.msk [vmem:[#allocation4 + $0x68] sm:$0xf] %vm1110, %v1789
      %1822 = vst.msk [vmem:[#allocation4 + $0x7c] sm:$0xf] %vm1110, %v1790
      %1823 = vst.msk [vmem:[#allocation4 + $0x90] sm:$0xf] %vm1110, %v1791
      %1824 = vst.msk [vmem:[#allocation4 + $0xa4] sm:$0xf] %vm1110, %v1792
      %1825 = vst.msk [vmem:[#allocation4 + $0xb8] sm:$0xf] %vm1110, %v1793
      %1826 = vst.msk [vmem:[#allocation4 + $0xcc] sm:$0xf] %vm1110, %v1794
      %1827 = vst.msk [vmem:[#allocation4 + $0xe0] sm:$0xf] %vm1110, %v1795
      %1828 = vst.msk [vmem:[#allocation4 + $0xf4] sm:$0xf] %vm1110, %v1796
      %1829 = vst.msk [vmem:[#allocation4 + $0x108] sm:$0xf] %vm1110, %v1797
      %1830 = vst.msk [vmem:[#allocation4 + $0x11c] sm:$0xf] %vm1110, %v1798
      %1831 = vst.msk [vmem:[#allocation4 + $0x130] sm:$0xf] %vm1110, %v1799
      %1832 = vst.msk [vmem:[#allocation4 + $0x144] sm:$0xf] %vm1110, %v1800
      %1833 = vst.msk [vmem:[#allocation4 + $0x158] sm:$0xf] %vm1110, %v1801
      %1834 = vst.msk [vmem:[#allocation4 + $0x16c] sm:$0xf] %vm1110, %v1802
      %1835 = vst.msk [vmem:[#allocation4 + $0x180] sm:$0xf] %vm1110, %v1803
      %1836 = vst.msk [vmem:[#allocation4 + $0x194] sm:$0xf] %vm1110, %v1804
      %1837 = vst.msk [vmem:[#allocation4 + $0x1a8] sm:$0xf] %vm1110, %v1805
      %1838 = vst.msk [vmem:[#allocation4 + $0x1bc] sm:$0xf] %vm1110, %v1806
      %1839 = vst.msk [vmem:[#allocation4 + $0x1d0] sm:$0xf] %vm1110, %v1807
      %1840 = vst.msk [vmem:[#allocation4 + $0x1e4] sm:$0xf] %vm1110, %v1808
      %1841 = vst.msk [vmem:[#allocation4 + $0x1f8] sm:$0xf] %vm1110, %v1809
      %1842 = vst.msk [vmem:[#allocation4 + $0x20c] sm:$0xf] %vm1110, %v1810
      %1843 = vst.msk [vmem:[#allocation4 + $0x220] sm:$0xf] %vm1110, %v1811
      %1844 = vst.msk [vmem:[#allocation4 + $0x234] sm:$0xf] %vm1110, %v1812
      %1845 = vst.msk [vmem:[#allocation4 + $0x248] sm:$0xf] %vm1110, %v1813
      %1846 = vst.msk [vmem:[#allocation4 + $0x25c] sm:$0xf] %vm1110, %v1814
      %1847 = vst.msk [vmem:[#allocation4 + $0x270] sm:$0xf] %vm1110, %v1815
      %s1848 = scalar_lea.vmem [#allocation2], 40
      %v1849 = vld [vmem:[%s1848 + $0x11] sm:$0xff]
      %v1850 = vld [vmem:[%s1848 + $0x19] sm:$0xff]
      %v1851 = vld [vmem:[%s1848 + $0x39] sm:$0xff]
      %v1852 = vld [vmem:[%s1848 + $0x41] sm:$0xff]
      %v1853 = vld [vmem:[%s1848 + $0x61] sm:$0xff]
      %v1854 = vld [vmem:[%s1848 + $0x69] sm:$0xff]
      %v1855 = vld [vmem:[%s1848 + $0x89] sm:$0xff]
      %v1856 = vld [vmem:[%s1848 + $0x91] sm:$0xff]
      %v1857 = vld [vmem:[%s1848 + $0xb1] sm:$0xff]
      %v1858 = vld [vmem:[%s1848 + $0xb9] sm:$0xff]
      %v1859 = vld [vmem:[%s1848 + $0xd9] sm:$0xff]
      %v1860 = vld [vmem:[%s1848 + $0xe1] sm:$0xff]
      %v1861 = vld [vmem:[%s1848 + $0x101] sm:$0xff]
      %v1862 = vld [vmem:[%s1848 + $0x109] sm:$0xff]
      %v1863 = vld [vmem:[%s1848 + $0x129] sm:$0xff]
      %v1864 = vld [vmem:[%s1848 + $0x131] sm:$0xff]
      %v1865 = vld [vmem:[%s1848 + $0x151] sm:$0xff]
      %v1866 = vld [vmem:[%s1848 + $0x159] sm:$0xff]
      %v1867 = vld [vmem:[%s1848 + $0x179] sm:$0xff]
      %v1868 = vld [vmem:[%s1848 + $0x181] sm:$0xff]
      %v1869 = vld [vmem:[%s1848 + $0x1a1] sm:$0xff]
      %v1870 = vld [vmem:[%s1848 + $0x1a9] sm:$0xff]
      %v1871 = vld [vmem:[%s1848 + $0x1c9] sm:$0xff]
      %v1872 = vld [vmem:[%s1848 + $0x1d1] sm:$0xff]
      %v1873 = vld [vmem:[%s1848 + $0x1f1] sm:$0xff]
      %v1874 = vld [vmem:[%s1848 + $0x1f9] sm:$0xff]
      %v1875 = vld [vmem:[%s1848 + $0x219] sm:$0xff]
      %v1876 = vld [vmem:[%s1848 + $0x221] sm:$0xff]
      %v1877 = vld [vmem:[%s1848 + $0x241] sm:$0xff]
      %v1878 = vld [vmem:[%s1848 + $0x249] sm:$0xff]
      %v1879 = vld [vmem:[%s1848 + $0x269] sm:$0xff]
      %v1880 = vld [vmem:[%s1848 + $0x271] sm:$0xff]
      %v1881 = vld [vmem:[%s1848] sm:$0xff]
      %v1882 = vld [vmem:[%s1848 + $0x8] sm:$0xff]
      %v1883 = vld [vmem:[%s1848 + $0x28] sm:$0xff]
      %v1884 = vld [vmem:[%s1848 + $0x30] sm:$0xff]
      %v1885 = vld [vmem:[%s1848 + $0x50] sm:$0xff]
      %v1886 = vld [vmem:[%s1848 + $0x58] sm:$0xff]
      %v1887 = vld [vmem:[%s1848 + $0x78] sm:$0xff]
      %v1888 = vld [vmem:[%s1848 + $0x80] sm:$0xff]
      %v1889 = vld [vmem:[%s1848 + $0xa0] sm:$0xff]
      %v1890 = vld [vmem:[%s1848 + $0xa8] sm:$0xff]
      %v1891 = vld [vmem:[%s1848 + $0xc8] sm:$0xff]
      %v1892 = vld [vmem:[%s1848 + $0xd0] sm:$0xff]
      %v1893 = vld [vmem:[%s1848 + $0xf0] sm:$0xff]
      %v1894 = vld [vmem:[%s1848 + $0xf8] sm:$0xff]
      %v1895 = vld [vmem:[%s1848 + $0x118] sm:$0xff]
      %v1896 = vld [vmem:[%s1848 + $0x120] sm:$0xff]
      %v1897 = vld [vmem:[%s1848 + $0x140] sm:$0xff]
      %v1898 = vld [vmem:[%s1848 + $0x148] sm:$0xff]
      %v1899 = vld [vmem:[%s1848 + $0x168] sm:$0xff]
      %v1900 = vld [vmem:[%s1848 + $0x170] sm:$0xff]
      %v1901 = vld [vmem:[%s1848 + $0x190] sm:$0xff]
      %v1902 = vld [vmem:[%s1848 + $0x198] sm:$0xff]
      %v1903 = vld [vmem:[%s1848 + $0x1b8] sm:$0xff]
      %v1904 = vld [vmem:[%s1848 + $0x1c0] sm:$0xff]
      %v1905 = vld [vmem:[%s1848 + $0x1e0] sm:$0xff]
      %v1906 = vld [vmem:[%s1848 + $0x1e8] sm:$0xff]
      %v1907 = vld [vmem:[%s1848 + $0x208] sm:$0xff]
      %v1908 = vld [vmem:[%s1848 + $0x210] sm:$0xff]
      %v1909 = vld [vmem:[%s1848 + $0x230] sm:$0xff]
      %v1910 = vld [vmem:[%s1848 + $0x238] sm:$0xff]
      %v1911 = vld [vmem:[%s1848 + $0x258] sm:$0xff]
      %v1912 = vld [vmem:[%s1848 + $0x260] sm:$0xff]
      %v1913 = vpack.c.bf16 %v1849, %v1849
      %v1914 = vpack.c.bf16 %v1850, %v1850
      %v1915 = vpack.c.bf16 %v1851, %v1851
      %v1916 = vpack.c.bf16 %v1852, %v1852
      %v1917 = vpack.c.bf16 %v1853, %v1853
      %v1918 = vpack.c.bf16 %v1854, %v1854
      %v1919 = vpack.c.bf16 %v1855, %v1855
      %v1920 = vpack.c.bf16 %v1856, %v1856
      %v1921 = vpack.c.bf16 %v1857, %v1857
      %v1922 = vpack.c.bf16 %v1858, %v1858
      %v1923 = vpack.c.bf16 %v1859, %v1859
      %v1924 = vpack.c.bf16 %v1860, %v1860
      %v1925 = vpack.c.bf16 %v1861, %v1861
      %v1926 = vpack.c.bf16 %v1862, %v1862
      %v1927 = vpack.c.bf16 %v1863, %v1863
      %v1928 = vpack.c.bf16 %v1864, %v1864
      %v1929 = vpack.c.bf16 %v1865, %v1865
      %v1930 = vpack.c.bf16 %v1866, %v1866
      %v1931 = vpack.c.bf16 %v1867, %v1867
      %v1932 = vpack.c.bf16 %v1868, %v1868
      %v1933 = vpack.c.bf16 %v1869, %v1869
      %v1934 = vpack.c.bf16 %v1870, %v1870
      %v1935 = vpack.c.bf16 %v1871, %v1871
      %v1936 = vpack.c.bf16 %v1872, %v1872
      %v1937 = vpack.c.bf16 %v1873, %v1873
      %v1938 = vpack.c.bf16 %v1874, %v1874
      %v1939 = vpack.c.bf16 %v1875, %v1875
      %v1940 = vpack.c.bf16 %v1876, %v1876
      %v1941 = vpack.c.bf16 %v1877, %v1877
      %v1942 = vpack.c.bf16 %v1878, %v1878
      %v1943 = vpack.c.bf16 %v1879, %v1879
      %v1944 = vpack.c.bf16 %v1880, %v1880
      %1977 = vrot.lane.b32.xlu0 %v1913, 64
      %v1978 = vpop.permute.xlu0 %1977
      %1979 = vrot.lane.b32.xlu0 %v1914, 64
      %v1980 = vpop.permute.xlu0 %1979
      %1981 = vrot.lane.b32.xlu0 %v1915, 64
      %v1982 = vpop.permute.xlu0 %1981
      %1983 = vrot.lane.b32.xlu0 %v1916, 64
      %v1984 = vpop.permute.xlu0 %1983
      %1985 = vrot.lane.b32.xlu0 %v1917, 64
      %v1986 = vpop.permute.xlu0 %1985
      %1987 = vrot.lane.b32.xlu0 %v1918, 64
      %v1988 = vpop.permute.xlu0 %1987
      %1989 = vrot.lane.b32.xlu0 %v1919, 64
      %v1990 = vpop.permute.xlu0 %1989
      %1991 = vrot.lane.b32.xlu0 %v1920, 64
      %v1992 = vpop.permute.xlu0 %1991
      %1993 = vrot.lane.b32.xlu0 %v1921, 64
      %v1994 = vpop.permute.xlu0 %1993
      %1995 = vrot.lane.b32.xlu0 %v1922, 64
      %v1996 = vpop.permute.xlu0 %1995
      %1997 = vrot.lane.b32.xlu0 %v1923, 64
      %v1998 = vpop.permute.xlu0 %1997
      %1999 = vrot.lane.b32.xlu0 %v1924, 64
      %v2000 = vpop.permute.xlu0 %1999
      %2001 = vrot.lane.b32.xlu0 %v1925, 64
      %v2002 = vpop.permute.xlu0 %2001
      %2003 = vrot.lane.b32.xlu0 %v1926, 64
      %v2004 = vpop.permute.xlu0 %2003
      %2005 = vrot.lane.b32.xlu0 %v1927, 64
      %v2006 = vpop.permute.xlu0 %2005
      %2007 = vrot.lane.b32.xlu0 %v1928, 64
      %v2008 = vpop.permute.xlu0 %2007
      %2009 = vrot.lane.b32.xlu0 %v1929, 64
      %v2010 = vpop.permute.xlu0 %2009
      %2011 = vrot.lane.b32.xlu0 %v1930, 64
      %v2012 = vpop.permute.xlu0 %2011
      %2013 = vrot.lane.b32.xlu0 %v1931, 64
      %v2014 = vpop.permute.xlu0 %2013
      %2015 = vrot.lane.b32.xlu0 %v1932, 64
      %v2016 = vpop.permute.xlu0 %2015
      %2017 = vrot.lane.b32.xlu0 %v1933, 64
      %v2018 = vpop.permute.xlu0 %2017
      %2019 = vrot.lane.b32.xlu0 %v1934, 64
      %v2020 = vpop.permute.xlu0 %2019
      %2021 = vrot.lane.b32.xlu0 %v1935, 64
      %v2022 = vpop.permute.xlu0 %2021
      %2023 = vrot.lane.b32.xlu0 %v1936, 64
      %v2024 = vpop.permute.xlu0 %2023
      %2025 = vrot.lane.b32.xlu0 %v1937, 64
      %v2026 = vpop.permute.xlu0 %2025
      %2027 = vrot.lane.b32.xlu0 %v1938, 64
      %v2028 = vpop.permute.xlu0 %2027
      %2029 = vrot.lane.b32.xlu0 %v1939, 64
      %v2030 = vpop.permute.xlu0 %2029
      %2031 = vrot.lane.b32.xlu0 %v1940, 64
      %v2032 = vpop.permute.xlu0 %2031
      %2033 = vrot.lane.b32.xlu0 %v1941, 64
      %v2034 = vpop.permute.xlu0 %2033
      %2035 = vrot.lane.b32.xlu0 %v1942, 64
      %v2036 = vpop.permute.xlu0 %2035
      %2037 = vrot.lane.b32.xlu0 %v1943, 64
      %v2038 = vpop.permute.xlu0 %2037
      %2039 = vrot.lane.b32.xlu0 %v1944, 64
      %v2040 = vpop.permute.xlu0 %2039
      %2073 = vst.msk [vmem:[#allocation3 + $0x4] sm:$0xf] %vm1431, %v1978
      %2074 = vst.msk [vmem:[#allocation3 + $0x18] sm:$0xf] %vm1431, %v1980
      %2075 = vst.msk [vmem:[#allocation3 + $0x2c] sm:$0xf] %vm1431, %v1982
      %2076 = vst.msk [vmem:[#allocation3 + $0x40] sm:$0xf] %vm1431, %v1984
      %2077 = vst.msk [vmem:[#allocation3 + $0x54] sm:$0xf] %vm1431, %v1986
      %2078 = vst.msk [vmem:[#allocation3 + $0x68] sm:$0xf] %vm1431, %v1988
      %2079 = vst.msk [vmem:[#allocation3 + $0x7c] sm:$0xf] %vm1431, %v1990
      %2080 = vst.msk [vmem:[#allocation3 + $0x90] sm:$0xf] %vm1431, %v1992
      %2081 = vst.msk [vmem:[#allocation3 + $0xa4] sm:$0xf] %vm1431, %v1994
      %2082 = vst.msk [vmem:[#allocation3 + $0xb8] sm:$0xf] %vm1431, %v1996
      %2083 = vst.msk [vmem:[#allocation3 + $0xcc] sm:$0xf] %vm1431, %v1998
      %2084 = vst.msk [vmem:[#allocation3 + $0xe0] sm:$0xf] %vm1431, %v2000
      %2085 = vst.msk [vmem:[#allocation3 + $0xf4] sm:$0xf] %vm1431, %v2002
      %2086 = vst.msk [vmem:[#allocation3 + $0x108] sm:$0xf] %vm1431, %v2004
      %2087 = vst.msk [vmem:[#allocation3 + $0x11c] sm:$0xf] %vm1431, %v2006
      %2088 = vst.msk [vmem:[#allocation3 + $0x130] sm:$0xf] %vm1431, %v2008
      %2089 = vst.msk [vmem:[#allocation3 + $0x144] sm:$0xf] %vm1431, %v2010
      %2090 = vst.msk [vmem:[#allocation3 + $0x158] sm:$0xf] %vm1431, %v2012
      %2091 = vst.msk [vmem:[#allocation3 + $0x16c] sm:$0xf] %vm1431, %v2014
      %2092 = vst.msk [vmem:[#allocation3 + $0x180] sm:$0xf] %vm1431, %v2016
      %2093 = vst.msk [vmem:[#allocation3 + $0x194] sm:$0xf] %vm1431, %v2018
      %2094 = vst.msk [vmem:[#allocation3 + $0x1a8] sm:$0xf] %vm1431, %v2020
      %2095 = vst.msk [vmem:[#allocation3 + $0x1bc] sm:$0xf] %vm1431, %v2022
      %2096 = vst.msk [vmem:[#allocation3 + $0x1d0] sm:$0xf] %vm1431, %v2024
      %2097 = vst.msk [vmem:[#allocation3 + $0x1e4] sm:$0xf] %vm1431, %v2026
      %2098 = vst.msk [vmem:[#allocation3 + $0x1f8] sm:$0xf] %vm1431, %v2028
      %2099 = vst.msk [vmem:[#allocation3 + $0x20c] sm:$0xf] %vm1431, %v2030
      %2100 = vst.msk [vmem:[#allocation3 + $0x220] sm:$0xf] %vm1431, %v2032
      %2101 = vst.msk [vmem:[#allocation3 + $0x234] sm:$0xf] %vm1431, %v2034
      %2102 = vst.msk [vmem:[#allocation3 + $0x248] sm:$0xf] %vm1431, %v2036
      %2103 = vst.msk [vmem:[#allocation3 + $0x25c] sm:$0xf] %vm1431, %v2038
      %2104 = vst.msk [vmem:[#allocation3 + $0x270] sm:$0xf] %vm1431, %v2040
      %v2105 = vpack.c.bf16 %v1881, %v1881
      %v2106 = vpack.c.bf16 %v1882, %v1882
      %v2107 = vpack.c.bf16 %v1883, %v1883
      %v2108 = vpack.c.bf16 %v1884, %v1884
      %v2109 = vpack.c.bf16 %v1885, %v1885
      %v2110 = vpack.c.bf16 %v1886, %v1886
      %v2111 = vpack.c.bf16 %v1887, %v1887
      %v2112 = vpack.c.bf16 %v1888, %v1888
      %v2113 = vpack.c.bf16 %v1889, %v1889
      %v2114 = vpack.c.bf16 %v1890, %v1890
      %v2115 = vpack.c.bf16 %v1891, %v1891
      %v2116 = vpack.c.bf16 %v1892, %v1892
      %v2117 = vpack.c.bf16 %v1893, %v1893
      %v2118 = vpack.c.bf16 %v1894, %v1894
      %v2119 = vpack.c.bf16 %v1895, %v1895
      %v2120 = vpack.c.bf16 %v1896, %v1896
      %v2121 = vpack.c.bf16 %v1897, %v1897
      %v2122 = vpack.c.bf16 %v1898, %v1898
      %v2123 = vpack.c.bf16 %v1899, %v1899
      %v2124 = vpack.c.bf16 %v1900, %v1900
      %v2125 = vpack.c.bf16 %v1901, %v1901
      %v2126 = vpack.c.bf16 %v1902, %v1902
      %v2127 = vpack.c.bf16 %v1903, %v1903
      %v2128 = vpack.c.bf16 %v1904, %v1904
      %v2129 = vpack.c.bf16 %v1905, %v1905
      %v2130 = vpack.c.bf16 %v1906, %v1906
      %v2131 = vpack.c.bf16 %v1907, %v1907
      %v2132 = vpack.c.bf16 %v1908, %v1908
      %v2133 = vpack.c.bf16 %v1909, %v1909
      %v2134 = vpack.c.bf16 %v1910, %v1910
      %v2135 = vpack.c.bf16 %v1911, %v1911
      %v2136 = vpack.c.bf16 %v1912, %v1912
      %2169 = vrot.lane.b32.xlu0 %v2105, 64
      %v2170 = vpop.permute.xlu0 %2169
      %2171 = vrot.lane.b32.xlu0 %v2106, 64
      %v2172 = vpop.permute.xlu0 %2171
      %2173 = vrot.lane.b32.xlu0 %v2107, 64
      %v2174 = vpop.permute.xlu0 %2173
      %2175 = vrot.lane.b32.xlu0 %v2108, 64
      %v2176 = vpop.permute.xlu0 %2175
      %2177 = vrot.lane.b32.xlu0 %v2109, 64
      %v2178 = vpop.permute.xlu0 %2177
      %2179 = vrot.lane.b32.xlu0 %v2110, 64
      %v2180 = vpop.permute.xlu0 %2179
      %2181 = vrot.lane.b32.xlu0 %v2111, 64
      %v2182 = vpop.permute.xlu0 %2181
      %2183 = vrot.lane.b32.xlu0 %v2112, 64
      %v2184 = vpop.permute.xlu0 %2183
      %2185 = vrot.lane.b32.xlu0 %v2113, 64
      %v2186 = vpop.permute.xlu0 %2185
      %2187 = vrot.lane.b32.xlu0 %v2114, 64
      %v2188 = vpop.permute.xlu0 %2187
      %2189 = vrot.lane.b32.xlu0 %v2115, 64
      %v2190 = vpop.permute.xlu0 %2189
      %2191 = vrot.lane.b32.xlu0 %v2116, 64
      %v2192 = vpop.permute.xlu0 %2191
      %2193 = vrot.lane.b32.xlu0 %v2117, 64
      %v2194 = vpop.permute.xlu0 %2193
      %2195 = vrot.lane.b32.xlu0 %v2118, 64
      %v2196 = vpop.permute.xlu0 %2195
      %2197 = vrot.lane.b32.xlu0 %v2119, 64
      %v2198 = vpop.permute.xlu0 %2197
      %2199 = vrot.lane.b32.xlu0 %v2120, 64
      %v2200 = vpop.permute.xlu0 %2199
      %2201 = vrot.lane.b32.xlu0 %v2121, 64
      %v2202 = vpop.permute.xlu0 %2201
      %2203 = vrot.lane.b32.xlu0 %v2122, 64
      %v2204 = vpop.permute.xlu0 %2203
      %2205 = vrot.lane.b32.xlu0 %v2123, 64
      %v2206 = vpop.permute.xlu0 %2205
      %2207 = vrot.lane.b32.xlu0 %v2124, 64
      %v2208 = vpop.permute.xlu0 %2207
      %2209 = vrot.lane.b32.xlu0 %v2125, 64
      %v2210 = vpop.permute.xlu0 %2209
      %2211 = vrot.lane.b32.xlu0 %v2126, 64
      %v2212 = vpop.permute.xlu0 %2211
      %2213 = vrot.lane.b32.xlu0 %v2127, 64
      %v2214 = vpop.permute.xlu0 %2213
      %2215 = vrot.lane.b32.xlu0 %v2128, 64
      %v2216 = vpop.permute.xlu0 %2215
      %2217 = vrot.lane.b32.xlu0 %v2129, 64
      %v2218 = vpop.permute.xlu0 %2217
      %2219 = vrot.lane.b32.xlu0 %v2130, 64
      %v2220 = vpop.permute.xlu0 %2219
      %2221 = vrot.lane.b32.xlu0 %v2131, 64
      %v2222 = vpop.permute.xlu0 %2221
      %2223 = vrot.lane.b32.xlu0 %v2132, 64
      %v2224 = vpop.permute.xlu0 %2223
      %2225 = vrot.lane.b32.xlu0 %v2133, 64
      %v2226 = vpop.permute.xlu0 %2225
      %2227 = vrot.lane.b32.xlu0 %v2134, 64
      %v2228 = vpop.permute.xlu0 %2227
      %2229 = vrot.lane.b32.xlu0 %v2135, 64
      %v2230 = vpop.permute.xlu0 %2229
      %2231 = vrot.lane.b32.xlu0 %v2136, 64
      %v2232 = vpop.permute.xlu0 %2231
      %2265 = vst.msk [vmem:[#allocation4 + $0x4] sm:$0xf] %vm1431, %v2170
      %2266 = vst.msk [vmem:[#allocation4 + $0x18] sm:$0xf] %vm1431, %v2172
      %2267 = vst.msk [vmem:[#allocation4 + $0x2c] sm:$0xf] %vm1431, %v2174
      %2268 = vst.msk [vmem:[#allocation4 + $0x40] sm:$0xf] %vm1431, %v2176
      %2269 = vst.msk [vmem:[#allocation4 + $0x54] sm:$0xf] %vm1431, %v2178
      %2270 = vst.msk [vmem:[#allocation4 + $0x68] sm:$0xf] %vm1431, %v2180
      %2271 = vst.msk [vmem:[#allocation4 + $0x7c] sm:$0xf] %vm1431, %v2182
      %2272 = vst.msk [vmem:[#allocation4 + $0x90] sm:$0xf] %vm1431, %v2184
      %2273 = vst.msk [vmem:[#allocation4 + $0xa4] sm:$0xf] %vm1431, %v2186
      %2274 = vst.msk [vmem:[#allocation4 + $0xb8] sm:$0xf] %vm1431, %v2188
      %2275 = vst.msk [vmem:[#allocation4 + $0xcc] sm:$0xf] %vm1431, %v2190
      %2276 = vst.msk [vmem:[#allocation4 + $0xe0] sm:$0xf] %vm1431, %v2192
      %2277 = vst.msk [vmem:[#allocation4 + $0xf4] sm:$0xf] %vm1431, %v2194
      %2278 = vst.msk [vmem:[#allocation4 + $0x108] sm:$0xf] %vm1431, %v2196
      %2279 = vst.msk [vmem:[#allocation4 + $0x11c] sm:$0xf] %vm1431, %v2198
      %2280 = vst.msk [vmem:[#allocation4 + $0x130] sm:$0xf] %vm1431, %v2200
      %2281 = vst.msk [vmem:[#allocation4 + $0x144] sm:$0xf] %vm1431, %v2202
      %2282 = vst.msk [vmem:[#allocation4 + $0x158] sm:$0xf] %vm1431, %v2204
      %2283 = vst.msk [vmem:[#allocation4 + $0x16c] sm:$0xf] %vm1431, %v2206
      %2284 = vst.msk [vmem:[#allocation4 + $0x180] sm:$0xf] %vm1431, %v2208
      %2285 = vst.msk [vmem:[#allocation4 + $0x194] sm:$0xf] %vm1431, %v2210
      %2286 = vst.msk [vmem:[#allocation4 + $0x1a8] sm:$0xf] %vm1431, %v2212
      %2287 = vst.msk [vmem:[#allocation4 + $0x1bc] sm:$0xf] %vm1431, %v2214
      %2288 = vst.msk [vmem:[#allocation4 + $0x1d0] sm:$0xf] %vm1431, %v2216
      %2289 = vst.msk [vmem:[#allocation4 + $0x1e4] sm:$0xf] %vm1431, %v2218
      %2290 = vst.msk [vmem:[#allocation4 + $0x1f8] sm:$0xf] %vm1431, %v2220
      %2291 = vst.msk [vmem:[#allocation4 + $0x20c] sm:$0xf] %vm1431, %v2222
      %2292 = vst.msk [vmem:[#allocation4 + $0x220] sm:$0xf] %vm1431, %v2224
      %2293 = vst.msk [vmem:[#allocation4 + $0x234] sm:$0xf] %vm1431, %v2226
      %2294 = vst.msk [vmem:[#allocation4 + $0x248] sm:$0xf] %vm1431, %v2228
      %2295 = vst.msk [vmem:[#allocation4 + $0x25c] sm:$0xf] %vm1431, %v2230
      %2296 = vst.msk [vmem:[#allocation4 + $0x270] sm:$0xf] %vm1431, %v2232
      %v2297 = vld [vmem:[%s1848] sm:$0xff]
      %v2298 = vld [vmem:[%s1848 + $0x8] sm:$0xff]
      %v2299 = vld [vmem:[%s1848 + $0x28] sm:$0xff]
      %v2300 = vld [vmem:[%s1848 + $0x30] sm:$0xff]
      %v2301 = vld [vmem:[%s1848 + $0x50] sm:$0xff]
      %v2302 = vld [vmem:[%s1848 + $0x58] sm:$0xff]
      %v2303 = vld [vmem:[%s1848 + $0x78] sm:$0xff]
      %v2304 = vld [vmem:[%s1848 + $0x80] sm:$0xff]
      %v2305 = vld [vmem:[%s1848 + $0xa0] sm:$0xff]
      %v2306 = vld [vmem:[%s1848 + $0xa8] sm:$0xff]
      %v2307 = vld [vmem:[%s1848 + $0xc8] sm:$0xff]
      %v2308 = vld [vmem:[%s1848 + $0xd0] sm:$0xff]
      %v2309 = vld [vmem:[%s1848 + $0xf0] sm:$0xff]
      %v2310 = vld [vmem:[%s1848 + $0xf8] sm:$0xff]
      %v2311 = vld [vmem:[%s1848 + $0x118] sm:$0xff]
      %v2312 = vld [vmem:[%s1848 + $0x120] sm:$0xff]
      %v2313 = vld [vmem:[%s1848 + $0x140] sm:$0xff]
      %v2314 = vld [vmem:[%s1848 + $0x148] sm:$0xff]
      %v2315 = vld [vmem:[%s1848 + $0x168] sm:$0xff]
      %v2316 = vld [vmem:[%s1848 + $0x170] sm:$0xff]
      %v2317 = vld [vmem:[%s1848 + $0x190] sm:$0xff]
      %v2318 = vld [vmem:[%s1848 + $0x198] sm:$0xff]
      %v2319 = vld [vmem:[%s1848 + $0x1b8] sm:$0xff]
      %v2320 = vld [vmem:[%s1848 + $0x1c0] sm:$0xff]
      %v2321 = vld [vmem:[%s1848 + $0x1e0] sm:$0xff]
      %v2322 = vld [vmem:[%s1848 + $0x1e8] sm:$0xff]
      %v2323 = vld [vmem:[%s1848 + $0x208] sm:$0xff]
      %v2324 = vld [vmem:[%s1848 + $0x210] sm:$0xff]
      %v2325 = vld [vmem:[%s1848 + $0x230] sm:$0xff]
      %v2326 = vld [vmem:[%s1848 + $0x238] sm:$0xff]
      %v2327 = vld [vmem:[%s1848 + $0x258] sm:$0xff]
      %v2328 = vld [vmem:[%s1848 + $0x260] sm:$0xff]
      %v2329 = vld [vmem:[%s1848 + $0x12] sm:$0xff]
      %v2330 = vld [vmem:[%s1848 + $0x1a] sm:$0xff]
      %v2331 = vld [vmem:[%s1848 + $0x3a] sm:$0xff]
      %v2332 = vld [vmem:[%s1848 + $0x42] sm:$0xff]
      %v2333 = vld [vmem:[%s1848 + $0x62] sm:$0xff]
      %v2334 = vld [vmem:[%s1848 + $0x6a] sm:$0xff]
      %v2335 = vld [vmem:[%s1848 + $0x8a] sm:$0xff]
      %v2336 = vld [vmem:[%s1848 + $0x92] sm:$0xff]
      %v2337 = vld [vmem:[%s1848 + $0xb2] sm:$0xff]
      %v2338 = vld [vmem:[%s1848 + $0xba] sm:$0xff]
      %v2339 = vld [vmem:[%s1848 + $0xda] sm:$0xff]
      %v2340 = vld [vmem:[%s1848 + $0xe2] sm:$0xff]
      %v2341 = vld [vmem:[%s1848 + $0x102] sm:$0xff]
      %v2342 = vld [vmem:[%s1848 + $0x10a] sm:$0xff]
      %v2343 = vld [vmem:[%s1848 + $0x12a] sm:$0xff]
      %v2344 = vld [vmem:[%s1848 + $0x132] sm:$0xff]
      %v2345 = vld [vmem:[%s1848 + $0x152] sm:$0xff]
      %v2346 = vld [vmem:[%s1848 + $0x15a] sm:$0xff]
      %v2347 = vld [vmem:[%s1848 + $0x17a] sm:$0xff]
      %v2348 = vld [vmem:[%s1848 + $0x182] sm:$0xff]
      %v2349 = vld [vmem:[%s1848 + $0x1a2] sm:$0xff]
      %v2350 = vld [vmem:[%s1848 + $0x1aa] sm:$0xff]
      %v2351 = vld [vmem:[%s1848 + $0x1ca] sm:$0xff]
      %v2352 = vld [vmem:[%s1848 + $0x1d2] sm:$0xff]
      %v2353 = vld [vmem:[%s1848 + $0x1f2] sm:$0xff]
      %v2354 = vld [vmem:[%s1848 + $0x1fa] sm:$0xff]
      %v2355 = vld [vmem:[%s1848 + $0x21a] sm:$0xff]
      %v2356 = vld [vmem:[%s1848 + $0x222] sm:$0xff]
      %v2357 = vld [vmem:[%s1848 + $0x242] sm:$0xff]
      %v2358 = vld [vmem:[%s1848 + $0x24a] sm:$0xff]
      %v2359 = vld [vmem:[%s1848 + $0x26a] sm:$0xff]
      %v2360 = vld [vmem:[%s1848 + $0x272] sm:$0xff]
      %v2361 = vpack.c.bf16 %v2297, %v2297
      %v2362 = vpack.c.bf16 %v2298, %v2298
      %v2363 = vpack.c.bf16 %v2299, %v2299
      %v2364 = vpack.c.bf16 %v2300, %v2300
      %v2365 = vpack.c.bf16 %v2301, %v2301
      %v2366 = vpack.c.bf16 %v2302, %v2302
      %v2367 = vpack.c.bf16 %v2303, %v2303
      %v2368 = vpack.c.bf16 %v2304, %v2304
      %v2369 = vpack.c.bf16 %v2305, %v2305
      %v2370 = vpack.c.bf16 %v2306, %v2306
      %v2371 = vpack.c.bf16 %v2307, %v2307
      %v2372 = vpack.c.bf16 %v2308, %v2308
      %v2373 = vpack.c.bf16 %v2309, %v2309
      %v2374 = vpack.c.bf16 %v2310, %v2310
      %v2375 = vpack.c.bf16 %v2311, %v2311
      %v2376 = vpack.c.bf16 %v2312, %v2312
      %v2377 = vpack.c.bf16 %v2313, %v2313
      %v2378 = vpack.c.bf16 %v2314, %v2314
      %v2379 = vpack.c.bf16 %v2315, %v2315
      %v2380 = vpack.c.bf16 %v2316, %v2316
      %v2381 = vpack.c.bf16 %v2317, %v2317
      %v2382 = vpack.c.bf16 %v2318, %v2318
      %v2383 = vpack.c.bf16 %v2319, %v2319
      %v2384 = vpack.c.bf16 %v2320, %v2320
      %v2385 = vpack.c.bf16 %v2321, %v2321
      %v2386 = vpack.c.bf16 %v2322, %v2322
      %v2387 = vpack.c.bf16 %v2323, %v2323
      %v2388 = vpack.c.bf16 %v2324, %v2324
      %v2389 = vpack.c.bf16 %v2325, %v2325
      %v2390 = vpack.c.bf16 %v2326, %v2326
      %v2391 = vpack.c.bf16 %v2327, %v2327
      %v2392 = vpack.c.bf16 %v2328, %v2328
      %2393 = vst.msk [vmem:[#allocation3 + $0x8] sm:$0xf] %vm1110, %v2361
      %2394 = vst.msk [vmem:[#allocation3 + $0x1c] sm:$0xf] %vm1110, %v2362
      %2395 = vst.msk [vmem:[#allocation3 + $0x30] sm:$0xf] %vm1110, %v2363
      %2396 = vst.msk [vmem:[#allocation3 + $0x44] sm:$0xf] %vm1110, %v2364
      %2397 = vst.msk [vmem:[#allocation3 + $0x58] sm:$0xf] %vm1110, %v2365
      %2398 = vst.msk [vmem:[#allocation3 + $0x6c] sm:$0xf] %vm1110, %v2366
      %2399 = vst.msk [vmem:[#allocation3 + $0x80] sm:$0xf] %vm1110, %v2367
      %2400 = vst.msk [vmem:[#allocation3 + $0x94] sm:$0xf] %vm1110, %v2368
      %2401 = vst.msk [vmem:[#allocation3 + $0xa8] sm:$0xf] %vm1110, %v2369
      %2402 = vst.msk [vmem:[#allocation3 + $0xbc] sm:$0xf] %vm1110, %v2370
      %2403 = vst.msk [vmem:[#allocation3 + $0xd0] sm:$0xf] %vm1110, %v2371
      %2404 = vst.msk [vmem:[#allocation3 + $0xe4] sm:$0xf] %vm1110, %v2372
      %2405 = vst.msk [vmem:[#allocation3 + $0xf8] sm:$0xf] %vm1110, %v2373
      %2406 = vst.msk [vmem:[#allocation3 + $0x10c] sm:$0xf] %vm1110, %v2374
      %2407 = vst.msk [vmem:[#allocation3 + $0x120] sm:$0xf] %vm1110, %v2375
      %2408 = vst.msk [vmem:[#allocation3 + $0x134] sm:$0xf] %vm1110, %v2376
      %2409 = vst.msk [vmem:[#allocation3 + $0x148] sm:$0xf] %vm1110, %v2377
      %2410 = vst.msk [vmem:[#allocation3 + $0x15c] sm:$0xf] %vm1110, %v2378
      %2411 = vst.msk [vmem:[#allocation3 + $0x170] sm:$0xf] %vm1110, %v2379
      %2412 = vst.msk [vmem:[#allocation3 + $0x184] sm:$0xf] %vm1110, %v2380
      %2413 = vst.msk [vmem:[#allocation3 + $0x198] sm:$0xf] %vm1110, %v2381
      %2414 = vst.msk [vmem:[#allocation3 + $0x1ac] sm:$0xf] %vm1110, %v2382
      %2415 = vst.msk [vmem:[#allocation3 + $0x1c0] sm:$0xf] %vm1110, %v2383
      %2416 = vst.msk [vmem:[#allocation3 + $0x1d4] sm:$0xf] %vm1110, %v2384
      %2417 = vst.msk [vmem:[#allocation3 + $0x1e8] sm:$0xf] %vm1110, %v2385
      %2418 = vst.msk [vmem:[#allocation3 + $0x1fc] sm:$0xf] %vm1110, %v2386
      %2419 = vst.msk [vmem:[#allocation3 + $0x210] sm:$0xf] %vm1110, %v2387
      %2420 = vst.msk [vmem:[#allocation3 + $0x224] sm:$0xf] %vm1110, %v2388
      %2421 = vst.msk [vmem:[#allocation3 + $0x238] sm:$0xf] %vm1110, %v2389
      %2422 = vst.msk [vmem:[#allocation3 + $0x24c] sm:$0xf] %vm1110, %v2390
      %2423 = vst.msk [vmem:[#allocation3 + $0x260] sm:$0xf] %vm1110, %v2391
      %2424 = vst.msk [vmem:[#allocation3 + $0x274] sm:$0xf] %vm1110, %v2392
      %v2425 = vpack.c.bf16 %v2329, %v2329
      %v2426 = vpack.c.bf16 %v2330, %v2330
      %v2427 = vpack.c.bf16 %v2331, %v2331
      %v2428 = vpack.c.bf16 %v2332, %v2332
      %v2429 = vpack.c.bf16 %v2333, %v2333
      %v2430 = vpack.c.bf16 %v2334, %v2334
      %v2431 = vpack.c.bf16 %v2335, %v2335
      %v2432 = vpack.c.bf16 %v2336, %v2336
      %v2433 = vpack.c.bf16 %v2337, %v2337
      %v2434 = vpack.c.bf16 %v2338, %v2338
      %v2435 = vpack.c.bf16 %v2339, %v2339
      %v2436 = vpack.c.bf16 %v2340, %v2340
      %v2437 = vpack.c.bf16 %v2341, %v2341
      %v2438 = vpack.c.bf16 %v2342, %v2342
      %v2439 = vpack.c.bf16 %v2343, %v2343
      %v2440 = vpack.c.bf16 %v2344, %v2344
      %v2441 = vpack.c.bf16 %v2345, %v2345
      %v2442 = vpack.c.bf16 %v2346, %v2346
      %v2443 = vpack.c.bf16 %v2347, %v2347
      %v2444 = vpack.c.bf16 %v2348, %v2348
      %v2445 = vpack.c.bf16 %v2349, %v2349
      %v2446 = vpack.c.bf16 %v2350, %v2350
      %v2447 = vpack.c.bf16 %v2351, %v2351
      %v2448 = vpack.c.bf16 %v2352, %v2352
      %v2449 = vpack.c.bf16 %v2353, %v2353
      %v2450 = vpack.c.bf16 %v2354, %v2354
      %v2451 = vpack.c.bf16 %v2355, %v2355
      %v2452 = vpack.c.bf16 %v2356, %v2356
      %v2453 = vpack.c.bf16 %v2357, %v2357
      %v2454 = vpack.c.bf16 %v2358, %v2358
      %v2455 = vpack.c.bf16 %v2359, %v2359
      %v2456 = vpack.c.bf16 %v2360, %v2360
      %2457 = vst.msk [vmem:[#allocation4 + $0x8] sm:$0xf] %vm1110, %v2425
      %2458 = vst.msk [vmem:[#allocation4 + $0x1c] sm:$0xf] %vm1110, %v2426
      %2459 = vst.msk [vmem:[#allocation4 + $0x30] sm:$0xf] %vm1110, %v2427
      %2460 = vst.msk [vmem:[#allocation4 + $0x44] sm:$0xf] %vm1110, %v2428
      %2461 = vst.msk [vmem:[#allocation4 + $0x58] sm:$0xf] %vm1110, %v2429
      %2462 = vst.msk [vmem:[#allocation4 + $0x6c] sm:$0xf] %vm1110, %v2430
      %2463 = vst.msk [vmem:[#allocation4 + $0x80] sm:$0xf] %vm1110, %v2431
      %2464 = vst.msk [vmem:[#allocation4 + $0x94] sm:$0xf] %vm1110, %v2432
      %2465 = vst.msk [vmem:[#allocation4 + $0xa8] sm:$0xf] %vm1110, %v2433
      %2466 = vst.msk [vmem:[#allocation4 + $0xbc] sm:$0xf] %vm1110, %v2434
      %2467 = vst.msk [vmem:[#allocation4 + $0xd0] sm:$0xf] %vm1110, %v2435
      %2468 = vst.msk [vmem:[#allocation4 + $0xe4] sm:$0xf] %vm1110, %v2436
      %2469 = vst.msk [vmem:[#allocation4 + $0xf8] sm:$0xf] %vm1110, %v2437
      %2470 = vst.msk [vmem:[#allocation4 + $0x10c] sm:$0xf] %vm1110, %v2438
      %2471 = vst.msk [vmem:[#allocation4 + $0x120] sm:$0xf] %vm1110, %v2439
      %2472 = vst.msk [vmem:[#allocation4 + $0x134] sm:$0xf] %vm1110, %v2440
      %2473 = vst.msk [vmem:[#allocation4 + $0x148] sm:$0xf] %vm1110, %v2441
      %2474 = vst.msk [vmem:[#allocation4 + $0x15c] sm:$0xf] %vm1110, %v2442
      %2475 = vst.msk [vmem:[#allocation4 + $0x170] sm:$0xf] %vm1110, %v2443
      %2476 = vst.msk [vmem:[#allocation4 + $0x184] sm:$0xf] %vm1110, %v2444
      %2477 = vst.msk [vmem:[#allocation4 + $0x198] sm:$0xf] %vm1110, %v2445
      %2478 = vst.msk [vmem:[#allocation4 + $0x1ac] sm:$0xf] %vm1110, %v2446
      %2479 = vst.msk [vmem:[#allocation4 + $0x1c0] sm:$0xf] %vm1110, %v2447
      %2480 = vst.msk [vmem:[#allocation4 + $0x1d4] sm:$0xf] %vm1110, %v2448
      %2481 = vst.msk [vmem:[#allocation4 + $0x1e8] sm:$0xf] %vm1110, %v2449
      %2482 = vst.msk [vmem:[#allocation4 + $0x1fc] sm:$0xf] %vm1110, %v2450
      %2483 = vst.msk [vmem:[#allocation4 + $0x210] sm:$0xf] %vm1110, %v2451
      %2484 = vst.msk [vmem:[#allocation4 + $0x224] sm:$0xf] %vm1110, %v2452
      %2485 = vst.msk [vmem:[#allocation4 + $0x238] sm:$0xf] %vm1110, %v2453
      %2486 = vst.msk [vmem:[#allocation4 + $0x24c] sm:$0xf] %vm1110, %v2454
      %2487 = vst.msk [vmem:[#allocation4 + $0x260] sm:$0xf] %vm1110, %v2455
      %2488 = vst.msk [vmem:[#allocation4 + $0x274] sm:$0xf] %vm1110, %v2456
      %v2489 = vld [vmem:[%s1848 + $0x12] sm:$0xff]
      %v2490 = vld [vmem:[%s1848 + $0x1a] sm:$0xff]
      %v2491 = vld [vmem:[%s1848 + $0x3a] sm:$0xff]
      %v2492 = vld [vmem:[%s1848 + $0x42] sm:$0xff]
      %v2493 = vld [vmem:[%s1848 + $0x62] sm:$0xff]
      %v2494 = vld [vmem:[%s1848 + $0x6a] sm:$0xff]
      %v2495 = vld [vmem:[%s1848 + $0x8a] sm:$0xff]
      %v2496 = vld [vmem:[%s1848 + $0x92] sm:$0xff]
      %v2497 = vld [vmem:[%s1848 + $0xb2] sm:$0xff]
      %v2498 = vld [vmem:[%s1848 + $0xba] sm:$0xff]
      %v2499 = vld [vmem:[%s1848 + $0xda] sm:$0xff]
      %v2500 = vld [vmem:[%s1848 + $0xe2] sm:$0xff]
      %v2501 = vld [vmem:[%s1848 + $0x102] sm:$0xff]
      %v2502 = vld [vmem:[%s1848 + $0x10a] sm:$0xff]
      %v2503 = vld [vmem:[%s1848 + $0x12a] sm:$0xff]
      %v2504 = vld [vmem:[%s1848 + $0x132] sm:$0xff]
      %v2505 = vld [vmem:[%s1848 + $0x152] sm:$0xff]
      %v2506 = vld [vmem:[%s1848 + $0x15a] sm:$0xff]
      %v2507 = vld [vmem:[%s1848 + $0x17a] sm:$0xff]
      %v2508 = vld [vmem:[%s1848 + $0x182] sm:$0xff]
      %v2509 = vld [vmem:[%s1848 + $0x1a2] sm:$0xff]
      %v2510 = vld [vmem:[%s1848 + $0x1aa] sm:$0xff]
      %v2511 = vld [vmem:[%s1848 + $0x1ca] sm:$0xff]
      %v2512 = vld [vmem:[%s1848 + $0x1d2] sm:$0xff]
      %v2513 = vld [vmem:[%s1848 + $0x1f2] sm:$0xff]
      %v2514 = vld [vmem:[%s1848 + $0x1fa] sm:$0xff]
      %v2515 = vld [vmem:[%s1848 + $0x21a] sm:$0xff]
      %v2516 = vld [vmem:[%s1848 + $0x222] sm:$0xff]
      %v2517 = vld [vmem:[%s1848 + $0x242] sm:$0xff]
      %v2518 = vld [vmem:[%s1848 + $0x24a] sm:$0xff]
      %v2519 = vld [vmem:[%s1848 + $0x26a] sm:$0xff]
      %v2520 = vld [vmem:[%s1848 + $0x272] sm:$0xff]
      %v2521 = vld [vmem:[%s1848 + $0x1] sm:$0xff]
      %v2522 = vld [vmem:[%s1848 + $0x9] sm:$0xff]
      %v2523 = vld [vmem:[%s1848 + $0x29] sm:$0xff]
      %v2524 = vld [vmem:[%s1848 + $0x31] sm:$0xff]
      %v2525 = vld [vmem:[%s1848 + $0x51] sm:$0xff]
      %v2526 = vld [vmem:[%s1848 + $0x59] sm:$0xff]
      %v2527 = vld [vmem:[%s1848 + $0x79] sm:$0xff]
      %v2528 = vld [vmem:[%s1848 + $0x81] sm:$0xff]
      %v2529 = vld [vmem:[%s1848 + $0xa1] sm:$0xff]
      %v2530 = vld [vmem:[%s1848 + $0xa9] sm:$0xff]
      %v2531 = vld [vmem:[%s1848 + $0xc9] sm:$0xff]
      %v2532 = vld [vmem:[%s1848 + $0xd1] sm:$0xff]
      %v2533 = vld [vmem:[%s1848 + $0xf1] sm:$0xff]
      %v2534 = vld [vmem:[%s1848 + $0xf9] sm:$0xff]
      %v2535 = vld [vmem:[%s1848 + $0x119] sm:$0xff]
      %v2536 = vld [vmem:[%s1848 + $0x121] sm:$0xff]
      %v2537 = vld [vmem:[%s1848 + $0x141] sm:$0xff]
      %v2538 = vld [vmem:[%s1848 + $0x149] sm:$0xff]
      %v2539 = vld [vmem:[%s1848 + $0x169] sm:$0xff]
      %v2540 = vld [vmem:[%s1848 + $0x171] sm:$0xff]
      %v2541 = vld [vmem:[%s1848 + $0x191] sm:$0xff]
      %v2542 = vld [vmem:[%s1848 + $0x199] sm:$0xff]
      %v2543 = vld [vmem:[%s1848 + $0x1b9] sm:$0xff]
      %v2544 = vld [vmem:[%s1848 + $0x1c1] sm:$0xff]
      %v2545 = vld [vmem:[%s1848 + $0x1e1] sm:$0xff]
      %v2546 = vld [vmem:[%s1848 + $0x1e9] sm:$0xff]
      %v2547 = vld [vmem:[%s1848 + $0x209] sm:$0xff]
      %v2548 = vld [vmem:[%s1848 + $0x211] sm:$0xff]
      %v2549 = vld [vmem:[%s1848 + $0x231] sm:$0xff]
      %v2550 = vld [vmem:[%s1848 + $0x239] sm:$0xff]
      %v2551 = vld [vmem:[%s1848 + $0x259] sm:$0xff]
      %v2552 = vld [vmem:[%s1848 + $0x261] sm:$0xff]
      %v2553 = vpack.c.bf16 %v2489, %v2489
      %v2554 = vpack.c.bf16 %v2490, %v2490
      %v2555 = vpack.c.bf16 %v2491, %v2491
      %v2556 = vpack.c.bf16 %v2492, %v2492
      %v2557 = vpack.c.bf16 %v2493, %v2493
      %v2558 = vpack.c.bf16 %v2494, %v2494
      %v2559 = vpack.c.bf16 %v2495, %v2495
      %v2560 = vpack.c.bf16 %v2496, %v2496
      %v2561 = vpack.c.bf16 %v2497, %v2497
      %v2562 = vpack.c.bf16 %v2498, %v2498
      %v2563 = vpack.c.bf16 %v2499, %v2499
      %v2564 = vpack.c.bf16 %v2500, %v2500
      %v2565 = vpack.c.bf16 %v2501, %v2501
      %v2566 = vpack.c.bf16 %v2502, %v2502
      %v2567 = vpack.c.bf16 %v2503, %v2503
      %v2568 = vpack.c.bf16 %v2504, %v2504
      %v2569 = vpack.c.bf16 %v2505, %v2505
      %v2570 = vpack.c.bf16 %v2506, %v2506
      %v2571 = vpack.c.bf16 %v2507, %v2507
      %v2572 = vpack.c.bf16 %v2508, %v2508
      %v2573 = vpack.c.bf16 %v2509, %v2509
      %v2574 = vpack.c.bf16 %v2510, %v2510
      %v2575 = vpack.c.bf16 %v2511, %v2511
      %v2576 = vpack.c.bf16 %v2512, %v2512
      %v2577 = vpack.c.bf16 %v2513, %v2513
      %v2578 = vpack.c.bf16 %v2514, %v2514
      %v2579 = vpack.c.bf16 %v2515, %v2515
      %v2580 = vpack.c.bf16 %v2516, %v2516
      %v2581 = vpack.c.bf16 %v2517, %v2517
      %v2582 = vpack.c.bf16 %v2518, %v2518
      %v2583 = vpack.c.bf16 %v2519, %v2519
      %v2584 = vpack.c.bf16 %v2520, %v2520
      %2617 = vrot.lane.b32.xlu0 %v2553, 64
      %v2618 = vpop.permute.xlu0 %2617
      %2619 = vrot.lane.b32.xlu0 %v2554, 64
      %v2620 = vpop.permute.xlu0 %2619
      %2621 = vrot.lane.b32.xlu0 %v2555, 64
      %v2622 = vpop.permute.xlu0 %2621
      %2623 = vrot.lane.b32.xlu0 %v2556, 64
      %v2624 = vpop.permute.xlu0 %2623
      %2625 = vrot.lane.b32.xlu0 %v2557, 64
      %v2626 = vpop.permute.xlu0 %2625
      %2627 = vrot.lane.b32.xlu0 %v2558, 64
      %v2628 = vpop.permute.xlu0 %2627
      %2629 = vrot.lane.b32.xlu0 %v2559, 64
      %v2630 = vpop.permute.xlu0 %2629
      %2631 = vrot.lane.b32.xlu0 %v2560, 64
      %v2632 = vpop.permute.xlu0 %2631
      %2633 = vrot.lane.b32.xlu0 %v2561, 64
      %v2634 = vpop.permute.xlu0 %2633
      %2635 = vrot.lane.b32.xlu0 %v2562, 64
      %v2636 = vpop.permute.xlu0 %2635
      %2637 = vrot.lane.b32.xlu0 %v2563, 64
      %v2638 = vpop.permute.xlu0 %2637
      %2639 = vrot.lane.b32.xlu0 %v2564, 64
      %v2640 = vpop.permute.xlu0 %2639
      %2641 = vrot.lane.b32.xlu0 %v2565, 64
      %v2642 = vpop.permute.xlu0 %2641
      %2643 = vrot.lane.b32.xlu0 %v2566, 64
      %v2644 = vpop.permute.xlu0 %2643
      %2645 = vrot.lane.b32.xlu0 %v2567, 64
      %v2646 = vpop.permute.xlu0 %2645
      %2647 = vrot.lane.b32.xlu0 %v2568, 64
      %v2648 = vpop.permute.xlu0 %2647
      %2649 = vrot.lane.b32.xlu0 %v2569, 64
      %v2650 = vpop.permute.xlu0 %2649
      %2651 = vrot.lane.b32.xlu0 %v2570, 64
      %v2652 = vpop.permute.xlu0 %2651
      %2653 = vrot.lane.b32.xlu0 %v2571, 64
      %v2654 = vpop.permute.xlu0 %2653
      %2655 = vrot.lane.b32.xlu0 %v2572, 64
      %v2656 = vpop.permute.xlu0 %2655
      %2657 = vrot.lane.b32.xlu0 %v2573, 64
      %v2658 = vpop.permute.xlu0 %2657
      %2659 = vrot.lane.b32.xlu0 %v2574, 64
      %v2660 = vpop.permute.xlu0 %2659
      %2661 = vrot.lane.b32.xlu0 %v2575, 64
      %v2662 = vpop.permute.xlu0 %2661
      %2663 = vrot.lane.b32.xlu0 %v2576, 64
      %v2664 = vpop.permute.xlu0 %2663
      %2665 = vrot.lane.b32.xlu0 %v2577, 64
      %v2666 = vpop.permute.xlu0 %2665
      %2667 = vrot.lane.b32.xlu0 %v2578, 64
      %v2668 = vpop.permute.xlu0 %2667
      %2669 = vrot.lane.b32.xlu0 %v2579, 64
      %v2670 = vpop.permute.xlu0 %2669
      %2671 = vrot.lane.b32.xlu0 %v2580, 64
      %v2672 = vpop.permute.xlu0 %2671
      %2673 = vrot.lane.b32.xlu0 %v2581, 64
      %v2674 = vpop.permute.xlu0 %2673
      %2675 = vrot.lane.b32.xlu0 %v2582, 64
      %v2676 = vpop.permute.xlu0 %2675
      %2677 = vrot.lane.b32.xlu0 %v2583, 64
      %v2678 = vpop.permute.xlu0 %2677
      %2679 = vrot.lane.b32.xlu0 %v2584, 64
      %v2680 = vpop.permute.xlu0 %2679
      %2713 = vst.msk [vmem:[#allocation3 + $0x8] sm:$0xf] %vm1431, %v2618
      %2714 = vst.msk [vmem:[#allocation3 + $0x1c] sm:$0xf] %vm1431, %v2620
      %2715 = vst.msk [vmem:[#allocation3 + $0x30] sm:$0xf] %vm1431, %v2622
      %2716 = vst.msk [vmem:[#allocation3 + $0x44] sm:$0xf] %vm1431, %v2624
      %2717 = vst.msk [vmem:[#allocation3 + $0x58] sm:$0xf] %vm1431, %v2626
      %2718 = vst.msk [vmem:[#allocation3 + $0x6c] sm:$0xf] %vm1431, %v2628
      %2719 = vst.msk [vmem:[#allocation3 + $0x80] sm:$0xf] %vm1431, %v2630
      %2720 = vst.msk [vmem:[#allocation3 + $0x94] sm:$0xf] %vm1431, %v2632
      %2721 = vst.msk [vmem:[#allocation3 + $0xa8] sm:$0xf] %vm1431, %v2634
      %2722 = vst.msk [vmem:[#allocation3 + $0xbc] sm:$0xf] %vm1431, %v2636
      %2723 = vst.msk [vmem:[#allocation3 + $0xd0] sm:$0xf] %vm1431, %v2638
      %2724 = vst.msk [vmem:[#allocation3 + $0xe4] sm:$0xf] %vm1431, %v2640
      %2725 = vst.msk [vmem:[#allocation3 + $0xf8] sm:$0xf] %vm1431, %v2642
      %2726 = vst.msk [vmem:[#allocation3 + $0x10c] sm:$0xf] %vm1431, %v2644
      %2727 = vst.msk [vmem:[#allocation3 + $0x120] sm:$0xf] %vm1431, %v2646
      %2728 = vst.msk [vmem:[#allocation3 + $0x134] sm:$0xf] %vm1431, %v2648
      %2729 = vst.msk [vmem:[#allocation3 + $0x148] sm:$0xf] %vm1431, %v2650
      %2730 = vst.msk [vmem:[#allocation3 + $0x15c] sm:$0xf] %vm1431, %v2652
      %2731 = vst.msk [vmem:[#allocation3 + $0x170] sm:$0xf] %vm1431, %v2654
      %2732 = vst.msk [vmem:[#allocation3 + $0x184] sm:$0xf] %vm1431, %v2656
      %2733 = vst.msk [vmem:[#allocation3 + $0x198] sm:$0xf] %vm1431, %v2658
      %2734 = vst.msk [vmem:[#allocation3 + $0x1ac] sm:$0xf] %vm1431, %v2660
      %2735 = vst.msk [vmem:[#allocation3 + $0x1c0] sm:$0xf] %vm1431, %v2662
      %2736 = vst.msk [vmem:[#allocation3 + $0x1d4] sm:$0xf] %vm1431, %v2664
      %2737 = vst.msk [vmem:[#allocation3 + $0x1e8] sm:$0xf] %vm1431, %v2666
      %2738 = vst.msk [vmem:[#allocation3 + $0x1fc] sm:$0xf] %vm1431, %v2668
      %2739 = vst.msk [vmem:[#allocation3 + $0x210] sm:$0xf] %vm1431, %v2670
      %2740 = vst.msk [vmem:[#allocation3 + $0x224] sm:$0xf] %vm1431, %v2672
      %2741 = vst.msk [vmem:[#allocation3 + $0x238] sm:$0xf] %vm1431, %v2674
      %2742 = vst.msk [vmem:[#allocation3 + $0x24c] sm:$0xf] %vm1431, %v2676
      %2743 = vst.msk [vmem:[#allocation3 + $0x260] sm:$0xf] %vm1431, %v2678
      %2744 = vst.msk [vmem:[#allocation3 + $0x274] sm:$0xf] %vm1431, %v2680
      %v2745 = vpack.c.bf16 %v2521, %v2521
      %v2746 = vpack.c.bf16 %v2522, %v2522
      %v2747 = vpack.c.bf16 %v2523, %v2523
      %v2748 = vpack.c.bf16 %v2524, %v2524
      %v2749 = vpack.c.bf16 %v2525, %v2525
      %v2750 = vpack.c.bf16 %v2526, %v2526
      %v2751 = vpack.c.bf16 %v2527, %v2527
      %v2752 = vpack.c.bf16 %v2528, %v2528
      %v2753 = vpack.c.bf16 %v2529, %v2529
      %v2754 = vpack.c.bf16 %v2530, %v2530
      %v2755 = vpack.c.bf16 %v2531, %v2531
      %v2756 = vpack.c.bf16 %v2532, %v2532
      %v2757 = vpack.c.bf16 %v2533, %v2533
      %v2758 = vpack.c.bf16 %v2534, %v2534
      %v2759 = vpack.c.bf16 %v2535, %v2535
      %v2760 = vpack.c.bf16 %v2536, %v2536
      %v2761 = vpack.c.bf16 %v2537, %v2537
      %v2762 = vpack.c.bf16 %v2538, %v2538
      %v2763 = vpack.c.bf16 %v2539, %v2539
      %v2764 = vpack.c.bf16 %v2540, %v2540
      %v2765 = vpack.c.bf16 %v2541, %v2541
      %v2766 = vpack.c.bf16 %v2542, %v2542
      %v2767 = vpack.c.bf16 %v2543, %v2543
      %v2768 = vpack.c.bf16 %v2544, %v2544
      %v2769 = vpack.c.bf16 %v2545, %v2545
      %v2770 = vpack.c.bf16 %v2546, %v2546
      %v2771 = vpack.c.bf16 %v2547, %v2547
      %v2772 = vpack.c.bf16 %v2548, %v2548
      %v2773 = vpack.c.bf16 %v2549, %v2549
      %v2774 = vpack.c.bf16 %v2550, %v2550
      %v2775 = vpack.c.bf16 %v2551, %v2551
      %v2776 = vpack.c.bf16 %v2552, %v2552
      %2809 = vrot.lane.b32.xlu0 %v2745, 64
      %v2810 = vpop.permute.xlu0 %2809
      %2811 = vrot.lane.b32.xlu0 %v2746, 64
      %v2812 = vpop.permute.xlu0 %2811
      %2813 = vrot.lane.b32.xlu0 %v2747, 64
      %v2814 = vpop.permute.xlu0 %2813
      %2815 = vrot.lane.b32.xlu0 %v2748, 64
      %v2816 = vpop.permute.xlu0 %2815
      %2817 = vrot.lane.b32.xlu0 %v2749, 64
      %v2818 = vpop.permute.xlu0 %2817
      %2819 = vrot.lane.b32.xlu0 %v2750, 64
      %v2820 = vpop.permute.xlu0 %2819
      %2821 = vrot.lane.b32.xlu0 %v2751, 64
      %v2822 = vpop.permute.xlu0 %2821
      %2823 = vrot.lane.b32.xlu0 %v2752, 64
      %v2824 = vpop.permute.xlu0 %2823
      %2825 = vrot.lane.b32.xlu0 %v2753, 64
      %v2826 = vpop.permute.xlu0 %2825
      %2827 = vrot.lane.b32.xlu0 %v2754, 64
      %v2828 = vpop.permute.xlu0 %2827
      %2829 = vrot.lane.b32.xlu0 %v2755, 64
      %v2830 = vpop.permute.xlu0 %2829
      %2831 = vrot.lane.b32.xlu0 %v2756, 64
      %v2832 = vpop.permute.xlu0 %2831
      %2833 = vrot.lane.b32.xlu0 %v2757, 64
      %v2834 = vpop.permute.xlu0 %2833
      %2835 = vrot.lane.b32.xlu0 %v2758, 64
      %v2836 = vpop.permute.xlu0 %2835
      %2837 = vrot.lane.b32.xlu0 %v2759, 64
      %v2838 = vpop.permute.xlu0 %2837
      %2839 = vrot.lane.b32.xlu0 %v2760, 64
      %v2840 = vpop.permute.xlu0 %2839
      %2841 = vrot.lane.b32.xlu0 %v2761, 64
      %v2842 = vpop.permute.xlu0 %2841
      %2843 = vrot.lane.b32.xlu0 %v2762, 64
      %v2844 = vpop.permute.xlu0 %2843
      %2845 = vrot.lane.b32.xlu0 %v2763, 64
      %v2846 = vpop.permute.xlu0 %2845
      %2847 = vrot.lane.b32.xlu0 %v2764, 64
      %v2848 = vpop.permute.xlu0 %2847
      %2849 = vrot.lane.b32.xlu0 %v2765, 64
      %v2850 = vpop.permute.xlu0 %2849
      %2851 = vrot.lane.b32.xlu0 %v2766, 64
      %v2852 = vpop.permute.xlu0 %2851
      %2853 = vrot.lane.b32.xlu0 %v2767, 64
      %v2854 = vpop.permute.xlu0 %2853
      %2855 = vrot.lane.b32.xlu0 %v2768, 64
      %v2856 = vpop.permute.xlu0 %2855
      %2857 = vrot.lane.b32.xlu0 %v2769, 64
      %v2858 = vpop.permute.xlu0 %2857
      %2859 = vrot.lane.b32.xlu0 %v2770, 64
      %v2860 = vpop.permute.xlu0 %2859
      %2861 = vrot.lane.b32.xlu0 %v2771, 64
      %v2862 = vpop.permute.xlu0 %2861
      %2863 = vrot.lane.b32.xlu0 %v2772, 64
      %v2864 = vpop.permute.xlu0 %2863
      %2865 = vrot.lane.b32.xlu0 %v2773, 64
      %v2866 = vpop.permute.xlu0 %2865
      %2867 = vrot.lane.b32.xlu0 %v2774, 64
      %v2868 = vpop.permute.xlu0 %2867
      %2869 = vrot.lane.b32.xlu0 %v2775, 64
      %v2870 = vpop.permute.xlu0 %2869
      %2871 = vrot.lane.b32.xlu0 %v2776, 64
      %v2872 = vpop.permute.xlu0 %2871
      %2905 = vst.msk [vmem:[#allocation4 + $0x8] sm:$0xf] %vm1431, %v2810
      %2906 = vst.msk [vmem:[#allocation4 + $0x1c] sm:$0xf] %vm1431, %v2812
      %2907 = vst.msk [vmem:[#allocation4 + $0x30] sm:$0xf] %vm1431, %v2814
      %2908 = vst.msk [vmem:[#allocation4 + $0x44] sm:$0xf] %vm1431, %v2816
      %2909 = vst.msk [vmem:[#allocation4 + $0x58] sm:$0xf] %vm1431, %v2818
      %2910 = vst.msk [vmem:[#allocation4 + $0x6c] sm:$0xf] %vm1431, %v2820
      %2911 = vst.msk [vmem:[#allocation4 + $0x80] sm:$0xf] %vm1431, %v2822
      %2912 = vst.msk [vmem:[#allocation4 + $0x94] sm:$0xf] %vm1431, %v2824
      %2913 = vst.msk [vmem:[#allocation4 + $0xa8] sm:$0xf] %vm1431, %v2826
      %2914 = vst.msk [vmem:[#allocation4 + $0xbc] sm:$0xf] %vm1431, %v2828
      %2915 = vst.msk [vmem:[#allocation4 + $0xd0] sm:$0xf] %vm1431, %v2830
      %2916 = vst.msk [vmem:[#allocation4 + $0xe4] sm:$0xf] %vm1431, %v2832
      %2917 = vst.msk [vmem:[#allocation4 + $0xf8] sm:$0xf] %vm1431, %v2834
      %2918 = vst.msk [vmem:[#allocation4 + $0x10c] sm:$0xf] %vm1431, %v2836
      %2919 = vst.msk [vmem:[#allocation4 + $0x120] sm:$0xf] %vm1431, %v2838
      %2920 = vst.msk [vmem:[#allocation4 + $0x134] sm:$0xf] %vm1431, %v2840
      %2921 = vst.msk [vmem:[#allocation4 + $0x148] sm:$0xf] %vm1431, %v2842
      %2922 = vst.msk [vmem:[#allocation4 + $0x15c] sm:$0xf] %vm1431, %v2844
      %2923 = vst.msk [vmem:[#allocation4 + $0x170] sm:$0xf] %vm1431, %v2846
      %2924 = vst.msk [vmem:[#allocation4 + $0x184] sm:$0xf] %vm1431, %v2848
      %2925 = vst.msk [vmem:[#allocation4 + $0x198] sm:$0xf] %vm1431, %v2850
      %2926 = vst.msk [vmem:[#allocation4 + $0x1ac] sm:$0xf] %vm1431, %v2852
      %2927 = vst.msk [vmem:[#allocation4 + $0x1c0] sm:$0xf] %vm1431, %v2854
      %2928 = vst.msk [vmem:[#allocation4 + $0x1d4] sm:$0xf] %vm1431, %v2856
      %2929 = vst.msk [vmem:[#allocation4 + $0x1e8] sm:$0xf] %vm1431, %v2858
      %2930 = vst.msk [vmem:[#allocation4 + $0x1fc] sm:$0xf] %vm1431, %v2860
      %2931 = vst.msk [vmem:[#allocation4 + $0x210] sm:$0xf] %vm1431, %v2862
      %2932 = vst.msk [vmem:[#allocation4 + $0x224] sm:$0xf] %vm1431, %v2864
      %2933 = vst.msk [vmem:[#allocation4 + $0x238] sm:$0xf] %vm1431, %v2866
      %2934 = vst.msk [vmem:[#allocation4 + $0x24c] sm:$0xf] %vm1431, %v2868
      %2935 = vst.msk [vmem:[#allocation4 + $0x260] sm:$0xf] %vm1431, %v2870
      %2936 = vst.msk [vmem:[#allocation4 + $0x274] sm:$0xf] %vm1431, %v2872
      %s2937 = scalar_lea.vmem [#allocation2], 80
      %v2938 = vld [vmem:[%s2937 + $0x11] sm:$0xff]
      %v2939 = vld [vmem:[%s2937 + $0x19] sm:$0xff]
      %v2940 = vld [vmem:[%s2937 + $0x39] sm:$0xff]
      %v2941 = vld [vmem:[%s2937 + $0x41] sm:$0xff]
      %v2942 = vld [vmem:[%s2937 + $0x61] sm:$0xff]
      %v2943 = vld [vmem:[%s2937 + $0x69] sm:$0xff]
      %v2944 = vld [vmem:[%s2937 + $0x89] sm:$0xff]
      %v2945 = vld [vmem:[%s2937 + $0x91] sm:$0xff]
      %v2946 = vld [vmem:[%s2937 + $0xb1] sm:$0xff]
      %v2947 = vld [vmem:[%s2937 + $0xb9] sm:$0xff]
      %v2948 = vld [vmem:[%s2937 + $0xd9] sm:$0xff]
      %v2949 = vld [vmem:[%s2937 + $0xe1] sm:$0xff]
      %v2950 = vld [vmem:[%s2937 + $0x101] sm:$0xff]
      %v2951 = vld [vmem:[%s2937 + $0x109] sm:$0xff]
      %v2952 = vld [vmem:[%s2937 + $0x129] sm:$0xff]
      %v2953 = vld [vmem:[%s2937 + $0x131] sm:$0xff]
      %v2954 = vld [vmem:[%s2937 + $0x151] sm:$0xff]
      %v2955 = vld [vmem:[%s2937 + $0x159] sm:$0xff]
      %v2956 = vld [vmem:[%s2937 + $0x179] sm:$0xff]
      %v2957 = vld [vmem:[%s2937 + $0x181] sm:$0xff]
      %v2958 = vld [vmem:[%s2937 + $0x1a1] sm:$0xff]
      %v2959 = vld [vmem:[%s2937 + $0x1a9] sm:$0xff]
      %v2960 = vld [vmem:[%s2937 + $0x1c9] sm:$0xff]
      %v2961 = vld [vmem:[%s2937 + $0x1d1] sm:$0xff]
      %v2962 = vld [vmem:[%s2937 + $0x1f1] sm:$0xff]
      %v2963 = vld [vmem:[%s2937 + $0x1f9] sm:$0xff]
      %v2964 = vld [vmem:[%s2937 + $0x219] sm:$0xff]
      %v2965 = vld [vmem:[%s2937 + $0x221] sm:$0xff]
      %v2966 = vld [vmem:[%s2937 + $0x241] sm:$0xff]
      %v2967 = vld [vmem:[%s2937 + $0x249] sm:$0xff]
      %v2968 = vld [vmem:[%s2937 + $0x269] sm:$0xff]
      %v2969 = vld [vmem:[%s2937 + $0x271] sm:$0xff]
      %v2970 = vld [vmem:[%s2937] sm:$0xff]
      %v2971 = vld [vmem:[%s2937 + $0x8] sm:$0xff]
      %v2972 = vld [vmem:[%s2937 + $0x28] sm:$0xff]
      %v2973 = vld [vmem:[%s2937 + $0x30] sm:$0xff]
      %v2974 = vld [vmem:[%s2937 + $0x50] sm:$0xff]
      %v2975 = vld [vmem:[%s2937 + $0x58] sm:$0xff]
      %v2976 = vld [vmem:[%s2937 + $0x78] sm:$0xff]
      %v2977 = vld [vmem:[%s2937 + $0x80] sm:$0xff]
      %v2978 = vld [vmem:[%s2937 + $0xa0] sm:$0xff]
      %v2979 = vld [vmem:[%s2937 + $0xa8] sm:$0xff]
      %v2980 = vld [vmem:[%s2937 + $0xc8] sm:$0xff]
      %v2981 = vld [vmem:[%s2937 + $0xd0] sm:$0xff]
      %v2982 = vld [vmem:[%s2937 + $0xf0] sm:$0xff]
      %v2983 = vld [vmem:[%s2937 + $0xf8] sm:$0xff]
      %v2984 = vld [vmem:[%s2937 + $0x118] sm:$0xff]
      %v2985 = vld [vmem:[%s2937 + $0x120] sm:$0xff]
      %v2986 = vld [vmem:[%s2937 + $0x140] sm:$0xff]
      %v2987 = vld [vmem:[%s2937 + $0x148] sm:$0xff]
      %v2988 = vld [vmem:[%s2937 + $0x168] sm:$0xff]
      %v2989 = vld [vmem:[%s2937 + $0x170] sm:$0xff]
      %v2990 = vld [vmem:[%s2937 + $0x190] sm:$0xff]
      %v2991 = vld [vmem:[%s2937 + $0x198] sm:$0xff]
      %v2992 = vld [vmem:[%s2937 + $0x1b8] sm:$0xff]
      %v2993 = vld [vmem:[%s2937 + $0x1c0] sm:$0xff]
      %v2994 = vld [vmem:[%s2937 + $0x1e0] sm:$0xff]
      %v2995 = vld [vmem:[%s2937 + $0x1e8] sm:$0xff]
      %v2996 = vld [vmem:[%s2937 + $0x208] sm:$0xff]
      %v2997 = vld [vmem:[%s2937 + $0x210] sm:$0xff]
      %v2998 = vld [vmem:[%s2937 + $0x230] sm:$0xff]
      %v2999 = vld [vmem:[%s2937 + $0x238] sm:$0xff]
      %v3000 = vld [vmem:[%s2937 + $0x258] sm:$0xff]
      %v3001 = vld [vmem:[%s2937 + $0x260] sm:$0xff]
      %v3002 = vpack.c.bf16 %v2938, %v2938
      %v3003 = vpack.c.bf16 %v2939, %v2939
      %v3004 = vpack.c.bf16 %v2940, %v2940
      %v3005 = vpack.c.bf16 %v2941, %v2941
      %v3006 = vpack.c.bf16 %v2942, %v2942
      %v3007 = vpack.c.bf16 %v2943, %v2943
      %v3008 = vpack.c.bf16 %v2944, %v2944
      %v3009 = vpack.c.bf16 %v2945, %v2945
      %v3010 = vpack.c.bf16 %v2946, %v2946
      %v3011 = vpack.c.bf16 %v2947, %v2947
      %v3012 = vpack.c.bf16 %v2948, %v2948
      %v3013 = vpack.c.bf16 %v2949, %v2949
      %v3014 = vpack.c.bf16 %v2950, %v2950
      %v3015 = vpack.c.bf16 %v2951, %v2951
      %v3016 = vpack.c.bf16 %v2952, %v2952
      %v3017 = vpack.c.bf16 %v2953, %v2953
      %v3018 = vpack.c.bf16 %v2954, %v2954
      %v3019 = vpack.c.bf16 %v2955, %v2955
      %v3020 = vpack.c.bf16 %v2956, %v2956
      %v3021 = vpack.c.bf16 %v2957, %v2957
      %v3022 = vpack.c.bf16 %v2958, %v2958
      %v3023 = vpack.c.bf16 %v2959, %v2959
      %v3024 = vpack.c.bf16 %v2960, %v2960
      %v3025 = vpack.c.bf16 %v2961, %v2961
      %v3026 = vpack.c.bf16 %v2962, %v2962
      %v3027 = vpack.c.bf16 %v2963, %v2963
      %v3028 = vpack.c.bf16 %v2964, %v2964
      %v3029 = vpack.c.bf16 %v2965, %v2965
      %v3030 = vpack.c.bf16 %v2966, %v2966
      %v3031 = vpack.c.bf16 %v2967, %v2967
      %v3032 = vpack.c.bf16 %v2968, %v2968
      %v3033 = vpack.c.bf16 %v2969, %v2969
      %3034 = vst.msk [vmem:[#allocation3 + $0xc] sm:$0xf] %vm1110, %v3002
      %3035 = vst.msk [vmem:[#allocation3 + $0x20] sm:$0xf] %vm1110, %v3003
      %3036 = vst.msk [vmem:[#allocation3 + $0x34] sm:$0xf] %vm1110, %v3004
      %3037 = vst.msk [vmem:[#allocation3 + $0x48] sm:$0xf] %vm1110, %v3005
      %3038 = vst.msk [vmem:[#allocation3 + $0x5c] sm:$0xf] %vm1110, %v3006
      %3039 = vst.msk [vmem:[#allocation3 + $0x70] sm:$0xf] %vm1110, %v3007
      %3040 = vst.msk [vmem:[#allocation3 + $0x84] sm:$0xf] %vm1110, %v3008
      %3041 = vst.msk [vmem:[#allocation3 + $0x98] sm:$0xf] %vm1110, %v3009
      %3042 = vst.msk [vmem:[#allocation3 + $0xac] sm:$0xf] %vm1110, %v3010
      %3043 = vst.msk [vmem:[#allocation3 + $0xc0] sm:$0xf] %vm1110, %v3011
      %3044 = vst.msk [vmem:[#allocation3 + $0xd4] sm:$0xf] %vm1110, %v3012
      %3045 = vst.msk [vmem:[#allocation3 + $0xe8] sm:$0xf] %vm1110, %v3013
      %3046 = vst.msk [vmem:[#allocation3 + $0xfc] sm:$0xf] %vm1110, %v3014
      %3047 = vst.msk [vmem:[#allocation3 + $0x110] sm:$0xf] %vm1110, %v3015
      %3048 = vst.msk [vmem:[#allocation3 + $0x124] sm:$0xf] %vm1110, %v3016
      %3049 = vst.msk [vmem:[#allocation3 + $0x138] sm:$0xf] %vm1110, %v3017
      %3050 = vst.msk [vmem:[#allocation3 + $0x14c] sm:$0xf] %vm1110, %v3018
      %3051 = vst.msk [vmem:[#allocation3 + $0x160] sm:$0xf] %vm1110, %v3019
      %3052 = vst.msk [vmem:[#allocation3 + $0x174] sm:$0xf] %vm1110, %v3020
      %3053 = vst.msk [vmem:[#allocation3 + $0x188] sm:$0xf] %vm1110, %v3021
      %3054 = vst.msk [vmem:[#allocation3 + $0x19c] sm:$0xf] %vm1110, %v3022
      %3055 = vst.msk [vmem:[#allocation3 + $0x1b0] sm:$0xf] %vm1110, %v3023
      %3056 = vst.msk [vmem:[#allocation3 + $0x1c4] sm:$0xf] %vm1110, %v3024
      %3057 = vst.msk [vmem:[#allocation3 + $0x1d8] sm:$0xf] %vm1110, %v3025
      %3058 = vst.msk [vmem:[#allocation3 + $0x1ec] sm:$0xf] %vm1110, %v3026
      %3059 = vst.msk [vmem:[#allocation3 + $0x200] sm:$0xf] %vm1110, %v3027
      %3060 = vst.msk [vmem:[#allocation3 + $0x214] sm:$0xf] %vm1110, %v3028
      %3061 = vst.msk [vmem:[#allocation3 + $0x228] sm:$0xf] %vm1110, %v3029
      %3062 = vst.msk [vmem:[#allocation3 + $0x23c] sm:$0xf] %vm1110, %v3030
      %3063 = vst.msk [vmem:[#allocation3 + $0x250] sm:$0xf] %vm1110, %v3031
      %3064 = vst.msk [vmem:[#allocation3 + $0x264] sm:$0xf] %vm1110, %v3032
      %3065 = vst.msk [vmem:[#allocation3 + $0x278] sm:$0xf] %vm1110, %v3033
      %v3066 = vpack.c.bf16 %v2970, %v2970
      %v3067 = vpack.c.bf16 %v2971, %v2971
      %v3068 = vpack.c.bf16 %v2972, %v2972
      %v3069 = vpack.c.bf16 %v2973, %v2973
      %v3070 = vpack.c.bf16 %v2974, %v2974
      %v3071 = vpack.c.bf16 %v2975, %v2975
      %v3072 = vpack.c.bf16 %v2976, %v2976
      %v3073 = vpack.c.bf16 %v2977, %v2977
      %v3074 = vpack.c.bf16 %v2978, %v2978
      %v3075 = vpack.c.bf16 %v2979, %v2979
      %v3076 = vpack.c.bf16 %v2980, %v2980
      %v3077 = vpack.c.bf16 %v2981, %v2981
      %v3078 = vpack.c.bf16 %v2982, %v2982
      %v3079 = vpack.c.bf16 %v2983, %v2983
      %v3080 = vpack.c.bf16 %v2984, %v2984
      %v3081 = vpack.c.bf16 %v2985, %v2985
      %v3082 = vpack.c.bf16 %v2986, %v2986
      %v3083 = vpack.c.bf16 %v2987, %v2987
      %v3084 = vpack.c.bf16 %v2988, %v2988
      %v3085 = vpack.c.bf16 %v2989, %v2989
      %v3086 = vpack.c.bf16 %v2990, %v2990
      %v3087 = vpack.c.bf16 %v2991, %v2991
      %v3088 = vpack.c.bf16 %v2992, %v2992
      %v3089 = vpack.c.bf16 %v2993, %v2993
      %v3090 = vpack.c.bf16 %v2994, %v2994
      %v3091 = vpack.c.bf16 %v2995, %v2995
      %v3092 = vpack.c.bf16 %v2996, %v2996
      %v3093 = vpack.c.bf16 %v2997, %v2997
      %v3094 = vpack.c.bf16 %v2998, %v2998
      %v3095 = vpack.c.bf16 %v2999, %v2999
      %v3096 = vpack.c.bf16 %v3000, %v3000
      %v3097 = vpack.c.bf16 %v3001, %v3001
      %3098 = vst.msk [vmem:[#allocation4 + $0xc] sm:$0xf] %vm1110, %v3066
      %3099 = vst.msk [vmem:[#allocation4 + $0x20] sm:$0xf] %vm1110, %v3067
      %3100 = vst.msk [vmem:[#allocation4 + $0x34] sm:$0xf] %vm1110, %v3068
      %3101 = vst.msk [vmem:[#allocation4 + $0x48] sm:$0xf] %vm1110, %v3069
      %3102 = vst.msk [vmem:[#allocation4 + $0x5c] sm:$0xf] %vm1110, %v3070
      %3103 = vst.msk [vmem:[#allocation4 + $0x70] sm:$0xf] %vm1110, %v3071
      %3104 = vst.msk [vmem:[#allocation4 + $0x84] sm:$0xf] %vm1110, %v3072
      %3105 = vst.msk [vmem:[#allocation4 + $0x98] sm:$0xf] %vm1110, %v3073
      %3106 = vst.msk [vmem:[#allocation4 + $0xac] sm:$0xf] %vm1110, %v3074
      %3107 = vst.msk [vmem:[#allocation4 + $0xc0] sm:$0xf] %vm1110, %v3075
      %3108 = vst.msk [vmem:[#allocation4 + $0xd4] sm:$0xf] %vm1110, %v3076
      %3109 = vst.msk [vmem:[#allocation4 + $0xe8] sm:$0xf] %vm1110, %v3077
      %3110 = vst.msk [vmem:[#allocation4 + $0xfc] sm:$0xf] %vm1110, %v3078
      %3111 = vst.msk [vmem:[#allocation4 + $0x110] sm:$0xf] %vm1110, %v3079
      %3112 = vst.msk [vmem:[#allocation4 + $0x124] sm:$0xf] %vm1110, %v3080
      %3113 = vst.msk [vmem:[#allocation4 + $0x138] sm:$0xf] %vm1110, %v3081
      %3114 = vst.msk [vmem:[#allocation4 + $0x14c] sm:$0xf] %vm1110, %v3082
      %3115 = vst.msk [vmem:[#allocation4 + $0x160] sm:$0xf] %vm1110, %v3083
      %3116 = vst.msk [vmem:[#allocation4 + $0x174] sm:$0xf] %vm1110, %v3084
      %3117 = vst.msk [vmem:[#allocation4 + $0x188] sm:$0xf] %vm1110, %v3085
      %3118 = vst.msk [vmem:[#allocation4 + $0x19c] sm:$0xf] %vm1110, %v3086
      %3119 = vst.msk [vmem:[#allocation4 + $0x1b0] sm:$0xf] %vm1110, %v3087
      %3120 = vst.msk [vmem:[#allocation4 + $0x1c4] sm:$0xf] %vm1110, %v3088
      %3121 = vst.msk [vmem:[#allocation4 + $0x1d8] sm:$0xf] %vm1110, %v3089
      %3122 = vst.msk [vmem:[#allocation4 + $0x1ec] sm:$0xf] %vm1110, %v3090
      %3123 = vst.msk [vmem:[#allocation4 + $0x200] sm:$0xf] %vm1110, %v3091
      %3124 = vst.msk [vmem:[#allocation4 + $0x214] sm:$0xf] %vm1110, %v3092
      %3125 = vst.msk [vmem:[#allocation4 + $0x228] sm:$0xf] %vm1110, %v3093
      %3126 = vst.msk [vmem:[#allocation4 + $0x23c] sm:$0xf] %vm1110, %v3094
      %3127 = vst.msk [vmem:[#allocation4 + $0x250] sm:$0xf] %vm1110, %v3095
      %3128 = vst.msk [vmem:[#allocation4 + $0x264] sm:$0xf] %vm1110, %v3096
      %3129 = vst.msk [vmem:[#allocation4 + $0x278] sm:$0xf] %vm1110, %v3097
      %v3130 = vld [vmem:[%s2937] sm:$0xff]
      %v3131 = vld [vmem:[%s2937 + $0x8] sm:$0xff]
      %v3132 = vld [vmem:[%s2937 + $0x28] sm:$0xff]
      %v3133 = vld [vmem:[%s2937 + $0x30] sm:$0xff]
      %v3134 = vld [vmem:[%s2937 + $0x50] sm:$0xff]
      %v3135 = vld [vmem:[%s2937 + $0x58] sm:$0xff]
      %v3136 = vld [vmem:[%s2937 + $0x78] sm:$0xff]
      %v3137 = vld [vmem:[%s2937 + $0x80] sm:$0xff]
      %v3138 = vld [vmem:[%s2937 + $0xa0] sm:$0xff]
      %v3139 = vld [vmem:[%s2937 + $0xa8] sm:$0xff]
      %v3140 = vld [vmem:[%s2937 + $0xc8] sm:$0xff]
      %v3141 = vld [vmem:[%s2937 + $0xd0] sm:$0xff]
      %v3142 = vld [vmem:[%s2937 + $0xf0] sm:$0xff]
      %v3143 = vld [vmem:[%s2937 + $0xf8] sm:$0xff]
      %v3144 = vld [vmem:[%s2937 + $0x118] sm:$0xff]
      %v3145 = vld [vmem:[%s2937 + $0x120] sm:$0xff]
      %v3146 = vld [vmem:[%s2937 + $0x140] sm:$0xff]
      %v3147 = vld [vmem:[%s2937 + $0x148] sm:$0xff]
      %v3148 = vld [vmem:[%s2937 + $0x168] sm:$0xff]
      %v3149 = vld [vmem:[%s2937 + $0x170] sm:$0xff]
      %v3150 = vld [vmem:[%s2937 + $0x190] sm:$0xff]
      %v3151 = vld [vmem:[%s2937 + $0x198] sm:$0xff]
      %v3152 = vld [vmem:[%s2937 + $0x1b8] sm:$0xff]
      %v3153 = vld [vmem:[%s2937 + $0x1c0] sm:$0xff]
      %v3154 = vld [vmem:[%s2937 + $0x1e0] sm:$0xff]
      %v3155 = vld [vmem:[%s2937 + $0x1e8] sm:$0xff]
      %v3156 = vld [vmem:[%s2937 + $0x208] sm:$0xff]
      %v3157 = vld [vmem:[%s2937 + $0x210] sm:$0xff]
      %v3158 = vld [vmem:[%s2937 + $0x230] sm:$0xff]
      %v3159 = vld [vmem:[%s2937 + $0x238] sm:$0xff]
      %v3160 = vld [vmem:[%s2937 + $0x258] sm:$0xff]
      %v3161 = vld [vmem:[%s2937 + $0x260] sm:$0xff]
      %v3162 = vld [vmem:[%s2937 + $0x12] sm:$0xff]
      %v3163 = vld [vmem:[%s2937 + $0x1a] sm:$0xff]
      %v3164 = vld [vmem:[%s2937 + $0x3a] sm:$0xff]
      %v3165 = vld [vmem:[%s2937 + $0x42] sm:$0xff]
      %v3166 = vld [vmem:[%s2937 + $0x62] sm:$0xff]
      %v3167 = vld [vmem:[%s2937 + $0x6a] sm:$0xff]
      %v3168 = vld [vmem:[%s2937 + $0x8a] sm:$0xff]
      %v3169 = vld [vmem:[%s2937 + $0x92] sm:$0xff]
      %v3170 = vld [vmem:[%s2937 + $0xb2] sm:$0xff]
      %v3171 = vld [vmem:[%s2937 + $0xba] sm:$0xff]
      %v3172 = vld [vmem:[%s2937 + $0xda] sm:$0xff]
      %v3173 = vld [vmem:[%s2937 + $0xe2] sm:$0xff]
      %v3174 = vld [vmem:[%s2937 + $0x102] sm:$0xff]
      %v3175 = vld [vmem:[%s2937 + $0x10a] sm:$0xff]
      %v3176 = vld [vmem:[%s2937 + $0x12a] sm:$0xff]
      %v3177 = vld [vmem:[%s2937 + $0x132] sm:$0xff]
      %v3178 = vld [vmem:[%s2937 + $0x152] sm:$0xff]
      %v3179 = vld [vmem:[%s2937 + $0x15a] sm:$0xff]
      %v3180 = vld [vmem:[%s2937 + $0x17a] sm:$0xff]
      %v3181 = vld [vmem:[%s2937 + $0x182] sm:$0xff]
      %v3182 = vld [vmem:[%s2937 + $0x1a2] sm:$0xff]
      %v3183 = vld [vmem:[%s2937 + $0x1aa] sm:$0xff]
      %v3184 = vld [vmem:[%s2937 + $0x1ca] sm:$0xff]
      %v3185 = vld [vmem:[%s2937 + $0x1d2] sm:$0xff]
      %v3186 = vld [vmem:[%s2937 + $0x1f2] sm:$0xff]
      %v3187 = vld [vmem:[%s2937 + $0x1fa] sm:$0xff]
      %v3188 = vld [vmem:[%s2937 + $0x21a] sm:$0xff]
      %v3189 = vld [vmem:[%s2937 + $0x222] sm:$0xff]
      %v3190 = vld [vmem:[%s2937 + $0x242] sm:$0xff]
      %v3191 = vld [vmem:[%s2937 + $0x24a] sm:$0xff]
      %v3192 = vld [vmem:[%s2937 + $0x26a] sm:$0xff]
      %v3193 = vld [vmem:[%s2937 + $0x272] sm:$0xff]
      %v3194 = vpack.c.bf16 %v3130, %v3130
      %v3195 = vpack.c.bf16 %v3131, %v3131
      %v3196 = vpack.c.bf16 %v3132, %v3132
      %v3197 = vpack.c.bf16 %v3133, %v3133
      %v3198 = vpack.c.bf16 %v3134, %v3134
      %v3199 = vpack.c.bf16 %v3135, %v3135
      %v3200 = vpack.c.bf16 %v3136, %v3136
      %v3201 = vpack.c.bf16 %v3137, %v3137
      %v3202 = vpack.c.bf16 %v3138, %v3138
      %v3203 = vpack.c.bf16 %v3139, %v3139
      %v3204 = vpack.c.bf16 %v3140, %v3140
      %v3205 = vpack.c.bf16 %v3141, %v3141
      %v3206 = vpack.c.bf16 %v3142, %v3142
      %v3207 = vpack.c.bf16 %v3143, %v3143
      %v3208 = vpack.c.bf16 %v3144, %v3144
      %v3209 = vpack.c.bf16 %v3145, %v3145
      %v3210 = vpack.c.bf16 %v3146, %v3146
      %v3211 = vpack.c.bf16 %v3147, %v3147
      %v3212 = vpack.c.bf16 %v3148, %v3148
      %v3213 = vpack.c.bf16 %v3149, %v3149
      %v3214 = vpack.c.bf16 %v3150, %v3150
      %v3215 = vpack.c.bf16 %v3151, %v3151
      %v3216 = vpack.c.bf16 %v3152, %v3152
      %v3217 = vpack.c.bf16 %v3153, %v3153
      %v3218 = vpack.c.bf16 %v3154, %v3154
      %v3219 = vpack.c.bf16 %v3155, %v3155
      %v3220 = vpack.c.bf16 %v3156, %v3156
      %v3221 = vpack.c.bf16 %v3157, %v3157
      %v3222 = vpack.c.bf16 %v3158, %v3158
      %v3223 = vpack.c.bf16 %v3159, %v3159
      %v3224 = vpack.c.bf16 %v3160, %v3160
      %v3225 = vpack.c.bf16 %v3161, %v3161
      %3258 = vrot.lane.b32.xlu0 %v3194, 64
      %v3259 = vpop.permute.xlu0 %3258
      %3260 = vrot.lane.b32.xlu0 %v3195, 64
      %v3261 = vpop.permute.xlu0 %3260
      %3262 = vrot.lane.b32.xlu0 %v3196, 64
      %v3263 = vpop.permute.xlu0 %3262
      %3264 = vrot.lane.b32.xlu0 %v3197, 64
      %v3265 = vpop.permute.xlu0 %3264
      %3266 = vrot.lane.b32.xlu0 %v3198, 64
      %v3267 = vpop.permute.xlu0 %3266
      %3268 = vrot.lane.b32.xlu0 %v3199, 64
      %v3269 = vpop.permute.xlu0 %3268
      %3270 = vrot.lane.b32.xlu0 %v3200, 64
      %v3271 = vpop.permute.xlu0 %3270
      %3272 = vrot.lane.b32.xlu0 %v3201, 64
      %v3273 = vpop.permute.xlu0 %3272
      %3274 = vrot.lane.b32.xlu0 %v3202, 64
      %v3275 = vpop.permute.xlu0 %3274
      %3276 = vrot.lane.b32.xlu0 %v3203, 64
      %v3277 = vpop.permute.xlu0 %3276
      %3278 = vrot.lane.b32.xlu0 %v3204, 64
      %v3279 = vpop.permute.xlu0 %3278
      %3280 = vrot.lane.b32.xlu0 %v3205, 64
      %v3281 = vpop.permute.xlu0 %3280
      %3282 = vrot.lane.b32.xlu0 %v3206, 64
      %v3283 = vpop.permute.xlu0 %3282
      %3284 = vrot.lane.b32.xlu0 %v3207, 64
      %v3285 = vpop.permute.xlu0 %3284
      %3286 = vrot.lane.b32.xlu0 %v3208, 64
      %v3287 = vpop.permute.xlu0 %3286
      %3288 = vrot.lane.b32.xlu0 %v3209, 64
      %v3289 = vpop.permute.xlu0 %3288
      %3290 = vrot.lane.b32.xlu0 %v3210, 64
      %v3291 = vpop.permute.xlu0 %3290
      %3292 = vrot.lane.b32.xlu0 %v3211, 64
      %v3293 = vpop.permute.xlu0 %3292
      %3294 = vrot.lane.b32.xlu0 %v3212, 64
      %v3295 = vpop.permute.xlu0 %3294
      %3296 = vrot.lane.b32.xlu0 %v3213, 64
      %v3297 = vpop.permute.xlu0 %3296
      %3298 = vrot.lane.b32.xlu0 %v3214, 64
      %v3299 = vpop.permute.xlu0 %3298
      %3300 = vrot.lane.b32.xlu0 %v3215, 64
      %v3301 = vpop.permute.xlu0 %3300
      %3302 = vrot.lane.b32.xlu0 %v3216, 64
      %v3303 = vpop.permute.xlu0 %3302
      %3304 = vrot.lane.b32.xlu0 %v3217, 64
      %v3305 = vpop.permute.xlu0 %3304
      %3306 = vrot.lane.b32.xlu0 %v3218, 64
      %v3307 = vpop.permute.xlu0 %3306
      %3308 = vrot.lane.b32.xlu0 %v3219, 64
      %v3309 = vpop.permute.xlu0 %3308
      %3310 = vrot.lane.b32.xlu0 %v3220, 64
      %v3311 = vpop.permute.xlu0 %3310
      %3312 = vrot.lane.b32.xlu0 %v3221, 64
      %v3313 = vpop.permute.xlu0 %3312
      %3314 = vrot.lane.b32.xlu0 %v3222, 64
      %v3315 = vpop.permute.xlu0 %3314
      %3316 = vrot.lane.b32.xlu0 %v3223, 64
      %v3317 = vpop.permute.xlu0 %3316
      %3318 = vrot.lane.b32.xlu0 %v3224, 64
      %v3319 = vpop.permute.xlu0 %3318
      %3320 = vrot.lane.b32.xlu0 %v3225, 64
      %v3321 = vpop.permute.xlu0 %3320
      %3354 = vst.msk [vmem:[#allocation3 + $0xc] sm:$0xf] %vm1431, %v3259
      %3355 = vst.msk [vmem:[#allocation3 + $0x20] sm:$0xf] %vm1431, %v3261
      %3356 = vst.msk [vmem:[#allocation3 + $0x34] sm:$0xf] %vm1431, %v3263
      %3357 = vst.msk [vmem:[#allocation3 + $0x48] sm:$0xf] %vm1431, %v3265
      %3358 = vst.msk [vmem:[#allocation3 + $0x5c] sm:$0xf] %vm1431, %v3267
      %3359 = vst.msk [vmem:[#allocation3 + $0x70] sm:$0xf] %vm1431, %v3269
      %3360 = vst.msk [vmem:[#allocation3 + $0x84] sm:$0xf] %vm1431, %v3271
      %3361 = vst.msk [vmem:[#allocation3 + $0x98] sm:$0xf] %vm1431, %v3273
      %3362 = vst.msk [vmem:[#allocation3 + $0xac] sm:$0xf] %vm1431, %v3275
      %3363 = vst.msk [vmem:[#allocation3 + $0xc0] sm:$0xf] %vm1431, %v3277
      %3364 = vst.msk [vmem:[#allocation3 + $0xd4] sm:$0xf] %vm1431, %v3279
      %3365 = vst.msk [vmem:[#allocation3 + $0xe8] sm:$0xf] %vm1431, %v3281
      %3366 = vst.msk [vmem:[#allocation3 + $0xfc] sm:$0xf] %vm1431, %v3283
      %3367 = vst.msk [vmem:[#allocation3 + $0x110] sm:$0xf] %vm1431, %v3285
      %3368 = vst.msk [vmem:[#allocation3 + $0x124] sm:$0xf] %vm1431, %v3287
      %3369 = vst.msk [vmem:[#allocation3 + $0x138] sm:$0xf] %vm1431, %v3289
      %3370 = vst.msk [vmem:[#allocation3 + $0x14c] sm:$0xf] %vm1431, %v3291
      %3371 = vst.msk [vmem:[#allocation3 + $0x160] sm:$0xf] %vm1431, %v3293
      %3372 = vst.msk [vmem:[#allocation3 + $0x174] sm:$0xf] %vm1431, %v3295
      %3373 = vst.msk [vmem:[#allocation3 + $0x188] sm:$0xf] %vm1431, %v3297
      %3374 = vst.msk [vmem:[#allocation3 + $0x19c] sm:$0xf] %vm1431, %v3299
      %3375 = vst.msk [vmem:[#allocation3 + $0x1b0] sm:$0xf] %vm1431, %v3301
      %3376 = vst.msk [vmem:[#allocation3 + $0x1c4] sm:$0xf] %vm1431, %v3303
      %3377 = vst.msk [vmem:[#allocation3 + $0x1d8] sm:$0xf] %vm1431, %v3305
      %3378 = vst.msk [vmem:[#allocation3 + $0x1ec] sm:$0xf] %vm1431, %v3307
      %3379 = vst.msk [vmem:[#allocation3 + $0x200] sm:$0xf] %vm1431, %v3309
      %3380 = vst.msk [vmem:[#allocation3 + $0x214] sm:$0xf] %vm1431, %v3311
      %3381 = vst.msk [vmem:[#allocation3 + $0x228] sm:$0xf] %vm1431, %v3313
      %3382 = vst.msk [vmem:[#allocation3 + $0x23c] sm:$0xf] %vm1431, %v3315
      %3383 = vst.msk [vmem:[#allocation3 + $0x250] sm:$0xf] %vm1431, %v3317
      %3384 = vst.msk [vmem:[#allocation3 + $0x264] sm:$0xf] %vm1431, %v3319
      %3385 = vst.msk [vmem:[#allocation3 + $0x278] sm:$0xf] %vm1431, %v3321
      %v3386 = vpack.c.bf16 %v3162, %v3162
      %v3387 = vpack.c.bf16 %v3163, %v3163
      %v3388 = vpack.c.bf16 %v3164, %v3164
      %v3389 = vpack.c.bf16 %v3165, %v3165
      %v3390 = vpack.c.bf16 %v3166, %v3166
      %v3391 = vpack.c.bf16 %v3167, %v3167
      %v3392 = vpack.c.bf16 %v3168, %v3168
      %v3393 = vpack.c.bf16 %v3169, %v3169
      %v3394 = vpack.c.bf16 %v3170, %v3170
      %v3395 = vpack.c.bf16 %v3171, %v3171
      %v3396 = vpack.c.bf16 %v3172, %v3172
      %v3397 = vpack.c.bf16 %v3173, %v3173
      %v3398 = vpack.c.bf16 %v3174, %v3174
      %v3399 = vpack.c.bf16 %v3175, %v3175
      %v3400 = vpack.c.bf16 %v3176, %v3176
      %v3401 = vpack.c.bf16 %v3177, %v3177
      %v3402 = vpack.c.bf16 %v3178, %v3178
      %v3403 = vpack.c.bf16 %v3179, %v3179
      %v3404 = vpack.c.bf16 %v3180, %v3180
      %v3405 = vpack.c.bf16 %v3181, %v3181
      %v3406 = vpack.c.bf16 %v3182, %v3182
      %v3407 = vpack.c.bf16 %v3183, %v3183
      %v3408 = vpack.c.bf16 %v3184, %v3184
      %v3409 = vpack.c.bf16 %v3185, %v3185
      %v3410 = vpack.c.bf16 %v3186, %v3186
      %v3411 = vpack.c.bf16 %v3187, %v3187
      %v3412 = vpack.c.bf16 %v3188, %v3188
      %v3413 = vpack.c.bf16 %v3189, %v3189
      %v3414 = vpack.c.bf16 %v3190, %v3190
      %v3415 = vpack.c.bf16 %v3191, %v3191
      %v3416 = vpack.c.bf16 %v3192, %v3192
      %v3417 = vpack.c.bf16 %v3193, %v3193
      %3450 = vrot.lane.b32.xlu0 %v3386, 64
      %v3451 = vpop.permute.xlu0 %3450
      %3452 = vrot.lane.b32.xlu0 %v3387, 64
      %v3453 = vpop.permute.xlu0 %3452
      %3454 = vrot.lane.b32.xlu0 %v3388, 64
      %v3455 = vpop.permute.xlu0 %3454
      %3456 = vrot.lane.b32.xlu0 %v3389, 64
      %v3457 = vpop.permute.xlu0 %3456
      %3458 = vrot.lane.b32.xlu0 %v3390, 64
      %v3459 = vpop.permute.xlu0 %3458
      %3460 = vrot.lane.b32.xlu0 %v3391, 64
      %v3461 = vpop.permute.xlu0 %3460
      %3462 = vrot.lane.b32.xlu0 %v3392, 64
      %v3463 = vpop.permute.xlu0 %3462
      %3464 = vrot.lane.b32.xlu0 %v3393, 64
      %v3465 = vpop.permute.xlu0 %3464
      %3466 = vrot.lane.b32.xlu0 %v3394, 64
      %v3467 = vpop.permute.xlu0 %3466
      %3468 = vrot.lane.b32.xlu0 %v3395, 64
      %v3469 = vpop.permute.xlu0 %3468
      %3470 = vrot.lane.b32.xlu0 %v3396, 64
      %v3471 = vpop.permute.xlu0 %3470
      %3472 = vrot.lane.b32.xlu0 %v3397, 64
      %v3473 = vpop.permute.xlu0 %3472
      %3474 = vrot.lane.b32.xlu0 %v3398, 64
      %v3475 = vpop.permute.xlu0 %3474
      %3476 = vrot.lane.b32.xlu0 %v3399, 64
      %v3477 = vpop.permute.xlu0 %3476
      %3478 = vrot.lane.b32.xlu0 %v3400, 64
      %v3479 = vpop.permute.xlu0 %3478
      %3480 = vrot.lane.b32.xlu0 %v3401, 64
      %v3481 = vpop.permute.xlu0 %3480
      %3482 = vrot.lane.b32.xlu0 %v3402, 64
      %v3483 = vpop.permute.xlu0 %3482
      %3484 = vrot.lane.b32.xlu0 %v3403, 64
      %v3485 = vpop.permute.xlu0 %3484
      %3486 = vrot.lane.b32.xlu0 %v3404, 64
      %v3487 = vpop.permute.xlu0 %3486
      %3488 = vrot.lane.b32.xlu0 %v3405, 64
      %v3489 = vpop.permute.xlu0 %3488
      %3490 = vrot.lane.b32.xlu0 %v3406, 64
      %v3491 = vpop.permute.xlu0 %3490
      %3492 = vrot.lane.b32.xlu0 %v3407, 64
      %v3493 = vpop.permute.xlu0 %3492
      %3494 = vrot.lane.b32.xlu0 %v3408, 64
      %v3495 = vpop.permute.xlu0 %3494
      %3496 = vrot.lane.b32.xlu0 %v3409, 64
      %v3497 = vpop.permute.xlu0 %3496
      %3498 = vrot.lane.b32.xlu0 %v3410, 64
      %v3499 = vpop.permute.xlu0 %3498
      %3500 = vrot.lane.b32.xlu0 %v3411, 64
      %v3501 = vpop.permute.xlu0 %3500
      %3502 = vrot.lane.b32.xlu0 %v3412, 64
      %v3503 = vpop.permute.xlu0 %3502
      %3504 = vrot.lane.b32.xlu0 %v3413, 64
      %v3505 = vpop.permute.xlu0 %3504
      %3506 = vrot.lane.b32.xlu0 %v3414, 64
      %v3507 = vpop.permute.xlu0 %3506
      %3508 = vrot.lane.b32.xlu0 %v3415, 64
      %v3509 = vpop.permute.xlu0 %3508
      %3510 = vrot.lane.b32.xlu0 %v3416, 64
      %v3511 = vpop.permute.xlu0 %3510
      %3512 = vrot.lane.b32.xlu0 %v3417, 64
      %v3513 = vpop.permute.xlu0 %3512
      %3546 = vst.msk [vmem:[#allocation4 + $0xc] sm:$0xf] %vm1431, %v3451
      %3547 = vst.msk [vmem:[#allocation4 + $0x20] sm:$0xf] %vm1431, %v3453
      %3548 = vst.msk [vmem:[#allocation4 + $0x34] sm:$0xf] %vm1431, %v3455
      %3549 = vst.msk [vmem:[#allocation4 + $0x48] sm:$0xf] %vm1431, %v3457
      %3550 = vst.msk [vmem:[#allocation4 + $0x5c] sm:$0xf] %vm1431, %v3459
      %3551 = vst.msk [vmem:[#allocation4 + $0x70] sm:$0xf] %vm1431, %v3461
      %3552 = vst.msk [vmem:[#allocation4 + $0x84] sm:$0xf] %vm1431, %v3463
      %3553 = vst.msk [vmem:[#allocation4 + $0x98] sm:$0xf] %vm1431, %v3465
      %3554 = vst.msk [vmem:[#allocation4 + $0xac] sm:$0xf] %vm1431, %v3467
      %3555 = vst.msk [vmem:[#allocation4 + $0xc0] sm:$0xf] %vm1431, %v3469
      %3556 = vst.msk [vmem:[#allocation4 + $0xd4] sm:$0xf] %vm1431, %v3471
      %3557 = vst.msk [vmem:[#allocation4 + $0xe8] sm:$0xf] %vm1431, %v3473
      %3558 = vst.msk [vmem:[#allocation4 + $0xfc] sm:$0xf] %vm1431, %v3475
      %3559 = vst.msk [vmem:[#allocation4 + $0x110] sm:$0xf] %vm1431, %v3477
      %3560 = vst.msk [vmem:[#allocation4 + $0x124] sm:$0xf] %vm1431, %v3479
      %3561 = vst.msk [vmem:[#allocation4 + $0x138] sm:$0xf] %vm1431, %v3481
      %3562 = vst.msk [vmem:[#allocation4 + $0x14c] sm:$0xf] %vm1431, %v3483
      %3563 = vst.msk [vmem:[#allocation4 + $0x160] sm:$0xf] %vm1431, %v3485
      %3564 = vst.msk [vmem:[#allocation4 + $0x174] sm:$0xf] %vm1431, %v3487
      %3565 = vst.msk [vmem:[#allocation4 + $0x188] sm:$0xf] %vm1431, %v3489
      %3566 = vst.msk [vmem:[#allocation4 + $0x19c] sm:$0xf] %vm1431, %v3491
      %3567 = vst.msk [vmem:[#allocation4 + $0x1b0] sm:$0xf] %vm1431, %v3493
      %3568 = vst.msk [vmem:[#allocation4 + $0x1c4] sm:$0xf] %vm1431, %v3495
      %3569 = vst.msk [vmem:[#allocation4 + $0x1d8] sm:$0xf] %vm1431, %v3497
      %3570 = vst.msk [vmem:[#allocation4 + $0x1ec] sm:$0xf] %vm1431, %v3499
      %3571 = vst.msk [vmem:[#allocation4 + $0x200] sm:$0xf] %vm1431, %v3501
      %3572 = vst.msk [vmem:[#allocation4 + $0x214] sm:$0xf] %vm1431, %v3503
      %3573 = vst.msk [vmem:[#allocation4 + $0x228] sm:$0xf] %vm1431, %v3505
      %3574 = vst.msk [vmem:[#allocation4 + $0x23c] sm:$0xf] %vm1431, %v3507
      %3575 = vst.msk [vmem:[#allocation4 + $0x250] sm:$0xf] %vm1431, %v3509
      %3576 = vst.msk [vmem:[#allocation4 + $0x264] sm:$0xf] %vm1431, %v3511
      %3577 = vst.msk [vmem:[#allocation4 + $0x278] sm:$0xf] %vm1431, %v3513
      %v3578 = vld [vmem:[%s2937 + $0x12] sm:$0xff]
      %v3579 = vld [vmem:[%s2937 + $0x1a] sm:$0xff]
      %v3580 = vld [vmem:[%s2937 + $0x3a] sm:$0xff]
      %v3581 = vld [vmem:[%s2937 + $0x42] sm:$0xff]
      %v3582 = vld [vmem:[%s2937 + $0x62] sm:$0xff]
      %v3583 = vld [vmem:[%s2937 + $0x6a] sm:$0xff]
      %v3584 = vld [vmem:[%s2937 + $0x8a] sm:$0xff]
      %v3585 = vld [vmem:[%s2937 + $0x92] sm:$0xff]
      %v3586 = vld [vmem:[%s2937 + $0xb2] sm:$0xff]
      %v3587 = vld [vmem:[%s2937 + $0xba] sm:$0xff]
      %v3588 = vld [vmem:[%s2937 + $0xda] sm:$0xff]
      %v3589 = vld [vmem:[%s2937 + $0xe2] sm:$0xff]
      %v3590 = vld [vmem:[%s2937 + $0x102] sm:$0xff]
      %v3591 = vld [vmem:[%s2937 + $0x10a] sm:$0xff]
      %v3592 = vld [vmem:[%s2937 + $0x12a] sm:$0xff]
      %v3593 = vld [vmem:[%s2937 + $0x132] sm:$0xff]
      %v3594 = vld [vmem:[%s2937 + $0x152] sm:$0xff]
      %v3595 = vld [vmem:[%s2937 + $0x15a] sm:$0xff]
      %v3596 = vld [vmem:[%s2937 + $0x17a] sm:$0xff]
      %v3597 = vld [vmem:[%s2937 + $0x182] sm:$0xff]
      %v3598 = vld [vmem:[%s2937 + $0x1a2] sm:$0xff]
      %v3599 = vld [vmem:[%s2937 + $0x1aa] sm:$0xff]
      %v3600 = vld [vmem:[%s2937 + $0x1ca] sm:$0xff]
      %v3601 = vld [vmem:[%s2937 + $0x1d2] sm:$0xff]
      %v3602 = vld [vmem:[%s2937 + $0x1f2] sm:$0xff]
      %v3603 = vld [vmem:[%s2937 + $0x1fa] sm:$0xff]
      %v3604 = vld [vmem:[%s2937 + $0x21a] sm:$0xff]
      %v3605 = vld [vmem:[%s2937 + $0x222] sm:$0xff]
      %v3606 = vld [vmem:[%s2937 + $0x242] sm:$0xff]
      %v3607 = vld [vmem:[%s2937 + $0x24a] sm:$0xff]
      %v3608 = vld [vmem:[%s2937 + $0x26a] sm:$0xff]
      %v3609 = vld [vmem:[%s2937 + $0x272] sm:$0xff]
      %v3610 = vld [vmem:[%s2937 + $0x1] sm:$0xff]
      %v3611 = vld [vmem:[%s2937 + $0x9] sm:$0xff]
      %v3612 = vld [vmem:[%s2937 + $0x29] sm:$0xff]
      %v3613 = vld [vmem:[%s2937 + $0x31] sm:$0xff]
      %v3614 = vld [vmem:[%s2937 + $0x51] sm:$0xff]
      %v3615 = vld [vmem:[%s2937 + $0x59] sm:$0xff]
      %v3616 = vld [vmem:[%s2937 + $0x79] sm:$0xff]
      %v3617 = vld [vmem:[%s2937 + $0x81] sm:$0xff]
      %v3618 = vld [vmem:[%s2937 + $0xa1] sm:$0xff]
      %v3619 = vld [vmem:[%s2937 + $0xa9] sm:$0xff]
      %v3620 = vld [vmem:[%s2937 + $0xc9] sm:$0xff]
      %v3621 = vld [vmem:[%s2937 + $0xd1] sm:$0xff]
      %v3622 = vld [vmem:[%s2937 + $0xf1] sm:$0xff]
      %v3623 = vld [vmem:[%s2937 + $0xf9] sm:$0xff]
      %v3624 = vld [vmem:[%s2937 + $0x119] sm:$0xff]
      %v3625 = vld [vmem:[%s2937 + $0x121] sm:$0xff]
      %v3626 = vld [vmem:[%s2937 + $0x141] sm:$0xff]
      %v3627 = vld [vmem:[%s2937 + $0x149] sm:$0xff]
      %v3628 = vld [vmem:[%s2937 + $0x169] sm:$0xff]
      %v3629 = vld [vmem:[%s2937 + $0x171] sm:$0xff]
      %v3630 = vld [vmem:[%s2937 + $0x191] sm:$0xff]
      %v3631 = vld [vmem:[%s2937 + $0x199] sm:$0xff]
      %v3632 = vld [vmem:[%s2937 + $0x1b9] sm:$0xff]
      %v3633 = vld [vmem:[%s2937 + $0x1c1] sm:$0xff]
      %v3634 = vld [vmem:[%s2937 + $0x1e1] sm:$0xff]
      %v3635 = vld [vmem:[%s2937 + $0x1e9] sm:$0xff]
      %v3636 = vld [vmem:[%s2937 + $0x209] sm:$0xff]
      %v3637 = vld [vmem:[%s2937 + $0x211] sm:$0xff]
      %v3638 = vld [vmem:[%s2937 + $0x231] sm:$0xff]
      %v3639 = vld [vmem:[%s2937 + $0x239] sm:$0xff]
      %v3640 = vld [vmem:[%s2937 + $0x259] sm:$0xff]
      %v3641 = vld [vmem:[%s2937 + $0x261] sm:$0xff]
      %v3642 = vpack.c.bf16 %v3578, %v3578
      %v3643 = vpack.c.bf16 %v3579, %v3579
      %v3644 = vpack.c.bf16 %v3580, %v3580
      %v3645 = vpack.c.bf16 %v3581, %v3581
      %v3646 = vpack.c.bf16 %v3582, %v3582
      %v3647 = vpack.c.bf16 %v3583, %v3583
      %v3648 = vpack.c.bf16 %v3584, %v3584
      %v3649 = vpack.c.bf16 %v3585, %v3585
      %v3650 = vpack.c.bf16 %v3586, %v3586
      %v3651 = vpack.c.bf16 %v3587, %v3587
      %v3652 = vpack.c.bf16 %v3588, %v3588
      %v3653 = vpack.c.bf16 %v3589, %v3589
      %v3654 = vpack.c.bf16 %v3590, %v3590
      %v3655 = vpack.c.bf16 %v3591, %v3591
      %v3656 = vpack.c.bf16 %v3592, %v3592
      %v3657 = vpack.c.bf16 %v3593, %v3593
      %v3658 = vpack.c.bf16 %v3594, %v3594
      %v3659 = vpack.c.bf16 %v3595, %v3595
      %v3660 = vpack.c.bf16 %v3596, %v3596
      %v3661 = vpack.c.bf16 %v3597, %v3597
      %v3662 = vpack.c.bf16 %v3598, %v3598
      %v3663 = vpack.c.bf16 %v3599, %v3599
      %v3664 = vpack.c.bf16 %v3600, %v3600
      %v3665 = vpack.c.bf16 %v3601, %v3601
      %v3666 = vpack.c.bf16 %v3602, %v3602
      %v3667 = vpack.c.bf16 %v3603, %v3603
      %v3668 = vpack.c.bf16 %v3604, %v3604
      %v3669 = vpack.c.bf16 %v3605, %v3605
      %v3670 = vpack.c.bf16 %v3606, %v3606
      %v3671 = vpack.c.bf16 %v3607, %v3607
      %v3672 = vpack.c.bf16 %v3608, %v3608
      %v3673 = vpack.c.bf16 %v3609, %v3609
      %3674 = vst.msk [vmem:[#allocation3 + $0x10] sm:$0xf] %vm1110, %v3642
      %3675 = vst.msk [vmem:[#allocation3 + $0x24] sm:$0xf] %vm1110, %v3643
      %3676 = vst.msk [vmem:[#allocation3 + $0x38] sm:$0xf] %vm1110, %v3644
      %3677 = vst.msk [vmem:[#allocation3 + $0x4c] sm:$0xf] %vm1110, %v3645
      %3678 = vst.msk [vmem:[#allocation3 + $0x60] sm:$0xf] %vm1110, %v3646
      %3679 = vst.msk [vmem:[#allocation3 + $0x74] sm:$0xf] %vm1110, %v3647
      %3680 = vst.msk [vmem:[#allocation3 + $0x88] sm:$0xf] %vm1110, %v3648
      %3681 = vst.msk [vmem:[#allocation3 + $0x9c] sm:$0xf] %vm1110, %v3649
      %3682 = vst.msk [vmem:[#allocation3 + $0xb0] sm:$0xf] %vm1110, %v3650
      %3683 = vst.msk [vmem:[#allocation3 + $0xc4] sm:$0xf] %vm1110, %v3651
      %3684 = vst.msk [vmem:[#allocation3 + $0xd8] sm:$0xf] %vm1110, %v3652
      %3685 = vst.msk [vmem:[#allocation3 + $0xec] sm:$0xf] %vm1110, %v3653
      %3686 = vst.msk [vmem:[#allocation3 + $0x100] sm:$0xf] %vm1110, %v3654
      %3687 = vst.msk [vmem:[#allocation3 + $0x114] sm:$0xf] %vm1110, %v3655
      %3688 = vst.msk [vmem:[#allocation3 + $0x128] sm:$0xf] %vm1110, %v3656
      %3689 = vst.msk [vmem:[#allocation3 + $0x13c] sm:$0xf] %vm1110, %v3657
      %3690 = vst.msk [vmem:[#allocation3 + $0x150] sm:$0xf] %vm1110, %v3658
      %3691 = vst.msk [vmem:[#allocation3 + $0x164] sm:$0xf] %vm1110, %v3659
      %3692 = vst.msk [vmem:[#allocation3 + $0x178] sm:$0xf] %vm1110, %v3660
      %3693 = vst.msk [vmem:[#allocation3 + $0x18c] sm:$0xf] %vm1110, %v3661
      %3694 = vst.msk [vmem:[#allocation3 + $0x1a0] sm:$0xf] %vm1110, %v3662
      %3695 = vst.msk [vmem:[#allocation3 + $0x1b4] sm:$0xf] %vm1110, %v3663
      %3696 = vst.msk [vmem:[#allocation3 + $0x1c8] sm:$0xf] %vm1110, %v3664
      %3697 = vst.msk [vmem:[#allocation3 + $0x1dc] sm:$0xf] %vm1110, %v3665
      %3698 = vst.msk [vmem:[#allocation3 + $0x1f0] sm:$0xf] %vm1110, %v3666
      %3699 = vst.msk [vmem:[#allocation3 + $0x204] sm:$0xf] %vm1110, %v3667
      %3700 = vst.msk [vmem:[#allocation3 + $0x218] sm:$0xf] %vm1110, %v3668
      %3701 = vst.msk [vmem:[#allocation3 + $0x22c] sm:$0xf] %vm1110, %v3669
      %3702 = vst.msk [vmem:[#allocation3 + $0x240] sm:$0xf] %vm1110, %v3670
      %3703 = vst.msk [vmem:[#allocation3 + $0x254] sm:$0xf] %vm1110, %v3671
      %3704 = vst.msk [vmem:[#allocation3 + $0x268] sm:$0xf] %vm1110, %v3672
      %3705 = vst.msk [vmem:[#allocation3 + $0x27c] sm:$0xf] %vm1110, %v3673
      %v3706 = vpack.c.bf16 %v3610, %v3610
      %v3707 = vpack.c.bf16 %v3611, %v3611
      %v3708 = vpack.c.bf16 %v3612, %v3612
      %v3709 = vpack.c.bf16 %v3613, %v3613
      %v3710 = vpack.c.bf16 %v3614, %v3614
      %v3711 = vpack.c.bf16 %v3615, %v3615
      %v3712 = vpack.c.bf16 %v3616, %v3616
      %v3713 = vpack.c.bf16 %v3617, %v3617
      %v3714 = vpack.c.bf16 %v3618, %v3618
      %v3715 = vpack.c.bf16 %v3619, %v3619
      %v3716 = vpack.c.bf16 %v3620, %v3620
      %v3717 = vpack.c.bf16 %v3621, %v3621
      %v3718 = vpack.c.bf16 %v3622, %v3622
      %v3719 = vpack.c.bf16 %v3623, %v3623
      %v3720 = vpack.c.bf16 %v3624, %v3624
      %v3721 = vpack.c.bf16 %v3625, %v3625
      %v3722 = vpack.c.bf16 %v3626, %v3626
      %v3723 = vpack.c.bf16 %v3627, %v3627
      %v3724 = vpack.c.bf16 %v3628, %v3628
      %v3725 = vpack.c.bf16 %v3629, %v3629
      %v3726 = vpack.c.bf16 %v3630, %v3630
      %v3727 = vpack.c.bf16 %v3631, %v3631
      %v3728 = vpack.c.bf16 %v3632, %v3632
      %v3729 = vpack.c.bf16 %v3633, %v3633
      %v3730 = vpack.c.bf16 %v3634, %v3634
      %v3731 = vpack.c.bf16 %v3635, %v3635
      %v3732 = vpack.c.bf16 %v3636, %v3636
      %v3733 = vpack.c.bf16 %v3637, %v3637
      %v3734 = vpack.c.bf16 %v3638, %v3638
      %v3735 = vpack.c.bf16 %v3639, %v3639
      %v3736 = vpack.c.bf16 %v3640, %v3640
      %v3737 = vpack.c.bf16 %v3641, %v3641
      %3738 = vst.msk [vmem:[#allocation4 + $0x10] sm:$0xf] %vm1110, %v3706
      %3739 = vst.msk [vmem:[#allocation4 + $0x24] sm:$0xf] %vm1110, %v3707
      %3740 = vst.msk [vmem:[#allocation4 + $0x38] sm:$0xf] %vm1110, %v3708
      %3741 = vst.msk [vmem:[#allocation4 + $0x4c] sm:$0xf] %vm1110, %v3709
      %3742 = vst.msk [vmem:[#allocation4 + $0x60] sm:$0xf] %vm1110, %v3710
      %3743 = vst.msk [vmem:[#allocation4 + $0x74] sm:$0xf] %vm1110, %v3711
      %3744 = vst.msk [vmem:[#allocation4 + $0x88] sm:$0xf] %vm1110, %v3712
      %3745 = vst.msk [vmem:[#allocation4 + $0x9c] sm:$0xf] %vm1110, %v3713
      %3746 = vst.msk [vmem:[#allocation4 + $0xb0] sm:$0xf] %vm1110, %v3714
      %3747 = vst.msk [vmem:[#allocation4 + $0xc4] sm:$0xf] %vm1110, %v3715
      %3748 = vst.msk [vmem:[#allocation4 + $0xd8] sm:$0xf] %vm1110, %v3716
      %3749 = vst.msk [vmem:[#allocation4 + $0xec] sm:$0xf] %vm1110, %v3717
      %3750 = vst.msk [vmem:[#allocation4 + $0x100] sm:$0xf] %vm1110, %v3718
      %3751 = vst.msk [vmem:[#allocation4 + $0x114] sm:$0xf] %vm1110, %v3719
      %3752 = vst.msk [vmem:[#allocation4 + $0x128] sm:$0xf] %vm1110, %v3720
      %3753 = vst.msk [vmem:[#allocation4 + $0x13c] sm:$0xf] %vm1110, %v3721
      %3754 = vst.msk [vmem:[#allocation4 + $0x150] sm:$0xf] %vm1110, %v3722
      %3755 = vst.msk [vmem:[#allocation4 + $0x164] sm:$0xf] %vm1110, %v3723
      %3756 = vst.msk [vmem:[#allocation4 + $0x178] sm:$0xf] %vm1110, %v3724
      %3757 = vst.msk [vmem:[#allocation4 + $0x18c] sm:$0xf] %vm1110, %v3725
      %3758 = vst.msk [vmem:[#allocation4 + $0x1a0] sm:$0xf] %vm1110, %v3726
      %3759 = vst.msk [vmem:[#allocation4 + $0x1b4] sm:$0xf] %vm1110, %v3727
      %3760 = vst.msk [vmem:[#allocation4 + $0x1c8] sm:$0xf] %vm1110, %v3728
      %3761 = vst.msk [vmem:[#allocation4 + $0x1dc] sm:$0xf] %vm1110, %v3729
      %3762 = vst.msk [vmem:[#allocation4 + $0x1f0] sm:$0xf] %vm1110, %v3730
      %3763 = vst.msk [vmem:[#allocation4 + $0x204] sm:$0xf] %vm1110, %v3731
      %3764 = vst.msk [vmem:[#allocation4 + $0x218] sm:$0xf] %vm1110, %v3732
      %3765 = vst.msk [vmem:[#allocation4 + $0x22c] sm:$0xf] %vm1110, %v3733
      %3766 = vst.msk [vmem:[#allocation4 + $0x240] sm:$0xf] %vm1110, %v3734
      %3767 = vst.msk [vmem:[#allocation4 + $0x254] sm:$0xf] %vm1110, %v3735
      %3768 = vst.msk [vmem:[#allocation4 + $0x268] sm:$0xf] %vm1110, %v3736
      %3769 = vst.msk [vmem:[#allocation4 + $0x27c] sm:$0xf] %vm1110, %v3737
      %v3770 = vld [vmem:[%s3] sm:$0xf]
      %v3771 = vld [vmem:[%s3 + $0x4] sm:$0xf]
      %v3772 = vld [vmem:[%s3 + $0x8] sm:$0xf]
      %v3773 = vld [vmem:[%s3 + $0xc] sm:$0xf]
      %v3774 = vld [vmem:[%s3 + $0x10] sm:$0xf]
      %v3775 = vld [vmem:[%s3 + $0x14] sm:$0xf]
      %v3776 = vld [vmem:[%s3 + $0x18] sm:$0xf]
      %v3777 = vld [vmem:[%s3 + $0x1c] sm:$0xf]
      %v3778 = vld [vmem:[%s3 + $0x20] sm:$0xf]
      %v3779 = vld [vmem:[%s3 + $0x24] sm:$0xf]
      %v3780 = vld [vmem:[%s3 + $0x28] sm:$0xf]
      %v3781 = vld [vmem:[%s3 + $0x2c] sm:$0xf]
      %v3782 = vld [vmem:[%s3 + $0x30] sm:$0xf]
      %v3783 = vld [vmem:[%s3 + $0x34] sm:$0xf]
      %v3784 = vld [vmem:[%s3 + $0x38] sm:$0xf]
      %v3785 = vld [vmem:[%s3 + $0x3c] sm:$0xf]
      %v3786 = vld [vmem:[%s3 + $0x40] sm:$0xf]
      %v3787 = vld [vmem:[%s3 + $0x44] sm:$0xf]
      %v3788 = vld [vmem:[%s3 + $0x48] sm:$0xf]
      %v3789 = vld [vmem:[%s3 + $0x4c] sm:$0xf]
      %v3790 = vld [vmem:[%s3 + $0x50] sm:$0xf]
      %v3791 = vld [vmem:[%s3 + $0x54] sm:$0xf]
      %v3792 = vld [vmem:[%s3 + $0x58] sm:$0xf]
      %v3793 = vld [vmem:[%s3 + $0x5c] sm:$0xf]
      %v3794 = vld [vmem:[%s3 + $0x60] sm:$0xf]
      %v3795 = vld [vmem:[%s3 + $0x64] sm:$0xf]
      %v3796 = vld [vmem:[%s3 + $0x68] sm:$0xf]
      %v3797 = vld [vmem:[%s3 + $0x6c] sm:$0xf]
      %v3798 = vld [vmem:[%s3 + $0x70] sm:$0xf]
      %v3799 = vld [vmem:[%s3 + $0x74] sm:$0xf]
      %v3800 = vld [vmem:[%s3 + $0x78] sm:$0xf]
      %v3801 = vld [vmem:[%s3 + $0x7c] sm:$0xf]
      %v3802 = vld [vmem:[%s3 + $0x80] sm:$0xf]
      %v3803 = vld [vmem:[%s3 + $0x84] sm:$0xf]
      %v3804 = vld [vmem:[%s3 + $0x88] sm:$0xf]
      %v3805 = vld [vmem:[%s3 + $0x8c] sm:$0xf]
      %v3806 = vld [vmem:[%s3 + $0x90] sm:$0xf]
      %v3807 = vld [vmem:[%s3 + $0x94] sm:$0xf]
      %v3808 = vld [vmem:[%s3 + $0x98] sm:$0xf]
      %v3809 = vld [vmem:[%s3 + $0x9c] sm:$0xf]
      %v3810 = vld [vmem:[%s3 + $0xa0] sm:$0xf]
      %v3811 = vld [vmem:[%s3 + $0xa4] sm:$0xf]
      %v3812 = vld [vmem:[%s3 + $0xa8] sm:$0xf]
      %v3813 = vld [vmem:[%s3 + $0xac] sm:$0xf]
      %v3814 = vld [vmem:[%s3 + $0xb0] sm:$0xf]
      %v3815 = vld [vmem:[%s3 + $0xb4] sm:$0xf]
      %v3816 = vld [vmem:[%s3 + $0xb8] sm:$0xf]
      %v3817 = vld [vmem:[%s3 + $0xbc] sm:$0xf]
      %v3818 = vld [vmem:[%s3 + $0xc0] sm:$0xf]
      %v3819 = vld [vmem:[%s3 + $0xc4] sm:$0xf]
      %v3820 = vld [vmem:[%s3 + $0xc8] sm:$0xf]
      %v3821 = vld [vmem:[%s3 + $0xcc] sm:$0xf]
      %v3822 = vld [vmem:[%s3 + $0xd0] sm:$0xf]
      %v3823 = vld [vmem:[%s3 + $0xd4] sm:$0xf]
      %v3824 = vld [vmem:[%s3 + $0xd8] sm:$0xf]
      %v3825 = vld [vmem:[%s3 + $0xdc] sm:$0xf]
      %v3826 = vld [vmem:[%s3 + $0xe0] sm:$0xf]
      %v3827 = vld [vmem:[%s3 + $0xe4] sm:$0xf]
      %v3828 = vld [vmem:[%s3 + $0xe8] sm:$0xf]
      %v3829 = vld [vmem:[%s3 + $0xec] sm:$0xf]
      %v3830 = vld [vmem:[%s3 + $0xf0] sm:$0xf]
      %v3831 = vld [vmem:[%s3 + $0xf4] sm:$0xf]
      %v3832 = vld [vmem:[%s3 + $0xf8] sm:$0xf]
      %v3833 = vld [vmem:[%s3 + $0xfc] sm:$0xf]
      %v3834 = vld [vmem:[%s3 + $0x100] sm:$0xf]
      %v3835 = vld [vmem:[%s3 + $0x104] sm:$0xf]
      %v3836 = vld [vmem:[%s3 + $0x108] sm:$0xf]
      %v3837 = vld [vmem:[%s3 + $0x10c] sm:$0xf]
      %v3838 = vld [vmem:[%s3 + $0x110] sm:$0xf]
      %v3839 = vld [vmem:[%s3 + $0x114] sm:$0xf]
      %v3840 = vld [vmem:[%s3 + $0x118] sm:$0xf]
      %v3841 = vld [vmem:[%s3 + $0x11c] sm:$0xf]
      %v3842 = vld [vmem:[#allocation3] sm:$0xff]
      %v3843 = vld [vmem:[#allocation3 + $0x8] sm:$0xff]
      %v3844 = vld [vmem:[#allocation3 + $0x10] sm:$0xf]
      %v3845 = vld [vmem:[#allocation3 + $0x14] sm:$0xff]
      %v3846 = vld [vmem:[#allocation3 + $0x1c] sm:$0xff]
      %v3847 = vld [vmem:[#allocation3 + $0x24] sm:$0xf]
      %v3848 = vld [vmem:[#allocation3 + $0x28] sm:$0xff]
      %v3849 = vld [vmem:[#allocation3 + $0x30] sm:$0xff]
      %v3850 = vld [vmem:[#allocation3 + $0x38] sm:$0xf]
      %v3851 = vld [vmem:[#allocation3 + $0x3c] sm:$0xff]
      %v3852 = vld [vmem:[#allocation3 + $0x44] sm:$0xff]
      %v3853 = vld [vmem:[#allocation3 + $0x4c] sm:$0xf]
      %v3854 = vld [vmem:[#allocation3 + $0x50] sm:$0xff]
      %v3855 = vld [vmem:[#allocation3 + $0x58] sm:$0xff]
      %v3856 = vld [vmem:[#allocation3 + $0x60] sm:$0xf]
      %v3857 = vld [vmem:[#allocation3 + $0x64] sm:$0xff]
      %v3858 = vld [vmem:[#allocation3 + $0x6c] sm:$0xff]
      %v3859 = vld [vmem:[#allocation3 + $0x74] sm:$0xf]
      %v3860 = vld [vmem:[#allocation3 + $0x78] sm:$0xff]
      %v3861 = vld [vmem:[#allocation3 + $0x80] sm:$0xff]
      %v3862 = vld [vmem:[#allocation3 + $0x88] sm:$0xf]
      %v3863 = vld [vmem:[#allocation3 + $0x8c] sm:$0xff]
      %v3864 = vld [vmem:[#allocation3 + $0x94] sm:$0xff]
      %v3865 = vld [vmem:[#allocation3 + $0x9c] sm:$0xf]
      %v3866 = vld [vmem:[#allocation3 + $0xa0] sm:$0xff]
      %v3867 = vld [vmem:[#allocation3 + $0xa8] sm:$0xff]
      %v3868 = vld [vmem:[#allocation3 + $0xb0] sm:$0xf]
      %v3869 = vld [vmem:[#allocation3 + $0xb4] sm:$0xff]
      %v3870 = vld [vmem:[#allocation3 + $0xbc] sm:$0xff]
      %v3871 = vld [vmem:[#allocation3 + $0xc4] sm:$0xf]
      %v3872 = vld [vmem:[#allocation3 + $0xc8] sm:$0xff]
      %v3873 = vld [vmem:[#allocation3 + $0xd0] sm:$0xff]
      %v3874 = vld [vmem:[#allocation3 + $0xd8] sm:$0xf]
      %v3875 = vld [vmem:[#allocation3 + $0xdc] sm:$0xff]
      %v3876 = vld [vmem:[#allocation3 + $0xe4] sm:$0xff]
      %v3877 = vld [vmem:[#allocation3 + $0xec] sm:$0xf]
      %v3878 = vld [vmem:[#allocation3 + $0xf0] sm:$0xff]
      %v3879 = vld [vmem:[#allocation3 + $0xf8] sm:$0xff]
      %v3880 = vld [vmem:[#allocation3 + $0x100] sm:$0xf]
      %v3881 = vld [vmem:[#allocation3 + $0x104] sm:$0xff]
      %v3882 = vld [vmem:[#allocation3 + $0x10c] sm:$0xff]
      %v3883 = vld [vmem:[#allocation3 + $0x114] sm:$0xf]
      %v3884 = vld [vmem:[#allocation3 + $0x118] sm:$0xff]
      %v3885 = vld [vmem:[#allocation3 + $0x120] sm:$0xff]
      %v3886 = vld [vmem:[#allocation3 + $0x128] sm:$0xf]
      %v3887 = vld [vmem:[#allocation3 + $0x12c] sm:$0xff]
      %v3888 = vld [vmem:[#allocation3 + $0x134] sm:$0xff]
      %v3889 = vld [vmem:[#allocation3 + $0x13c] sm:$0xf]
      %v3890 = vld [vmem:[#allocation3 + $0x140] sm:$0xff]
      %v3891 = vld [vmem:[#allocation3 + $0x148] sm:$0xff]
      %v3892 = vld [vmem:[#allocation3 + $0x150] sm:$0xf]
      %v3893 = vld [vmem:[#allocation3 + $0x154] sm:$0xff]
      %v3894 = vld [vmem:[#allocation3 + $0x15c] sm:$0xff]
      %v3895 = vld [vmem:[#allocation3 + $0x164] sm:$0xf]
      %v3896 = vld [vmem:[#allocation3 + $0x168] sm:$0xff]
      %v3897 = vld [vmem:[#allocation3 + $0x170] sm:$0xff]
      %v3898 = vld [vmem:[#allocation3 + $0x178] sm:$0xf]
      %v3899 = vld [vmem:[#allocation3 + $0x17c] sm:$0xff]
      %v3900 = vld [vmem:[#allocation3 + $0x184] sm:$0xff]
      %v3901 = vld [vmem:[#allocation3 + $0x18c] sm:$0xf]
      %v3902 = vld [vmem:[#allocation3 + $0x190] sm:$0xff]
      %v3903 = vld [vmem:[#allocation3 + $0x198] sm:$0xff]
      %v3904 = vld [vmem:[#allocation3 + $0x1a0] sm:$0xf]
      %v3905 = vld [vmem:[#allocation3 + $0x1a4] sm:$0xff]
      %v3906 = vld [vmem:[#allocation3 + $0x1ac] sm:$0xff]
      %v3907 = vld [vmem:[#allocation3 + $0x1b4] sm:$0xf]
      %v3908 = vld [vmem:[#allocation3 + $0x1b8] sm:$0xff]
      %v3909 = vld [vmem:[#allocation3 + $0x1c0] sm:$0xff]
      %v3910 = vld [vmem:[#allocation3 + $0x1c8] sm:$0xf]
      %v3911 = vld [vmem:[#allocation3 + $0x1cc] sm:$0xff]
      %v3912 = vld [vmem:[#allocation3 + $0x1d4] sm:$0xff]
      %v3913 = vld [vmem:[#allocation3 + $0x1dc] sm:$0xf]
      %v3914 = vld [vmem:[#allocation3 + $0x1e0] sm:$0xff]
      %v3915 = vld [vmem:[#allocation3 + $0x1e8] sm:$0xff]
      %v3916 = vld [vmem:[#allocation3 + $0x1f0] sm:$0xf]
      %v3917 = vld [vmem:[#allocation3 + $0x1f4] sm:$0xff]
      %v3918 = vld [vmem:[#allocation3 + $0x1fc] sm:$0xff]
      %v3919 = vld [vmem:[#allocation3 + $0x204] sm:$0xf]
      %v3920 = vld [vmem:[#allocation3 + $0x208] sm:$0xff]
      %v3921 = vld [vmem:[#allocation3 + $0x210] sm:$0xff]
      %v3922 = vld [vmem:[#allocation3 + $0x218] sm:$0xf]
      %v3923 = vld [vmem:[#allocation3 + $0x21c] sm:$0xff]
      %v3924 = vld [vmem:[#allocation3 + $0x224] sm:$0xff]
      %v3925 = vld [vmem:[#allocation3 + $0x22c] sm:$0xf]
      %v3926 = vld [vmem:[#allocation3 + $0x230] sm:$0xff]
      %v3927 = vld [vmem:[#allocation3 + $0x238] sm:$0xff]
      %v3928 = vld [vmem:[#allocation3 + $0x240] sm:$0xf]
      %v3929 = vld [vmem:[#allocation3 + $0x244] sm:$0xff]
      %v3930 = vld [vmem:[#allocation3 + $0x24c] sm:$0xff]
      %v3931 = vld [vmem:[#allocation3 + $0x254] sm:$0xf]
      %v3932 = vld [vmem:[#allocation3 + $0x258] sm:$0xff]
      %v3933 = vld [vmem:[#allocation3 + $0x260] sm:$0xff]
      %v3934 = vld [vmem:[#allocation3 + $0x268] sm:$0xf]
      %v3935 = vld [vmem:[#allocation3 + $0x26c] sm:$0xff]
      %v3936 = vld [vmem:[#allocation3 + $0x274] sm:$0xff]
      %v3937 = vld [vmem:[#allocation3 + $0x27c] sm:$0xf]
      %v3938 = vld [vmem:[%s4] sm:$0x1]
      %v3940 = vperm.slane %v3938, 0
      %v4038 = vunpack.c.l.b16 %v3842
      %v4039 = vunpack.c.h.b16 %v3842
      %v4040 = vunpack.c.l.b16 %v3843
      %v4041 = vunpack.c.h.b16 %v3843
      %v4042 = vunpack.c.l.b16 %v3844
      %v4043 = vunpack.c.l.b16 %v3845
      %v4044 = vunpack.c.h.b16 %v3845
      %v4045 = vunpack.c.l.b16 %v3846
      %v4046 = vunpack.c.h.b16 %v3846
      %v4047 = vunpack.c.l.b16 %v3847
      %v4048 = vunpack.c.l.b16 %v3848
      %v4049 = vunpack.c.h.b16 %v3848
      %v4050 = vunpack.c.l.b16 %v3849
      %v4051 = vunpack.c.h.b16 %v3849
      %v4052 = vunpack.c.l.b16 %v3850
      %v4053 = vunpack.c.l.b16 %v3851
      %v4054 = vunpack.c.h.b16 %v3851
      %v4055 = vunpack.c.l.b16 %v3852
      %v4056 = vunpack.c.h.b16 %v3852
      %v4057 = vunpack.c.l.b16 %v3853
      %v4058 = vunpack.c.l.b16 %v3854
      %v4059 = vunpack.c.h.b16 %v3854
      %v4060 = vunpack.c.l.b16 %v3855
      %v4061 = vunpack.c.h.b16 %v3855
      %v4062 = vunpack.c.l.b16 %v3856
      %v4063 = vunpack.c.l.b16 %v3857
      %v4064 = vunpack.c.h.b16 %v3857
      %v4065 = vunpack.c.l.b16 %v3858
      %v4066 = vunpack.c.h.b16 %v3858
      %v4067 = vunpack.c.l.b16 %v3859
      %v4068 = vunpack.c.l.b16 %v3860
      %v4069 = vunpack.c.h.b16 %v3860
      %v4070 = vunpack.c.l.b16 %v3861
      %v4071 = vunpack.c.h.b16 %v3861
      %v4072 = vunpack.c.l.b16 %v3862
      %v4073 = vunpack.c.l.b16 %v3863
      %v4074 = vunpack.c.h.b16 %v3863
      %v4075 = vunpack.c.l.b16 %v3864
      %v4076 = vunpack.c.h.b16 %v3864
      %v4077 = vunpack.c.l.b16 %v3865
      %v4078 = vunpack.c.l.b16 %v3866
      %v4079 = vunpack.c.h.b16 %v3866
      %v4080 = vunpack.c.l.b16 %v3867
      %v4081 = vunpack.c.h.b16 %v3867
      %v4082 = vunpack.c.l.b16 %v3868
      %v4083 = vunpack.c.l.b16 %v3869
      %v4084 = vunpack.c.h.b16 %v3869
      %v4085 = vunpack.c.l.b16 %v3870
      %v4086 = vunpack.c.h.b16 %v3870
      %v4087 = vunpack.c.l.b16 %v3871
      %v4088 = vunpack.c.l.b16 %v3872
      %v4089 = vunpack.c.h.b16 %v3872
      %v4090 = vunpack.c.l.b16 %v3873
      %v4091 = vunpack.c.h.b16 %v3873
      %v4092 = vunpack.c.l.b16 %v3874
      %v4093 = vunpack.c.l.b16 %v3875
      %v4094 = vunpack.c.h.b16 %v3875
      %v4095 = vunpack.c.l.b16 %v3876
      %v4096 = vunpack.c.h.b16 %v3876
      %v4097 = vunpack.c.l.b16 %v3877
      %v4098 = vunpack.c.l.b16 %v3878
      %v4099 = vunpack.c.h.b16 %v3878
      %v4100 = vunpack.c.l.b16 %v3879
      %v4101 = vunpack.c.h.b16 %v3879
      %v4102 = vunpack.c.l.b16 %v3880
      %v4103 = vunpack.c.l.b16 %v3881
      %v4104 = vunpack.c.h.b16 %v3881
      %v4105 = vunpack.c.l.b16 %v3882
      %v4106 = vunpack.c.h.b16 %v3882
      %v4107 = vunpack.c.l.b16 %v3883
      %v4108 = vunpack.c.l.b16 %v3884
      %v4109 = vunpack.c.h.b16 %v3884
      %v4110 = vunpack.c.l.b16 %v3885
      %v4111 = vunpack.c.h.b16 %v3885
      %v4112 = vunpack.c.l.b16 %v3886
      %v4113 = vunpack.c.l.b16 %v3887
      %v4114 = vunpack.c.h.b16 %v3887
      %v4115 = vunpack.c.l.b16 %v3888
      %v4116 = vunpack.c.h.b16 %v3888
      %v4117 = vunpack.c.l.b16 %v3889
      %v4118 = vunpack.c.l.b16 %v3890
      %v4119 = vunpack.c.h.b16 %v3890
      %v4120 = vunpack.c.l.b16 %v3891
      %v4121 = vunpack.c.h.b16 %v3891
      %v4122 = vunpack.c.l.b16 %v3892
      %v4123 = vunpack.c.l.b16 %v3893
      %v4124 = vunpack.c.h.b16 %v3893
      %v4125 = vunpack.c.l.b16 %v3894
      %v4126 = vunpack.c.h.b16 %v3894
      %v4127 = vunpack.c.l.b16 %v3895
      %v4128 = vunpack.c.l.b16 %v3896
      %v4129 = vunpack.c.h.b16 %v3896
      %v4130 = vunpack.c.l.b16 %v3897
      %v4131 = vunpack.c.h.b16 %v3897
      %v4132 = vunpack.c.l.b16 %v3898
      %v4133 = vunpack.c.l.b16 %v3899
      %v4134 = vunpack.c.h.b16 %v3899
      %v4135 = vunpack.c.l.b16 %v3900
      %v4136 = vunpack.c.h.b16 %v3900
      %v4137 = vunpack.c.l.b16 %v3901
      %v4138 = vunpack.c.l.b16 %v3902
      %v4139 = vunpack.c.h.b16 %v3902
      %v4140 = vunpack.c.l.b16 %v3903
      %v4141 = vunpack.c.h.b16 %v3903
      %v4142 = vunpack.c.l.b16 %v3904
      %v4143 = vunpack.c.l.b16 %v3905
      %v4144 = vunpack.c.h.b16 %v3905
      %v4145 = vunpack.c.l.b16 %v3906
      %v4146 = vunpack.c.h.b16 %v3906
      %v4147 = vunpack.c.l.b16 %v3907
      %v4148 = vunpack.c.l.b16 %v3908
      %v4149 = vunpack.c.h.b16 %v3908
      %v4150 = vunpack.c.l.b16 %v3909
      %v4151 = vunpack.c.h.b16 %v3909
      %v4152 = vunpack.c.l.b16 %v3910
      %v4153 = vunpack.c.l.b16 %v3911
      %v4154 = vunpack.c.h.b16 %v3911
      %v4155 = vunpack.c.l.b16 %v3912
      %v4156 = vunpack.c.h.b16 %v3912
      %v4157 = vunpack.c.l.b16 %v3913
      %v4158 = vunpack.c.l.b16 %v3914
      %v4159 = vunpack.c.h.b16 %v3914
      %v4160 = vunpack.c.l.b16 %v3915
      %v4161 = vunpack.c.h.b16 %v3915
      %v4162 = vunpack.c.l.b16 %v3916
      %v4163 = vunpack.c.l.b16 %v3917
      %v4164 = vunpack.c.h.b16 %v3917
      %v4165 = vunpack.c.l.b16 %v3918
      %v4166 = vunpack.c.h.b16 %v3918
      %v4167 = vunpack.c.l.b16 %v3919
      %v4168 = vunpack.c.l.b16 %v3920
      %v4169 = vunpack.c.h.b16 %v3920
      %v4170 = vunpack.c.l.b16 %v3921
      %v4171 = vunpack.c.h.b16 %v3921
      %v4172 = vunpack.c.l.b16 %v3922
      %v4173 = vunpack.c.l.b16 %v3923
      %v4174 = vunpack.c.h.b16 %v3923
      %v4175 = vunpack.c.l.b16 %v3924
      %v4176 = vunpack.c.h.b16 %v3924
      %v4177 = vunpack.c.l.b16 %v3925
      %v4178 = vunpack.c.l.b16 %v3926
      %v4179 = vunpack.c.h.b16 %v3926
      %v4180 = vunpack.c.l.b16 %v3927
      %v4181 = vunpack.c.h.b16 %v3927
      %v4182 = vunpack.c.l.b16 %v3928
      %v4183 = vunpack.c.l.b16 %v3929
      %v4184 = vunpack.c.h.b16 %v3929
      %v4185 = vunpack.c.l.b16 %v3930
      %v4186 = vunpack.c.h.b16 %v3930
      %v4187 = vunpack.c.l.b16 %v3931
      %v4188 = vunpack.c.l.b16 %v3932
      %v4189 = vunpack.c.h.b16 %v3932
      %v4190 = vunpack.c.l.b16 %v3933
      %v4191 = vunpack.c.h.b16 %v3933
      %v4192 = vunpack.c.l.b16 %v3934
      %v4193 = vunpack.c.l.b16 %v3935
      %v4194 = vunpack.c.h.b16 %v3935
      %v4195 = vunpack.c.l.b16 %v3936
      %v4196 = vunpack.c.h.b16 %v3936
      %v4197 = vunpack.c.l.b16 %v3937
      %v4198 = vpack.c.b16 %v4043, %v4038
      %v4199 = vpack.c.b16 %v4044, %v4039
      %v4200 = vpack.c.b16 %v4045, %v4040
      %v4201 = vpack.c.b16 %v4046, %v4041
      %v4202 = vpack.c.b16 %v4047, %v4042
      %v4203 = vpack.c.b16 %v4053, %v4048
      %v4204 = vpack.c.b16 %v4054, %v4049
      %v4205 = vpack.c.b16 %v4055, %v4050
      %v4206 = vpack.c.b16 %v4056, %v4051
      %v4207 = vpack.c.b16 %v4057, %v4052
      %v4208 = vpack.c.b16 %v4063, %v4058
      %v4209 = vpack.c.b16 %v4064, %v4059
      %v4210 = vpack.c.b16 %v4065, %v4060
      %v4211 = vpack.c.b16 %v4066, %v4061
      %v4212 = vpack.c.b16 %v4067, %v4062
      %v4213 = vpack.c.b16 %v4073, %v4068
      %v4214 = vpack.c.b16 %v4074, %v4069
      %v4215 = vpack.c.b16 %v4075, %v4070
      %v4216 = vpack.c.b16 %v4076, %v4071
      %v4217 = vpack.c.b16 %v4077, %v4072
      %v4218 = vpack.c.b16 %v4083, %v4078
      %v4219 = vpack.c.b16 %v4084, %v4079
      %v4220 = vpack.c.b16 %v4085, %v4080
      %v4221 = vpack.c.b16 %v4086, %v4081
      %v4222 = vpack.c.b16 %v4087, %v4082
      %v4223 = vpack.c.b16 %v4093, %v4088
      %v4224 = vpack.c.b16 %v4094, %v4089
      %v4225 = vpack.c.b16 %v4095, %v4090
      %v4226 = vpack.c.b16 %v4096, %v4091
      %v4227 = vpack.c.b16 %v4097, %v4092
      %v4228 = vpack.c.b16 %v4103, %v4098
      %v4229 = vpack.c.b16 %v4104, %v4099
      %v4230 = vpack.c.b16 %v4105, %v4100
      %v4231 = vpack.c.b16 %v4106, %v4101
      %v4232 = vpack.c.b16 %v4107, %v4102
      %v4233 = vpack.c.b16 %v4113, %v4108
      %v4234 = vpack.c.b16 %v4114, %v4109
      %v4235 = vpack.c.b16 %v4115, %v4110
      %v4236 = vpack.c.b16 %v4116, %v4111
      %v4237 = vpack.c.b16 %v4117, %v4112
      %v4238 = vpack.c.b16 %v4123, %v4118
      %v4239 = vpack.c.b16 %v4124, %v4119
      %v4240 = vpack.c.b16 %v4125, %v4120
      %v4241 = vpack.c.b16 %v4126, %v4121
      %v4242 = vpack.c.b16 %v4127, %v4122
      %v4243 = vpack.c.b16 %v4133, %v4128
      %v4244 = vpack.c.b16 %v4134, %v4129
      %v4245 = vpack.c.b16 %v4135, %v4130
      %v4246 = vpack.c.b16 %v4136, %v4131
      %v4247 = vpack.c.b16 %v4137, %v4132
      %v4248 = vpack.c.b16 %v4143, %v4138
      %v4249 = vpack.c.b16 %v4144, %v4139
      %v4250 = vpack.c.b16 %v4145, %v4140
      %v4251 = vpack.c.b16 %v4146, %v4141
      %v4252 = vpack.c.b16 %v4147, %v4142
      %v4253 = vpack.c.b16 %v4153, %v4148
      %v4254 = vpack.c.b16 %v4154, %v4149
      %v4255 = vpack.c.b16 %v4155, %v4150
      %v4256 = vpack.c.b16 %v4156, %v4151
      %v4257 = vpack.c.b16 %v4157, %v4152
      %v4258 = vpack.c.b16 %v4163, %v4158
      %v4259 = vpack.c.b16 %v4164, %v4159
      %v4260 = vpack.c.b16 %v4165, %v4160
      %v4261 = vpack.c.b16 %v4166, %v4161
      %v4262 = vpack.c.b16 %v4167, %v4162
      %v4263 = vpack.c.b16 %v4173, %v4168
      %v4264 = vpack.c.b16 %v4174, %v4169
      %v4265 = vpack.c.b16 %v4175, %v4170
      %v4266 = vpack.c.b16 %v4176, %v4171
      %v4267 = vpack.c.b16 %v4177, %v4172
      %v4268 = vpack.c.b16 %v4183, %v4178
      %v4269 = vpack.c.b16 %v4184, %v4179
      %v4270 = vpack.c.b16 %v4185, %v4180
      %v4271 = vpack.c.b16 %v4186, %v4181
      %v4272 = vpack.c.b16 %v4187, %v4182
      %v4273 = vpack.c.b16 %v4193, %v4188
      %v4274 = vpack.c.b16 %v4194, %v4189
      %v4275 = vpack.c.b16 %v4195, %v4190
      %v4276 = vpack.c.b16 %v4196, %v4191
      %v4277 = vpack.c.b16 %v4197, %v4192
      %v4414 = vunpack.c.l.b16 %v3770
      %v4415 = vunpack.c.l.b16 %v3771
      %v4416 = vunpack.c.l.b16 %v3772
      %v4417 = vunpack.c.l.b16 %v3773
      %v4418 = vunpack.c.l.b16 %v3774
      %v4419 = vunpack.c.l.b16 %v3775
      %v4420 = vunpack.c.l.b16 %v3776
      %v4421 = vunpack.c.l.b16 %v3777
      %v4422 = vunpack.c.l.b16 %v3778
      %v4423 = vunpack.c.l.b16 %v3779
      %v4424 = vunpack.c.l.b16 %v3780
      %v4425 = vunpack.c.l.b16 %v3781
      %v4426 = vunpack.c.l.b16 %v3782
      %v4427 = vunpack.c.l.b16 %v3783
      %v4428 = vunpack.c.l.b16 %v3784
      %v4429 = vunpack.c.l.b16 %v3785
      %v4430 = vunpack.c.l.b16 %v3786
      %v4431 = vunpack.c.l.b16 %v3787
      %v4432 = vunpack.c.l.b16 %v3788
      %v4433 = vunpack.c.l.b16 %v3789
      %v4434 = vunpack.c.l.b16 %v3790
      %v4435 = vunpack.c.l.b16 %v3791
      %v4436 = vunpack.c.l.b16 %v3792
      %v4437 = vunpack.c.l.b16 %v3793
      %v4438 = vunpack.c.l.b16 %v3794
      %v4439 = vunpack.c.l.b16 %v3795
      %v4440 = vunpack.c.l.b16 %v3796
      %v4441 = vunpack.c.l.b16 %v3797
      %v4442 = vunpack.c.l.b16 %v3798
      %v4443 = vunpack.c.l.b16 %v3799
      %v4444 = vunpack.c.l.b16 %v3800
      %v4445 = vunpack.c.l.b16 %v3801
      %v4446 = vunpack.c.l.b16 %v3802
      %v4447 = vunpack.c.l.b16 %v3803
      %v4448 = vunpack.c.l.b16 %v3804
      %v4449 = vunpack.c.l.b16 %v3805
      %v4450 = vunpack.c.l.b16 %v3806
      %v4451 = vunpack.c.l.b16 %v3807
      %v4452 = vunpack.c.l.b16 %v3808
      %v4453 = vunpack.c.l.b16 %v3809
      %v4454 = vunpack.c.l.b16 %v3810
      %v4455 = vunpack.c.l.b16 %v3811
      %v4456 = vunpack.c.l.b16 %v3812
      %v4457 = vunpack.c.l.b16 %v3813
      %v4458 = vunpack.c.l.b16 %v3814
      %v4459 = vunpack.c.l.b16 %v3815
      %v4460 = vunpack.c.l.b16 %v3816
      %v4461 = vunpack.c.l.b16 %v3817
      %v4462 = vunpack.c.l.b16 %v3818
      %v4463 = vunpack.c.l.b16 %v3819
      %v4464 = vunpack.c.l.b16 %v3820
      %v4465 = vunpack.c.l.b16 %v3821
      %v4466 = vunpack.c.l.b16 %v3822
      %v4467 = vunpack.c.l.b16 %v3823
      %v4468 = vunpack.c.l.b16 %v3824
      %v4469 = vunpack.c.l.b16 %v3825
      %v4470 = vunpack.c.l.b16 %v3826
      %v4471 = vunpack.c.l.b16 %v3827
      %v4472 = vunpack.c.l.b16 %v3828
      %v4473 = vunpack.c.l.b16 %v3829
      %v4474 = vunpack.c.l.b16 %v3830
      %v4475 = vunpack.c.l.b16 %v3831
      %v4476 = vunpack.c.l.b16 %v3832
      %v4477 = vunpack.c.l.b16 %v3833
      %v4478 = vunpack.c.l.b16 %v3834
      %v4479 = vunpack.c.l.b16 %v3835
      %v4480 = vunpack.c.l.b16 %v3836
      %v4481 = vunpack.c.l.b16 %v3837
      %v4482 = vunpack.c.l.b16 %v3838
      %v4483 = vunpack.c.l.b16 %v3839
      %v4484 = vunpack.c.l.b16 %v3840
      %v4485 = vunpack.c.l.b16 %v3841
      %v4486 = vpack.c.b16 %v4415, %v4414
      %v4487 = vpack.c.b16 %v4417, %v4416
      %v4488 = vpack.c.b16 %v4419, %v4418
      %v4489 = vpack.c.b16 %v4421, %v4420
      %v4490 = vpack.c.b16 %v4423, %v4422
      %v4491 = vpack.c.b16 %v4425, %v4424
      %v4492 = vpack.c.b16 %v4427, %v4426
      %v4493 = vpack.c.b16 %v4429, %v4428
      %v4494 = vpack.c.b16 %v4431, %v4430
      %v4495 = vpack.c.b16 %v4433, %v4432
      %v4496 = vpack.c.b16 %v4435, %v4434
      %v4497 = vpack.c.b16 %v4437, %v4436
      %v4498 = vpack.c.b16 %v4439, %v4438
      %v4499 = vpack.c.b16 %v4441, %v4440
      %v4500 = vpack.c.b16 %v4443, %v4442
      %v4501 = vpack.c.b16 %v4445, %v4444
      %v4502 = vpack.c.b16 %v4447, %v4446
      %v4503 = vpack.c.b16 %v4449, %v4448
      %v4504 = vpack.c.b16 %v4451, %v4450
      %v4505 = vpack.c.b16 %v4453, %v4452
      %v4506 = vpack.c.b16 %v4455, %v4454
      %v4507 = vpack.c.b16 %v4457, %v4456
      %v4508 = vpack.c.b16 %v4459, %v4458
      %v4509 = vpack.c.b16 %v4461, %v4460
      %v4510 = vpack.c.b16 %v4463, %v4462
      %v4511 = vpack.c.b16 %v4465, %v4464
      %v4512 = vpack.c.b16 %v4467, %v4466
      %v4513 = vpack.c.b16 %v4469, %v4468
      %v4514 = vpack.c.b16 %v4471, %v4470
      %v4515 = vpack.c.b16 %v4473, %v4472
      %v4516 = vpack.c.b16 %v4475, %v4474
      %v4517 = vpack.c.b16 %v4477, %v4476
      %v4518 = vpack.c.b16 %v4479, %v4478
      %v4519 = vpack.c.b16 %v4481, %v4480
      %v4520 = vpack.c.b16 %v4483, %v4482
      %v4521 = vpack.c.b16 %v4485, %v4484
      %v4559 = vsel %vm903, %v4202, 0
      %v4562 = vsel %vm903, %v4207, 0
      %v4565 = vsel %vm903, %v4212, 0
      %v4568 = vsel %vm903, %v4217, 0
      %v4571 = vsel %vm903, %v4222, 0
      %v4574 = vsel %vm903, %v4227, 0
      %v4577 = vsel %vm903, %v4232, 0
      %v4580 = vsel %vm903, %v4237, 0
      %v4583 = vsel %vm903, %v4242, 0
      %v4586 = vsel %vm903, %v4247, 0
      %v4589 = vsel %vm903, %v4252, 0
      %v4592 = vsel %vm903, %v4257, 0
      %v4595 = vsel %vm903, %v4262, 0
      %v4598 = vsel %vm903, %v4267, 0
      %v4601 = vsel %vm903, %v4272, 0
      %v4604 = vsel %vm903, %v4277, 0
      %4606 = vmatpush.bf16.msra.mxu0 %v4493
      %4607 = vmatpush.bf16.msra.mxu0 %v4492
      %4608 = vmatpush.bf16.msra.mxu0 %v4491
      %4609 = vmatpush.bf16.msra.mxu0 %v4490
      %4610 = vmatpush.bf16.msra.mxu0 %v4489
      %4611 = vmatpush.bf16.msra.mxu0 %v4488
      %4612 = vmatpush.bf16.msra.mxu0 %v4487
      %4613 = vmatpush.bf16.msra.mxu0 %v4486
      %4614 = vmatmul.bf16.gmra.mxu0 %v4198
      %v4615 = vpop.f32.mrf.mxu0
      %v4616 = vadd.f32 %v3940, %v4615
      %v4617 = vpop.f32.mrf.mxu0
      %v4618 = vadd.f32 %v3940, %v4617
      %4619 = vmatmul.bf16.gmra.mxu0 %v4203
      %v4620 = vpop.f32.mrf.mxu0
      %v4621 = vadd.f32 %v3940, %v4620
      %v4622 = vpop.f32.mrf.mxu0
      %v4623 = vadd.f32 %v3940, %v4622
      %4624 = vmatmul.bf16.gmra.mxu0 %v4208
      %v4625 = vpop.f32.mrf.mxu0
      %v4626 = vadd.f32 %v3940, %v4625
      %v4627 = vpop.f32.mrf.mxu0
      %v4628 = vadd.f32 %v3940, %v4627
      %4629 = vmatmul.bf16.gmra.mxu0 %v4213
      %v4630 = vpop.f32.mrf.mxu0
      %v4631 = vadd.f32 %v3940, %v4630
      %v4632 = vpop.f32.mrf.mxu0
      %v4633 = vadd.f32 %v3940, %v4632
      %4634 = vmatmul.bf16.gmra.mxu0 %v4218
      %v4635 = vpop.f32.mrf.mxu0
      %v4636 = vadd.f32 %v3940, %v4635
      %v4637 = vpop.f32.mrf.mxu0
      %v4638 = vadd.f32 %v3940, %v4637
      %4639 = vmatmul.bf16.gmra.mxu0 %v4223
      %v4640 = vpop.f32.mrf.mxu0
      %v4641 = vadd.f32 %v3940, %v4640
      %v4642 = vpop.f32.mrf.mxu0
      %v4643 = vadd.f32 %v3940, %v4642
      %4644 = vmatmul.bf16.gmra.mxu0 %v4228
      %v4645 = vpop.f32.mrf.mxu0
      %v4646 = vadd.f32 %v3940, %v4645
      %v4647 = vpop.f32.mrf.mxu0
      %v4648 = vadd.f32 %v3940, %v4647
      %4649 = vmatmul.bf16.gmra.mxu0 %v4233
      %v4650 = vpop.f32.mrf.mxu0
      %v4651 = vadd.f32 %v3940, %v4650
      %v4652 = vpop.f32.mrf.mxu0
      %v4653 = vadd.f32 %v3940, %v4652
      %4654 = vmatmul.bf16.gmra.mxu0 %v4238
      %v4655 = vpop.f32.mrf.mxu0
      %v4656 = vadd.f32 %v3940, %v4655
      %v4657 = vpop.f32.mrf.mxu0
      %v4658 = vadd.f32 %v3940, %v4657
      %4659 = vmatmul.bf16.gmra.mxu0 %v4243
      %v4660 = vpop.f32.mrf.mxu0
      %v4661 = vadd.f32 %v3940, %v4660
      %v4662 = vpop.f32.mrf.mxu0
      %v4663 = vadd.f32 %v3940, %v4662
      %4664 = vmatmul.bf16.gmra.mxu0 %v4248
      %v4665 = vpop.f32.mrf.mxu0
      %v4666 = vadd.f32 %v3940, %v4665
      %v4667 = vpop.f32.mrf.mxu0
      %v4668 = vadd.f32 %v3940, %v4667
      %4669 = vmatmul.bf16.gmra.mxu0 %v4253
      %v4670 = vpop.f32.mrf.mxu0
      %v4671 = vadd.f32 %v3940, %v4670
      %v4672 = vpop.f32.mrf.mxu0
      %v4673 = vadd.f32 %v3940, %v4672
      %4674 = vmatmul.bf16.gmra.mxu0 %v4258
      %v4675 = vpop.f32.mrf.mxu0
      %v4676 = vadd.f32 %v3940, %v4675
      %v4677 = vpop.f32.mrf.mxu0
      %v4678 = vadd.f32 %v3940, %v4677
      %4679 = vmatmul.bf16.gmra.mxu0 %v4263
      %v4680 = vpop.f32.mrf.mxu0
      %v4681 = vadd.f32 %v3940, %v4680
      %v4682 = vpop.f32.mrf.mxu0
      %v4683 = vadd.f32 %v3940, %v4682
      %4684 = vmatmul.bf16.gmra.mxu0 %v4268
      %v4685 = vpop.f32.mrf.mxu0
      %v4686 = vadd.f32 %v3940, %v4685
      %v4687 = vpop.f32.mrf.mxu0
      %v4688 = vadd.f32 %v3940, %v4687
      %4689 = vmatmul.bf16.gmra.mxu0 %v4273
      %v4690 = vpop.f32.mrf.mxu0
      %v4691 = vadd.f32 %v3940, %v4690
      %v4692 = vpop.f32.mrf.mxu0
      %v4693 = vadd.f32 %v3940, %v4692
      %4694 = vdwg.mxu0
      %4695 = vmatpush.bf16.msra.mxu0 %v4501
      %4696 = vmatpush.bf16.msra.mxu0 %v4500
      %4697 = vmatpush.bf16.msra.mxu0 %v4499
      %4698 = vmatpush.bf16.msra.mxu0 %v4498
      %4699 = vmatpush.bf16.msra.mxu0 %v4497
      %4700 = vmatpush.bf16.msra.mxu0 %v4496
      %4701 = vmatpush.bf16.msra.mxu0 %v4495
      %4702 = vmatpush.bf16.msra.mxu0 %v4494
      %4703 = vmatmul.bf16.gmra.mxu0 %v4199
      %v4704 = vpop.f32.mrf.mxu0
      %v4705 = vadd.f32 %v4616, %v4704
      %v4706 = vpop.f32.mrf.mxu0
      %v4707 = vadd.f32 %v4618, %v4706
      %4708 = vmatmul.bf16.gmra.mxu0 %v4204
      %v4709 = vpop.f32.mrf.mxu0
      %v4710 = vadd.f32 %v4621, %v4709
      %v4711 = vpop.f32.mrf.mxu0
      %v4712 = vadd.f32 %v4623, %v4711
      %4713 = vmatmul.bf16.gmra.mxu0 %v4209
      %v4714 = vpop.f32.mrf.mxu0
      %v4715 = vadd.f32 %v4626, %v4714
      %v4716 = vpop.f32.mrf.mxu0
      %v4717 = vadd.f32 %v4628, %v4716
      %4718 = vmatmul.bf16.gmra.mxu0 %v4214
      %v4719 = vpop.f32.mrf.mxu0
      %v4720 = vadd.f32 %v4631, %v4719
      %v4721 = vpop.f32.mrf.mxu0
      %v4722 = vadd.f32 %v4633, %v4721
      %4723 = vmatmul.bf16.gmra.mxu0 %v4219
      %v4724 = vpop.f32.mrf.mxu0
      %v4725 = vadd.f32 %v4636, %v4724
      %v4726 = vpop.f32.mrf.mxu0
      %v4727 = vadd.f32 %v4638, %v4726
      %4728 = vmatmul.bf16.gmra.mxu0 %v4224
      %v4729 = vpop.f32.mrf.mxu0
      %v4730 = vadd.f32 %v4641, %v4729
      %v4731 = vpop.f32.mrf.mxu0
      %v4732 = vadd.f32 %v4643, %v4731
      %4733 = vmatmul.bf16.gmra.mxu0 %v4229
      %v4734 = vpop.f32.mrf.mxu0
      %v4735 = vadd.f32 %v4646, %v4734
      %v4736 = vpop.f32.mrf.mxu0
      %v4737 = vadd.f32 %v4648, %v4736
      %4738 = vmatmul.bf16.gmra.mxu0 %v4234
      %v4739 = vpop.f32.mrf.mxu0
      %v4740 = vadd.f32 %v4651, %v4739
      %v4741 = vpop.f32.mrf.mxu0
      %v4742 = vadd.f32 %v4653, %v4741
      %4743 = vmatmul.bf16.gmra.mxu0 %v4239
      %v4744 = vpop.f32.mrf.mxu0
      %v4745 = vadd.f32 %v4656, %v4744
      %v4746 = vpop.f32.mrf.mxu0
      %v4747 = vadd.f32 %v4658, %v4746
      %4748 = vmatmul.bf16.gmra.mxu0 %v4244
      %v4749 = vpop.f32.mrf.mxu0
      %v4750 = vadd.f32 %v4661, %v4749
      %v4751 = vpop.f32.mrf.mxu0
      %v4752 = vadd.f32 %v4663, %v4751
      %4753 = vmatmul.bf16.gmra.mxu0 %v4249
      %v4754 = vpop.f32.mrf.mxu0
      %v4755 = vadd.f32 %v4666, %v4754
      %v4756 = vpop.f32.mrf.mxu0
      %v4757 = vadd.f32 %v4668, %v4756
      %4758 = vmatmul.bf16.gmra.mxu0 %v4254
      %v4759 = vpop.f32.mrf.mxu0
      %v4760 = vadd.f32 %v4671, %v4759
      %v4761 = vpop.f32.mrf.mxu0
      %v4762 = vadd.f32 %v4673, %v4761
      %4763 = vmatmul.bf16.gmra.mxu0 %v4259
      %v4764 = vpop.f32.mrf.mxu0
      %v4765 = vadd.f32 %v4676, %v4764
      %v4766 = vpop.f32.mrf.mxu0
      %v4767 = vadd.f32 %v4678, %v4766
      %4768 = vmatmul.bf16.gmra.mxu0 %v4264
      %v4769 = vpop.f32.mrf.mxu0
      %v4770 = vadd.f32 %v4681, %v4769
      %v4771 = vpop.f32.mrf.mxu0
      %v4772 = vadd.f32 %v4683, %v4771
      %4773 = vmatmul.bf16.gmra.mxu0 %v4269
      %v4774 = vpop.f32.mrf.mxu0
      %v4775 = vadd.f32 %v4686, %v4774
      %v4776 = vpop.f32.mrf.mxu0
      %v4777 = vadd.f32 %v4688, %v4776
      %4778 = vmatmul.bf16.gmra.mxu0 %v4274
      %v4779 = vpop.f32.mrf.mxu0
      %v4780 = vadd.f32 %v4691, %v4779
      %v4781 = vpop.f32.mrf.mxu0
      %v4782 = vadd.f32 %v4693, %v4781
      %4783 = vdwg.mxu0
      %4784 = vmatpush.bf16.msra.mxu0 %v4509
      %4785 = vmatpush.bf16.msra.mxu0 %v4508
      %4786 = vmatpush.bf16.msra.mxu0 %v4507
      %4787 = vmatpush.bf16.msra.mxu0 %v4506
      %4788 = vmatpush.bf16.msra.mxu0 %v4505
      %4789 = vmatpush.bf16.msra.mxu0 %v4504
      %4790 = vmatpush.bf16.msra.mxu0 %v4503
      %4791 = vmatpush.bf16.msra.mxu0 %v4502
      %4792 = vmatmul.bf16.gmra.mxu0 %v4200
      %v4793 = vpop.f32.mrf.mxu0
      %v4794 = vadd.f32 %v4705, %v4793
      %v4795 = vpop.f32.mrf.mxu0
      %v4796 = vadd.f32 %v4707, %v4795
      %4797 = vmatmul.bf16.gmra.mxu0 %v4205
      %v4798 = vpop.f32.mrf.mxu0
      %v4799 = vadd.f32 %v4710, %v4798
      %v4800 = vpop.f32.mrf.mxu0
      %v4801 = vadd.f32 %v4712, %v4800
      %4802 = vmatmul.bf16.gmra.mxu0 %v4210
      %v4803 = vpop.f32.mrf.mxu0
      %v4804 = vadd.f32 %v4715, %v4803
      %v4805 = vpop.f32.mrf.mxu0
      %v4806 = vadd.f32 %v4717, %v4805
      %4807 = vmatmul.bf16.gmra.mxu0 %v4215
      %v4808 = vpop.f32.mrf.mxu0
      %v4809 = vadd.f32 %v4720, %v4808
      %v4810 = vpop.f32.mrf.mxu0
      %v4811 = vadd.f32 %v4722, %v4810
      %4812 = vmatmul.bf16.gmra.mxu0 %v4220
      %v4813 = vpop.f32.mrf.mxu0
      %v4814 = vadd.f32 %v4725, %v4813
      %v4815 = vpop.f32.mrf.mxu0
      %v4816 = vadd.f32 %v4727, %v4815
      %4817 = vmatmul.bf16.gmra.mxu0 %v4225
      %v4818 = vpop.f32.mrf.mxu0
      %v4819 = vadd.f32 %v4730, %v4818
      %v4820 = vpop.f32.mrf.mxu0
      %v4821 = vadd.f32 %v4732, %v4820
      %4822 = vmatmul.bf16.gmra.mxu0 %v4230
      %v4823 = vpop.f32.mrf.mxu0
      %v4824 = vadd.f32 %v4735, %v4823
      %v4825 = vpop.f32.mrf.mxu0
      %v4826 = vadd.f32 %v4737, %v4825
      %4827 = vmatmul.bf16.gmra.mxu0 %v4235
      %v4828 = vpop.f32.mrf.mxu0
      %v4829 = vadd.f32 %v4740, %v4828
      %v4830 = vpop.f32.mrf.mxu0
      %v4831 = vadd.f32 %v4742, %v4830
      %4832 = vmatmul.bf16.gmra.mxu0 %v4240
      %v4833 = vpop.f32.mrf.mxu0
      %v4834 = vadd.f32 %v4745, %v4833
      %v4835 = vpop.f32.mrf.mxu0
      %v4836 = vadd.f32 %v4747, %v4835
      %4837 = vmatmul.bf16.gmra.mxu0 %v4245
      %v4838 = vpop.f32.mrf.mxu0
      %v4839 = vadd.f32 %v4750, %v4838
      %v4840 = vpop.f32.mrf.mxu0
      %v4841 = vadd.f32 %v4752, %v4840
      %4842 = vmatmul.bf16.gmra.mxu0 %v4250
      %v4843 = vpop.f32.mrf.mxu0
      %v4844 = vadd.f32 %v4755, %v4843
      %v4845 = vpop.f32.mrf.mxu0
      %v4846 = vadd.f32 %v4757, %v4845
      %4847 = vmatmul.bf16.gmra.mxu0 %v4255
      %v4848 = vpop.f32.mrf.mxu0
      %v4849 = vadd.f32 %v4760, %v4848
      %v4850 = vpop.f32.mrf.mxu0
      %v4851 = vadd.f32 %v4762, %v4850
      %4852 = vmatmul.bf16.gmra.mxu0 %v4260
      %v4853 = vpop.f32.mrf.mxu0
      %v4854 = vadd.f32 %v4765, %v4853
      %v4855 = vpop.f32.mrf.mxu0
      %v4856 = vadd.f32 %v4767, %v4855
      %4857 = vmatmul.bf16.gmra.mxu0 %v4265
      %v4858 = vpop.f32.mrf.mxu0
      %v4859 = vadd.f32 %v4770, %v4858
      %v4860 = vpop.f32.mrf.mxu0
      %v4861 = vadd.f32 %v4772, %v4860
      %4862 = vmatmul.bf16.gmra.mxu0 %v4270
      %v4863 = vpop.f32.mrf.mxu0
      %v4864 = vadd.f32 %v4775, %v4863
      %v4865 = vpop.f32.mrf.mxu0
      %v4866 = vadd.f32 %v4777, %v4865
      %4867 = vmatmul.bf16.gmra.mxu0 %v4275
      %v4868 = vpop.f32.mrf.mxu0
      %v4869 = vadd.f32 %v4780, %v4868
      %v4870 = vpop.f32.mrf.mxu0
      %v4871 = vadd.f32 %v4782, %v4870
      %4872 = vdwg.mxu0
      %4873 = vmatpush.bf16.msra.mxu0 %v4517
      %4874 = vmatpush.bf16.msra.mxu0 %v4516
      %4875 = vmatpush.bf16.msra.mxu0 %v4515
      %4876 = vmatpush.bf16.msra.mxu0 %v4514
      %4877 = vmatpush.bf16.msra.mxu0 %v4513
      %4878 = vmatpush.bf16.msra.mxu0 %v4512
      %4879 = vmatpush.bf16.msra.mxu0 %v4511
      %4880 = vmatpush.bf16.msra.mxu0 %v4510
      %4881 = vmatmul.bf16.gmra.mxu0 %v4201
      %v4882 = vpop.f32.mrf.mxu0
      %v4883 = vadd.f32 %v4794, %v4882
      %v4884 = vpop.f32.mrf.mxu0
      %v4885 = vadd.f32 %v4796, %v4884
      %4886 = vmatmul.bf16.gmra.mxu0 %v4206
      %v4887 = vpop.f32.mrf.mxu0
      %v4888 = vadd.f32 %v4799, %v4887
      %v4889 = vpop.f32.mrf.mxu0
      %v4890 = vadd.f32 %v4801, %v4889
      %4891 = vmatmul.bf16.gmra.mxu0 %v4211
      %v4892 = vpop.f32.mrf.mxu0
      %v4893 = vadd.f32 %v4804, %v4892
      %v4894 = vpop.f32.mrf.mxu0
      %v4895 = vadd.f32 %v4806, %v4894
      %4896 = vmatmul.bf16.gmra.mxu0 %v4216
      %v4897 = vpop.f32.mrf.mxu0
      %v4898 = vadd.f32 %v4809, %v4897
      %v4899 = vpop.f32.mrf.mxu0
      %v4900 = vadd.f32 %v4811, %v4899
      %4901 = vmatmul.bf16.gmra.mxu0 %v4221
      %v4902 = vpop.f32.mrf.mxu0
      %v4903 = vadd.f32 %v4814, %v4902
      %v4904 = vpop.f32.mrf.mxu0
      %v4905 = vadd.f32 %v4816, %v4904
      %4906 = vmatmul.bf16.gmra.mxu0 %v4226
      %v4907 = vpop.f32.mrf.mxu0
      %v4908 = vadd.f32 %v4819, %v4907
      %v4909 = vpop.f32.mrf.mxu0
      %v4910 = vadd.f32 %v4821, %v4909
      %4911 = vmatmul.bf16.gmra.mxu0 %v4231
      %v4912 = vpop.f32.mrf.mxu0
      %v4913 = vadd.f32 %v4824, %v4912
      %v4914 = vpop.f32.mrf.mxu0
      %v4915 = vadd.f32 %v4826, %v4914
      %4916 = vmatmul.bf16.gmra.mxu0 %v4236
      %v4917 = vpop.f32.mrf.mxu0
      %v4918 = vadd.f32 %v4829, %v4917
      %v4919 = vpop.f32.mrf.mxu0
      %v4920 = vadd.f32 %v4831, %v4919
      %4921 = vmatmul.bf16.gmra.mxu0 %v4241
      %v4922 = vpop.f32.mrf.mxu0
      %v4923 = vadd.f32 %v4834, %v4922
      %v4924 = vpop.f32.mrf.mxu0
      %v4925 = vadd.f32 %v4836, %v4924
      %4926 = vmatmul.bf16.gmra.mxu0 %v4246
      %v4927 = vpop.f32.mrf.mxu0
      %v4928 = vadd.f32 %v4839, %v4927
      %v4929 = vpop.f32.mrf.mxu0
      %v4930 = vadd.f32 %v4841, %v4929
      %4931 = vmatmul.bf16.gmra.mxu0 %v4251
      %v4932 = vpop.f32.mrf.mxu0
      %v4933 = vadd.f32 %v4844, %v4932
      %v4934 = vpop.f32.mrf.mxu0
      %v4935 = vadd.f32 %v4846, %v4934
      %4936 = vmatmul.bf16.gmra.mxu0 %v4256
      %v4937 = vpop.f32.mrf.mxu0
      %v4938 = vadd.f32 %v4849, %v4937
      %v4939 = vpop.f32.mrf.mxu0
      %v4940 = vadd.f32 %v4851, %v4939
      %4941 = vmatmul.bf16.gmra.mxu0 %v4261
      %v4942 = vpop.f32.mrf.mxu0
      %v4943 = vadd.f32 %v4854, %v4942
      %v4944 = vpop.f32.mrf.mxu0
      %v4945 = vadd.f32 %v4856, %v4944
      %4946 = vmatmul.bf16.gmra.mxu0 %v4266
      %v4947 = vpop.f32.mrf.mxu0
      %v4948 = vadd.f32 %v4859, %v4947
      %v4949 = vpop.f32.mrf.mxu0
      %v4950 = vadd.f32 %v4861, %v4949
      %4951 = vmatmul.bf16.gmra.mxu0 %v4271
      %v4952 = vpop.f32.mrf.mxu0
      %v4953 = vadd.f32 %v4864, %v4952
      %v4954 = vpop.f32.mrf.mxu0
      %v4955 = vadd.f32 %v4866, %v4954
      %4956 = vmatmul.bf16.gmra.mxu0 %v4276
      %v4957 = vpop.f32.mrf.mxu0
      %v4958 = vadd.f32 %v4869, %v4957
      %v4959 = vpop.f32.mrf.mxu0
      %v4960 = vadd.f32 %v4871, %v4959
      %4961 = vdwg.mxu0
      %4962 = vmatpush.bf16.msra.mxu0 0
      %4963 = vmatpush.bf16.msra.mxu0 0
      %4964 = vmatpush.bf16.msra.mxu0 0
      %4965 = vmatpush.bf16.msra.mxu0 0
      %4966 = vmatpush.bf16.msra.mxu0 %v4521
      %4967 = vmatpush.bf16.msra.mxu0 %v4520
      %4968 = vmatpush.bf16.msra.mxu0 %v4519
      %4969 = vmatpush.bf16.msra.mxu0 %v4518
      %4970 = vmatmul.bf16.gmra.mxu0 %v4559
      %v4971 = vpop.f32.mrf.mxu0
      %v4972 = vadd.f32 %v4883, %v4971
      %v4973 = vpop.f32.mrf.mxu0
      %v4974 = vadd.f32 %v4885, %v4973
      %4975 = vmatmul.bf16.gmra.mxu0 %v4562
      %v4976 = vpop.f32.mrf.mxu0
      %v4977 = vadd.f32 %v4888, %v4976
      %v4978 = vpop.f32.mrf.mxu0
      %v4979 = vadd.f32 %v4890, %v4978
      %4980 = vmatmul.bf16.gmra.mxu0 %v4565
      %v4981 = vpop.f32.mrf.mxu0
      %v4982 = vadd.f32 %v4893, %v4981
      %v4983 = vpop.f32.mrf.mxu0
      %v4984 = vadd.f32 %v4895, %v4983
      %4985 = vmatmul.bf16.gmra.mxu0 %v4568
      %v4986 = vpop.f32.mrf.mxu0
      %v4987 = vadd.f32 %v4898, %v4986
      %v4988 = vpop.f32.mrf.mxu0
      %v4989 = vadd.f32 %v4900, %v4988
      %4990 = vmatmul.bf16.gmra.mxu0 %v4571
      %v4991 = vpop.f32.mrf.mxu0
      %v4992 = vadd.f32 %v4903, %v4991
      %v4993 = vpop.f32.mrf.mxu0
      %v4994 = vadd.f32 %v4905, %v4993
      %4995 = vmatmul.bf16.gmra.mxu0 %v4574
      %v4996 = vpop.f32.mrf.mxu0
      %v4997 = vadd.f32 %v4908, %v4996
      %v4998 = vpop.f32.mrf.mxu0
      %v4999 = vadd.f32 %v4910, %v4998
      %5000 = vmatmul.bf16.gmra.mxu0 %v4577
      %v5001 = vpop.f32.mrf.mxu0
      %v5002 = vadd.f32 %v4913, %v5001
      %v5003 = vpop.f32.mrf.mxu0
      %v5004 = vadd.f32 %v4915, %v5003
      %5005 = vmatmul.bf16.gmra.mxu0 %v4580
      %v5006 = vpop.f32.mrf.mxu0
      %v5007 = vadd.f32 %v4918, %v5006
      %v5008 = vpop.f32.mrf.mxu0
      %v5009 = vadd.f32 %v4920, %v5008
      %5010 = vmatmul.bf16.gmra.mxu0 %v4583
      %v5011 = vpop.f32.mrf.mxu0
      %v5012 = vadd.f32 %v4923, %v5011
      %v5013 = vpop.f32.mrf.mxu0
      %v5014 = vadd.f32 %v4925, %v5013
      %5015 = vmatmul.bf16.gmra.mxu0 %v4586
      %v5016 = vpop.f32.mrf.mxu0
      %v5017 = vadd.f32 %v4928, %v5016
      %v5018 = vpop.f32.mrf.mxu0
      %v5019 = vadd.f32 %v4930, %v5018
      %5020 = vmatmul.bf16.gmra.mxu0 %v4589
      %v5021 = vpop.f32.mrf.mxu0
      %v5022 = vadd.f32 %v4933, %v5021
      %v5023 = vpop.f32.mrf.mxu0
      %v5024 = vadd.f32 %v4935, %v5023
      %5025 = vmatmul.bf16.gmra.mxu0 %v4592
      %v5026 = vpop.f32.mrf.mxu0
      %v5027 = vadd.f32 %v4938, %v5026
      %v5028 = vpop.f32.mrf.mxu0
      %v5029 = vadd.f32 %v4940, %v5028
      %5030 = vmatmul.bf16.gmra.mxu0 %v4595
      %v5031 = vpop.f32.mrf.mxu0
      %v5032 = vadd.f32 %v4943, %v5031
      %v5033 = vpop.f32.mrf.mxu0
      %v5034 = vadd.f32 %v4945, %v5033
      %5035 = vmatmul.bf16.gmra.mxu0 %v4598
      %v5036 = vpop.f32.mrf.mxu0
      %v5037 = vadd.f32 %v4948, %v5036
      %v5038 = vpop.f32.mrf.mxu0
      %v5039 = vadd.f32 %v4950, %v5038
      %5040 = vmatmul.bf16.gmra.mxu0 %v4601
      %v5041 = vpop.f32.mrf.mxu0
      %v5042 = vadd.f32 %v4953, %v5041
      %v5043 = vpop.f32.mrf.mxu0
      %v5044 = vadd.f32 %v4955, %v5043
      %5045 = vmatmul.bf16.gmra.mxu0 %v4604
      %v5046 = vpop.f32.mrf.mxu0
      %v5047 = vadd.f32 %v4958, %v5046
      %v5048 = vpop.f32.mrf.mxu0
      %v5049 = vadd.f32 %v4960, %v5048
      %5050 = vdwg.mxu0
      %v5051 = vmax.f32 %v4972, 0.0
      %v5052 = vmax.f32 %v4974, 0.0
      %v5053 = vmax.f32 %v4977, 0.0
      %v5054 = vmax.f32 %v4979, 0.0
      %v5055 = vmax.f32 %v4982, 0.0
      %v5056 = vmax.f32 %v4984, 0.0
      %v5057 = vmax.f32 %v4987, 0.0
      %v5058 = vmax.f32 %v4989, 0.0
      %v5059 = vmax.f32 %v4992, 0.0
      %v5060 = vmax.f32 %v4994, 0.0
      %v5061 = vmax.f32 %v4997, 0.0
      %v5062 = vmax.f32 %v4999, 0.0
      %v5063 = vmax.f32 %v5002, 0.0
      %v5064 = vmax.f32 %v5004, 0.0
      %v5065 = vmax.f32 %v5007, 0.0
      %v5066 = vmax.f32 %v5009, 0.0
      %v5067 = vmax.f32 %v5012, 0.0
      %v5068 = vmax.f32 %v5014, 0.0
      %v5069 = vmax.f32 %v5017, 0.0
      %v5070 = vmax.f32 %v5019, 0.0
      %v5071 = vmax.f32 %v5022, 0.0
      %v5072 = vmax.f32 %v5024, 0.0
      %v5073 = vmax.f32 %v5027, 0.0
      %v5074 = vmax.f32 %v5029, 0.0
      %v5075 = vmax.f32 %v5032, 0.0
      %v5076 = vmax.f32 %v5034, 0.0
      %v5077 = vmax.f32 %v5037, 0.0
      %v5078 = vmax.f32 %v5039, 0.0
      %v5079 = vmax.f32 %v5042, 0.0
      %v5080 = vmax.f32 %v5044, 0.0
      %v5081 = vmax.f32 %v5047, 0.0
      %v5082 = vmax.f32 %v5049, 0.0
      %v5083 = vld [vmem:[#allocation4] sm:$0xff]
      %v5084 = vld [vmem:[#allocation4 + $0x8] sm:$0xff]
      %v5085 = vld [vmem:[#allocation4 + $0x10] sm:$0xf]
      %v5086 = vld [vmem:[#allocation4 + $0x14] sm:$0xff]
      %v5087 = vld [vmem:[#allocation4 + $0x1c] sm:$0xff]
      %v5088 = vld [vmem:[#allocation4 + $0x24] sm:$0xf]
      %v5089 = vld [vmem:[#allocation4 + $0x28] sm:$0xff]
      %v5090 = vld [vmem:[#allocation4 + $0x30] sm:$0xff]
      %v5091 = vld [vmem:[#allocation4 + $0x38] sm:$0xf]
      %v5092 = vld [vmem:[#allocation4 + $0x3c] sm:$0xff]
      %v5093 = vld [vmem:[#allocation4 + $0x44] sm:$0xff]
      %v5094 = vld [vmem:[#allocation4 + $0x4c] sm:$0xf]
      %v5095 = vld [vmem:[#allocation4 + $0x50] sm:$0xff]
      %v5096 = vld [vmem:[#allocation4 + $0x58] sm:$0xff]
      %v5097 = vld [vmem:[#allocation4 + $0x60] sm:$0xf]
      %v5098 = vld [vmem:[#allocation4 + $0x64] sm:$0xff]
      %v5099 = vld [vmem:[#allocation4 + $0x6c] sm:$0xff]
      %v5100 = vld [vmem:[#allocation4 + $0x74] sm:$0xf]
      %v5101 = vld [vmem:[#allocation4 + $0x78] sm:$0xff]
      %v5102 = vld [vmem:[#allocation4 + $0x80] sm:$0xff]
      %v5103 = vld [vmem:[#allocation4 + $0x88] sm:$0xf]
      %v5104 = vld [vmem:[#allocation4 + $0x8c] sm:$0xff]
      %v5105 = vld [vmem:[#allocation4 + $0x94] sm:$0xff]
      %v5106 = vld [vmem:[#allocation4 + $0x9c] sm:$0xf]
      %v5107 = vld [vmem:[#allocation4 + $0xa0] sm:$0xff]
      %v5108 = vld [vmem:[#allocation4 + $0xa8] sm:$0xff]
      %v5109 = vld [vmem:[#allocation4 + $0xb0] sm:$0xf]
      %v5110 = vld [vmem:[#allocation4 + $0xb4] sm:$0xff]
      %v5111 = vld [vmem:[#allocation4 + $0xbc] sm:$0xff]
      %v5112 = vld [vmem:[#allocation4 + $0xc4] sm:$0xf]
      %v5113 = vld [vmem:[#allocation4 + $0xc8] sm:$0xff]
      %v5114 = vld [vmem:[#allocation4 + $0xd0] sm:$0xff]
      %v5115 = vld [vmem:[#allocation4 + $0xd8] sm:$0xf]
      %v5116 = vld [vmem:[#allocation4 + $0xdc] sm:$0xff]
      %v5117 = vld [vmem:[#allocation4 + $0xe4] sm:$0xff]
      %v5118 = vld [vmem:[#allocation4 + $0xec] sm:$0xf]
      %v5119 = vld [vmem:[#allocation4 + $0xf0] sm:$0xff]
      %v5120 = vld [vmem:[#allocation4 + $0xf8] sm:$0xff]
      %v5121 = vld [vmem:[#allocation4 + $0x100] sm:$0xf]
      %v5122 = vld [vmem:[#allocation4 + $0x104] sm:$0xff]
      %v5123 = vld [vmem:[#allocation4 + $0x10c] sm:$0xff]
      %v5124 = vld [vmem:[#allocation4 + $0x114] sm:$0xf]
      %v5125 = vld [vmem:[#allocation4 + $0x118] sm:$0xff]
      %v5126 = vld [vmem:[#allocation4 + $0x120] sm:$0xff]
      %v5127 = vld [vmem:[#allocation4 + $0x128] sm:$0xf]
      %v5128 = vld [vmem:[#allocation4 + $0x12c] sm:$0xff]
      %v5129 = vld [vmem:[#allocation4 + $0x134] sm:$0xff]
      %v5130 = vld [vmem:[#allocation4 + $0x13c] sm:$0xf]
      %v5131 = vld [vmem:[#allocation4 + $0x140] sm:$0xff]
      %v5132 = vld [vmem:[#allocation4 + $0x148] sm:$0xff]
      %v5133 = vld [vmem:[#allocation4 + $0x150] sm:$0xf]
      %v5134 = vld [vmem:[#allocation4 + $0x154] sm:$0xff]
      %v5135 = vld [vmem:[#allocation4 + $0x15c] sm:$0xff]
      %v5136 = vld [vmem:[#allocation4 + $0x164] sm:$0xf]
      %v5137 = vld [vmem:[#allocation4 + $0x168] sm:$0xff]
      %v5138 = vld [vmem:[#allocation4 + $0x170] sm:$0xff]
      %v5139 = vld [vmem:[#allocation4 + $0x178] sm:$0xf]
      %v5140 = vld [vmem:[#allocation4 + $0x17c] sm:$0xff]
      %v5141 = vld [vmem:[#allocation4 + $0x184] sm:$0xff]
      %v5142 = vld [vmem:[#allocation4 + $0x18c] sm:$0xf]
      %v5143 = vld [vmem:[#allocation4 + $0x190] sm:$0xff]
      %v5144 = vld [vmem:[#allocation4 + $0x198] sm:$0xff]
      %v5145 = vld [vmem:[#allocation4 + $0x1a0] sm:$0xf]
      %v5146 = vld [vmem:[#allocation4 + $0x1a4] sm:$0xff]
      %v5147 = vld [vmem:[#allocation4 + $0x1ac] sm:$0xff]
      %v5148 = vld [vmem:[#allocation4 + $0x1b4] sm:$0xf]
      %v5149 = vld [vmem:[#allocation4 + $0x1b8] sm:$0xff]
      %v5150 = vld [vmem:[#allocation4 + $0x1c0] sm:$0xff]
      %v5151 = vld [vmem:[#allocation4 + $0x1c8] sm:$0xf]
      %v5152 = vld [vmem:[#allocation4 + $0x1cc] sm:$0xff]
      %v5153 = vld [vmem:[#allocation4 + $0x1d4] sm:$0xff]
      %v5154 = vld [vmem:[#allocation4 + $0x1dc] sm:$0xf]
      %v5155 = vld [vmem:[#allocation4 + $0x1e0] sm:$0xff]
      %v5156 = vld [vmem:[#allocation4 + $0x1e8] sm:$0xff]
      %v5157 = vld [vmem:[#allocation4 + $0x1f0] sm:$0xf]
      %v5158 = vld [vmem:[#allocation4 + $0x1f4] sm:$0xff]
      %v5159 = vld [vmem:[#allocation4 + $0x1fc] sm:$0xff]
      %v5160 = vld [vmem:[#allocation4 + $0x204] sm:$0xf]
      %v5161 = vld [vmem:[#allocation4 + $0x208] sm:$0xff]
      %v5162 = vld [vmem:[#allocation4 + $0x210] sm:$0xff]
      %v5163 = vld [vmem:[#allocation4 + $0x218] sm:$0xf]
      %v5164 = vld [vmem:[#allocation4 + $0x21c] sm:$0xff]
      %v5165 = vld [vmem:[#allocation4 + $0x224] sm:$0xff]
      %v5166 = vld [vmem:[#allocation4 + $0x22c] sm:$0xf]
      %v5167 = vld [vmem:[#allocation4 + $0x230] sm:$0xff]
      %v5168 = vld [vmem:[#allocation4 + $0x238] sm:$0xff]
      %v5169 = vld [vmem:[#allocation4 + $0x240] sm:$0xf]
      %v5170 = vld [vmem:[#allocation4 + $0x244] sm:$0xff]
      %v5171 = vld [vmem:[#allocation4 + $0x24c] sm:$0xff]
      %v5172 = vld [vmem:[#allocation4 + $0x254] sm:$0xf]
      %v5173 = vld [vmem:[#allocation4 + $0x258] sm:$0xff]
      %v5174 = vld [vmem:[#allocation4 + $0x260] sm:$0xff]
      %v5175 = vld [vmem:[#allocation4 + $0x268] sm:$0xf]
      %v5176 = vld [vmem:[#allocation4 + $0x26c] sm:$0xff]
      %v5177 = vld [vmem:[#allocation4 + $0x274] sm:$0xff]
      %v5178 = vld [vmem:[#allocation4 + $0x27c] sm:$0xf]
      %v5275 = vunpack.c.l.b16 %v5083
      %v5276 = vunpack.c.h.b16 %v5083
      %v5277 = vunpack.c.l.b16 %v5084
      %v5278 = vunpack.c.h.b16 %v5084
      %v5279 = vunpack.c.l.b16 %v5085
      %v5280 = vunpack.c.l.b16 %v5086
      %v5281 = vunpack.c.h.b16 %v5086
      %v5282 = vunpack.c.l.b16 %v5087
      %v5283 = vunpack.c.h.b16 %v5087
      %v5284 = vunpack.c.l.b16 %v5088
      %v5285 = vunpack.c.l.b16 %v5089
      %v5286 = vunpack.c.h.b16 %v5089
      %v5287 = vunpack.c.l.b16 %v5090
      %v5288 = vunpack.c.h.b16 %v5090
      %v5289 = vunpack.c.l.b16 %v5091
      %v5290 = vunpack.c.l.b16 %v5092
      %v5291 = vunpack.c.h.b16 %v5092
      %v5292 = vunpack.c.l.b16 %v5093
      %v5293 = vunpack.c.h.b16 %v5093
      %v5294 = vunpack.c.l.b16 %v5094
      %v5295 = vunpack.c.l.b16 %v5095
      %v5296 = vunpack.c.h.b16 %v5095
      %v5297 = vunpack.c.l.b16 %v5096
      %v5298 = vunpack.c.h.b16 %v5096
      %v5299 = vunpack.c.l.b16 %v5097
      %v5300 = vunpack.c.l.b16 %v5098
      %v5301 = vunpack.c.h.b16 %v5098
      %v5302 = vunpack.c.l.b16 %v5099
      %v5303 = vunpack.c.h.b16 %v5099
      %v5304 = vunpack.c.l.b16 %v5100
      %v5305 = vunpack.c.l.b16 %v5101
      %v5306 = vunpack.c.h.b16 %v5101
      %v5307 = vunpack.c.l.b16 %v5102
      %v5308 = vunpack.c.h.b16 %v5102
      %v5309 = vunpack.c.l.b16 %v5103
      %v5310 = vunpack.c.l.b16 %v5104
      %v5311 = vunpack.c.h.b16 %v5104
      %v5312 = vunpack.c.l.b16 %v5105
      %v5313 = vunpack.c.h.b16 %v5105
      %v5314 = vunpack.c.l.b16 %v5106
      %v5315 = vunpack.c.l.b16 %v5107
      %v5316 = vunpack.c.h.b16 %v5107
      %v5317 = vunpack.c.l.b16 %v5108
      %v5318 = vunpack.c.h.b16 %v5108
      %v5319 = vunpack.c.l.b16 %v5109
      %v5320 = vunpack.c.l.b16 %v5110
      %v5321 = vunpack.c.h.b16 %v5110
      %v5322 = vunpack.c.l.b16 %v5111
      %v5323 = vunpack.c.h.b16 %v5111
      %v5324 = vunpack.c.l.b16 %v5112
      %v5325 = vunpack.c.l.b16 %v5113
      %v5326 = vunpack.c.h.b16 %v5113
      %v5327 = vunpack.c.l.b16 %v5114
      %v5328 = vunpack.c.h.b16 %v5114
      %v5329 = vunpack.c.l.b16 %v5115
      %v5330 = vunpack.c.l.b16 %v5116
      %v5331 = vunpack.c.h.b16 %v5116
      %v5332 = vunpack.c.l.b16 %v5117
      %v5333 = vunpack.c.h.b16 %v5117
      %v5334 = vunpack.c.l.b16 %v5118
      %v5335 = vunpack.c.l.b16 %v5119
      %v5336 = vunpack.c.h.b16 %v5119
      %v5337 = vunpack.c.l.b16 %v5120
      %v5338 = vunpack.c.h.b16 %v5120
      %v5339 = vunpack.c.l.b16 %v5121
      %v5340 = vunpack.c.l.b16 %v5122
      %v5341 = vunpack.c.h.b16 %v5122
      %v5342 = vunpack.c.l.b16 %v5123
      %v5343 = vunpack.c.h.b16 %v5123
      %v5344 = vunpack.c.l.b16 %v5124
      %v5345 = vunpack.c.l.b16 %v5125
      %v5346 = vunpack.c.h.b16 %v5125
      %v5347 = vunpack.c.l.b16 %v5126
      %v5348 = vunpack.c.h.b16 %v5126
      %v5349 = vunpack.c.l.b16 %v5127
      %v5350 = vunpack.c.l.b16 %v5128
      %v5351 = vunpack.c.h.b16 %v5128
      %v5352 = vunpack.c.l.b16 %v5129
      %v5353 = vunpack.c.h.b16 %v5129
      %v5354 = vunpack.c.l.b16 %v5130
      %v5355 = vunpack.c.l.b16 %v5131
      %v5356 = vunpack.c.h.b16 %v5131
      %v5357 = vunpack.c.l.b16 %v5132
      %v5358 = vunpack.c.h.b16 %v5132
      %v5359 = vunpack.c.l.b16 %v5133
      %v5360 = vunpack.c.l.b16 %v5134
      %v5361 = vunpack.c.h.b16 %v5134
      %v5362 = vunpack.c.l.b16 %v5135
      %v5363 = vunpack.c.h.b16 %v5135
      %v5364 = vunpack.c.l.b16 %v5136
      %v5365 = vunpack.c.l.b16 %v5137
      %v5366 = vunpack.c.h.b16 %v5137
      %v5367 = vunpack.c.l.b16 %v5138
      %v5368 = vunpack.c.h.b16 %v5138
      %v5369 = vunpack.c.l.b16 %v5139
      %v5370 = vunpack.c.l.b16 %v5140
      %v5371 = vunpack.c.h.b16 %v5140
      %v5372 = vunpack.c.l.b16 %v5141
      %v5373 = vunpack.c.h.b16 %v5141
      %v5374 = vunpack.c.l.b16 %v5142
      %v5375 = vunpack.c.l.b16 %v5143
      %v5376 = vunpack.c.h.b16 %v5143
      %v5377 = vunpack.c.l.b16 %v5144
      %v5378 = vunpack.c.h.b16 %v5144
      %v5379 = vunpack.c.l.b16 %v5145
      %v5380 = vunpack.c.l.b16 %v5146
      %v5381 = vunpack.c.h.b16 %v5146
      %v5382 = vunpack.c.l.b16 %v5147
      %v5383 = vunpack.c.h.b16 %v5147
      %v5384 = vunpack.c.l.b16 %v5148
      %v5385 = vunpack.c.l.b16 %v5149
      %v5386 = vunpack.c.h.b16 %v5149
      %v5387 = vunpack.c.l.b16 %v5150
      %v5388 = vunpack.c.h.b16 %v5150
      %v5389 = vunpack.c.l.b16 %v5151
      %v5390 = vunpack.c.l.b16 %v5152
      %v5391 = vunpack.c.h.b16 %v5152
      %v5392 = vunpack.c.l.b16 %v5153
      %v5393 = vunpack.c.h.b16 %v5153
      %v5394 = vunpack.c.l.b16 %v5154
      %v5395 = vunpack.c.l.b16 %v5155
      %v5396 = vunpack.c.h.b16 %v5155
      %v5397 = vunpack.c.l.b16 %v5156
      %v5398 = vunpack.c.h.b16 %v5156
      %v5399 = vunpack.c.l.b16 %v5157
      %v5400 = vunpack.c.l.b16 %v5158
      %v5401 = vunpack.c.h.b16 %v5158
      %v5402 = vunpack.c.l.b16 %v5159
      %v5403 = vunpack.c.h.b16 %v5159
      %v5404 = vunpack.c.l.b16 %v5160
      %v5405 = vunpack.c.l.b16 %v5161
      %v5406 = vunpack.c.h.b16 %v5161
      %v5407 = vunpack.c.l.b16 %v5162
      %v5408 = vunpack.c.h.b16 %v5162
      %v5409 = vunpack.c.l.b16 %v5163
      %v5410 = vunpack.c.l.b16 %v5164
      %v5411 = vunpack.c.h.b16 %v5164
      %v5412 = vunpack.c.l.b16 %v5165
      %v5413 = vunpack.c.h.b16 %v5165
      %v5414 = vunpack.c.l.b16 %v5166
      %v5415 = vunpack.c.l.b16 %v5167
      %v5416 = vunpack.c.h.b16 %v5167
      %v5417 = vunpack.c.l.b16 %v5168
      %v5418 = vunpack.c.h.b16 %v5168
      %v5419 = vunpack.c.l.b16 %v5169
      %v5420 = vunpack.c.l.b16 %v5170
      %v5421 = vunpack.c.h.b16 %v5170
      %v5422 = vunpack.c.l.b16 %v5171
      %v5423 = vunpack.c.h.b16 %v5171
      %v5424 = vunpack.c.l.b16 %v5172
      %v5425 = vunpack.c.l.b16 %v5173
      %v5426 = vunpack.c.h.b16 %v5173
      %v5427 = vunpack.c.l.b16 %v5174
      %v5428 = vunpack.c.h.b16 %v5174
      %v5429 = vunpack.c.l.b16 %v5175
      %v5430 = vunpack.c.l.b16 %v5176
      %v5431 = vunpack.c.h.b16 %v5176
      %v5432 = vunpack.c.l.b16 %v5177
      %v5433 = vunpack.c.h.b16 %v5177
      %v5434 = vunpack.c.l.b16 %v5178
      %v5435 = vpack.c.b16 %v5280, %v5275
      %v5436 = vpack.c.b16 %v5281, %v5276
      %v5437 = vpack.c.b16 %v5282, %v5277
      %v5438 = vpack.c.b16 %v5283, %v5278
      %v5439 = vpack.c.b16 %v5284, %v5279
      %v5440 = vpack.c.b16 %v5290, %v5285
      %v5441 = vpack.c.b16 %v5291, %v5286
      %v5442 = vpack.c.b16 %v5292, %v5287
      %v5443 = vpack.c.b16 %v5293, %v5288
      %v5444 = vpack.c.b16 %v5294, %v5289
      %v5445 = vpack.c.b16 %v5300, %v5295
      %v5446 = vpack.c.b16 %v5301, %v5296
      %v5447 = vpack.c.b16 %v5302, %v5297
      %v5448 = vpack.c.b16 %v5303, %v5298
      %v5449 = vpack.c.b16 %v5304, %v5299
      %v5450 = vpack.c.b16 %v5310, %v5305
      %v5451 = vpack.c.b16 %v5311, %v5306
      %v5452 = vpack.c.b16 %v5312, %v5307
      %v5453 = vpack.c.b16 %v5313, %v5308
      %v5454 = vpack.c.b16 %v5314, %v5309
      %v5455 = vpack.c.b16 %v5320, %v5315
      %v5456 = vpack.c.b16 %v5321, %v5316
      %v5457 = vpack.c.b16 %v5322, %v5317
      %v5458 = vpack.c.b16 %v5323, %v5318
      %v5459 = vpack.c.b16 %v5324, %v5319
      %v5460 = vpack.c.b16 %v5330, %v5325
      %v5461 = vpack.c.b16 %v5331, %v5326
      %v5462 = vpack.c.b16 %v5332, %v5327
      %v5463 = vpack.c.b16 %v5333, %v5328
      %v5464 = vpack.c.b16 %v5334, %v5329
      %v5465 = vpack.c.b16 %v5340, %v5335
      %v5466 = vpack.c.b16 %v5341, %v5336
      %v5467 = vpack.c.b16 %v5342, %v5337
      %v5468 = vpack.c.b16 %v5343, %v5338
      %v5469 = vpack.c.b16 %v5344, %v5339
      %v5470 = vpack.c.b16 %v5350, %v5345
      %v5471 = vpack.c.b16 %v5351, %v5346
      %v5472 = vpack.c.b16 %v5352, %v5347
      %v5473 = vpack.c.b16 %v5353, %v5348
      %v5474 = vpack.c.b16 %v5354, %v5349
      %v5475 = vpack.c.b16 %v5360, %v5355
      %v5476 = vpack.c.b16 %v5361, %v5356
      %v5477 = vpack.c.b16 %v5362, %v5357
      %v5478 = vpack.c.b16 %v5363, %v5358
      %v5479 = vpack.c.b16 %v5364, %v5359
      %v5480 = vpack.c.b16 %v5370, %v5365
      %v5481 = vpack.c.b16 %v5371, %v5366
      %v5482 = vpack.c.b16 %v5372, %v5367
      %v5483 = vpack.c.b16 %v5373, %v5368
      %v5484 = vpack.c.b16 %v5374, %v5369
      %v5485 = vpack.c.b16 %v5380, %v5375
      %v5486 = vpack.c.b16 %v5381, %v5376
      %v5487 = vpack.c.b16 %v5382, %v5377
      %v5488 = vpack.c.b16 %v5383, %v5378
      %v5489 = vpack.c.b16 %v5384, %v5379
      %v5490 = vpack.c.b16 %v5390, %v5385
      %v5491 = vpack.c.b16 %v5391, %v5386
      %v5492 = vpack.c.b16 %v5392, %v5387
      %v5493 = vpack.c.b16 %v5393, %v5388
      %v5494 = vpack.c.b16 %v5394, %v5389
      %v5495 = vpack.c.b16 %v5400, %v5395
      %v5496 = vpack.c.b16 %v5401, %v5396
      %v5497 = vpack.c.b16 %v5402, %v5397
      %v5498 = vpack.c.b16 %v5403, %v5398
      %v5499 = vpack.c.b16 %v5404, %v5399
      %v5500 = vpack.c.b16 %v5410, %v5405
      %v5501 = vpack.c.b16 %v5411, %v5406
      %v5502 = vpack.c.b16 %v5412, %v5407
      %v5503 = vpack.c.b16 %v5413, %v5408
      %v5504 = vpack.c.b16 %v5414, %v5409
      %v5505 = vpack.c.b16 %v5420, %v5415
      %v5506 = vpack.c.b16 %v5421, %v5416
      %v5507 = vpack.c.b16 %v5422, %v5417
      %v5508 = vpack.c.b16 %v5423, %v5418
      %v5509 = vpack.c.b16 %v5424, %v5419
      %v5510 = vpack.c.b16 %v5430, %v5425
      %v5511 = vpack.c.b16 %v5431, %v5426
      %v5512 = vpack.c.b16 %v5432, %v5427
      %v5513 = vpack.c.b16 %v5433, %v5428
      %v5514 = vpack.c.b16 %v5434, %v5429
      %v5580 = vsel %vm903, %v5439, 0
      %v5583 = vsel %vm903, %v5444, 0
      %v5586 = vsel %vm903, %v5449, 0
      %v5589 = vsel %vm903, %v5454, 0
      %v5592 = vsel %vm903, %v5459, 0
      %v5595 = vsel %vm903, %v5464, 0
      %v5598 = vsel %vm903, %v5469, 0
      %v5601 = vsel %vm903, %v5474, 0
      %v5604 = vsel %vm903, %v5479, 0
      %v5607 = vsel %vm903, %v5484, 0
      %v5610 = vsel %vm903, %v5489, 0
      %v5613 = vsel %vm903, %v5494, 0
      %v5616 = vsel %vm903, %v5499, 0
      %v5619 = vsel %vm903, %v5504, 0
      %v5622 = vsel %vm903, %v5509, 0
      %v5625 = vsel %vm903, %v5514, 0
      %5627 = vmatpush.bf16.msra.mxu0 %v4493
      %5628 = vmatpush.bf16.msra.mxu0 %v4492
      %5629 = vmatpush.bf16.msra.mxu0 %v4491
      %5630 = vmatpush.bf16.msra.mxu0 %v4490
      %5631 = vmatpush.bf16.msra.mxu0 %v4489
      %5632 = vmatpush.bf16.msra.mxu0 %v4488
      %5633 = vmatpush.bf16.msra.mxu0 %v4487
      %5634 = vmatpush.bf16.msra.mxu0 %v4486
      %5635 = vmatmul.bf16.gmra.mxu0 %v5435
      %v5636 = vpop.f32.mrf.mxu0
      %v5637 = vadd.f32 %v3940, %v5636
      %v5638 = vpop.f32.mrf.mxu0
      %v5639 = vadd.f32 %v3940, %v5638
      %5640 = vmatmul.bf16.gmra.mxu0 %v5440
      %v5641 = vpop.f32.mrf.mxu0
      %v5642 = vadd.f32 %v3940, %v5641
      %v5643 = vpop.f32.mrf.mxu0
      %v5644 = vadd.f32 %v3940, %v5643
      %5645 = vmatmul.bf16.gmra.mxu0 %v5445
      %v5646 = vpop.f32.mrf.mxu0
      %v5647 = vadd.f32 %v3940, %v5646
      %v5648 = vpop.f32.mrf.mxu0
      %v5649 = vadd.f32 %v3940, %v5648
      %5650 = vmatmul.bf16.gmra.mxu0 %v5450
      %v5651 = vpop.f32.mrf.mxu0
      %v5652 = vadd.f32 %v3940, %v5651
      %v5653 = vpop.f32.mrf.mxu0
      %v5654 = vadd.f32 %v3940, %v5653
      %5655 = vmatmul.bf16.gmra.mxu0 %v5455
      %v5656 = vpop.f32.mrf.mxu0
      %v5657 = vadd.f32 %v3940, %v5656
      %v5658 = vpop.f32.mrf.mxu0
      %v5659 = vadd.f32 %v3940, %v5658
      %5660 = vmatmul.bf16.gmra.mxu0 %v5460
      %v5661 = vpop.f32.mrf.mxu0
      %v5662 = vadd.f32 %v3940, %v5661
      %v5663 = vpop.f32.mrf.mxu0
      %v5664 = vadd.f32 %v3940, %v5663
      %5665 = vmatmul.bf16.gmra.mxu0 %v5465
      %v5666 = vpop.f32.mrf.mxu0
      %v5667 = vadd.f32 %v3940, %v5666
      %v5668 = vpop.f32.mrf.mxu0
      %v5669 = vadd.f32 %v3940, %v5668
      %5670 = vmatmul.bf16.gmra.mxu0 %v5470
      %v5671 = vpop.f32.mrf.mxu0
      %v5672 = vadd.f32 %v3940, %v5671
      %v5673 = vpop.f32.mrf.mxu0
      %v5674 = vadd.f32 %v3940, %v5673
      %5675 = vmatmul.bf16.gmra.mxu0 %v5475
      %v5676 = vpop.f32.mrf.mxu0
      %v5677 = vadd.f32 %v3940, %v5676
      %v5678 = vpop.f32.mrf.mxu0
      %v5679 = vadd.f32 %v3940, %v5678
      %5680 = vmatmul.bf16.gmra.mxu0 %v5480
      %v5681 = vpop.f32.mrf.mxu0
      %v5682 = vadd.f32 %v3940, %v5681
      %v5683 = vpop.f32.mrf.mxu0
      %v5684 = vadd.f32 %v3940, %v5683
      %5685 = vmatmul.bf16.gmra.mxu0 %v5485
      %v5686 = vpop.f32.mrf.mxu0
      %v5687 = vadd.f32 %v3940, %v5686
      %v5688 = vpop.f32.mrf.mxu0
      %v5689 = vadd.f32 %v3940, %v5688
      %5690 = vmatmul.bf16.gmra.mxu0 %v5490
      %v5691 = vpop.f32.mrf.mxu0
      %v5692 = vadd.f32 %v3940, %v5691
      %v5693 = vpop.f32.mrf.mxu0
      %v5694 = vadd.f32 %v3940, %v5693
      %5695 = vmatmul.bf16.gmra.mxu0 %v5495
      %v5696 = vpop.f32.mrf.mxu0
      %v5697 = vadd.f32 %v3940, %v5696
      %v5698 = vpop.f32.mrf.mxu0
      %v5699 = vadd.f32 %v3940, %v5698
      %5700 = vmatmul.bf16.gmra.mxu0 %v5500
      %v5701 = vpop.f32.mrf.mxu0
      %v5702 = vadd.f32 %v3940, %v5701
      %v5703 = vpop.f32.mrf.mxu0
      %v5704 = vadd.f32 %v3940, %v5703
      %5705 = vmatmul.bf16.gmra.mxu0 %v5505
      %v5706 = vpop.f32.mrf.mxu0
      %v5707 = vadd.f32 %v3940, %v5706
      %v5708 = vpop.f32.mrf.mxu0
      %v5709 = vadd.f32 %v3940, %v5708
      %5710 = vmatmul.bf16.gmra.mxu0 %v5510
      %v5711 = vpop.f32.mrf.mxu0
      %v5712 = vadd.f32 %v3940, %v5711
      %v5713 = vpop.f32.mrf.mxu0
      %v5714 = vadd.f32 %v3940, %v5713
      %5715 = vdwg.mxu0
      %5716 = vmatpush.bf16.msra.mxu0 %v4501
      %5717 = vmatpush.bf16.msra.mxu0 %v4500
      %5718 = vmatpush.bf16.msra.mxu0 %v4499
      %5719 = vmatpush.bf16.msra.mxu0 %v4498
      %5720 = vmatpush.bf16.msra.mxu0 %v4497
      %5721 = vmatpush.bf16.msra.mxu0 %v4496
      %5722 = vmatpush.bf16.msra.mxu0 %v4495
      %5723 = vmatpush.bf16.msra.mxu0 %v4494
      %5724 = vmatmul.bf16.gmra.mxu0 %v5436
      %v5725 = vpop.f32.mrf.mxu0
      %v5726 = vadd.f32 %v5637, %v5725
      %v5727 = vpop.f32.mrf.mxu0
      %v5728 = vadd.f32 %v5639, %v5727
      %5729 = vmatmul.bf16.gmra.mxu0 %v5441
      %v5730 = vpop.f32.mrf.mxu0
      %v5731 = vadd.f32 %v5642, %v5730
      %v5732 = vpop.f32.mrf.mxu0
      %v5733 = vadd.f32 %v5644, %v5732
      %5734 = vmatmul.bf16.gmra.mxu0 %v5446
      %v5735 = vpop.f32.mrf.mxu0
      %v5736 = vadd.f32 %v5647, %v5735
      %v5737 = vpop.f32.mrf.mxu0
      %v5738 = vadd.f32 %v5649, %v5737
      %5739 = vmatmul.bf16.gmra.mxu0 %v5451
      %v5740 = vpop.f32.mrf.mxu0
      %v5741 = vadd.f32 %v5652, %v5740
      %v5742 = vpop.f32.mrf.mxu0
      %v5743 = vadd.f32 %v5654, %v5742
      %5744 = vmatmul.bf16.gmra.mxu0 %v5456
      %v5745 = vpop.f32.mrf.mxu0
      %v5746 = vadd.f32 %v5657, %v5745
      %v5747 = vpop.f32.mrf.mxu0
      %v5748 = vadd.f32 %v5659, %v5747
      %5749 = vmatmul.bf16.gmra.mxu0 %v5461
      %v5750 = vpop.f32.mrf.mxu0
      %v5751 = vadd.f32 %v5662, %v5750
      %v5752 = vpop.f32.mrf.mxu0
      %v5753 = vadd.f32 %v5664, %v5752
      %5754 = vmatmul.bf16.gmra.mxu0 %v5466
      %v5755 = vpop.f32.mrf.mxu0
      %v5756 = vadd.f32 %v5667, %v5755
      %v5757 = vpop.f32.mrf.mxu0
      %v5758 = vadd.f32 %v5669, %v5757
      %5759 = vmatmul.bf16.gmra.mxu0 %v5471
      %v5760 = vpop.f32.mrf.mxu0
      %v5761 = vadd.f32 %v5672, %v5760
      %v5762 = vpop.f32.mrf.mxu0
      %v5763 = vadd.f32 %v5674, %v5762
      %5764 = vmatmul.bf16.gmra.mxu0 %v5476
      %v5765 = vpop.f32.mrf.mxu0
      %v5766 = vadd.f32 %v5677, %v5765
      %v5767 = vpop.f32.mrf.mxu0
      %v5768 = vadd.f32 %v5679, %v5767
      %5769 = vmatmul.bf16.gmra.mxu0 %v5481
      %v5770 = vpop.f32.mrf.mxu0
      %v5771 = vadd.f32 %v5682, %v5770
      %v5772 = vpop.f32.mrf.mxu0
      %v5773 = vadd.f32 %v5684, %v5772
      %5774 = vmatmul.bf16.gmra.mxu0 %v5486
      %v5775 = vpop.f32.mrf.mxu0
      %v5776 = vadd.f32 %v5687, %v5775
      %v5777 = vpop.f32.mrf.mxu0
      %v5778 = vadd.f32 %v5689, %v5777
      %5779 = vmatmul.bf16.gmra.mxu0 %v5491
      %v5780 = vpop.f32.mrf.mxu0
      %v5781 = vadd.f32 %v5692, %v5780
      %v5782 = vpop.f32.mrf.mxu0
      %v5783 = vadd.f32 %v5694, %v5782
      %5784 = vmatmul.bf16.gmra.mxu0 %v5496
      %v5785 = vpop.f32.mrf.mxu0
      %v5786 = vadd.f32 %v5697, %v5785
      %v5787 = vpop.f32.mrf.mxu0
      %v5788 = vadd.f32 %v5699, %v5787
      %5789 = vmatmul.bf16.gmra.mxu0 %v5501
      %v5790 = vpop.f32.mrf.mxu0
      %v5791 = vadd.f32 %v5702, %v5790
      %v5792 = vpop.f32.mrf.mxu0
      %v5793 = vadd.f32 %v5704, %v5792
      %5794 = vmatmul.bf16.gmra.mxu0 %v5506
      %v5795 = vpop.f32.mrf.mxu0
      %v5796 = vadd.f32 %v5707, %v5795
      %v5797 = vpop.f32.mrf.mxu0
      %v5798 = vadd.f32 %v5709, %v5797
      %5799 = vmatmul.bf16.gmra.mxu0 %v5511
      %v5800 = vpop.f32.mrf.mxu0
      %v5801 = vadd.f32 %v5712, %v5800
      %v5802 = vpop.f32.mrf.mxu0
      %v5803 = vadd.f32 %v5714, %v5802
      %5804 = vdwg.mxu0
      %5805 = vmatpush.bf16.msra.mxu0 %v4509
      %5806 = vmatpush.bf16.msra.mxu0 %v4508
      %5807 = vmatpush.bf16.msra.mxu0 %v4507
      %5808 = vmatpush.bf16.msra.mxu0 %v4506
      %5809 = vmatpush.bf16.msra.mxu0 %v4505
      %5810 = vmatpush.bf16.msra.mxu0 %v4504
      %5811 = vmatpush.bf16.msra.mxu0 %v4503
      %5812 = vmatpush.bf16.msra.mxu0 %v4502
      %5813 = vmatmul.bf16.gmra.mxu0 %v5437
      %v5814 = vpop.f32.mrf.mxu0
      %v5815 = vadd.f32 %v5726, %v5814
      %v5816 = vpop.f32.mrf.mxu0
      %v5817 = vadd.f32 %v5728, %v5816
      %5818 = vmatmul.bf16.gmra.mxu0 %v5442
      %v5819 = vpop.f32.mrf.mxu0
      %v5820 = vadd.f32 %v5731, %v5819
      %v5821 = vpop.f32.mrf.mxu0
      %v5822 = vadd.f32 %v5733, %v5821
      %5823 = vmatmul.bf16.gmra.mxu0 %v5447
      %v5824 = vpop.f32.mrf.mxu0
      %v5825 = vadd.f32 %v5736, %v5824
      %v5826 = vpop.f32.mrf.mxu0
      %v5827 = vadd.f32 %v5738, %v5826
      %5828 = vmatmul.bf16.gmra.mxu0 %v5452
      %v5829 = vpop.f32.mrf.mxu0
      %v5830 = vadd.f32 %v5741, %v5829
      %v5831 = vpop.f32.mrf.mxu0
      %v5832 = vadd.f32 %v5743, %v5831
      %5833 = vmatmul.bf16.gmra.mxu0 %v5457
      %v5834 = vpop.f32.mrf.mxu0
      %v5835 = vadd.f32 %v5746, %v5834
      %v5836 = vpop.f32.mrf.mxu0
      %v5837 = vadd.f32 %v5748, %v5836
      %5838 = vmatmul.bf16.gmra.mxu0 %v5462
      %v5839 = vpop.f32.mrf.mxu0
      %v5840 = vadd.f32 %v5751, %v5839
      %v5841 = vpop.f32.mrf.mxu0
      %v5842 = vadd.f32 %v5753, %v5841
      %5843 = vmatmul.bf16.gmra.mxu0 %v5467
      %v5844 = vpop.f32.mrf.mxu0
      %v5845 = vadd.f32 %v5756, %v5844
      %v5846 = vpop.f32.mrf.mxu0
      %v5847 = vadd.f32 %v5758, %v5846
      %5848 = vmatmul.bf16.gmra.mxu0 %v5472
      %v5849 = vpop.f32.mrf.mxu0
      %v5850 = vadd.f32 %v5761, %v5849
      %v5851 = vpop.f32.mrf.mxu0
      %v5852 = vadd.f32 %v5763, %v5851
      %5853 = vmatmul.bf16.gmra.mxu0 %v5477
      %v5854 = vpop.f32.mrf.mxu0
      %v5855 = vadd.f32 %v5766, %v5854
      %v5856 = vpop.f32.mrf.mxu0
      %v5857 = vadd.f32 %v5768, %v5856
      %5858 = vmatmul.bf16.gmra.mxu0 %v5482
      %v5859 = vpop.f32.mrf.mxu0
      %v5860 = vadd.f32 %v5771, %v5859
      %v5861 = vpop.f32.mrf.mxu0
      %v5862 = vadd.f32 %v5773, %v5861
      %5863 = vmatmul.bf16.gmra.mxu0 %v5487
      %v5864 = vpop.f32.mrf.mxu0
      %v5865 = vadd.f32 %v5776, %v5864
      %v5866 = vpop.f32.mrf.mxu0
      %v5867 = vadd.f32 %v5778, %v5866
      %5868 = vmatmul.bf16.gmra.mxu0 %v5492
      %v5869 = vpop.f32.mrf.mxu0
      %v5870 = vadd.f32 %v5781, %v5869
      %v5871 = vpop.f32.mrf.mxu0
      %v5872 = vadd.f32 %v5783, %v5871
      %5873 = vmatmul.bf16.gmra.mxu0 %v5497
      %v5874 = vpop.f32.mrf.mxu0
      %v5875 = vadd.f32 %v5786, %v5874
      %v5876 = vpop.f32.mrf.mxu0
      %v5877 = vadd.f32 %v5788, %v5876
      %5878 = vmatmul.bf16.gmra.mxu0 %v5502
      %v5879 = vpop.f32.mrf.mxu0
      %v5880 = vadd.f32 %v5791, %v5879
      %v5881 = vpop.f32.mrf.mxu0
      %v5882 = vadd.f32 %v5793, %v5881
      %5883 = vmatmul.bf16.gmra.mxu0 %v5507
      %v5884 = vpop.f32.mrf.mxu0
      %v5885 = vadd.f32 %v5796, %v5884
      %v5886 = vpop.f32.mrf.mxu0
      %v5887 = vadd.f32 %v5798, %v5886
      %5888 = vmatmul.bf16.gmra.mxu0 %v5512
      %v5889 = vpop.f32.mrf.mxu0
      %v5890 = vadd.f32 %v5801, %v5889
      %v5891 = vpop.f32.mrf.mxu0
      %v5892 = vadd.f32 %v5803, %v5891
      %5893 = vdwg.mxu0
      %5894 = vmatpush.bf16.msra.mxu0 %v4517
      %5895 = vmatpush.bf16.msra.mxu0 %v4516
      %5896 = vmatpush.bf16.msra.mxu0 %v4515
      %5897 = vmatpush.bf16.msra.mxu0 %v4514
      %5898 = vmatpush.bf16.msra.mxu0 %v4513
      %5899 = vmatpush.bf16.msra.mxu0 %v4512
      %5900 = vmatpush.bf16.msra.mxu0 %v4511
      %5901 = vmatpush.bf16.msra.mxu0 %v4510
      %5902 = vmatmul.bf16.gmra.mxu0 %v5438
      %v5903 = vpop.f32.mrf.mxu0
      %v5904 = vadd.f32 %v5815, %v5903
      %v5905 = vpop.f32.mrf.mxu0
      %v5906 = vadd.f32 %v5817, %v5905
      %5907 = vmatmul.bf16.gmra.mxu0 %v5443
      %v5908 = vpop.f32.mrf.mxu0
      %v5909 = vadd.f32 %v5820, %v5908
      %v5910 = vpop.f32.mrf.mxu0
      %v5911 = vadd.f32 %v5822, %v5910
      %5912 = vmatmul.bf16.gmra.mxu0 %v5448
      %v5913 = vpop.f32.mrf.mxu0
      %v5914 = vadd.f32 %v5825, %v5913
      %v5915 = vpop.f32.mrf.mxu0
      %v5916 = vadd.f32 %v5827, %v5915
      %5917 = vmatmul.bf16.gmra.mxu0 %v5453
      %v5918 = vpop.f32.mrf.mxu0
      %v5919 = vadd.f32 %v5830, %v5918
      %v5920 = vpop.f32.mrf.mxu0
      %v5921 = vadd.f32 %v5832, %v5920
      %5922 = vmatmul.bf16.gmra.mxu0 %v5458
      %v5923 = vpop.f32.mrf.mxu0
      %v5924 = vadd.f32 %v5835, %v5923
      %v5925 = vpop.f32.mrf.mxu0
      %v5926 = vadd.f32 %v5837, %v5925
      %5927 = vmatmul.bf16.gmra.mxu0 %v5463
      %v5928 = vpop.f32.mrf.mxu0
      %v5929 = vadd.f32 %v5840, %v5928
      %v5930 = vpop.f32.mrf.mxu0
      %v5931 = vadd.f32 %v5842, %v5930
      %5932 = vmatmul.bf16.gmra.mxu0 %v5468
      %v5933 = vpop.f32.mrf.mxu0
      %v5934 = vadd.f32 %v5845, %v5933
      %v5935 = vpop.f32.mrf.mxu0
      %v5936 = vadd.f32 %v5847, %v5935
      %5937 = vmatmul.bf16.gmra.mxu0 %v5473
      %v5938 = vpop.f32.mrf.mxu0
      %v5939 = vadd.f32 %v5850, %v5938
      %v5940 = vpop.f32.mrf.mxu0
      %v5941 = vadd.f32 %v5852, %v5940
      %5942 = vmatmul.bf16.gmra.mxu0 %v5478
      %v5943 = vpop.f32.mrf.mxu0
      %v5944 = vadd.f32 %v5855, %v5943
      %v5945 = vpop.f32.mrf.mxu0
      %v5946 = vadd.f32 %v5857, %v5945
      %5947 = vmatmul.bf16.gmra.mxu0 %v5483
      %v5948 = vpop.f32.mrf.mxu0
      %v5949 = vadd.f32 %v5860, %v5948
      %v5950 = vpop.f32.mrf.mxu0
      %v5951 = vadd.f32 %v5862, %v5950
      %5952 = vmatmul.bf16.gmra.mxu0 %v5488
      %v5953 = vpop.f32.mrf.mxu0
      %v5954 = vadd.f32 %v5865, %v5953
      %v5955 = vpop.f32.mrf.mxu0
      %v5956 = vadd.f32 %v5867, %v5955
      %5957 = vmatmul.bf16.gmra.mxu0 %v5493
      %v5958 = vpop.f32.mrf.mxu0
      %v5959 = vadd.f32 %v5870, %v5958
      %v5960 = vpop.f32.mrf.mxu0
      %v5961 = vadd.f32 %v5872, %v5960
      %5962 = vmatmul.bf16.gmra.mxu0 %v5498
      %v5963 = vpop.f32.mrf.mxu0
      %v5964 = vadd.f32 %v5875, %v5963
      %v5965 = vpop.f32.mrf.mxu0
      %v5966 = vadd.f32 %v5877, %v5965
      %5967 = vmatmul.bf16.gmra.mxu0 %v5503
      %v5968 = vpop.f32.mrf.mxu0
      %v5969 = vadd.f32 %v5880, %v5968
      %v5970 = vpop.f32.mrf.mxu0
      %v5971 = vadd.f32 %v5882, %v5970
      %5972 = vmatmul.bf16.gmra.mxu0 %v5508
      %v5973 = vpop.f32.mrf.mxu0
      %v5974 = vadd.f32 %v5885, %v5973
      %v5975 = vpop.f32.mrf.mxu0
      %v5976 = vadd.f32 %v5887, %v5975
      %5977 = vmatmul.bf16.gmra.mxu0 %v5513
      %v5978 = vpop.f32.mrf.mxu0
      %v5979 = vadd.f32 %v5890, %v5978
      %v5980 = vpop.f32.mrf.mxu0
      %v5981 = vadd.f32 %v5892, %v5980
      %5982 = vdwg.mxu0
      %5983 = vmatpush.bf16.msra.mxu0 0
      %5984 = vmatpush.bf16.msra.mxu0 0
      %5985 = vmatpush.bf16.msra.mxu0 0
      %5986 = vmatpush.bf16.msra.mxu0 0
      %5987 = vmatpush.bf16.msra.mxu0 %v4521
      %5988 = vmatpush.bf16.msra.mxu0 %v4520
      %5989 = vmatpush.bf16.msra.mxu0 %v4519
      %5990 = vmatpush.bf16.msra.mxu0 %v4518
      %5991 = vmatmul.bf16.gmra.mxu0 %v5580
      %v5992 = vpop.f32.mrf.mxu0
      %v5993 = vadd.f32 %v5904, %v5992
      %v5994 = vpop.f32.mrf.mxu0
      %v5995 = vadd.f32 %v5906, %v5994
      %5996 = vmatmul.bf16.gmra.mxu0 %v5583
      %v5997 = vpop.f32.mrf.mxu0
      %v5998 = vadd.f32 %v5909, %v5997
      %v5999 = vpop.f32.mrf.mxu0
      %v6000 = vadd.f32 %v5911, %v5999
      %6001 = vmatmul.bf16.gmra.mxu0 %v5586
      %v6002 = vpop.f32.mrf.mxu0
      %v6003 = vadd.f32 %v5914, %v6002
      %v6004 = vpop.f32.mrf.mxu0
      %v6005 = vadd.f32 %v5916, %v6004
      %6006 = vmatmul.bf16.gmra.mxu0 %v5589
      %v6007 = vpop.f32.mrf.mxu0
      %v6008 = vadd.f32 %v5919, %v6007
      %v6009 = vpop.f32.mrf.mxu0
      %v6010 = vadd.f32 %v5921, %v6009
      %6011 = vmatmul.bf16.gmra.mxu0 %v5592
      %v6012 = vpop.f32.mrf.mxu0
      %v6013 = vadd.f32 %v5924, %v6012
      %v6014 = vpop.f32.mrf.mxu0
      %v6015 = vadd.f32 %v5926, %v6014
      %6016 = vmatmul.bf16.gmra.mxu0 %v5595
      %v6017 = vpop.f32.mrf.mxu0
      %v6018 = vadd.f32 %v5929, %v6017
      %v6019 = vpop.f32.mrf.mxu0
      %v6020 = vadd.f32 %v5931, %v6019
      %6021 = vmatmul.bf16.gmra.mxu0 %v5598
      %v6022 = vpop.f32.mrf.mxu0
      %v6023 = vadd.f32 %v5934, %v6022
      %v6024 = vpop.f32.mrf.mxu0
      %v6025 = vadd.f32 %v5936, %v6024
      %6026 = vmatmul.bf16.gmra.mxu0 %v5601
      %v6027 = vpop.f32.mrf.mxu0
      %v6028 = vadd.f32 %v5939, %v6027
      %v6029 = vpop.f32.mrf.mxu0
      %v6030 = vadd.f32 %v5941, %v6029
      %6031 = vmatmul.bf16.gmra.mxu0 %v5604
      %v6032 = vpop.f32.mrf.mxu0
      %v6033 = vadd.f32 %v5944, %v6032
      %v6034 = vpop.f32.mrf.mxu0
      %v6035 = vadd.f32 %v5946, %v6034
      %6036 = vmatmul.bf16.gmra.mxu0 %v5607
      %v6037 = vpop.f32.mrf.mxu0
      %v6038 = vadd.f32 %v5949, %v6037
      %v6039 = vpop.f32.mrf.mxu0
      %v6040 = vadd.f32 %v5951, %v6039
      %6041 = vmatmul.bf16.gmra.mxu0 %v5610
      %v6042 = vpop.f32.mrf.mxu0
      %v6043 = vadd.f32 %v5954, %v6042
      %v6044 = vpop.f32.mrf.mxu0
      %v6045 = vadd.f32 %v5956, %v6044
      %6046 = vmatmul.bf16.gmra.mxu0 %v5613
      %v6047 = vpop.f32.mrf.mxu0
      %v6048 = vadd.f32 %v5959, %v6047
      %v6049 = vpop.f32.mrf.mxu0
      %v6050 = vadd.f32 %v5961, %v6049
      %6051 = vmatmul.bf16.gmra.mxu0 %v5616
      %v6052 = vpop.f32.mrf.mxu0
      %v6053 = vadd.f32 %v5964, %v6052
      %v6054 = vpop.f32.mrf.mxu0
      %v6055 = vadd.f32 %v5966, %v6054
      %6056 = vmatmul.bf16.gmra.mxu0 %v5619
      %v6057 = vpop.f32.mrf.mxu0
      %v6058 = vadd.f32 %v5969, %v6057
      %v6059 = vpop.f32.mrf.mxu0
      %v6060 = vadd.f32 %v5971, %v6059
      %6061 = vmatmul.bf16.gmra.mxu0 %v5622
      %v6062 = vpop.f32.mrf.mxu0
      %v6063 = vadd.f32 %v5974, %v6062
      %v6064 = vpop.f32.mrf.mxu0
      %v6065 = vadd.f32 %v5976, %v6064
      %6066 = vmatmul.bf16.gmra.mxu0 %v5625
      %v6067 = vpop.f32.mrf.mxu0
      %v6068 = vadd.f32 %v5979, %v6067
      %v6069 = vpop.f32.mrf.mxu0
      %v6070 = vadd.f32 %v5981, %v6069
      %6071 = vdwg.mxu0
      %v6072 = vmax.f32 %v5993, 0.0
      %v6073 = vmax.f32 %v5995, 0.0
      %v6074 = vmax.f32 %v5998, 0.0
      %v6075 = vmax.f32 %v6000, 0.0
      %v6076 = vmax.f32 %v6003, 0.0
      %v6077 = vmax.f32 %v6005, 0.0
      %v6078 = vmax.f32 %v6008, 0.0
      %v6079 = vmax.f32 %v6010, 0.0
      %v6080 = vmax.f32 %v6013, 0.0
      %v6081 = vmax.f32 %v6015, 0.0
      %v6082 = vmax.f32 %v6018, 0.0
      %v6083 = vmax.f32 %v6020, 0.0
      %v6084 = vmax.f32 %v6023, 0.0
      %v6085 = vmax.f32 %v6025, 0.0
      %v6086 = vmax.f32 %v6028, 0.0
      %v6087 = vmax.f32 %v6030, 0.0
      %v6088 = vmax.f32 %v6033, 0.0
      %v6089 = vmax.f32 %v6035, 0.0
      %v6090 = vmax.f32 %v6038, 0.0
      %v6091 = vmax.f32 %v6040, 0.0
      %v6092 = vmax.f32 %v6043, 0.0
      %v6093 = vmax.f32 %v6045, 0.0
      %v6094 = vmax.f32 %v6048, 0.0
      %v6095 = vmax.f32 %v6050, 0.0
      %v6096 = vmax.f32 %v6053, 0.0
      %v6097 = vmax.f32 %v6055, 0.0
      %v6098 = vmax.f32 %v6058, 0.0
      %v6099 = vmax.f32 %v6060, 0.0
      %v6100 = vmax.f32 %v6063, 0.0
      %v6101 = vmax.f32 %v6065, 0.0
      %v6102 = vmax.f32 %v6068, 0.0
      %v6103 = vmax.f32 %v6070, 0.0
      %v6104 = vmax.f32 %v5051, %v6072
      %v6105 = vmax.f32 %v5052, %v6073
      %v6106 = vmax.f32 %v5053, %v6074
      %v6107 = vmax.f32 %v5054, %v6075
      %v6108 = vmax.f32 %v5055, %v6076
      %v6109 = vmax.f32 %v5056, %v6077
      %v6110 = vmax.f32 %v5057, %v6078
      %v6111 = vmax.f32 %v5058, %v6079
      %v6112 = vmax.f32 %v5059, %v6080
      %v6113 = vmax.f32 %v5060, %v6081
      %v6114 = vmax.f32 %v5061, %v6082
      %v6115 = vmax.f32 %v5062, %v6083
      %v6116 = vmax.f32 %v5063, %v6084
      %v6117 = vmax.f32 %v5064, %v6085
      %v6118 = vmax.f32 %v5065, %v6086
      %v6119 = vmax.f32 %v5066, %v6087
      %v6120 = vmax.f32 %v5067, %v6088
      %v6121 = vmax.f32 %v5068, %v6089
      %v6122 = vmax.f32 %v5069, %v6090
      %v6123 = vmax.f32 %v5070, %v6091
      %v6124 = vmax.f32 %v5071, %v6092
      %v6125 = vmax.f32 %v5072, %v6093
      %v6126 = vmax.f32 %v5073, %v6094
      %v6127 = vmax.f32 %v5074, %v6095
      %v6128 = vmax.f32 %v5075, %v6096
      %v6129 = vmax.f32 %v5076, %v6097
      %v6130 = vmax.f32 %v5077, %v6098
      %v6131 = vmax.f32 %v5078, %v6099
      %v6132 = vmax.f32 %v5079, %v6100
      %v6133 = vmax.f32 %v5080, %v6101
      %v6134 = vmax.f32 %v5081, %v6102
      %v6135 = vmax.f32 %v5082, %v6103
      %v6136 = vsel %vm903, %v6104, -inf
      %v6137 = vsel %vm903, %v6106, -inf
      %v6138 = vmax.f32 %v6136, %v6137
      %v6139 = vsel %vm903, %v6105, -inf
      %v6140 = vsel %vm903, %v6107, -inf
      %v6141 = vmax.f32 %v6139, %v6140
      %v6142 = vsel %vm903, %v6108, -inf
      %v6143 = vsel %vm903, %v6110, -inf
      %v6144 = vmax.f32 %v6142, %v6143
      %v6145 = vsel %vm903, %v6109, -inf
      %v6146 = vsel %vm903, %v6111, -inf
      %v6147 = vmax.f32 %v6145, %v6146
      %v6148 = vsel %vm903, %v6112, -inf
      %v6149 = vsel %vm903, %v6114, -inf
      %v6150 = vmax.f32 %v6148, %v6149
      %v6151 = vsel %vm903, %v6113, -inf
      %v6152 = vsel %vm903, %v6115, -inf
      %v6153 = vmax.f32 %v6151, %v6152
      %v6154 = vsel %vm903, %v6116, -inf
      %v6155 = vsel %vm903, %v6118, -inf
      %v6156 = vmax.f32 %v6154, %v6155
      %v6157 = vsel %vm903, %v6117, -inf
      %v6158 = vsel %vm903, %v6119, -inf
      %v6159 = vmax.f32 %v6157, %v6158
      %v6160 = vsel %vm903, %v6120, -inf
      %v6161 = vsel %vm903, %v6122, -inf
      %v6162 = vmax.f32 %v6160, %v6161
      %v6163 = vsel %vm903, %v6121, -inf
      %v6164 = vsel %vm903, %v6123, -inf
      %v6165 = vmax.f32 %v6163, %v6164
      %v6166 = vsel %vm903, %v6124, -inf
      %v6167 = vsel %vm903, %v6126, -inf
      %v6168 = vmax.f32 %v6166, %v6167
      %v6169 = vsel %vm903, %v6125, -inf
      %v6170 = vsel %vm903, %v6127, -inf
      %v6171 = vmax.f32 %v6169, %v6170
      %v6172 = vsel %vm903, %v6128, -inf
      %v6173 = vsel %vm903, %v6130, -inf
      %v6174 = vmax.f32 %v6172, %v6173
      %v6175 = vsel %vm903, %v6129, -inf
      %v6176 = vsel %vm903, %v6131, -inf
      %v6177 = vmax.f32 %v6175, %v6176
      %v6178 = vsel %vm903, %v6132, -inf
      %v6179 = vsel %vm903, %v6134, -inf
      %v6180 = vmax.f32 %v6178, %v6179
      %v6181 = vsel %vm903, %v6133, -inf
      %v6182 = vsel %vm903, %v6135, -inf
      %v6183 = vmax.f32 %v6181, %v6182
      %v6184 = vpack.c.bf16 %v6138, %v6138
      %v6185 = vpack.c.bf16 %v6141, %v6141
      %v6186 = vpack.c.bf16 %v6144, %v6144
      %v6187 = vpack.c.bf16 %v6147, %v6147
      %v6188 = vpack.c.bf16 %v6150, %v6150
      %v6189 = vpack.c.bf16 %v6153, %v6153
      %v6190 = vpack.c.bf16 %v6156, %v6156
      %v6191 = vpack.c.bf16 %v6159, %v6159
      %v6192 = vpack.c.bf16 %v6162, %v6162
      %v6193 = vpack.c.bf16 %v6165, %v6165
      %v6194 = vpack.c.bf16 %v6168, %v6168
      %v6195 = vpack.c.bf16 %v6171, %v6171
      %v6196 = vpack.c.bf16 %v6174, %v6174
      %v6197 = vpack.c.bf16 %v6177, %v6177
      %v6198 = vpack.c.bf16 %v6180, %v6180
      %v6199 = vpack.c.bf16 %v6183, %v6183
      %6200 = vst.msk [vmem:[%s248] sm:$0xf] %vm1110, %v6184
      %6201 = vst.msk [vmem:[%s248 + $0x4] sm:$0xf] %vm1110, %v6185
      %6202 = vst.msk [vmem:[%s248 + $0x8] sm:$0xf] %vm1110, %v6186
      %6203 = vst.msk [vmem:[%s248 + $0xc] sm:$0xf] %vm1110, %v6187
      %6204 = vst.msk [vmem:[%s248 + $0x10] sm:$0xf] %vm1110, %v6188
      %6205 = vst.msk [vmem:[%s248 + $0x14] sm:$0xf] %vm1110, %v6189
      %6206 = vst.msk [vmem:[%s248 + $0x18] sm:$0xf] %vm1110, %v6190
      %6207 = vst.msk [vmem:[%s248 + $0x1c] sm:$0xf] %vm1110, %v6191
      %6208 = vst.msk [vmem:[%s248 + $0x20] sm:$0xf] %vm1110, %v6192
      %6209 = vst.msk [vmem:[%s248 + $0x24] sm:$0xf] %vm1110, %v6193
      %6210 = vst.msk [vmem:[%s248 + $0x28] sm:$0xf] %vm1110, %v6194
      %6211 = vst.msk [vmem:[%s248 + $0x2c] sm:$0xf] %vm1110, %v6195
      %6212 = vst.msk [vmem:[%s248 + $0x30] sm:$0xf] %vm1110, %v6196
      %6213 = vst.msk [vmem:[%s248 + $0x34] sm:$0xf] %vm1110, %v6197
      %6214 = vst.msk [vmem:[%s248 + $0x38] sm:$0xf] %vm1110, %v6198
      %6215 = vst.msk [vmem:[%s248 + $0x3c] sm:$0xf] %vm1110, %v6199
      %s6216 = smul.u32 8, %s21
      %p6217 = scmp.lt.s32.totalorder %s20, 1
      %s6218 = scalar_select %p6217, %s20, 1
      %p6219 = scmp.lt.s32.totalorder %s6216, 15
      %s6220 = scalar_select %p6219, %s6216, 15
      %s6221 = smul.addr %s6220, 2
      %s6222 = smul.addr %s6218, 32
      %s6223 = sadd.s32 %s6221, %s6222
      %s6224 = smul.addr %s6223, 4
      %s6225 = scalar_lea.vmem %s5, %s6224
      // Predicated region
      $region49: #{truncated_vgg19_forward.2} parent=39 // pred_check
        %p6226 = pneg %p158
      $region50: #{truncated_vgg19_forward.2} parent=39 // pred_check_branch
        %6228 = sbr.rel (%p6226) target = $region52
      $region51: #{truncated_vgg19_forward.2} parent=39 // pred_region
        %s6229 = smul.u32 8, %s21
      $region52: #{truncated_vgg19_forward.2} parent=39 // pred_fallthru
        _
    $region40: #{truncated_vgg19_forward.2} parent=5 // pred_fallthru
      _
    %p6230 = scmp.le.s32.totalorder 2, %s11
    // Predicated region
    $region53: #{truncated_vgg19_forward.2} parent=5 // pred_check
      %p6231 = pneg %p6230
    $region54: #{truncated_vgg19_forward.2} parent=5 // pred_check_branch
      %6233 = sbr.rel (%p6231) target = $region56
    $region55: #{truncated_vgg19_forward.2} parent=5 // pred_region
      %s6234 = ssub.s32 %s11, 2
      // Predicated region
      $region57: #{truncated_vgg19_forward.2} parent=55 // pred_check
        %p6235 = pneg %p164
      $region58: #{truncated_vgg19_forward.2} parent=55 // pred_check_branch
        %6237 = sbr.rel (%p6235) target = $region60
      $region59: #{truncated_vgg19_forward.2} parent=55 // pred_region
        %s6238 = smul.u32 8, %s23
        %p6239 = scmp.lt.s32.totalorder %s22, 1
        %s6240 = scalar_select %p6239, %s22, 1
        %p6241 = scmp.lt.s32.totalorder %s6238, 15
        %s6242 = scalar_select %p6241, %s6238, 15
        %s6243 = smul.addr %s6242, 2
        %s6244 = smul.addr %s6240, 32
        %s6245 = sadd.s32 %s6243, %s6244
        %s6246 = smul.addr %s6245, 4
        %s6247 = scalar_lea.vmem %s5, %s6246
      $region60: #{truncated_vgg19_forward.2} parent=55 // pred_fallthru
        _
    $region56: #{truncated_vgg19_forward.2} parent=5 // pred_fallthru
      _
  $region6: #{truncated_vgg19_forward.2} parent=0 // loop_footer
    %s15 = sadd.s32 1, %s11
  $region7: #{truncated_vgg19_forward.2} parent=0 // loop_footer_branch
    %10 = sbr.rel target = $region3
  $region8: #{truncated_vgg19_forward.2} parent=0 // loop_exit
    _

</llo_original>
